<compile_context>
chip_gen: v6e
topology: v6e:2x2x1
jax: 0.10.0
libtpu: 0.0.40
codegen_flags: <defaults>
</compile_context>

<pallas_src>
import math

import jax
import jax.numpy as jnp
from jax import lax
from jax.experimental import pallas as pl
from jax.experimental.pallas import tpu as pltpu


# bf16 weights are MXU-native on v5e/v6e/v7x; accumulation is f32 and all
# elementwise (sigmoid/tanh/LN/softmax) math stays f32 (v5e has no bf16 VPU/EUP).
MATMUL_WEIGHT_DTYPE = jnp.bfloat16

FFN_CHUNK = 512  # F is processed in 512-wide slabs (caps live ReLU intermediate)


def _full_spec(shape):
    zeros = (0,) * len(shape)
    return pl.BlockSpec(shape, lambda i, z=zeros: z)


def _mm(x, w):
    """MXU matmul with f32 accumulation. Caller casts x to the weight dtype."""
    return jnp.dot(x, w, preferred_element_type=jnp.float32)


def _layernorm(y, g, b, eps=1e-5):
    mu = jnp.mean(y, axis=-1, keepdims=True)
    var = jnp.mean((y - mu) ** 2, axis=-1, keepdims=True)
    return (y - mu) * lax.rsqrt(var + eps) * g + b


# --------------------------------------------------------------------------
# Pack all small f32 vectors (biases, LN params) into one (1, P) array with
# 128-lane-aligned segments so in-kernel slices are lane-aligned.
# --------------------------------------------------------------------------
def _pack_small_params(params):
    segs, offsets = [], {}
    cursor = 0

    def add(name, arr):
        nonlocal cursor
        a = jnp.asarray(arr, jnp.float32).reshape(1, -1)
        w = a.shape[1]
        pad = (-w) % 128
        if pad:
            a = jnp.pad(a, ((0, 0), (0, pad)))
        offsets[name] = (cursor, w)
        segs.append(a)
        cursor += w + pad

    for l, (_, _, b) in enumerate(params['lstm']):
        add(f'lstm{l}_b', b)
    keys = ['in_proj_b', 'out_proj_b', 'ln1_g', 'ln1_b', 'b1', 'b2', 'ln2_g', 'ln2_b']
    for l, lp in enumerate(params['transformer']):
        for k in keys:
            add(f'tf{l}_{k}', lp[k])
    add('fc_b', params['fc_b'])
    return jnp.concatenate(segs, axis=1), offsets


# --------------------------------------------------------------------------
# Fused whole-model kernel (single grid=(1,) invocation; everything VMEM
# resident, all loops statically unrolled at trace time).
# --------------------------------------------------------------------------
def _make_fused_kernel(T, B, H, nhead, n_lstm, n_tf, F, offsets):
    E = H
    hd = E // nhead
    S = T
    wdt = MATMUL_WEIGHT_DTYPE

    def kernel(*refs):
        it = iter(refs)
        x_ref = next(it)                                        # (T*B, Din), time-major rows t*B + b
        lstm_w = [(next(it), next(it)) for _ in range(n_lstm)]  # (wih_t, whh_t) bf16
        tf_w = [tuple(next(it) for _ in range(4)) for _ in range(n_tf)]
        fc_w_ref = next(it)
        packed_ref = next(it)                                   # (1, P) packed f32 small params
        out_ref = next(it)

        def pv(name):
            off, w = offsets[name]
            return packed_ref[:, off:off + w]                   # static, lane-aligned slice

        # ------------------------- LSTM stack -----------------------------
        seq = x_ref[...]                                        # (T*B, Din) f32
        hs = None
        for li, (wih_ref, whh_ref) in enumerate(lstm_w):
            whh = whh_ref[...]                                  # (H, 4H) bf16, hoisted
            # Input projection + bias hoisted out of the recurrence:
            xw = _mm(seq.astype(wdt), wih_ref[...]) + pv(f'lstm{li}_b')   # (T*B, 4H) f32
            h = jnp.zeros((B, H), jnp.float32)
            c = jnp.zeros((B, H), jnp.float32)
            hs = []
            for t in range(T):                                  # static unroll (T small)
                gates = xw[t * B:(t + 1) * B, :] + _mm(h.astype(wdt), whh)  # (B, 4H)
                sg = jax.nn.sigmoid(gates)                      # one full-width EUP pass
                g_g = jnp.tanh(gates[:, 2 * H:3 * H])
                c = sg[:, H:2 * H] * c + sg[:, 0:H] * g_g       # f, i slices of sg
                h = sg[:, 3 * H:4 * H] * jnp.tanh(c)            # o slice of sg
                hs.append(h)
            if li + 1 < n_lstm:
                seq = jnp.concatenate(hs, axis=0)               # time-major (T*B, H)

        # Batch-major relayout from full (B,H) tiles (no 1-row slices).
        x2 = jnp.stack(hs, axis=1).reshape(B * S, H)            # rows b*S + t

        # --------------------- Transformer encoder stack -------------------
        for li, (inw_ref, outw_ref, w1_ref, w2_ref) in enumerate(tf_w):
            # Fused QKV projection; q-scale is pre-folded into the weights.
            qkv = _mm(x2.astype(wdt), inw_ref[...]) + pv(f'tf{li}_in_proj_b')   # (B*S, 3E)
            q3 = qkv[:, 0 * E:1 * E].reshape(B, S, E)
            k3 = qkv[:, 1 * E:2 * E].reshape(B, S, E)
            v3 = qkv[:, 2 * E:3 * E].reshape(B, S, E)

            # Per-head attention, batched over B with 3-D einsums.
            heads = []
            for hi in range(nhead):
                c0, c1 = hi * hd, (hi + 1) * hd
                s_mat = jnp.einsum('bqd,bkd->bqk', q3[:, :, c0:c1], k3[:, :, c0:c1],
                                   preferred_element_type=jnp.float32)          # (B, S, S)
                m = jnp.max(s_mat, axis=-1, keepdims=True)
                p = jnp.exp(s_mat - m)
                denom = jnp.sum(p, axis=-1, keepdims=True)
                p = p * pl.reciprocal(denom, approx=True)        # EUP, frees VPU
                heads.append(jnp.einsum('bqk,bkd->bqd', p, v3[:, :, c0:c1],
                                        preferred_element_type=jnp.float32))    # (B, S, hd)
            attn = jnp.concatenate(heads, axis=-1).reshape(B * S, E)
            attn = _mm(attn.astype(wdt), outw_ref[...]) + pv(f'tf{li}_out_proj_b')

            # Post-norm residual 1
            h1 = _layernorm(x2 + attn, pv(f'tf{li}_ln1_g'), pv(f'tf{li}_ln1_b'))

            # ReLU FFN, chunked over F to cap the live intermediate.
            h1_bf = h1.astype(wdt)                               # cast once, reused per chunk
            b1_off, _ = offsets[f'tf{li}_b1']
            ff = jnp.zeros((B * S, E), jnp.float32)
            for c0 in range(0, F, FFN_CHUNK):
                c1 = min(c0 + FFN_CHUNK, F)
                z = _mm(h1_bf, w1_ref[:, c0:c1])                 # (B*S, chunk)
                z = jnp.maximum(z + packed_ref[:, b1_off + c0:b1_off + c1], 0.0)
                ff = ff + _mm(z.astype(wdt), w2_ref[c0:c1, :])   # accumulate into (B*S, E)
            ff = ff + pv(f'tf{li}_b2')

            # Post-norm residual 2
            x2 = _layernorm(h1 + ff, pv(f'tf{li}_ln2_g'), pv(f'tf{li}_ln2_b'))

        # --------------- last time step + classifier (fused) ---------------
        last = x2.reshape(B, S, E)[:, S - 1:S, :].reshape(B, E)
        out_ref[...] = _mm(last.astype(wdt), fc_w_ref[...]) + pv('fc_b')

    return kernel


# --------------------------------------------------------------------------
# Wrapper
# --------------------------------------------------------------------------
def lstm_transformer_forward(x, params, nhead):
    """x: (B, input_dim, T) — same layout the PyTorch module receives."""
    B, input_dim, T = x.shape
    H = params['lstm'][0][1].shape[0]          # whh_t is (H, 4H)
    n_lstm = len(params['lstm'])
    n_tf = len(params['transformer'])
    C = params['fc_w_t'].shape[1]
    F = params['transformer'][0]['w1_t'].shape[1]
    assert H % nhead == 0

    # x.permute(0,2,1) -> (B, T, Din); fold to time-major rows (t*B + b, Din).
    # Single tiny XLA transpose on the raw input; everything else is in-kernel.
    x_seq = jnp.transpose(x, (2, 0, 1)).astype(jnp.float32).reshape(T * B, input_dim)

    # Pack the ~20 tiny f32 vectors into one input (constant-folds under jit).
    packed, offsets = _pack_small_params(params)

    args = [x_seq]
    for (wih_t, whh_t, _) in params['lstm']:
        args += [wih_t, whh_t]
    for lp in params['transformer']:
        args += [lp['in_proj_w_t'], lp['out_proj_w_t'], lp['w1_t'], lp['w2_t']]
    args += [params['fc_w_t'], packed]

    kernel = _make_fused_kernel(T, B, H, nhead, n_lstm, n_tf, F, offsets)

    return pl.pallas_call(
        kernel,
        out_shape=jax.ShapeDtypeStruct((B, C), jnp.float32),
        grid=(1,),
        in_specs=[_full_spec(a.shape) for a in args],
        out_specs=_full_spec((B, C)),
        compiler_params=pltpu.CompilerParams(
            dimension_semantics=("arbitrary",)),
    )(*args)


# --------------------------------------------------------------------------
# Deterministic parameter construction (shapes from LSTMTransformer.__init__)
# The 1/sqrt(head_dim) q-scale is folded into the q rows of in_proj w/b here.
# --------------------------------------------------------------------------
def init_params(key, input_dim, hidden_dim, nhead, lstm_layers,
                transformer_layers, num_classes, ffn_dim=2048):
    keys = iter(jax.random.split(key, 128))
    wdt = MATMUL_WEIGHT_DTYPE

    def u(shape, scale):
        return jax.random.uniform(next(keys), shape, jnp.float32, -scale, scale)

    params = {}
    stdv = 1.0 / math.sqrt(hidden_dim)
    lstm = []
    for l in range(lstm_layers):
        din = input_dim if l == 0 else hidden_dim
        w_ih = u((4 * hidden_dim, din), stdv)
        w_hh = u((4 * hidden_dim, hidden_dim), stdv)
        b_ih = u((4 * hidden_dim,), stdv)
        b_hh = u((4 * hidden_dim,), stdv)
        lstm.append((w_ih.T.astype(wdt), w_hh.T.astype(wdt),
                     (b_ih + b_hh).reshape(1, -1)))            # bias stays f32
    params['lstm'] = lstm

    E, Fd = hidden_dim, ffn_dim
    hd = E // nhead
    q_scale = 1.0 / math.sqrt(hd)
    se, sf = 1.0 / math.sqrt(E), 1.0 / math.sqrt(Fd)
    tlayers = []
    for _ in range(transformer_layers):
        in_w = u((3 * E, E), se)                               # rows = [q; k; v] outputs
        in_b = u((3 * E,), se)
        in_w = in_w.at[:E, :].multiply(q_scale)                # fold q scaling
        in_b = in_b.at[:E].multiply(q_scale)
        tlayers.append(dict(
            in_proj_w_t=in_w.T.astype(wdt),
            in_proj_b=in_b.reshape(1, -1),
            out_proj_w_t=u((E, E), se).T.astype(wdt),
            out_proj_b=u((E,), se).reshape(1, -1),
            w1_t=u((Fd, E), se).T.astype(wdt), b1=u((Fd,), se).reshape(1, -1),
            w2_t=u((E, Fd), sf).T.astype(wdt), b2=u((E,), sf).reshape(1, -1),
            ln1_g=jnp.ones((1, E), jnp.float32), ln1_b=jnp.zeros((1, E), jnp.float32),
            ln2_g=jnp.ones((1, E), jnp.float32), ln2_b=jnp.zeros((1, E), jnp.float32),
        ))
    params['transformer'] = tlayers

    params['fc_w_t'] = u((num_classes, E), se).T.astype(wdt)
    params['fc_b'] = u((num_classes,), se).reshape(1, -1)
    return params


# --------------------------------------------------------------------------
if __name__ == "__main__":
    # TODO(synk): dropout layers (LSTM inter-layer, MHA, FFN) are identity here
    # (inference semantics); no train-mode stochasticity is modeled.
    B, input_dim, seq_len = 2, 8, 8
    hidden_dim, nhead = 32, 4
    lstm_layers, transformer_layers, num_classes = 2, 2, 5

    key = jax.random.PRNGKey(0)
    k_x, k_p = jax.random.split(key)
    x = jax.random.normal(k_x, (B, input_dim, seq_len), jnp.float32)
    params = init_params(k_p, input_dim, hidden_dim, nhead,
                         lstm_layers, transformer_layers, num_classes)

    fwd = jax.jit(lambda xx: lstm_transformer_forward(xx, params, nhead))
    out = jax.block_until_ready(fwd(x))
    assert out.shape == (B, num_classes)
    assert bool(jnp.all(jnp.isfinite(out)))
    print("KERNEL_OK")
</pallas_src>

<mosaic_0001>
module attributes {stable_mosaic.version = 11 : i64} {
  func.func @kernel(%arg0: i32, %arg1: memref<16x8xf32, #tpu.memory_space<vmem>>, %arg2: memref<8x128xbf16, #tpu.memory_space<vmem>>, %arg3: memref<32x128xbf16, #tpu.memory_space<vmem>>, %arg4: memref<32x128xbf16, #tpu.memory_space<vmem>>, %arg5: memref<32x128xbf16, #tpu.memory_space<vmem>>, %arg6: memref<32x96xbf16, #tpu.memory_space<vmem>>, %arg7: memref<32x32xbf16, #tpu.memory_space<vmem>>, %arg8: memref<32x2048xbf16, #tpu.memory_space<vmem>>, %arg9: memref<2048x32xbf16, #tpu.memory_space<vmem>>, %arg10: memref<32x96xbf16, #tpu.memory_space<vmem>>, %arg11: memref<32x32xbf16, #tpu.memory_space<vmem>>, %arg12: memref<32x2048xbf16, #tpu.memory_space<vmem>>, %arg13: memref<2048x32xbf16, #tpu.memory_space<vmem>>, %arg14: memref<32x5xbf16, #tpu.memory_space<vmem>>, %arg15: memref<1x6272xf32, #tpu.memory_space<vmem>>, %arg16: memref<2x5xf32, #tpu.memory_space<vmem>>) attributes {dimension_semantics = [#tpu.dimension_semantics<arbitrary>], iteration_bounds = array<i64: 1>, scalar_prefetch = 0 : i64, scratch_operands = 0 : i64, tpu.core_type = #tpu.core_type<tc>, window_params = [{pipeline_mode = #tpu.pipeline_mode<synchronous>, transform_indices = @transform_0, window_bounds = array<i64: 16, 8>}, {pipeline_mode = #tpu.pipeline_mode<synchronous>, transform_indices = @transform_1, window_bounds = array<i64: 8, 128>}, {pipeline_mode = #tpu.pipeline_mode<synchronous>, transform_indices = @transform_2, window_bounds = array<i64: 32, 128>}, {pipeline_mode = #tpu.pipeline_mode<synchronous>, transform_indices = @transform_3, window_bounds = array<i64: 32, 128>}, {pipeline_mode = #tpu.pipeline_mode<synchronous>, transform_indices = @transform_4, window_bounds = array<i64: 32, 128>}, {pipeline_mode = #tpu.pipeline_mode<synchronous>, transform_indices = @transform_5, window_bounds = array<i64: 32, 96>}, {pipeline_mode = #tpu.pipeline_mode<synchronous>, transform_indices = @transform_6, window_bounds = array<i64: 32, 32>}, {pipeline_mode = #tpu.pipeline_mode<synchronous>, transform_indices = @transform_7, window_bounds = array<i64: 32, 2048>}, {pipeline_mode = #tpu.pipeline_mode<synchronous>, transform_indices = @transform_8, window_bounds = array<i64: 2048, 32>}, {pipeline_mode = #tpu.pipeline_mode<synchronous>, transform_indices = @transform_9, window_bounds = array<i64: 32, 96>}, {pipeline_mode = #tpu.pipeline_mode<synchronous>, transform_indices = @transform_10, window_bounds = array<i64: 32, 32>}, {pipeline_mode = #tpu.pipeline_mode<synchronous>, transform_indices = @transform_11, window_bounds = array<i64: 32, 2048>}, {pipeline_mode = #tpu.pipeline_mode<synchronous>, transform_indices = @transform_12, window_bounds = array<i64: 2048, 32>}, {pipeline_mode = #tpu.pipeline_mode<synchronous>, transform_indices = @transform_13, window_bounds = array<i64: 32, 5>}, {pipeline_mode = #tpu.pipeline_mode<synchronous>, transform_indices = @transform_14, window_bounds = array<i64: 1, 6272>}, {pipeline_mode = #tpu.pipeline_mode<synchronous>, transform_indices = @transform_15, window_bounds = array<i64: 2, 5>}]} {
    %c0 = arith.constant 0 : index
    %c0_0 = arith.constant 0 : index
    %0 = vector.load %arg1[%c0, %c0_0] : memref<16x8xf32, #tpu.memory_space<vmem>>, vector<16x8xf32>
    %c0_1 = arith.constant 0 : index
    %c0_2 = arith.constant 0 : index
    %1 = vector.load %arg3[%c0_1, %c0_2] : memref<32x128xbf16, #tpu.memory_space<vmem>>, vector<32x128xbf16>
    %2 = arith.truncf %0 : vector<16x8xf32> to vector<16x8xbf16>
    %c0_3 = arith.constant 0 : index
    %c0_4 = arith.constant 0 : index
    %3 = vector.load %arg2[%c0_3, %c0_4] : memref<8x128xbf16, #tpu.memory_space<vmem>>, vector<8x128xbf16>
    %cst = arith.constant dense<0.000000e+00> : vector<16x128xf32>
    %4 = tpu.matmul %2, %3, %cst {dimension_numbers = #tpu.dot_dimension_numbers<[1], [0], [0], [1], [0, 0, 1, 1], [], []>} : vector<16x8xbf16>, vector<8x128xbf16>, vector<16x128xf32> -> vector<16x128xf32>
    %c0_5 = arith.constant 0 : index
    %c0_6 = arith.constant 0 : index
    %5 = vector.load %arg15[%c0_5, %c0_6] : memref<1x6272xf32, #tpu.memory_space<vmem>>, vector<1x128xf32>
    %6 = vector.broadcast %5 : vector<1x128xf32> to vector<16x128xf32>
    %7 = arith.addf %4, %6 : vector<16x128xf32>
    %cst_7 = arith.constant 0.000000e+00 : f32
    %8 = vector.broadcast %cst_7 : f32 to vector<2x32xf32>
    %cst_8 = arith.constant 0.000000e+00 : f32
    %9 = vector.broadcast %cst_8 : f32 to vector<2x32xf32>
    %10 = vector.extract_strided_slice %7 {offsets = [0, 0], sizes = [2, 128], strides = [1, 1]} : vector<16x128xf32> to vector<2x128xf32>
    %11 = arith.truncf %8 : vector<2x32xf32> to vector<2x32xbf16>
    %cst_9 = arith.constant dense<0.000000e+00> : vector<2x128xf32>
    %12 = tpu.matmul %11, %1, %cst_9 {dimension_numbers = #tpu.dot_dimension_numbers<[1], [0], [0], [1], [0, 0, 1, 1], [], []>} : vector<2x32xbf16>, vector<32x128xbf16>, vector<2x128xf32> -> vector<2x128xf32>
    %13 = arith.addf %10, %12 : vector<2x128xf32>
    %14 = arith.negf %13 : vector<2x128xf32>
    %15 = math.exp %14 : vector<2x128xf32>
    %cst_10 = arith.constant 1.000000e+00 : f32
    %16 = vector.broadcast %cst_10 : f32 to vector<2x128xf32>
    %17 = arith.addf %16, %15 : vector<2x128xf32>
    %18 = arith.divf %16, %17 : vector<2x128xf32>
    %19 = vector.extract_strided_slice %13 {offsets = [0, 64], sizes = [2, 32], strides = [1, 1]} : vector<2x128xf32> to vector<2x32xf32>
    %20 = math.tanh %19 : vector<2x32xf32>
    %21 = vector.extract_strided_slice %18 {offsets = [0, 32], sizes = [2, 32], strides = [1, 1]} : vector<2x128xf32> to vector<2x32xf32>
    %22 = arith.mulf %21, %9 : vector<2x32xf32>
    %23 = vector.extract_strided_slice %18 {offsets = [0, 0], sizes = [2, 32], strides = [1, 1]} : vector<2x128xf32> to vector<2x32xf32>
    %24 = arith.mulf %23, %20 : vector<2x32xf32>
    %25 = arith.addf %22, %24 : vector<2x32xf32>
    %26 = vector.extract_strided_slice %18 {offsets = [0, 96], sizes = [2, 32], strides = [1, 1]} : vector<2x128xf32> to vector<2x32xf32>
    %27 = math.tanh %25 : vector<2x32xf32>
    %28 = arith.mulf %26, %27 : vector<2x32xf32>
    %29 = vector.extract_strided_slice %7 {offsets = [2, 0], sizes = [2, 128], strides = [1, 1]} : vector<16x128xf32> to vector<2x128xf32>
    %30 = arith.truncf %28 : vector<2x32xf32> to vector<2x32xbf16>
    %cst_11 = arith.constant dense<0.000000e+00> : vector<2x128xf32>
    %31 = tpu.matmul %30, %1, %cst_11 {dimension_numbers = #tpu.dot_dimension_numbers<[1], [0], [0], [1], [0, 0, 1, 1], [], []>} : vector<2x32xbf16>, vector<32x128xbf16>, vector<2x128xf32> -> vector<2x128xf32>
    %32 = arith.addf %29, %31 : vector<2x128xf32>
    %33 = arith.negf %32 : vector<2x128xf32>
    %34 = math.exp %33 : vector<2x128xf32>
    %cst_12 = arith.constant 1.000000e+00 : f32
    %35 = vector.broadcast %cst_12 : f32 to vector<2x128xf32>
    %36 = arith.addf %35, %34 : vector<2x128xf32>
    %37 = arith.divf %35, %36 : vector<2x128xf32>
    %38 = vector.extract_strided_slice %32 {offsets = [0, 64], sizes = [2, 32], strides = [1, 1]} : vector<2x128xf32> to vector<2x32xf32>
    %39 = math.tanh %38 : vector<2x32xf32>
    %40 = vector.extract_strided_slice %37 {offsets = [0, 32], sizes = [2, 32], strides = [1, 1]} : vector<2x128xf32> to vector<2x32xf32>
    %41 = arith.mulf %40, %25 : vector<2x32xf32>
    %42 = vector.extract_strided_slice %37 {offsets = [0, 0], sizes = [2, 32], strides = [1, 1]} : vector<2x128xf32> to vector<2x32xf32>
    %43 = arith.mulf %42, %39 : vector<2x32xf32>
    %44 = arith.addf %41, %43 : vector<2x32xf32>
    %45 = vector.extract_strided_slice %37 {offsets = [0, 96], sizes = [2, 32], strides = [1, 1]} : vector<2x128xf32> to vector<2x32xf32>
    %46 = math.tanh %44 : vector<2x32xf32>
    %47 = arith.mulf %45, %46 : vector<2x32xf32>
    %48 = vector.extract_strided_slice %7 {offsets = [4, 0], sizes = [2, 128], strides = [1, 1]} : vector<16x128xf32> to vector<2x128xf32>
    %49 = arith.truncf %47 : vector<2x32xf32> to vector<2x32xbf16>
    %cst_13 = arith.constant dense<0.000000e+00> : vector<2x128xf32>
    %50 = tpu.matmul %49, %1, %cst_13 {dimension_numbers = #tpu.dot_dimension_numbers<[1], [0], [0], [1], [0, 0, 1, 1], [], []>} : vector<2x32xbf16>, vector<32x128xbf16>, vector<2x128xf32> -> vector<2x128xf32>
    %51 = arith.addf %48, %50 : vector<2x128xf32>
    %52 = arith.negf %51 : vector<2x128xf32>
    %53 = math.exp %52 : vector<2x128xf32>
    %cst_14 = arith.constant 1.000000e+00 : f32
    %54 = vector.broadcast %cst_14 : f32 to vector<2x128xf32>
    %55 = arith.addf %54, %53 : vector<2x128xf32>
    %56 = arith.divf %54, %55 : vector<2x128xf32>
    %57 = vector.extract_strided_slice %51 {offsets = [0, 64], sizes = [2, 32], strides = [1, 1]} : vector<2x128xf32> to vector<2x32xf32>
    %58 = math.tanh %57 : vector<2x32xf32>
    %59 = vector.extract_strided_slice %56 {offsets = [0, 32], sizes = [2, 32], strides = [1, 1]} : vector<2x128xf32> to vector<2x32xf32>
    %60 = arith.mulf %59, %44 : vector<2x32xf32>
    %61 = vector.extract_strided_slice %56 {offsets = [0, 0], sizes = [2, 32], strides = [1, 1]} : vector<2x128xf32> to vector<2x32xf32>
    %62 = arith.mulf %61, %58 : vector<2x32xf32>
    %63 = arith.addf %60, %62 : vector<2x32xf32>
    %64 = vector.extract_strided_slice %56 {offsets = [0, 96], sizes = [2, 32], strides = [1, 1]} : vector<2x128xf32> to vector<2x32xf32>
    %65 = math.tanh %63 : vector<2x32xf32>
    %66 = arith.mulf %64, %65 : vector<2x32xf32>
    %67 = vector.extract_strided_slice %7 {offsets = [6, 0], sizes = [2, 128], strides = [1, 1]} : vector<16x128xf32> to vector<2x128xf32>
    %68 = arith.truncf %66 : vector<2x32xf32> to vector<2x32xbf16>
    %cst_15 = arith.constant dense<0.000000e+00> : vector<2x128xf32>
    %69 = tpu.matmul %68, %1, %cst_15 {dimension_numbers = #tpu.dot_dimension_numbers<[1], [0], [0], [1], [0, 0, 1, 1], [], []>} : vector<2x32xbf16>, vector<32x128xbf16>, vector<2x128xf32> -> vector<2x128xf32>
    %70 = arith.addf %67, %69 : vector<2x128xf32>
    %71 = arith.negf %70 : vector<2x128xf32>
    %72 = math.exp %71 : vector<2x128xf32>
    %cst_16 = arith.constant 1.000000e+00 : f32
    %73 = vector.broadcast %cst_16 : f32 to vector<2x128xf32>
    %74 = arith.addf %73, %72 : vector<2x128xf32>
    %75 = arith.divf %73, %74 : vector<2x128xf32>
    %76 = vector.extract_strided_slice %70 {offsets = [0, 64], sizes = [2, 32], strides = [1, 1]} : vector<2x128xf32> to vector<2x32xf32>
    %77 = math.tanh %76 : vector<2x32xf32>
    %78 = vector.extract_strided_slice %75 {offsets = [0, 32], sizes = [2, 32], strides = [1, 1]} : vector<2x128xf32> to vector<2x32xf32>
    %79 = arith.mulf %78, %63 : vector<2x32xf32>
    %80 = vector.extract_strided_slice %75 {offsets = [0, 0], sizes = [2, 32], strides = [1, 1]} : vector<2x128xf32> to vector<2x32xf32>
    %81 = arith.mulf %80, %77 : vector<2x32xf32>
    %82 = arith.addf %79, %81 : vector<2x32xf32>
    %83 = vector.extract_strided_slice %75 {offsets = [0, 96], sizes = [2, 32], strides = [1, 1]} : vector<2x128xf32> to vector<2x32xf32>
    %84 = math.tanh %82 : vector<2x32xf32>
    %85 = arith.mulf %83, %84 : vector<2x32xf32>
    %86 = vector.extract_strided_slice %7 {offsets = [8, 0], sizes = [2, 128], strides = [1, 1]} : vector<16x128xf32> to vector<2x128xf32>
    %87 = arith.truncf %85 : vector<2x32xf32> to vector<2x32xbf16>
    %cst_17 = arith.constant dense<0.000000e+00> : vector<2x128xf32>
    %88 = tpu.matmul %87, %1, %cst_17 {dimension_numbers = #tpu.dot_dimension_numbers<[1], [0], [0], [1], [0, 0, 1, 1], [], []>} : vector<2x32xbf16>, vector<32x128xbf16>, vector<2x128xf32> -> vector<2x128xf32>
    %89 = arith.addf %86, %88 : vector<2x128xf32>
    %90 = arith.negf %89 : vector<2x128xf32>
    %91 = math.exp %90 : vector<2x128xf32>
    %cst_18 = arith.constant 1.000000e+00 : f32
    %92 = vector.broadcast %cst_18 : f32 to vector<2x128xf32>
    %93 = arith.addf %92, %91 : vector<2x128xf32>
    %94 = arith.divf %92, %93 : vector<2x128xf32>
    %95 = vector.extract_strided_slice %89 {offsets = [0, 64], sizes = [2, 32], strides = [1, 1]} : vector<2x128xf32> to vector<2x32xf32>
    %96 = math.tanh %95 : vector<2x32xf32>
    %97 = vector.extract_strided_slice %94 {offsets = [0, 32], sizes = [2, 32], strides = [1, 1]} : vector<2x128xf32> to vector<2x32xf32>
    %98 = arith.mulf %97, %82 : vector<2x32xf32>
    %99 = vector.extract_strided_slice %94 {offsets = [0, 0], sizes = [2, 32], strides = [1, 1]} : vector<2x128xf32> to vector<2x32xf32>
    %100 = arith.mulf %99, %96 : vector<2x32xf32>
    %101 = arith.addf %98, %100 : vector<2x32xf32>
    %102 = vector.extract_strided_slice %94 {offsets = [0, 96], sizes = [2, 32], strides = [1, 1]} : vector<2x128xf32> to vector<2x32xf32>
    %103 = math.tanh %101 : vector<2x32xf32>
    %104 = arith.mulf %102, %103 : vector<2x32xf32>
    %105 = vector.extract_strided_slice %7 {offsets = [10, 0], sizes = [2, 128], strides = [1, 1]} : vector<16x128xf32> to vector<2x128xf32>
    %106 = arith.truncf %104 : vector<2x32xf32> to vector<2x32xbf16>
    %cst_19 = arith.constant dense<0.000000e+00> : vector<2x128xf32>
    %107 = tpu.matmul %106, %1, %cst_19 {dimension_numbers = #tpu.dot_dimension_numbers<[1], [0], [0], [1], [0, 0, 1, 1], [], []>} : vector<2x32xbf16>, vector<32x128xbf16>, vector<2x128xf32> -> vector<2x128xf32>
    %108 = arith.addf %105, %107 : vector<2x128xf32>
    %109 = arith.negf %108 : vector<2x128xf32>
    %110 = math.exp %109 : vector<2x128xf32>
    %cst_20 = arith.constant 1.000000e+00 : f32
    %111 = vector.broadcast %cst_20 : f32 to vector<2x128xf32>
    %112 = arith.addf %111, %110 : vector<2x128xf32>
    %113 = arith.divf %111, %112 : vector<2x128xf32>
    %114 = vector.extract_strided_slice %108 {offsets = [0, 64], sizes = [2, 32], strides = [1, 1]} : vector<2x128xf32> to vector<2x32xf32>
    %115 = math.tanh %114 : vector<2x32xf32>
    %116 = vector.extract_strided_slice %113 {offsets = [0, 32], sizes = [2, 32], strides = [1, 1]} : vector<2x128xf32> to vector<2x32xf32>
    %117 = arith.mulf %116, %101 : vector<2x32xf32>
    %118 = vector.extract_strided_slice %113 {offsets = [0, 0], sizes = [2, 32], strides = [1, 1]} : vector<2x128xf32> to vector<2x32xf32>
    %119 = arith.mulf %118, %115 : vector<2x32xf32>
    %120 = arith.addf %117, %119 : vector<2x32xf32>
    %121 = vector.extract_strided_slice %113 {offsets = [0, 96], sizes = [2, 32], strides = [1, 1]} : vector<2x128xf32> to vector<2x32xf32>
    %122 = math.tanh %120 : vector<2x32xf32>
    %123 = arith.mulf %121, %122 : vector<2x32xf32>
    %124 = vector.extract_strided_slice %7 {offsets = [12, 0], sizes = [2, 128], strides = [1, 1]} : vector<16x128xf32> to vector<2x128xf32>
    %125 = arith.truncf %123 : vector<2x32xf32> to vector<2x32xbf16>
    %cst_21 = arith.constant dense<0.000000e+00> : vector<2x128xf32>
    %126 = tpu.matmul %125, %1, %cst_21 {dimension_numbers = #tpu.dot_dimension_numbers<[1], [0], [0], [1], [0, 0, 1, 1], [], []>} : vector<2x32xbf16>, vector<32x128xbf16>, vector<2x128xf32> -> vector<2x128xf32>
    %127 = arith.addf %124, %126 : vector<2x128xf32>
    %128 = arith.negf %127 : vector<2x128xf32>
    %129 = math.exp %128 : vector<2x128xf32>
    %cst_22 = arith.constant 1.000000e+00 : f32
    %130 = vector.broadcast %cst_22 : f32 to vector<2x128xf32>
    %131 = arith.addf %130, %129 : vector<2x128xf32>
    %132 = arith.divf %130, %131 : vector<2x128xf32>
    %133 = vector.extract_strided_slice %127 {offsets = [0, 64], sizes = [2, 32], strides = [1, 1]} : vector<2x128xf32> to vector<2x32xf32>
    %134 = math.tanh %133 : vector<2x32xf32>
    %135 = vector.extract_strided_slice %132 {offsets = [0, 32], sizes = [2, 32], strides = [1, 1]} : vector<2x128xf32> to vector<2x32xf32>
    %136 = arith.mulf %135, %120 : vector<2x32xf32>
    %137 = vector.extract_strided_slice %132 {offsets = [0, 0], sizes = [2, 32], strides = [1, 1]} : vector<2x128xf32> to vector<2x32xf32>
    %138 = arith.mulf %137, %134 : vector<2x32xf32>
    %139 = arith.addf %136, %138 : vector<2x32xf32>
    %140 = vector.extract_strided_slice %132 {offsets = [0, 96], sizes = [2, 32], strides = [1, 1]} : vector<2x128xf32> to vector<2x32xf32>
    %141 = math.tanh %139 : vector<2x32xf32>
    %142 = arith.mulf %140, %141 : vector<2x32xf32>
    %143 = vector.extract_strided_slice %7 {offsets = [14, 0], sizes = [2, 128], strides = [1, 1]} : vector<16x128xf32> to vector<2x128xf32>
    %144 = arith.truncf %142 : vector<2x32xf32> to vector<2x32xbf16>
    %cst_23 = arith.constant dense<0.000000e+00> : vector<2x128xf32>
    %145 = tpu.matmul %144, %1, %cst_23 {dimension_numbers = #tpu.dot_dimension_numbers<[1], [0], [0], [1], [0, 0, 1, 1], [], []>} : vector<2x32xbf16>, vector<32x128xbf16>, vector<2x128xf32> -> vector<2x128xf32>
    %146 = arith.addf %143, %145 : vector<2x128xf32>
    %147 = arith.negf %146 : vector<2x128xf32>
    %148 = math.exp %147 : vector<2x128xf32>
    %cst_24 = arith.constant 1.000000e+00 : f32
    %149 = vector.broadcast %cst_24 : f32 to vector<2x128xf32>
    %150 = arith.addf %149, %148 : vector<2x128xf32>
    %151 = arith.divf %149, %150 : vector<2x128xf32>
    %152 = vector.extract_strided_slice %146 {offsets = [0, 64], sizes = [2, 32], strides = [1, 1]} : vector<2x128xf32> to vector<2x32xf32>
    %153 = math.tanh %152 : vector<2x32xf32>
    %154 = vector.extract_strided_slice %151 {offsets = [0, 32], sizes = [2, 32], strides = [1, 1]} : vector<2x128xf32> to vector<2x32xf32>
    %155 = arith.mulf %154, %139 : vector<2x32xf32>
    %156 = vector.extract_strided_slice %151 {offsets = [0, 0], sizes = [2, 32], strides = [1, 1]} : vector<2x128xf32> to vector<2x32xf32>
    %157 = arith.mulf %156, %153 : vector<2x32xf32>
    %158 = arith.addf %155, %157 : vector<2x32xf32>
    %159 = vector.extract_strided_slice %151 {offsets = [0, 96], sizes = [2, 32], strides = [1, 1]} : vector<2x128xf32> to vector<2x32xf32>
    %160 = math.tanh %158 : vector<2x32xf32>
    %161 = arith.mulf %159, %160 : vector<2x32xf32>
    %162 = tpu.concatenate %28, %47, %66, %85, %104, %123, %142, %161 in 0 : vector<2x32xf32>, vector<2x32xf32>, vector<2x32xf32>, vector<2x32xf32>, vector<2x32xf32>, vector<2x32xf32>, vector<2x32xf32>, vector<2x32xf32> -> vector<16x32xf32>
    %c0_25 = arith.constant 0 : index
    %c0_26 = arith.constant 0 : index
    %163 = vector.load %arg5[%c0_25, %c0_26] : memref<32x128xbf16, #tpu.memory_space<vmem>>, vector<32x128xbf16>
    %164 = arith.truncf %162 : vector<16x32xf32> to vector<16x32xbf16>
    %c0_27 = arith.constant 0 : index
    %c0_28 = arith.constant 0 : index
    %165 = vector.load %arg4[%c0_27, %c0_28] : memref<32x128xbf16, #tpu.memory_space<vmem>>, vector<32x128xbf16>
    %cst_29 = arith.constant dense<0.000000e+00> : vector<16x128xf32>
    %166 = tpu.matmul %164, %165, %cst_29 {dimension_numbers = #tpu.dot_dimension_numbers<[1], [0], [0], [1], [0, 0, 1, 1], [], []>} : vector<16x32xbf16>, vector<32x128xbf16>, vector<16x128xf32> -> vector<16x128xf32>
    %c0_30 = arith.constant 0 : index
    %c128 = arith.constant 128 : index
    %167 = vector.load %arg15[%c0_30, %c128] : memref<1x6272xf32, #tpu.memory_space<vmem>>, vector<1x128xf32>
    %168 = vector.broadcast %167 : vector<1x128xf32> to vector<16x128xf32>
    %169 = arith.addf %166, %168 : vector<16x128xf32>
    %cst_31 = arith.constant 0.000000e+00 : f32
    %170 = vector.broadcast %cst_31 : f32 to vector<2x32xf32>
    %cst_32 = arith.constant 0.000000e+00 : f32
    %171 = vector.broadcast %cst_32 : f32 to vector<2x32xf32>
    %172 = vector.extract_strided_slice %169 {offsets = [0, 0], sizes = [2, 128], strides = [1, 1]} : vector<16x128xf32> to vector<2x128xf32>
    %173 = arith.truncf %170 : vector<2x32xf32> to vector<2x32xbf16>
    %cst_33 = arith.constant dense<0.000000e+00> : vector<2x128xf32>
    %174 = tpu.matmul %173, %163, %cst_33 {dimension_numbers = #tpu.dot_dimension_numbers<[1], [0], [0], [1], [0, 0, 1, 1], [], []>} : vector<2x32xbf16>, vector<32x128xbf16>, vector<2x128xf32> -> vector<2x128xf32>
    %175 = arith.addf %172, %174 : vector<2x128xf32>
    %176 = arith.negf %175 : vector<2x128xf32>
    %177 = math.exp %176 : vector<2x128xf32>
    %cst_34 = arith.constant 1.000000e+00 : f32
    %178 = vector.broadcast %cst_34 : f32 to vector<2x128xf32>
    %179 = arith.addf %178, %177 : vector<2x128xf32>
    %180 = arith.divf %178, %179 : vector<2x128xf32>
    %181 = vector.extract_strided_slice %175 {offsets = [0, 64], sizes = [2, 32], strides = [1, 1]} : vector<2x128xf32> to vector<2x32xf32>
    %182 = math.tanh %181 : vector<2x32xf32>
    %183 = vector.extract_strided_slice %180 {offsets = [0, 32], sizes = [2, 32], strides = [1, 1]} : vector<2x128xf32> to vector<2x32xf32>
    %184 = arith.mulf %183, %171 : vector<2x32xf32>
    %185 = vector.extract_strided_slice %180 {offsets = [0, 0], sizes = [2, 32], strides = [1, 1]} : vector<2x128xf32> to vector<2x32xf32>
    %186 = arith.mulf %185, %182 : vector<2x32xf32>
    %187 = arith.addf %184, %186 : vector<2x32xf32>
    %188 = vector.extract_strided_slice %180 {offsets = [0, 96], sizes = [2, 32], strides = [1, 1]} : vector<2x128xf32> to vector<2x32xf32>
    %189 = math.tanh %187 : vector<2x32xf32>
    %190 = arith.mulf %188, %189 : vector<2x32xf32>
    %191 = vector.extract_strided_slice %169 {offsets = [2, 0], sizes = [2, 128], strides = [1, 1]} : vector<16x128xf32> to vector<2x128xf32>
    %192 = arith.truncf %190 : vector<2x32xf32> to vector<2x32xbf16>
    %cst_35 = arith.constant dense<0.000000e+00> : vector<2x128xf32>
    %193 = tpu.matmul %192, %163, %cst_35 {dimension_numbers = #tpu.dot_dimension_numbers<[1], [0], [0], [1], [0, 0, 1, 1], [], []>} : vector<2x32xbf16>, vector<32x128xbf16>, vector<2x128xf32> -> vector<2x128xf32>
    %194 = arith.addf %191, %193 : vector<2x128xf32>
    %195 = arith.negf %194 : vector<2x128xf32>
    %196 = math.exp %195 : vector<2x128xf32>
    %cst_36 = arith.constant 1.000000e+00 : f32
    %197 = vector.broadcast %cst_36 : f32 to vector<2x128xf32>
    %198 = arith.addf %197, %196 : vector<2x128xf32>
    %199 = arith.divf %197, %198 : vector<2x128xf32>
    %200 = vector.extract_strided_slice %194 {offsets = [0, 64], sizes = [2, 32], strides = [1, 1]} : vector<2x128xf32> to vector<2x32xf32>
    %201 = math.tanh %200 : vector<2x32xf32>
    %202 = vector.extract_strided_slice %199 {offsets = [0, 32], sizes = [2, 32], strides = [1, 1]} : vector<2x128xf32> to vector<2x32xf32>
    %203 = arith.mulf %202, %187 : vector<2x32xf32>
    %204 = vector.extract_strided_slice %199 {offsets = [0, 0], sizes = [2, 32], strides = [1, 1]} : vector<2x128xf32> to vector<2x32xf32>
    %205 = arith.mulf %204, %201 : vector<2x32xf32>
    %206 = arith.addf %203, %205 : vector<2x32xf32>
    %207 = vector.extract_strided_slice %199 {offsets = [0, 96], sizes = [2, 32], strides = [1, 1]} : vector<2x128xf32> to vector<2x32xf32>
    %208 = math.tanh %206 : vector<2x32xf32>
    %209 = arith.mulf %207, %208 : vector<2x32xf32>
    %210 = vector.extract_strided_slice %169 {offsets = [4, 0], sizes = [2, 128], strides = [1, 1]} : vector<16x128xf32> to vector<2x128xf32>
    %211 = arith.truncf %209 : vector<2x32xf32> to vector<2x32xbf16>
    %cst_37 = arith.constant dense<0.000000e+00> : vector<2x128xf32>
    %212 = tpu.matmul %211, %163, %cst_37 {dimension_numbers = #tpu.dot_dimension_numbers<[1], [0], [0], [1], [0, 0, 1, 1], [], []>} : vector<2x32xbf16>, vector<32x128xbf16>, vector<2x128xf32> -> vector<2x128xf32>
    %213 = arith.addf %210, %212 : vector<2x128xf32>
    %214 = arith.negf %213 : vector<2x128xf32>
    %215 = math.exp %214 : vector<2x128xf32>
    %cst_38 = arith.constant 1.000000e+00 : f32
    %216 = vector.broadcast %cst_38 : f32 to vector<2x128xf32>
    %217 = arith.addf %216, %215 : vector<2x128xf32>
    %218 = arith.divf %216, %217 : vector<2x128xf32>
    %219 = vector.extract_strided_slice %213 {offsets = [0, 64], sizes = [2, 32], strides = [1, 1]} : vector<2x128xf32> to vector<2x32xf32>
    %220 = math.tanh %219 : vector<2x32xf32>
    %221 = vector.extract_strided_slice %218 {offsets = [0, 32], sizes = [2, 32], strides = [1, 1]} : vector<2x128xf32> to vector<2x32xf32>
    %222 = arith.mulf %221, %206 : vector<2x32xf32>
    %223 = vector.extract_strided_slice %218 {offsets = [0, 0], sizes = [2, 32], strides = [1, 1]} : vector<2x128xf32> to vector<2x32xf32>
    %224 = arith.mulf %223, %220 : vector<2x32xf32>
    %225 = arith.addf %222, %224 : vector<2x32xf32>
    %226 = vector.extract_strided_slice %218 {offsets = [0, 96], sizes = [2, 32], strides = [1, 1]} : vector<2x128xf32> to vector<2x32xf32>
    %227 = math.tanh %225 : vector<2x32xf32>
    %228 = arith.mulf %226, %227 : vector<2x32xf32>
    %229 = vector.extract_strided_slice %169 {offsets = [6, 0], sizes = [2, 128], strides = [1, 1]} : vector<16x128xf32> to vector<2x128xf32>
    %230 = arith.truncf %228 : vector<2x32xf32> to vector<2x32xbf16>
    %cst_39 = arith.constant dense<0.000000e+00> : vector<2x128xf32>
    %231 = tpu.matmul %230, %163, %cst_39 {dimension_numbers = #tpu.dot_dimension_numbers<[1], [0], [0], [1], [0, 0, 1, 1], [], []>} : vector<2x32xbf16>, vector<32x128xbf16>, vector<2x128xf32> -> vector<2x128xf32>
    %232 = arith.addf %229, %231 : vector<2x128xf32>
    %233 = arith.negf %232 : vector<2x128xf32>
    %234 = math.exp %233 : vector<2x128xf32>
    %cst_40 = arith.constant 1.000000e+00 : f32
    %235 = vector.broadcast %cst_40 : f32 to vector<2x128xf32>
    %236 = arith.addf %235, %234 : vector<2x128xf32>
    %237 = arith.divf %235, %236 : vector<2x128xf32>
    %238 = vector.extract_strided_slice %232 {offsets = [0, 64], sizes = [2, 32], strides = [1, 1]} : vector<2x128xf32> to vector<2x32xf32>
    %239 = math.tanh %238 : vector<2x32xf32>
    %240 = vector.extract_strided_slice %237 {offsets = [0, 32], sizes = [2, 32], strides = [1, 1]} : vector<2x128xf32> to vector<2x32xf32>
    %241 = arith.mulf %240, %225 : vector<2x32xf32>
    %242 = vector.extract_strided_slice %237 {offsets = [0, 0], sizes = [2, 32], strides = [1, 1]} : vector<2x128xf32> to vector<2x32xf32>
    %243 = arith.mulf %242, %239 : vector<2x32xf32>
    %244 = arith.addf %241, %243 : vector<2x32xf32>
    %245 = vector.extract_strided_slice %237 {offsets = [0, 96], sizes = [2, 32], strides = [1, 1]} : vector<2x128xf32> to vector<2x32xf32>
    %246 = math.tanh %244 : vector<2x32xf32>
    %247 = arith.mulf %245, %246 : vector<2x32xf32>
    %248 = vector.extract_strided_slice %169 {offsets = [8, 0], sizes = [2, 128], strides = [1, 1]} : vector<16x128xf32> to vector<2x128xf32>
    %249 = arith.truncf %247 : vector<2x32xf32> to vector<2x32xbf16>
    %cst_41 = arith.constant dense<0.000000e+00> : vector<2x128xf32>
    %250 = tpu.matmul %249, %163, %cst_41 {dimension_numbers = #tpu.dot_dimension_numbers<[1], [0], [0], [1], [0, 0, 1, 1], [], []>} : vector<2x32xbf16>, vector<32x128xbf16>, vector<2x128xf32> -> vector<2x128xf32>
    %251 = arith.addf %248, %250 : vector<2x128xf32>
    %252 = arith.negf %251 : vector<2x128xf32>
    %253 = math.exp %252 : vector<2x128xf32>
    %cst_42 = arith.constant 1.000000e+00 : f32
    %254 = vector.broadcast %cst_42 : f32 to vector<2x128xf32>
    %255 = arith.addf %254, %253 : vector<2x128xf32>
    %256 = arith.divf %254, %255 : vector<2x128xf32>
    %257 = vector.extract_strided_slice %251 {offsets = [0, 64], sizes = [2, 32], strides = [1, 1]} : vector<2x128xf32> to vector<2x32xf32>
    %258 = math.tanh %257 : vector<2x32xf32>
    %259 = vector.extract_strided_slice %256 {offsets = [0, 32], sizes = [2, 32], strides = [1, 1]} : vector<2x128xf32> to vector<2x32xf32>
    %260 = arith.mulf %259, %244 : vector<2x32xf32>
    %261 = vector.extract_strided_slice %256 {offsets = [0, 0], sizes = [2, 32], strides = [1, 1]} : vector<2x128xf32> to vector<2x32xf32>
    %262 = arith.mulf %261, %258 : vector<2x32xf32>
    %263 = arith.addf %260, %262 : vector<2x32xf32>
    %264 = vector.extract_strided_slice %256 {offsets = [0, 96], sizes = [2, 32], strides = [1, 1]} : vector<2x128xf32> to vector<2x32xf32>
    %265 = math.tanh %263 : vector<2x32xf32>
    %266 = arith.mulf %264, %265 : vector<2x32xf32>
    %267 = vector.extract_strided_slice %169 {offsets = [10, 0], sizes = [2, 128], strides = [1, 1]} : vector<16x128xf32> to vector<2x128xf32>
    %268 = arith.truncf %266 : vector<2x32xf32> to vector<2x32xbf16>
    %cst_43 = arith.constant dense<0.000000e+00> : vector<2x128xf32>
    %269 = tpu.matmul %268, %163, %cst_43 {dimension_numbers = #tpu.dot_dimension_numbers<[1], [0], [0], [1], [0, 0, 1, 1], [], []>} : vector<2x32xbf16>, vector<32x128xbf16>, vector<2x128xf32> -> vector<2x128xf32>
    %270 = arith.addf %267, %269 : vector<2x128xf32>
    %271 = arith.negf %270 : vector<2x128xf32>
    %272 = math.exp %271 : vector<2x128xf32>
    %cst_44 = arith.constant 1.000000e+00 : f32
    %273 = vector.broadcast %cst_44 : f32 to vector<2x128xf32>
    %274 = arith.addf %273, %272 : vector<2x128xf32>
    %275 = arith.divf %273, %274 : vector<2x128xf32>
    %276 = vector.extract_strided_slice %270 {offsets = [0, 64], sizes = [2, 32], strides = [1, 1]} : vector<2x128xf32> to vector<2x32xf32>
    %277 = math.tanh %276 : vector<2x32xf32>
    %278 = vector.extract_strided_slice %275 {offsets = [0, 32], sizes = [2, 32], strides = [1, 1]} : vector<2x128xf32> to vector<2x32xf32>
    %279 = arith.mulf %278, %263 : vector<2x32xf32>
    %280 = vector.extract_strided_slice %275 {offsets = [0, 0], sizes = [2, 32], strides = [1, 1]} : vector<2x128xf32> to vector<2x32xf32>
    %281 = arith.mulf %280, %277 : vector<2x32xf32>
    %282 = arith.addf %279, %281 : vector<2x32xf32>
    %283 = vector.extract_strided_slice %275 {offsets = [0, 96], sizes = [2, 32], strides = [1, 1]} : vector<2x128xf32> to vector<2x32xf32>
    %284 = math.tanh %282 : vector<2x32xf32>
    %285 = arith.mulf %283, %284 : vector<2x32xf32>
    %286 = vector.extract_strided_slice %169 {offsets = [12, 0], sizes = [2, 128], strides = [1, 1]} : vector<16x128xf32> to vector<2x128xf32>
    %287 = arith.truncf %285 : vector<2x32xf32> to vector<2x32xbf16>
    %cst_45 = arith.constant dense<0.000000e+00> : vector<2x128xf32>
    %288 = tpu.matmul %287, %163, %cst_45 {dimension_numbers = #tpu.dot_dimension_numbers<[1], [0], [0], [1], [0, 0, 1, 1], [], []>} : vector<2x32xbf16>, vector<32x128xbf16>, vector<2x128xf32> -> vector<2x128xf32>
    %289 = arith.addf %286, %288 : vector<2x128xf32>
    %290 = arith.negf %289 : vector<2x128xf32>
    %291 = math.exp %290 : vector<2x128xf32>
    %cst_46 = arith.constant 1.000000e+00 : f32
    %292 = vector.broadcast %cst_46 : f32 to vector<2x128xf32>
    %293 = arith.addf %292, %291 : vector<2x128xf32>
    %294 = arith.divf %292, %293 : vector<2x128xf32>
    %295 = vector.extract_strided_slice %289 {offsets = [0, 64], sizes = [2, 32], strides = [1, 1]} : vector<2x128xf32> to vector<2x32xf32>
    %296 = math.tanh %295 : vector<2x32xf32>
    %297 = vector.extract_strided_slice %294 {offsets = [0, 32], sizes = [2, 32], strides = [1, 1]} : vector<2x128xf32> to vector<2x32xf32>
    %298 = arith.mulf %297, %282 : vector<2x32xf32>
    %299 = vector.extract_strided_slice %294 {offsets = [0, 0], sizes = [2, 32], strides = [1, 1]} : vector<2x128xf32> to vector<2x32xf32>
    %300 = arith.mulf %299, %296 : vector<2x32xf32>
    %301 = arith.addf %298, %300 : vector<2x32xf32>
    %302 = vector.extract_strided_slice %294 {offsets = [0, 96], sizes = [2, 32], strides = [1, 1]} : vector<2x128xf32> to vector<2x32xf32>
    %303 = math.tanh %301 : vector<2x32xf32>
    %304 = arith.mulf %302, %303 : vector<2x32xf32>
    %305 = vector.extract_strided_slice %169 {offsets = [14, 0], sizes = [2, 128], strides = [1, 1]} : vector<16x128xf32> to vector<2x128xf32>
    %306 = arith.truncf %304 : vector<2x32xf32> to vector<2x32xbf16>
    %cst_47 = arith.constant dense<0.000000e+00> : vector<2x128xf32>
    %307 = tpu.matmul %306, %163, %cst_47 {dimension_numbers = #tpu.dot_dimension_numbers<[1], [0], [0], [1], [0, 0, 1, 1], [], []>} : vector<2x32xbf16>, vector<32x128xbf16>, vector<2x128xf32> -> vector<2x128xf32>
    %308 = arith.addf %305, %307 : vector<2x128xf32>
    %309 = arith.negf %308 : vector<2x128xf32>
    %310 = math.exp %309 : vector<2x128xf32>
    %cst_48 = arith.constant 1.000000e+00 : f32
    %311 = vector.broadcast %cst_48 : f32 to vector<2x128xf32>
    %312 = arith.addf %311, %310 : vector<2x128xf32>
    %313 = arith.divf %311, %312 : vector<2x128xf32>
    %314 = vector.extract_strided_slice %308 {offsets = [0, 64], sizes = [2, 32], strides = [1, 1]} : vector<2x128xf32> to vector<2x32xf32>
    %315 = math.tanh %314 : vector<2x32xf32>
    %316 = vector.extract_strided_slice %313 {offsets = [0, 32], sizes = [2, 32], strides = [1, 1]} : vector<2x128xf32> to vector<2x32xf32>
    %317 = arith.mulf %316, %301 : vector<2x32xf32>
    %318 = vector.extract_strided_slice %313 {offsets = [0, 0], sizes = [2, 32], strides = [1, 1]} : vector<2x128xf32> to vector<2x32xf32>
    %319 = arith.mulf %318, %315 : vector<2x32xf32>
    %320 = arith.addf %317, %319 : vector<2x32xf32>
    %321 = vector.extract_strided_slice %313 {offsets = [0, 96], sizes = [2, 32], strides = [1, 1]} : vector<2x128xf32> to vector<2x32xf32>
    %322 = math.tanh %320 : vector<2x32xf32>
    %323 = arith.mulf %321, %322 : vector<2x32xf32>
    %324 = vector.shape_cast %190 : vector<2x32xf32> to vector<2x1x32xf32>
    %325 = vector.shape_cast %209 : vector<2x32xf32> to vector<2x1x32xf32>
    %326 = vector.shape_cast %228 : vector<2x32xf32> to vector<2x1x32xf32>
    %327 = vector.shape_cast %247 : vector<2x32xf32> to vector<2x1x32xf32>
    %328 = vector.shape_cast %266 : vector<2x32xf32> to vector<2x1x32xf32>
    %329 = vector.shape_cast %285 : vector<2x32xf32> to vector<2x1x32xf32>
    %330 = vector.shape_cast %304 : vector<2x32xf32> to vector<2x1x32xf32>
    %331 = vector.shape_cast %323 : vector<2x32xf32> to vector<2x1x32xf32>
    %332 = tpu.concatenate %324, %325, %326, %327, %328, %329, %330, %331 in 1 : vector<2x1x32xf32>, vector<2x1x32xf32>, vector<2x1x32xf32>, vector<2x1x32xf32>, vector<2x1x32xf32>, vector<2x1x32xf32>, vector<2x1x32xf32>, vector<2x1x32xf32> -> vector<2x8x32xf32>
    %333 = vector.shape_cast %332 : vector<2x8x32xf32> to vector<16x32xf32>
    %334 = arith.truncf %333 : vector<16x32xf32> to vector<16x32xbf16>
    %c0_49 = arith.constant 0 : index
    %c0_50 = arith.constant 0 : index
    %335 = vector.load %arg6[%c0_49, %c0_50] : memref<32x96xbf16, #tpu.memory_space<vmem>>, vector<32x96xbf16>
    %cst_51 = arith.constant dense<0.000000e+00> : vector<16x96xf32>
    %336 = tpu.matmul %334, %335, %cst_51 {dimension_numbers = #tpu.dot_dimension_numbers<[1], [0], [0], [1], [0, 0, 1, 1], [], []>} : vector<16x32xbf16>, vector<32x96xbf16>, vector<16x96xf32> -> vector<16x96xf32>
    %c0_52 = arith.constant 0 : index
    %c256 = arith.constant 256 : index
    %337 = vector.load %arg15[%c0_52, %c256] : memref<1x6272xf32, #tpu.memory_space<vmem>>, vector<1x96xf32>
    %338 = vector.broadcast %337 : vector<1x96xf32> to vector<16x96xf32>
    %339 = arith.addf %336, %338 : vector<16x96xf32>
    %340 = vector.extract_strided_slice %339 {offsets = [0, 0], sizes = [16, 32], strides = [1, 1]} : vector<16x96xf32> to vector<16x32xf32>
    %341 = vector.shape_cast %340 : vector<16x32xf32> to vector<2x8x32xf32>
    %342 = vector.extract_strided_slice %339 {offsets = [0, 32], sizes = [16, 32], strides = [1, 1]} : vector<16x96xf32> to vector<16x32xf32>
    %343 = vector.shape_cast %342 : vector<16x32xf32> to vector<2x8x32xf32>
    %344 = vector.extract_strided_slice %339 {offsets = [0, 64], sizes = [16, 32], strides = [1, 1]} : vector<16x96xf32> to vector<16x32xf32>
    %345 = vector.shape_cast %344 : vector<16x32xf32> to vector<2x8x32xf32>
    %346 = vector.extract_strided_slice %341 {offsets = [0, 0, 0], sizes = [2, 8, 8], strides = [1, 1, 1]} : vector<2x8x32xf32> to vector<2x8x8xf32>
    %347 = vector.extract_strided_slice %343 {offsets = [0, 0, 0], sizes = [2, 8, 8], strides = [1, 1, 1]} : vector<2x8x32xf32> to vector<2x8x8xf32>
    "tpu.trace_start"() <{level = 10 : i32, message = "bqd,bkd->bqk"}> : () -> ()
    %cst_53 = arith.constant dense<0.000000e+00> : vector<2x8x8xf32>
    %348 = tpu.matmul %346, %347, %cst_53 {dimension_numbers = #tpu.dot_dimension_numbers<[2], [2], [1], [1], [0, 0, 0, 1, 1, 1], [0], [0]>} : vector<2x8x8xf32>, vector<2x8x8xf32>, vector<2x8x8xf32> -> vector<2x8x8xf32>
    "tpu.trace_stop"() : () -> ()
    %cst_54 = arith.constant dense<0xFF800000> : vector<2x8xf32>
    %349 = vector.multi_reduction <maximumf>, %348, %cst_54 [2] : vector<2x8x8xf32> to vector<2x8xf32>
    %350 = vector.shape_cast %349 : vector<2x8xf32> to vector<2x8x1xf32>
    %351 = vector.broadcast %350 : vector<2x8x1xf32> to vector<2x8x8xf32>
    %352 = arith.subf %348, %351 : vector<2x8x8xf32>
    %353 = math.exp %352 : vector<2x8x8xf32>
    %cst_55 = arith.constant dense<0.000000e+00> : vector<2x8xf32>
    %354 = vector.multi_reduction <add>, %353, %cst_55 [2] : vector<2x8x8xf32> to vector<2x8xf32>
    %355 = vector.shape_cast %354 : vector<2x8xf32> to vector<2x8x1xf32>
    %356 = tpu.reciprocal %355 {approx = true} : vector<2x8x1xf32> -> vector<2x8x1xf32>
    %357 = vector.broadcast %356 : vector<2x8x1xf32> to vector<2x8x8xf32>
    %358 = arith.mulf %353, %357 : vector<2x8x8xf32>
    %359 = vector.extract_strided_slice %345 {offsets = [0, 0, 0], sizes = [2, 8, 8], strides = [1, 1, 1]} : vector<2x8x32xf32> to vector<2x8x8xf32>
    "tpu.trace_start"() <{level = 10 : i32, message = "bqk,bkd->bqd"}> : () -> ()
    %cst_56 = arith.constant dense<0.000000e+00> : vector<2x8x8xf32>
    %360 = tpu.matmul %358, %359, %cst_56 {dimension_numbers = #tpu.dot_dimension_numbers<[2], [1], [1], [2], [0, 0, 0, 1, 1, 2], [0], [0]>} : vector<2x8x8xf32>, vector<2x8x8xf32>, vector<2x8x8xf32> -> vector<2x8x8xf32>
    "tpu.trace_stop"() : () -> ()
    %361 = vector.extract_strided_slice %341 {offsets = [0, 0, 8], sizes = [2, 8, 8], strides = [1, 1, 1]} : vector<2x8x32xf32> to vector<2x8x8xf32>
    %362 = vector.extract_strided_slice %343 {offsets = [0, 0, 8], sizes = [2, 8, 8], strides = [1, 1, 1]} : vector<2x8x32xf32> to vector<2x8x8xf32>
    "tpu.trace_start"() <{level = 10 : i32, message = "bqd,bkd->bqk"}> : () -> ()
    %cst_57 = arith.constant dense<0.000000e+00> : vector<2x8x8xf32>
    %363 = tpu.matmul %361, %362, %cst_57 {dimension_numbers = #tpu.dot_dimension_numbers<[2], [2], [1], [1], [0, 0, 0, 1, 1, 1], [0], [0]>} : vector<2x8x8xf32>, vector<2x8x8xf32>, vector<2x8x8xf32> -> vector<2x8x8xf32>
    "tpu.trace_stop"() : () -> ()
    %cst_58 = arith.constant dense<0xFF800000> : vector<2x8xf32>
    %364 = vector.multi_reduction <maximumf>, %363, %cst_58 [2] : vector<2x8x8xf32> to vector<2x8xf32>
    %365 = vector.shape_cast %364 : vector<2x8xf32> to vector<2x8x1xf32>
    %366 = vector.broadcast %365 : vector<2x8x1xf32> to vector<2x8x8xf32>
    %367 = arith.subf %363, %366 : vector<2x8x8xf32>
    %368 = math.exp %367 : vector<2x8x8xf32>
    %cst_59 = arith.constant dense<0.000000e+00> : vector<2x8xf32>
    %369 = vector.multi_reduction <add>, %368, %cst_59 [2] : vector<2x8x8xf32> to vector<2x8xf32>
    %370 = vector.shape_cast %369 : vector<2x8xf32> to vector<2x8x1xf32>
    %371 = tpu.reciprocal %370 {approx = true} : vector<2x8x1xf32> -> vector<2x8x1xf32>
    %372 = vector.broadcast %371 : vector<2x8x1xf32> to vector<2x8x8xf32>
    %373 = arith.mulf %368, %372 : vector<2x8x8xf32>
    %374 = vector.extract_strided_slice %345 {offsets = [0, 0, 8], sizes = [2, 8, 8], strides = [1, 1, 1]} : vector<2x8x32xf32> to vector<2x8x8xf32>
    "tpu.trace_start"() <{level = 10 : i32, message = "bqk,bkd->bqd"}> : () -> ()
    %cst_60 = arith.constant dense<0.000000e+00> : vector<2x8x8xf32>
    %375 = tpu.matmul %373, %374, %cst_60 {dimension_numbers = #tpu.dot_dimension_numbers<[2], [1], [1], [2], [0, 0, 0, 1, 1, 2], [0], [0]>} : vector<2x8x8xf32>, vector<2x8x8xf32>, vector<2x8x8xf32> -> vector<2x8x8xf32>
    "tpu.trace_stop"() : () -> ()
    %376 = vector.extract_strided_slice %341 {offsets = [0, 0, 16], sizes = [2, 8, 8], strides = [1, 1, 1]} : vector<2x8x32xf32> to vector<2x8x8xf32>
    %377 = vector.extract_strided_slice %343 {offsets = [0, 0, 16], sizes = [2, 8, 8], strides = [1, 1, 1]} : vector<2x8x32xf32> to vector<2x8x8xf32>
    "tpu.trace_start"() <{level = 10 : i32, message = "bqd,bkd->bqk"}> : () -> ()
    %cst_61 = arith.constant dense<0.000000e+00> : vector<2x8x8xf32>
    %378 = tpu.matmul %376, %377, %cst_61 {dimension_numbers = #tpu.dot_dimension_numbers<[2], [2], [1], [1], [0, 0, 0, 1, 1, 1], [0], [0]>} : vector<2x8x8xf32>, vector<2x8x8xf32>, vector<2x8x8xf32> -> vector<2x8x8xf32>
    "tpu.trace_stop"() : () -> ()
    %cst_62 = arith.constant dense<0xFF800000> : vector<2x8xf32>
    %379 = vector.multi_reduction <maximumf>, %378, %cst_62 [2] : vector<2x8x8xf32> to vector<2x8xf32>
    %380 = vector.shape_cast %379 : vector<2x8xf32> to vector<2x8x1xf32>
    %381 = vector.broadcast %380 : vector<2x8x1xf32> to vector<2x8x8xf32>
    %382 = arith.subf %378, %381 : vector<2x8x8xf32>
    %383 = math.exp %382 : vector<2x8x8xf32>
    %cst_63 = arith.constant dense<0.000000e+00> : vector<2x8xf32>
    %384 = vector.multi_reduction <add>, %383, %cst_63 [2] : vector<2x8x8xf32> to vector<2x8xf32>
    %385 = vector.shape_cast %384 : vector<2x8xf32> to vector<2x8x1xf32>
    %386 = tpu.reciprocal %385 {approx = true} : vector<2x8x1xf32> -> vector<2x8x1xf32>
    %387 = vector.broadcast %386 : vector<2x8x1xf32> to vector<2x8x8xf32>
    %388 = arith.mulf %383, %387 : vector<2x8x8xf32>
    %389 = vector.extract_strided_slice %345 {offsets = [0, 0, 16], sizes = [2, 8, 8], strides = [1, 1, 1]} : vector<2x8x32xf32> to vector<2x8x8xf32>
    "tpu.trace_start"() <{level = 10 : i32, message = "bqk,bkd->bqd"}> : () -> ()
    %cst_64 = arith.constant dense<0.000000e+00> : vector<2x8x8xf32>
    %390 = tpu.matmul %388, %389, %cst_64 {dimension_numbers = #tpu.dot_dimension_numbers<[2], [1], [1], [2], [0, 0, 0, 1, 1, 2], [0], [0]>} : vector<2x8x8xf32>, vector<2x8x8xf32>, vector<2x8x8xf32> -> vector<2x8x8xf32>
    "tpu.trace_stop"() : () -> ()
    %391 = vector.extract_strided_slice %341 {offsets = [0, 0, 24], sizes = [2, 8, 8], strides = [1, 1, 1]} : vector<2x8x32xf32> to vector<2x8x8xf32>
    %392 = vector.extract_strided_slice %343 {offsets = [0, 0, 24], sizes = [2, 8, 8], strides = [1, 1, 1]} : vector<2x8x32xf32> to vector<2x8x8xf32>
    "tpu.trace_start"() <{level = 10 : i32, message = "bqd,bkd->bqk"}> : () -> ()
    %cst_65 = arith.constant dense<0.000000e+00> : vector<2x8x8xf32>
    %393 = tpu.matmul %391, %392, %cst_65 {dimension_numbers = #tpu.dot_dimension_numbers<[2], [2], [1], [1], [0, 0, 0, 1, 1, 1], [0], [0]>} : vector<2x8x8xf32>, vector<2x8x8xf32>, vector<2x8x8xf32> -> vector<2x8x8xf32>
    "tpu.trace_stop"() : () -> ()
    %cst_66 = arith.constant dense<0xFF800000> : vector<2x8xf32>
    %394 = vector.multi_reduction <maximumf>, %393, %cst_66 [2] : vector<2x8x8xf32> to vector<2x8xf32>
    %395 = vector.shape_cast %394 : vector<2x8xf32> to vector<2x8x1xf32>
    %396 = vector.broadcast %395 : vector<2x8x1xf32> to vector<2x8x8xf32>
    %397 = arith.subf %393, %396 : vector<2x8x8xf32>
    %398 = math.exp %397 : vector<2x8x8xf32>
    %cst_67 = arith.constant dense<0.000000e+00> : vector<2x8xf32>
    %399 = vector.multi_reduction <add>, %398, %cst_67 [2] : vector<2x8x8xf32> to vector<2x8xf32>
    %400 = vector.shape_cast %399 : vector<2x8xf32> to vector<2x8x1xf32>
    %401 = tpu.reciprocal %400 {approx = true} : vector<2x8x1xf32> -> vector<2x8x1xf32>
    %402 = vector.broadcast %401 : vector<2x8x1xf32> to vector<2x8x8xf32>
    %403 = arith.mulf %398, %402 : vector<2x8x8xf32>
    %404 = vector.extract_strided_slice %345 {offsets = [0, 0, 24], sizes = [2, 8, 8], strides = [1, 1, 1]} : vector<2x8x32xf32> to vector<2x8x8xf32>
    "tpu.trace_start"() <{level = 10 : i32, message = "bqk,bkd->bqd"}> : () -> ()
    %cst_68 = arith.constant dense<0.000000e+00> : vector<2x8x8xf32>
    %405 = tpu.matmul %403, %404, %cst_68 {dimension_numbers = #tpu.dot_dimension_numbers<[2], [1], [1], [2], [0, 0, 0, 1, 1, 2], [0], [0]>} : vector<2x8x8xf32>, vector<2x8x8xf32>, vector<2x8x8xf32> -> vector<2x8x8xf32>
    "tpu.trace_stop"() : () -> ()
    %406 = tpu.concatenate %360, %375, %390, %405 in 2 : vector<2x8x8xf32>, vector<2x8x8xf32>, vector<2x8x8xf32>, vector<2x8x8xf32> -> vector<2x8x32xf32>
    %407 = vector.shape_cast %406 : vector<2x8x32xf32> to vector<16x32xf32>
    %408 = arith.truncf %407 : vector<16x32xf32> to vector<16x32xbf16>
    %c0_69 = arith.constant 0 : index
    %c0_70 = arith.constant 0 : index
    %409 = vector.load %arg7[%c0_69, %c0_70] : memref<32x32xbf16, #tpu.memory_space<vmem>>, vector<32x32xbf16>
    %cst_71 = arith.constant dense<0.000000e+00> : vector<16x32xf32>
    %410 = tpu.matmul %408, %409, %cst_71 {dimension_numbers = #tpu.dot_dimension_numbers<[1], [0], [0], [1], [0, 0, 1, 1], [], []>} : vector<16x32xbf16>, vector<32x32xbf16>, vector<16x32xf32> -> vector<16x32xf32>
    %c0_72 = arith.constant 0 : index
    %c384 = arith.constant 384 : index
    %411 = vector.load %arg15[%c0_72, %c384] : memref<1x6272xf32, #tpu.memory_space<vmem>>, vector<1x32xf32>
    %412 = vector.broadcast %411 : vector<1x32xf32> to vector<16x32xf32>
    %413 = arith.addf %410, %412 : vector<16x32xf32>
    %414 = arith.addf %333, %413 : vector<16x32xf32>
    %c0_73 = arith.constant 0 : index
    %c512 = arith.constant 512 : index
    %415 = vector.load %arg15[%c0_73, %c512] : memref<1x6272xf32, #tpu.memory_space<vmem>>, vector<1x32xf32>
    %c0_74 = arith.constant 0 : index
    %c640 = arith.constant 640 : index
    %416 = vector.load %arg15[%c0_74, %c640] : memref<1x6272xf32, #tpu.memory_space<vmem>>, vector<1x32xf32>
    %cst_75 = arith.constant dense<0.000000e+00> : vector<16xf32>
    %417 = vector.multi_reduction <add>, %414, %cst_75 [1] : vector<16x32xf32> to vector<16xf32>
    %418 = vector.shape_cast %417 : vector<16xf32> to vector<16x1xf32>
    %cst_76 = arith.constant 3.200000e+01 : f32
    %419 = vector.broadcast %cst_76 : f32 to vector<16x1xf32>
    %420 = arith.divf %418, %419 : vector<16x1xf32>
    %421 = vector.broadcast %420 : vector<16x1xf32> to vector<16x32xf32>
    %422 = arith.subf %414, %421 : vector<16x32xf32>
    %423 = arith.mulf %422, %422 : vector<16x32xf32>
    %cst_77 = arith.constant dense<0.000000e+00> : vector<16xf32>
    %424 = vector.multi_reduction <add>, %423, %cst_77 [1] : vector<16x32xf32> to vector<16xf32>
    %425 = vector.shape_cast %424 : vector<16xf32> to vector<16x1xf32>
    %cst_78 = arith.constant 3.200000e+01 : f32
    %426 = vector.broadcast %cst_78 : f32 to vector<16x1xf32>
    %427 = arith.divf %425, %426 : vector<16x1xf32>
    %428 = vector.broadcast %420 : vector<16x1xf32> to vector<16x32xf32>
    %429 = arith.subf %414, %428 : vector<16x32xf32>
    %cst_79 = arith.constant 9.99999974E-6 : f32
    %430 = vector.broadcast %cst_79 : f32 to vector<16x1xf32>
    %431 = arith.addf %427, %430 : vector<16x1xf32>
    %432 = math.rsqrt %431 : vector<16x1xf32>
    %433 = vector.broadcast %432 : vector<16x1xf32> to vector<16x32xf32>
    %434 = arith.mulf %429, %433 : vector<16x32xf32>
    %435 = vector.broadcast %415 : vector<1x32xf32> to vector<16x32xf32>
    %436 = arith.mulf %434, %435 : vector<16x32xf32>
    %437 = vector.broadcast %416 : vector<1x32xf32> to vector<16x32xf32>
    %438 = arith.addf %436, %437 : vector<16x32xf32>
    %439 = arith.truncf %438 : vector<16x32xf32> to vector<16x32xbf16>
    %cst_80 = arith.constant 0.000000e+00 : f32
    %440 = vector.broadcast %cst_80 : f32 to vector<16x32xf32>
    %c0_81 = arith.constant 0 : index
    %c0_82 = arith.constant 0 : index
    %441 = vector.load %arg8[%c0_81, %c0_82] : memref<32x2048xbf16, #tpu.memory_space<vmem>>, vector<32x512xbf16>
    %cst_83 = arith.constant dense<0.000000e+00> : vector<16x512xf32>
    %442 = tpu.matmul %439, %441, %cst_83 {dimension_numbers = #tpu.dot_dimension_numbers<[1], [0], [0], [1], [0, 0, 1, 1], [], []>} : vector<16x32xbf16>, vector<32x512xbf16>, vector<16x512xf32> -> vector<16x512xf32>
    %c0_84 = arith.constant 0 : index
    %c768 = arith.constant 768 : index
    %443 = vector.load %arg15[%c0_84, %c768] : memref<1x6272xf32, #tpu.memory_space<vmem>>, vector<1x512xf32>
    %444 = vector.broadcast %443 : vector<1x512xf32> to vector<16x512xf32>
    %445 = arith.addf %442, %444 : vector<16x512xf32>
    %cst_85 = arith.constant 0.000000e+00 : f32
    %446 = vector.broadcast %cst_85 : f32 to vector<16x512xf32>
    %447 = arith.maximumf %445, %446 : vector<16x512xf32>
    %448 = arith.truncf %447 : vector<16x512xf32> to vector<16x512xbf16>
    %c0_86 = arith.constant 0 : index
    %c0_87 = arith.constant 0 : index
    %449 = vector.load %arg9[%c0_86, %c0_87] : memref<2048x32xbf16, #tpu.memory_space<vmem>>, vector<512x32xbf16>
    %cst_88 = arith.constant dense<0.000000e+00> : vector<16x32xf32>
    %450 = tpu.matmul %448, %449, %cst_88 {dimension_numbers = #tpu.dot_dimension_numbers<[1], [0], [0], [1], [0, 0, 1, 1], [], []>} : vector<16x512xbf16>, vector<512x32xbf16>, vector<16x32xf32> -> vector<16x32xf32>
    %451 = arith.addf %440, %450 : vector<16x32xf32>
    %c0_89 = arith.constant 0 : index
    %c512_90 = arith.constant 512 : index
    %452 = vector.load %arg8[%c0_89, %c512_90] : memref<32x2048xbf16, #tpu.memory_space<vmem>>, vector<32x512xbf16>
    %cst_91 = arith.constant dense<0.000000e+00> : vector<16x512xf32>
    %453 = tpu.matmul %439, %452, %cst_91 {dimension_numbers = #tpu.dot_dimension_numbers<[1], [0], [0], [1], [0, 0, 1, 1], [], []>} : vector<16x32xbf16>, vector<32x512xbf16>, vector<16x512xf32> -> vector<16x512xf32>
    %c0_92 = arith.constant 0 : index
    %c1280 = arith.constant 1280 : index
    %454 = vector.load %arg15[%c0_92, %c1280] : memref<1x6272xf32, #tpu.memory_space<vmem>>, vector<1x512xf32>
    %455 = vector.broadcast %454 : vector<1x512xf32> to vector<16x512xf32>
    %456 = arith.addf %453, %455 : vector<16x512xf32>
    %cst_93 = arith.constant 0.000000e+00 : f32
    %457 = vector.broadcast %cst_93 : f32 to vector<16x512xf32>
    %458 = arith.maximumf %456, %457 : vector<16x512xf32>
    %459 = arith.truncf %458 : vector<16x512xf32> to vector<16x512xbf16>
    %c512_94 = arith.constant 512 : index
    %c0_95 = arith.constant 0 : index
    %460 = vector.load %arg9[%c512_94, %c0_95] : memref<2048x32xbf16, #tpu.memory_space<vmem>>, vector<512x32xbf16>
    %cst_96 = arith.constant dense<0.000000e+00> : vector<16x32xf32>
    %461 = tpu.matmul %459, %460, %cst_96 {dimension_numbers = #tpu.dot_dimension_numbers<[1], [0], [0], [1], [0, 0, 1, 1], [], []>} : vector<16x512xbf16>, vector<512x32xbf16>, vector<16x32xf32> -> vector<16x32xf32>
    %462 = arith.addf %451, %461 : vector<16x32xf32>
    %c0_97 = arith.constant 0 : index
    %c1024 = arith.constant 1024 : index
    %463 = vector.load %arg8[%c0_97, %c1024] : memref<32x2048xbf16, #tpu.memory_space<vmem>>, vector<32x512xbf16>
    %cst_98 = arith.constant dense<0.000000e+00> : vector<16x512xf32>
    %464 = tpu.matmul %439, %463, %cst_98 {dimension_numbers = #tpu.dot_dimension_numbers<[1], [0], [0], [1], [0, 0, 1, 1], [], []>} : vector<16x32xbf16>, vector<32x512xbf16>, vector<16x512xf32> -> vector<16x512xf32>
    %c0_99 = arith.constant 0 : index
    %c1792 = arith.constant 1792 : index
    %465 = vector.load %arg15[%c0_99, %c1792] : memref<1x6272xf32, #tpu.memory_space<vmem>>, vector<1x512xf32>
    %466 = vector.broadcast %465 : vector<1x512xf32> to vector<16x512xf32>
    %467 = arith.addf %464, %466 : vector<16x512xf32>
    %cst_100 = arith.constant 0.000000e+00 : f32
    %468 = vector.broadcast %cst_100 : f32 to vector<16x512xf32>
    %469 = arith.maximumf %467, %468 : vector<16x512xf32>
    %470 = arith.truncf %469 : vector<16x512xf32> to vector<16x512xbf16>
    %c1024_101 = arith.constant 1024 : index
    %c0_102 = arith.constant 0 : index
    %471 = vector.load %arg9[%c1024_101, %c0_102] : memref<2048x32xbf16, #tpu.memory_space<vmem>>, vector<512x32xbf16>
    %cst_103 = arith.constant dense<0.000000e+00> : vector<16x32xf32>
    %472 = tpu.matmul %470, %471, %cst_103 {dimension_numbers = #tpu.dot_dimension_numbers<[1], [0], [0], [1], [0, 0, 1, 1], [], []>} : vector<16x512xbf16>, vector<512x32xbf16>, vector<16x32xf32> -> vector<16x32xf32>
    %473 = arith.addf %462, %472 : vector<16x32xf32>
    %c0_104 = arith.constant 0 : index
    %c1536 = arith.constant 1536 : index
    %474 = vector.load %arg8[%c0_104, %c1536] : memref<32x2048xbf16, #tpu.memory_space<vmem>>, vector<32x512xbf16>
    %cst_105 = arith.constant dense<0.000000e+00> : vector<16x512xf32>
    %475 = tpu.matmul %439, %474, %cst_105 {dimension_numbers = #tpu.dot_dimension_numbers<[1], [0], [0], [1], [0, 0, 1, 1], [], []>} : vector<16x32xbf16>, vector<32x512xbf16>, vector<16x512xf32> -> vector<16x512xf32>
    %c0_106 = arith.constant 0 : index
    %c2304 = arith.constant 2304 : index
    %476 = vector.load %arg15[%c0_106, %c2304] : memref<1x6272xf32, #tpu.memory_space<vmem>>, vector<1x512xf32>
    %477 = vector.broadcast %476 : vector<1x512xf32> to vector<16x512xf32>
    %478 = arith.addf %475, %477 : vector<16x512xf32>
    %cst_107 = arith.constant 0.000000e+00 : f32
    %479 = vector.broadcast %cst_107 : f32 to vector<16x512xf32>
    %480 = arith.maximumf %478, %479 : vector<16x512xf32>
    %481 = arith.truncf %480 : vector<16x512xf32> to vector<16x512xbf16>
    %c1536_108 = arith.constant 1536 : index
    %c0_109 = arith.constant 0 : index
    %482 = vector.load %arg9[%c1536_108, %c0_109] : memref<2048x32xbf16, #tpu.memory_space<vmem>>, vector<512x32xbf16>
    %cst_110 = arith.constant dense<0.000000e+00> : vector<16x32xf32>
    %483 = tpu.matmul %481, %482, %cst_110 {dimension_numbers = #tpu.dot_dimension_numbers<[1], [0], [0], [1], [0, 0, 1, 1], [], []>} : vector<16x512xbf16>, vector<512x32xbf16>, vector<16x32xf32> -> vector<16x32xf32>
    %484 = arith.addf %473, %483 : vector<16x32xf32>
    %c0_111 = arith.constant 0 : index
    %c2816 = arith.constant 2816 : index
    %485 = vector.load %arg15[%c0_111, %c2816] : memref<1x6272xf32, #tpu.memory_space<vmem>>, vector<1x32xf32>
    %486 = vector.broadcast %485 : vector<1x32xf32> to vector<16x32xf32>
    %487 = arith.addf %484, %486 : vector<16x32xf32>
    %488 = arith.addf %438, %487 : vector<16x32xf32>
    %c0_112 = arith.constant 0 : index
    %c2944 = arith.constant 2944 : index
    %489 = vector.load %arg15[%c0_112, %c2944] : memref<1x6272xf32, #tpu.memory_space<vmem>>, vector<1x32xf32>
    %c0_113 = arith.constant 0 : index
    %c3072 = arith.constant 3072 : index
    %490 = vector.load %arg15[%c0_113, %c3072] : memref<1x6272xf32, #tpu.memory_space<vmem>>, vector<1x32xf32>
    %cst_114 = arith.constant dense<0.000000e+00> : vector<16xf32>
    %491 = vector.multi_reduction <add>, %488, %cst_114 [1] : vector<16x32xf32> to vector<16xf32>
    %492 = vector.shape_cast %491 : vector<16xf32> to vector<16x1xf32>
    %cst_115 = arith.constant 3.200000e+01 : f32
    %493 = vector.broadcast %cst_115 : f32 to vector<16x1xf32>
    %494 = arith.divf %492, %493 : vector<16x1xf32>
    %495 = vector.broadcast %494 : vector<16x1xf32> to vector<16x32xf32>
    %496 = arith.subf %488, %495 : vector<16x32xf32>
    %497 = arith.mulf %496, %496 : vector<16x32xf32>
    %cst_116 = arith.constant dense<0.000000e+00> : vector<16xf32>
    %498 = vector.multi_reduction <add>, %497, %cst_116 [1] : vector<16x32xf32> to vector<16xf32>
    %499 = vector.shape_cast %498 : vector<16xf32> to vector<16x1xf32>
    %cst_117 = arith.constant 3.200000e+01 : f32
    %500 = vector.broadcast %cst_117 : f32 to vector<16x1xf32>
    %501 = arith.divf %499, %500 : vector<16x1xf32>
    %502 = vector.broadcast %494 : vector<16x1xf32> to vector<16x32xf32>
    %503 = arith.subf %488, %502 : vector<16x32xf32>
    %cst_118 = arith.constant 9.99999974E-6 : f32
    %504 = vector.broadcast %cst_118 : f32 to vector<16x1xf32>
    %505 = arith.addf %501, %504 : vector<16x1xf32>
    %506 = math.rsqrt %505 : vector<16x1xf32>
    %507 = vector.broadcast %506 : vector<16x1xf32> to vector<16x32xf32>
    %508 = arith.mulf %503, %507 : vector<16x32xf32>
    %509 = vector.broadcast %489 : vector<1x32xf32> to vector<16x32xf32>
    %510 = arith.mulf %508, %509 : vector<16x32xf32>
    %511 = vector.broadcast %490 : vector<1x32xf32> to vector<16x32xf32>
    %512 = arith.addf %510, %511 : vector<16x32xf32>
    %513 = arith.truncf %512 : vector<16x32xf32> to vector<16x32xbf16>
    %c0_119 = arith.constant 0 : index
    %c0_120 = arith.constant 0 : index
    %514 = vector.load %arg10[%c0_119, %c0_120] : memref<32x96xbf16, #tpu.memory_space<vmem>>, vector<32x96xbf16>
    %cst_121 = arith.constant dense<0.000000e+00> : vector<16x96xf32>
    %515 = tpu.matmul %513, %514, %cst_121 {dimension_numbers = #tpu.dot_dimension_numbers<[1], [0], [0], [1], [0, 0, 1, 1], [], []>} : vector<16x32xbf16>, vector<32x96xbf16>, vector<16x96xf32> -> vector<16x96xf32>
    %c0_122 = arith.constant 0 : index
    %c3200 = arith.constant 3200 : index
    %516 = vector.load %arg15[%c0_122, %c3200] : memref<1x6272xf32, #tpu.memory_space<vmem>>, vector<1x96xf32>
    %517 = vector.broadcast %516 : vector<1x96xf32> to vector<16x96xf32>
    %518 = arith.addf %515, %517 : vector<16x96xf32>
    %519 = vector.extract_strided_slice %518 {offsets = [0, 0], sizes = [16, 32], strides = [1, 1]} : vector<16x96xf32> to vector<16x32xf32>
    %520 = vector.shape_cast %519 : vector<16x32xf32> to vector<2x8x32xf32>
    %521 = vector.extract_strided_slice %518 {offsets = [0, 32], sizes = [16, 32], strides = [1, 1]} : vector<16x96xf32> to vector<16x32xf32>
    %522 = vector.shape_cast %521 : vector<16x32xf32> to vector<2x8x32xf32>
    %523 = vector.extract_strided_slice %518 {offsets = [0, 64], sizes = [16, 32], strides = [1, 1]} : vector<16x96xf32> to vector<16x32xf32>
    %524 = vector.shape_cast %523 : vector<16x32xf32> to vector<2x8x32xf32>
    %525 = vector.extract_strided_slice %520 {offsets = [0, 0, 0], sizes = [2, 8, 8], strides = [1, 1, 1]} : vector<2x8x32xf32> to vector<2x8x8xf32>
    %526 = vector.extract_strided_slice %522 {offsets = [0, 0, 0], sizes = [2, 8, 8], strides = [1, 1, 1]} : vector<2x8x32xf32> to vector<2x8x8xf32>
    "tpu.trace_start"() <{level = 10 : i32, message = "bqd,bkd->bqk"}> : () -> ()
    %cst_123 = arith.constant dense<0.000000e+00> : vector<2x8x8xf32>
    %527 = tpu.matmul %525, %526, %cst_123 {dimension_numbers = #tpu.dot_dimension_numbers<[2], [2], [1], [1], [0, 0, 0, 1, 1, 1], [0], [0]>} : vector<2x8x8xf32>, vector<2x8x8xf32>, vector<2x8x8xf32> -> vector<2x8x8xf32>
    "tpu.trace_stop"() : () -> ()
    %cst_124 = arith.constant dense<0xFF800000> : vector<2x8xf32>
    %528 = vector.multi_reduction <maximumf>, %527, %cst_124 [2] : vector<2x8x8xf32> to vector<2x8xf32>
    %529 = vector.shape_cast %528 : vector<2x8xf32> to vector<2x8x1xf32>
    %530 = vector.broadcast %529 : vector<2x8x1xf32> to vector<2x8x8xf32>
    %531 = arith.subf %527, %530 : vector<2x8x8xf32>
    %532 = math.exp %531 : vector<2x8x8xf32>
    %cst_125 = arith.constant dense<0.000000e+00> : vector<2x8xf32>
    %533 = vector.multi_reduction <add>, %532, %cst_125 [2] : vector<2x8x8xf32> to vector<2x8xf32>
    %534 = vector.shape_cast %533 : vector<2x8xf32> to vector<2x8x1xf32>
    %535 = tpu.reciprocal %534 {approx = true} : vector<2x8x1xf32> -> vector<2x8x1xf32>
    %536 = vector.broadcast %535 : vector<2x8x1xf32> to vector<2x8x8xf32>
    %537 = arith.mulf %532, %536 : vector<2x8x8xf32>
    %538 = vector.extract_strided_slice %524 {offsets = [0, 0, 0], sizes = [2, 8, 8], strides = [1, 1, 1]} : vector<2x8x32xf32> to vector<2x8x8xf32>
    "tpu.trace_start"() <{level = 10 : i32, message = "bqk,bkd->bqd"}> : () -> ()
    %cst_126 = arith.constant dense<0.000000e+00> : vector<2x8x8xf32>
    %539 = tpu.matmul %537, %538, %cst_126 {dimension_numbers = #tpu.dot_dimension_numbers<[2], [1], [1], [2], [0, 0, 0, 1, 1, 2], [0], [0]>} : vector<2x8x8xf32>, vector<2x8x8xf32>, vector<2x8x8xf32> -> vector<2x8x8xf32>
    "tpu.trace_stop"() : () -> ()
    %540 = vector.extract_strided_slice %520 {offsets = [0, 0, 8], sizes = [2, 8, 8], strides = [1, 1, 1]} : vector<2x8x32xf32> to vector<2x8x8xf32>
    %541 = vector.extract_strided_slice %522 {offsets = [0, 0, 8], sizes = [2, 8, 8], strides = [1, 1, 1]} : vector<2x8x32xf32> to vector<2x8x8xf32>
    "tpu.trace_start"() <{level = 10 : i32, message = "bqd,bkd->bqk"}> : () -> ()
    %cst_127 = arith.constant dense<0.000000e+00> : vector<2x8x8xf32>
    %542 = tpu.matmul %540, %541, %cst_127 {dimension_numbers = #tpu.dot_dimension_numbers<[2], [2], [1], [1], [0, 0, 0, 1, 1, 1], [0], [0]>} : vector<2x8x8xf32>, vector<2x8x8xf32>, vector<2x8x8xf32> -> vector<2x8x8xf32>
    "tpu.trace_stop"() : () -> ()
    %cst_128 = arith.constant dense<0xFF800000> : vector<2x8xf32>
    %543 = vector.multi_reduction <maximumf>, %542, %cst_128 [2] : vector<2x8x8xf32> to vector<2x8xf32>
    %544 = vector.shape_cast %543 : vector<2x8xf32> to vector<2x8x1xf32>
    %545 = vector.broadcast %544 : vector<2x8x1xf32> to vector<2x8x8xf32>
    %546 = arith.subf %542, %545 : vector<2x8x8xf32>
    %547 = math.exp %546 : vector<2x8x8xf32>
    %cst_129 = arith.constant dense<0.000000e+00> : vector<2x8xf32>
    %548 = vector.multi_reduction <add>, %547, %cst_129 [2] : vector<2x8x8xf32> to vector<2x8xf32>
    %549 = vector.shape_cast %548 : vector<2x8xf32> to vector<2x8x1xf32>
    %550 = tpu.reciprocal %549 {approx = true} : vector<2x8x1xf32> -> vector<2x8x1xf32>
    %551 = vector.broadcast %550 : vector<2x8x1xf32> to vector<2x8x8xf32>
    %552 = arith.mulf %547, %551 : vector<2x8x8xf32>
    %553 = vector.extract_strided_slice %524 {offsets = [0, 0, 8], sizes = [2, 8, 8], strides = [1, 1, 1]} : vector<2x8x32xf32> to vector<2x8x8xf32>
    "tpu.trace_start"() <{level = 10 : i32, message = "bqk,bkd->bqd"}> : () -> ()
    %cst_130 = arith.constant dense<0.000000e+00> : vector<2x8x8xf32>
    %554 = tpu.matmul %552, %553, %cst_130 {dimension_numbers = #tpu.dot_dimension_numbers<[2], [1], [1], [2], [0, 0, 0, 1, 1, 2], [0], [0]>} : vector<2x8x8xf32>, vector<2x8x8xf32>, vector<2x8x8xf32> -> vector<2x8x8xf32>
    "tpu.trace_stop"() : () -> ()
    %555 = vector.extract_strided_slice %520 {offsets = [0, 0, 16], sizes = [2, 8, 8], strides = [1, 1, 1]} : vector<2x8x32xf32> to vector<2x8x8xf32>
    %556 = vector.extract_strided_slice %522 {offsets = [0, 0, 16], sizes = [2, 8, 8], strides = [1, 1, 1]} : vector<2x8x32xf32> to vector<2x8x8xf32>
    "tpu.trace_start"() <{level = 10 : i32, message = "bqd,bkd->bqk"}> : () -> ()
    %cst_131 = arith.constant dense<0.000000e+00> : vector<2x8x8xf32>
    %557 = tpu.matmul %555, %556, %cst_131 {dimension_numbers = #tpu.dot_dimension_numbers<[2], [2], [1], [1], [0, 0, 0, 1, 1, 1], [0], [0]>} : vector<2x8x8xf32>, vector<2x8x8xf32>, vector<2x8x8xf32> -> vector<2x8x8xf32>
    "tpu.trace_stop"() : () -> ()
    %cst_132 = arith.constant dense<0xFF800000> : vector<2x8xf32>
    %558 = vector.multi_reduction <maximumf>, %557, %cst_132 [2] : vector<2x8x8xf32> to vector<2x8xf32>
    %559 = vector.shape_cast %558 : vector<2x8xf32> to vector<2x8x1xf32>
    %560 = vector.broadcast %559 : vector<2x8x1xf32> to vector<2x8x8xf32>
    %561 = arith.subf %557, %560 : vector<2x8x8xf32>
    %562 = math.exp %561 : vector<2x8x8xf32>
    %cst_133 = arith.constant dense<0.000000e+00> : vector<2x8xf32>
    %563 = vector.multi_reduction <add>, %562, %cst_133 [2] : vector<2x8x8xf32> to vector<2x8xf32>
    %564 = vector.shape_cast %563 : vector<2x8xf32> to vector<2x8x1xf32>
    %565 = tpu.reciprocal %564 {approx = true} : vector<2x8x1xf32> -> vector<2x8x1xf32>
    %566 = vector.broadcast %565 : vector<2x8x1xf32> to vector<2x8x8xf32>
    %567 = arith.mulf %562, %566 : vector<2x8x8xf32>
    %568 = vector.extract_strided_slice %524 {offsets = [0, 0, 16], sizes = [2, 8, 8], strides = [1, 1, 1]} : vector<2x8x32xf32> to vector<2x8x8xf32>
    "tpu.trace_start"() <{level = 10 : i32, message = "bqk,bkd->bqd"}> : () -> ()
    %cst_134 = arith.constant dense<0.000000e+00> : vector<2x8x8xf32>
    %569 = tpu.matmul %567, %568, %cst_134 {dimension_numbers = #tpu.dot_dimension_numbers<[2], [1], [1], [2], [0, 0, 0, 1, 1, 2], [0], [0]>} : vector<2x8x8xf32>, vector<2x8x8xf32>, vector<2x8x8xf32> -> vector<2x8x8xf32>
    "tpu.trace_stop"() : () -> ()
    %570 = vector.extract_strided_slice %520 {offsets = [0, 0, 24], sizes = [2, 8, 8], strides = [1, 1, 1]} : vector<2x8x32xf32> to vector<2x8x8xf32>
    %571 = vector.extract_strided_slice %522 {offsets = [0, 0, 24], sizes = [2, 8, 8], strides = [1, 1, 1]} : vector<2x8x32xf32> to vector<2x8x8xf32>
    "tpu.trace_start"() <{level = 10 : i32, message = "bqd,bkd->bqk"}> : () -> ()
    %cst_135 = arith.constant dense<0.000000e+00> : vector<2x8x8xf32>
    %572 = tpu.matmul %570, %571, %cst_135 {dimension_numbers = #tpu.dot_dimension_numbers<[2], [2], [1], [1], [0, 0, 0, 1, 1, 1], [0], [0]>} : vector<2x8x8xf32>, vector<2x8x8xf32>, vector<2x8x8xf32> -> vector<2x8x8xf32>
    "tpu.trace_stop"() : () -> ()
    %cst_136 = arith.constant dense<0xFF800000> : vector<2x8xf32>
    %573 = vector.multi_reduction <maximumf>, %572, %cst_136 [2] : vector<2x8x8xf32> to vector<2x8xf32>
    %574 = vector.shape_cast %573 : vector<2x8xf32> to vector<2x8x1xf32>
    %575 = vector.broadcast %574 : vector<2x8x1xf32> to vector<2x8x8xf32>
    %576 = arith.subf %572, %575 : vector<2x8x8xf32>
    %577 = math.exp %576 : vector<2x8x8xf32>
    %cst_137 = arith.constant dense<0.000000e+00> : vector<2x8xf32>
    %578 = vector.multi_reduction <add>, %577, %cst_137 [2] : vector<2x8x8xf32> to vector<2x8xf32>
    %579 = vector.shape_cast %578 : vector<2x8xf32> to vector<2x8x1xf32>
    %580 = tpu.reciprocal %579 {approx = true} : vector<2x8x1xf32> -> vector<2x8x1xf32>
    %581 = vector.broadcast %580 : vector<2x8x1xf32> to vector<2x8x8xf32>
    %582 = arith.mulf %577, %581 : vector<2x8x8xf32>
    %583 = vector.extract_strided_slice %524 {offsets = [0, 0, 24], sizes = [2, 8, 8], strides = [1, 1, 1]} : vector<2x8x32xf32> to vector<2x8x8xf32>
    "tpu.trace_start"() <{level = 10 : i32, message = "bqk,bkd->bqd"}> : () -> ()
    %cst_138 = arith.constant dense<0.000000e+00> : vector<2x8x8xf32>
    %584 = tpu.matmul %582, %583, %cst_138 {dimension_numbers = #tpu.dot_dimension_numbers<[2], [1], [1], [2], [0, 0, 0, 1, 1, 2], [0], [0]>} : vector<2x8x8xf32>, vector<2x8x8xf32>, vector<2x8x8xf32> -> vector<2x8x8xf32>
    "tpu.trace_stop"() : () -> ()
    %585 = tpu.concatenate %539, %554, %569, %584 in 2 : vector<2x8x8xf32>, vector<2x8x8xf32>, vector<2x8x8xf32>, vector<2x8x8xf32> -> vector<2x8x32xf32>
    %586 = vector.shape_cast %585 : vector<2x8x32xf32> to vector<16x32xf32>
    %587 = arith.truncf %586 : vector<16x32xf32> to vector<16x32xbf16>
    %c0_139 = arith.constant 0 : index
    %c0_140 = arith.constant 0 : index
    %588 = vector.load %arg11[%c0_139, %c0_140] : memref<32x32xbf16, #tpu.memory_space<vmem>>, vector<32x32xbf16>
    %cst_141 = arith.constant dense<0.000000e+00> : vector<16x32xf32>
    %589 = tpu.matmul %587, %588, %cst_141 {dimension_numbers = #tpu.dot_dimension_numbers<[1], [0], [0], [1], [0, 0, 1, 1], [], []>} : vector<16x32xbf16>, vector<32x32xbf16>, vector<16x32xf32> -> vector<16x32xf32>
    %c0_142 = arith.constant 0 : index
    %c3328 = arith.constant 3328 : index
    %590 = vector.load %arg15[%c0_142, %c3328] : memref<1x6272xf32, #tpu.memory_space<vmem>>, vector<1x32xf32>
    %591 = vector.broadcast %590 : vector<1x32xf32> to vector<16x32xf32>
    %592 = arith.addf %589, %591 : vector<16x32xf32>
    %593 = arith.addf %512, %592 : vector<16x32xf32>
    %c0_143 = arith.constant 0 : index
    %c3456 = arith.constant 3456 : index
    %594 = vector.load %arg15[%c0_143, %c3456] : memref<1x6272xf32, #tpu.memory_space<vmem>>, vector<1x32xf32>
    %c0_144 = arith.constant 0 : index
    %c3584 = arith.constant 3584 : index
    %595 = vector.load %arg15[%c0_144, %c3584] : memref<1x6272xf32, #tpu.memory_space<vmem>>, vector<1x32xf32>
    %cst_145 = arith.constant dense<0.000000e+00> : vector<16xf32>
    %596 = vector.multi_reduction <add>, %593, %cst_145 [1] : vector<16x32xf32> to vector<16xf32>
    %597 = vector.shape_cast %596 : vector<16xf32> to vector<16x1xf32>
    %cst_146 = arith.constant 3.200000e+01 : f32
    %598 = vector.broadcast %cst_146 : f32 to vector<16x1xf32>
    %599 = arith.divf %597, %598 : vector<16x1xf32>
    %600 = vector.broadcast %599 : vector<16x1xf32> to vector<16x32xf32>
    %601 = arith.subf %593, %600 : vector<16x32xf32>
    %602 = arith.mulf %601, %601 : vector<16x32xf32>
    %cst_147 = arith.constant dense<0.000000e+00> : vector<16xf32>
    %603 = vector.multi_reduction <add>, %602, %cst_147 [1] : vector<16x32xf32> to vector<16xf32>
    %604 = vector.shape_cast %603 : vector<16xf32> to vector<16x1xf32>
    %cst_148 = arith.constant 3.200000e+01 : f32
    %605 = vector.broadcast %cst_148 : f32 to vector<16x1xf32>
    %606 = arith.divf %604, %605 : vector<16x1xf32>
    %607 = vector.broadcast %599 : vector<16x1xf32> to vector<16x32xf32>
    %608 = arith.subf %593, %607 : vector<16x32xf32>
    %cst_149 = arith.constant 9.99999974E-6 : f32
    %609 = vector.broadcast %cst_149 : f32 to vector<16x1xf32>
    %610 = arith.addf %606, %609 : vector<16x1xf32>
    %611 = math.rsqrt %610 : vector<16x1xf32>
    %612 = vector.broadcast %611 : vector<16x1xf32> to vector<16x32xf32>
    %613 = arith.mulf %608, %612 : vector<16x32xf32>
    %614 = vector.broadcast %594 : vector<1x32xf32> to vector<16x32xf32>
    %615 = arith.mulf %613, %614 : vector<16x32xf32>
    %616 = vector.broadcast %595 : vector<1x32xf32> to vector<16x32xf32>
    %617 = arith.addf %615, %616 : vector<16x32xf32>
    %618 = arith.truncf %617 : vector<16x32xf32> to vector<16x32xbf16>
    %cst_150 = arith.constant 0.000000e+00 : f32
    %619 = vector.broadcast %cst_150 : f32 to vector<16x32xf32>
    %c0_151 = arith.constant 0 : index
    %c0_152 = arith.constant 0 : index
    %620 = vector.load %arg12[%c0_151, %c0_152] : memref<32x2048xbf16, #tpu.memory_space<vmem>>, vector<32x512xbf16>
    %cst_153 = arith.constant dense<0.000000e+00> : vector<16x512xf32>
    %621 = tpu.matmul %618, %620, %cst_153 {dimension_numbers = #tpu.dot_dimension_numbers<[1], [0], [0], [1], [0, 0, 1, 1], [], []>} : vector<16x32xbf16>, vector<32x512xbf16>, vector<16x512xf32> -> vector<16x512xf32>
    %c0_154 = arith.constant 0 : index
    %c3712 = arith.constant 3712 : index
    %622 = vector.load %arg15[%c0_154, %c3712] : memref<1x6272xf32, #tpu.memory_space<vmem>>, vector<1x512xf32>
    %623 = vector.broadcast %622 : vector<1x512xf32> to vector<16x512xf32>
    %624 = arith.addf %621, %623 : vector<16x512xf32>
    %cst_155 = arith.constant 0.000000e+00 : f32
    %625 = vector.broadcast %cst_155 : f32 to vector<16x512xf32>
    %626 = arith.maximumf %624, %625 : vector<16x512xf32>
    %627 = arith.truncf %626 : vector<16x512xf32> to vector<16x512xbf16>
    %c0_156 = arith.constant 0 : index
    %c0_157 = arith.constant 0 : index
    %628 = vector.load %arg13[%c0_156, %c0_157] : memref<2048x32xbf16, #tpu.memory_space<vmem>>, vector<512x32xbf16>
    %cst_158 = arith.constant dense<0.000000e+00> : vector<16x32xf32>
    %629 = tpu.matmul %627, %628, %cst_158 {dimension_numbers = #tpu.dot_dimension_numbers<[1], [0], [0], [1], [0, 0, 1, 1], [], []>} : vector<16x512xbf16>, vector<512x32xbf16>, vector<16x32xf32> -> vector<16x32xf32>
    %630 = arith.addf %619, %629 : vector<16x32xf32>
    %c0_159 = arith.constant 0 : index
    %c512_160 = arith.constant 512 : index
    %631 = vector.load %arg12[%c0_159, %c512_160] : memref<32x2048xbf16, #tpu.memory_space<vmem>>, vector<32x512xbf16>
    %cst_161 = arith.constant dense<0.000000e+00> : vector<16x512xf32>
    %632 = tpu.matmul %618, %631, %cst_161 {dimension_numbers = #tpu.dot_dimension_numbers<[1], [0], [0], [1], [0, 0, 1, 1], [], []>} : vector<16x32xbf16>, vector<32x512xbf16>, vector<16x512xf32> -> vector<16x512xf32>
    %c0_162 = arith.constant 0 : index
    %c4224 = arith.constant 4224 : index
    %633 = vector.load %arg15[%c0_162, %c4224] : memref<1x6272xf32, #tpu.memory_space<vmem>>, vector<1x512xf32>
    %634 = vector.broadcast %633 : vector<1x512xf32> to vector<16x512xf32>
    %635 = arith.addf %632, %634 : vector<16x512xf32>
    %cst_163 = arith.constant 0.000000e+00 : f32
    %636 = vector.broadcast %cst_163 : f32 to vector<16x512xf32>
    %637 = arith.maximumf %635, %636 : vector<16x512xf32>
    %638 = arith.truncf %637 : vector<16x512xf32> to vector<16x512xbf16>
    %c512_164 = arith.constant 512 : index
    %c0_165 = arith.constant 0 : index
    %639 = vector.load %arg13[%c512_164, %c0_165] : memref<2048x32xbf16, #tpu.memory_space<vmem>>, vector<512x32xbf16>
    %cst_166 = arith.constant dense<0.000000e+00> : vector<16x32xf32>
    %640 = tpu.matmul %638, %639, %cst_166 {dimension_numbers = #tpu.dot_dimension_numbers<[1], [0], [0], [1], [0, 0, 1, 1], [], []>} : vector<16x512xbf16>, vector<512x32xbf16>, vector<16x32xf32> -> vector<16x32xf32>
    %641 = arith.addf %630, %640 : vector<16x32xf32>
    %c0_167 = arith.constant 0 : index
    %c1024_168 = arith.constant 1024 : index
    %642 = vector.load %arg12[%c0_167, %c1024_168] : memref<32x2048xbf16, #tpu.memory_space<vmem>>, vector<32x512xbf16>
    %cst_169 = arith.constant dense<0.000000e+00> : vector<16x512xf32>
    %643 = tpu.matmul %618, %642, %cst_169 {dimension_numbers = #tpu.dot_dimension_numbers<[1], [0], [0], [1], [0, 0, 1, 1], [], []>} : vector<16x32xbf16>, vector<32x512xbf16>, vector<16x512xf32> -> vector<16x512xf32>
    %c0_170 = arith.constant 0 : index
    %c4736 = arith.constant 4736 : index
    %644 = vector.load %arg15[%c0_170, %c4736] : memref<1x6272xf32, #tpu.memory_space<vmem>>, vector<1x512xf32>
    %645 = vector.broadcast %644 : vector<1x512xf32> to vector<16x512xf32>
    %646 = arith.addf %643, %645 : vector<16x512xf32>
    %cst_171 = arith.constant 0.000000e+00 : f32
    %647 = vector.broadcast %cst_171 : f32 to vector<16x512xf32>
    %648 = arith.maximumf %646, %647 : vector<16x512xf32>
    %649 = arith.truncf %648 : vector<16x512xf32> to vector<16x512xbf16>
    %c1024_172 = arith.constant 1024 : index
    %c0_173 = arith.constant 0 : index
    %650 = vector.load %arg13[%c1024_172, %c0_173] : memref<2048x32xbf16, #tpu.memory_space<vmem>>, vector<512x32xbf16>
    %cst_174 = arith.constant dense<0.000000e+00> : vector<16x32xf32>
    %651 = tpu.matmul %649, %650, %cst_174 {dimension_numbers = #tpu.dot_dimension_numbers<[1], [0], [0], [1], [0, 0, 1, 1], [], []>} : vector<16x512xbf16>, vector<512x32xbf16>, vector<16x32xf32> -> vector<16x32xf32>
    %652 = arith.addf %641, %651 : vector<16x32xf32>
    %c0_175 = arith.constant 0 : index
    %c1536_176 = arith.constant 1536 : index
    %653 = vector.load %arg12[%c0_175, %c1536_176] : memref<32x2048xbf16, #tpu.memory_space<vmem>>, vector<32x512xbf16>
    %cst_177 = arith.constant dense<0.000000e+00> : vector<16x512xf32>
    %654 = tpu.matmul %618, %653, %cst_177 {dimension_numbers = #tpu.dot_dimension_numbers<[1], [0], [0], [1], [0, 0, 1, 1], [], []>} : vector<16x32xbf16>, vector<32x512xbf16>, vector<16x512xf32> -> vector<16x512xf32>
    %c0_178 = arith.constant 0 : index
    %c5248 = arith.constant 5248 : index
    %655 = vector.load %arg15[%c0_178, %c5248] : memref<1x6272xf32, #tpu.memory_space<vmem>>, vector<1x512xf32>
    %656 = vector.broadcast %655 : vector<1x512xf32> to vector<16x512xf32>
    %657 = arith.addf %654, %656 : vector<16x512xf32>
    %cst_179 = arith.constant 0.000000e+00 : f32
    %658 = vector.broadcast %cst_179 : f32 to vector<16x512xf32>
    %659 = arith.maximumf %657, %658 : vector<16x512xf32>
    %660 = arith.truncf %659 : vector<16x512xf32> to vector<16x512xbf16>
    %c1536_180 = arith.constant 1536 : index
    %c0_181 = arith.constant 0 : index
    %661 = vector.load %arg13[%c1536_180, %c0_181] : memref<2048x32xbf16, #tpu.memory_space<vmem>>, vector<512x32xbf16>
    %cst_182 = arith.constant dense<0.000000e+00> : vector<16x32xf32>
    %662 = tpu.matmul %660, %661, %cst_182 {dimension_numbers = #tpu.dot_dimension_numbers<[1], [0], [0], [1], [0, 0, 1, 1], [], []>} : vector<16x512xbf16>, vector<512x32xbf16>, vector<16x32xf32> -> vector<16x32xf32>
    %663 = arith.addf %652, %662 : vector<16x32xf32>
    %c0_183 = arith.constant 0 : index
    %c5760 = arith.constant 5760 : index
    %664 = vector.load %arg15[%c0_183, %c5760] : memref<1x6272xf32, #tpu.memory_space<vmem>>, vector<1x32xf32>
    %665 = vector.broadcast %664 : vector<1x32xf32> to vector<16x32xf32>
    %666 = arith.addf %663, %665 : vector<16x32xf32>
    %667 = arith.addf %617, %666 : vector<16x32xf32>
    %c0_184 = arith.constant 0 : index
    %c5888 = arith.constant 5888 : index
    %668 = vector.load %arg15[%c0_184, %c5888] : memref<1x6272xf32, #tpu.memory_space<vmem>>, vector<1x32xf32>
    %c0_185 = arith.constant 0 : index
    %c6016 = arith.constant 6016 : index
    %669 = vector.load %arg15[%c0_185, %c6016] : memref<1x6272xf32, #tpu.memory_space<vmem>>, vector<1x32xf32>
    %cst_186 = arith.constant dense<0.000000e+00> : vector<16xf32>
    %670 = vector.multi_reduction <add>, %667, %cst_186 [1] : vector<16x32xf32> to vector<16xf32>
    %671 = vector.shape_cast %670 : vector<16xf32> to vector<16x1xf32>
    %cst_187 = arith.constant 3.200000e+01 : f32
    %672 = vector.broadcast %cst_187 : f32 to vector<16x1xf32>
    %673 = arith.divf %671, %672 : vector<16x1xf32>
    %674 = vector.broadcast %673 : vector<16x1xf32> to vector<16x32xf32>
    %675 = arith.subf %667, %674 : vector<16x32xf32>
    %676 = arith.mulf %675, %675 : vector<16x32xf32>
    %cst_188 = arith.constant dense<0.000000e+00> : vector<16xf32>
    %677 = vector.multi_reduction <add>, %676, %cst_188 [1] : vector<16x32xf32> to vector<16xf32>
    %678 = vector.shape_cast %677 : vector<16xf32> to vector<16x1xf32>
    %cst_189 = arith.constant 3.200000e+01 : f32
    %679 = vector.broadcast %cst_189 : f32 to vector<16x1xf32>
    %680 = arith.divf %678, %679 : vector<16x1xf32>
    %681 = vector.broadcast %673 : vector<16x1xf32> to vector<16x32xf32>
    %682 = arith.subf %667, %681 : vector<16x32xf32>
    %cst_190 = arith.constant 9.99999974E-6 : f32
    %683 = vector.broadcast %cst_190 : f32 to vector<16x1xf32>
    %684 = arith.addf %680, %683 : vector<16x1xf32>
    %685 = math.rsqrt %684 : vector<16x1xf32>
    %686 = vector.broadcast %685 : vector<16x1xf32> to vector<16x32xf32>
    %687 = arith.mulf %682, %686 : vector<16x32xf32>
    %688 = vector.broadcast %668 : vector<1x32xf32> to vector<16x32xf32>
    %689 = arith.mulf %687, %688 : vector<16x32xf32>
    %690 = vector.broadcast %669 : vector<1x32xf32> to vector<16x32xf32>
    %691 = arith.addf %689, %690 : vector<16x32xf32>
    %692 = vector.shape_cast %691 : vector<16x32xf32> to vector<2x8x32xf32>
    %693 = vector.extract_strided_slice %692 {offsets = [0, 7, 0], sizes = [2, 1, 32], strides = [1, 1, 1]} : vector<2x8x32xf32> to vector<2x1x32xf32>
    %694 = vector.shape_cast %693 : vector<2x1x32xf32> to vector<2x32xf32>
    %695 = arith.truncf %694 : vector<2x32xf32> to vector<2x32xbf16>
    %c0_191 = arith.constant 0 : index
    %c0_192 = arith.constant 0 : index
    %696 = vector.load %arg14[%c0_191, %c0_192] : memref<32x5xbf16, #tpu.memory_space<vmem>>, vector<32x5xbf16>
    %cst_193 = arith.constant dense<0.000000e+00> : vector<2x5xf32>
    %697 = tpu.matmul %695, %696, %cst_193 {dimension_numbers = #tpu.dot_dimension_numbers<[1], [0], [0], [1], [0, 0, 1, 1], [], []>} : vector<2x32xbf16>, vector<32x5xbf16>, vector<2x5xf32> -> vector<2x5xf32>
    %c0_194 = arith.constant 0 : index
    %c6144 = arith.constant 6144 : index
    %698 = vector.load %arg15[%c0_194, %c6144] : memref<1x6272xf32, #tpu.memory_space<vmem>>, vector<1x5xf32>
    %699 = vector.broadcast %698 : vector<1x5xf32> to vector<2x5xf32>
    %700 = arith.addf %697, %699 : vector<2x5xf32>
    %c0_195 = arith.constant 0 : index
    %c0_196 = arith.constant 0 : index
    %701 = vector.load %arg16[%c0_195, %c0_196] : memref<2x5xf32, #tpu.memory_space<vmem>>, vector<2x5xf32>
    tpu.vector_store %arg16[%c0_195, %c0_196], %700 {strides = array<i32>} : memref<2x5xf32, #tpu.memory_space<vmem>>, vector<2x5xf32>,
    return
  }
  func.func @transform_0(%arg0: i32) -> (i32, i32) {
    %c0_i32 = arith.constant 0 : i32
    %c0_i32_0 = arith.constant 0 : i32
    %c0_i32_1 = arith.constant 0 : i32
    return %c0_i32, %c0_i32_0 : i32, i32
  }
  func.func @transform_1(%arg0: i32) -> (i32, i32) {
    %c0_i32 = arith.constant 0 : i32
    %c0_i32_0 = arith.constant 0 : i32
    %c0_i32_1 = arith.constant 0 : i32
    return %c0_i32, %c0_i32_0 : i32, i32
  }
  func.func @transform_2(%arg0: i32) -> (i32, i32) {
    %c0_i32 = arith.constant 0 : i32
    %c0_i32_0 = arith.constant 0 : i32
    %c0_i32_1 = arith.constant 0 : i32
    return %c0_i32, %c0_i32_0 : i32, i32
  }
  func.func @transform_3(%arg0: i32) -> (i32, i32) {
    %c0_i32 = arith.constant 0 : i32
    %c0_i32_0 = arith.constant 0 : i32
    %c0_i32_1 = arith.constant 0 : i32
    return %c0_i32, %c0_i32_0 : i32, i32
  }
  func.func @transform_4(%arg0: i32) -> (i32, i32) {
    %c0_i32 = arith.constant 0 : i32
    %c0_i32_0 = arith.constant 0 : i32
    %c0_i32_1 = arith.constant 0 : i32
    return %c0_i32, %c0_i32_0 : i32, i32
  }
  func.func @transform_5(%arg0: i32) -> (i32, i32) {
    %c0_i32 = arith.constant 0 : i32
    %c0_i32_0 = arith.constant 0 : i32
    %c0_i32_1 = arith.constant 0 : i32
    return %c0_i32, %c0_i32_0 : i32, i32
  }
  func.func @transform_6(%arg0: i32) -> (i32, i32) {
    %c0_i32 = arith.constant 0 : i32
    %c0_i32_0 = arith.constant 0 : i32
    %c0_i32_1 = arith.constant 0 : i32
    return %c0_i32, %c0_i32_0 : i32, i32
  }
  func.func @transform_7(%arg0: i32) -> (i32, i32) {
    %c0_i32 = arith.constant 0 : i32
    %c0_i32_0 = arith.constant 0 : i32
    %c0_i32_1 = arith.constant 0 : i32
    return %c0_i32, %c0_i32_0 : i32, i32
  }
  func.func @transform_8(%arg0: i32) -> (i32, i32) {
    %c0_i32 = arith.constant 0 : i32
    %c0_i32_0 = arith.constant 0 : i32
    %c0_i32_1 = arith.constant 0 : i32
    return %c0_i32, %c0_i32_0 : i32, i32
  }
  func.func @transform_9(%arg0: i32) -> (i32, i32) {
    %c0_i32 = arith.constant 0 : i32
    %c0_i32_0 = arith.constant 0 : i32
    %c0_i32_1 = arith.constant 0 : i32
    return %c0_i32, %c0_i32_0 : i32, i32
  }
  func.func @transform_10(%arg0: i32) -> (i32, i32) {
    %c0_i32 = arith.constant 0 : i32
    %c0_i32_0 = arith.constant 0 : i32
    %c0_i32_1 = arith.constant 0 : i32
    return %c0_i32, %c0_i32_0 : i32, i32
  }
  func.func @transform_11(%arg0: i32) -> (i32, i32) {
    %c0_i32 = arith.constant 0 : i32
    %c0_i32_0 = arith.constant 0 : i32
    %c0_i32_1 = arith.constant 0 : i32
    return %c0_i32, %c0_i32_0 : i32, i32
  }
  func.func @transform_12(%arg0: i32) -> (i32, i32) {
    %c0_i32 = arith.constant 0 : i32
    %c0_i32_0 = arith.constant 0 : i32
    %c0_i32_1 = arith.constant 0 : i32
    return %c0_i32, %c0_i32_0 : i32, i32
  }
  func.func @transform_13(%arg0: i32) -> (i32, i32) {
    %c0_i32 = arith.constant 0 : i32
    %c0_i32_0 = arith.constant 0 : i32
    %c0_i32_1 = arith.constant 0 : i32
    return %c0_i32, %c0_i32_0 : i32, i32
  }
  func.func @transform_14(%arg0: i32) -> (i32, i32) {
    %c0_i32 = arith.constant 0 : i32
    %c0_i32_0 = arith.constant 0 : i32
    %c0_i32_1 = arith.constant 0 : i32
    return %c0_i32, %c0_i32_0 : i32, i32
  }
  func.func @transform_15(%arg0: i32) -> (i32, i32) {
    %c0_i32 = arith.constant 0 : i32
    %c0_i32_0 = arith.constant 0 : i32
    %c0_i32_1 = arith.constant 0 : i32
    return %c0_i32, %c0_i32_0 : i32, i32
  }
}

</mosaic_0001>

<llo_original>
// kernel: _lambda_.1
$region0: #{_lambda_.1}
  #allocation0 [shape = 'u32[]', space=smem, size = 0x4, offset = 0x4, fixed_abs, tag = 'smem constant byte address 0x4 - core index']
  #allocation1 [shape = 'u32[144,128]{1,0:T(1,128)}', space=vmem, size = 0x12000, scoped, tag = 'internal scratch']
  %s0 = inlined_call_operand.vmem [shape: f32[16,8], index: 0, kind: input, shape index: {}]
  %s1 = inlined_call_operand.hbm [shape: bf16[8,128], index: 1, kind: input, shape index: {}]
  %s2 = inlined_call_operand.vmem [shape: bf16[32,128], index: 2, kind: input, shape index: {}]
  %s3 = inlined_call_operand.vmem [shape: bf16[32,128], index: 3, kind: input, shape index: {}]
  %s4 = inlined_call_operand.vmem [shape: bf16[32,128], index: 4, kind: input, shape index: {}]
  %s5 = inlined_call_operand.vmem [shape: bf16[32,96], index: 5, kind: input, shape index: {}]
  %s6 = inlined_call_operand.vmem [shape: bf16[32,32], index: 6, kind: input, shape index: {}]
  %s7 = inlined_call_operand.hbm [shape: bf16[32,2048], index: 7, kind: input, shape index: {}]
  %s8 = inlined_call_operand.hbm [shape: bf16[2048,32], index: 8, kind: input, shape index: {}]
  %s9 = inlined_call_operand.vmem [shape: bf16[32,96], index: 9, kind: input, shape index: {}]
  %s10 = inlined_call_operand.vmem [shape: bf16[32,32], index: 10, kind: input, shape index: {}]
  %s11 = inlined_call_operand.hbm [shape: bf16[32,2048], index: 11, kind: input, shape index: {}]
  %s12 = inlined_call_operand.hbm [shape: bf16[2048,32], index: 12, kind: input, shape index: {}]
  %s13 = inlined_call_operand.vmem [shape: bf16[32,5], index: 13, kind: input, shape index: {}]
  %s14 = inlined_call_operand.vmem [shape: f32[1,6272], index: 14, kind: input, shape index: {}]
  %s15 = inlined_call_operand.hbm [shape: f32[2,5], index: 15, kind: output, shape index: {}]
  %s16 = sld [smem:[#allocation0]]
  $region90: #{_lambda_.1} parent=0
    _
  %s18 = ssub.s32 1, %s16
  %s19 = scalar_select 0, %s18, %s16
  $region1: #{_lambda_.1} parent=0
    #allocation2 [shape = 'u8[2048]{0}', space=vmem, size = 0x800, scoped, tag = 'input window, operand 1, single buffered']
    #allocation3 [shape = 's32[1]{0}', space=sflag, size = 0x4, scoped, tag = 'scoped memory for _lambda_.1']
    #allocation4 [shape = 's32[1]{0}', space=sflag, size = 0x4, scoped, tag = 'scoped memory for _lambda_.1']
    #allocation5 [shape = 'u8[131072]{0}', space=vmem, size = 0x20000, scoped, tag = 'input window, operand 7, single buffered']
    #allocation6 [shape = 's32[1]{0}', space=sflag, size = 0x4, scoped, tag = 'scoped memory for _lambda_.1']
    #allocation7 [shape = 'u8[524288]{0}', space=vmem, size = 0x80000, scoped, tag = 'input window, operand 8, single buffered']
    #allocation8 [shape = 'u8[131072]{0}', space=vmem, size = 0x20000, scoped, tag = 'input window, operand 11, single buffered']
    #allocation9 [shape = 's32[1]{0}', space=sflag, size = 0x4, scoped, tag = 'scoped memory for _lambda_.1']
    #allocation10 [shape = 'u8[524288]{0}', space=vmem, size = 0x80000, scoped, tag = 'input window, operand 12, single buffered']
    #allocation11 [shape = 'u8[1024]{0}', space=vmem, size = 0x400, scoped, tag = 'output window, operand 0, single buffered']
    %20 = vsyncpa [#allocation3], 0
    %21 = vsyncpa [#allocation6], 0
    %22 = vsyncpa [#allocation9], 0
    %23 = vsyncpa [#allocation4], 0
    // Predicated region
    $region2: #{_lambda_.1} parent=1 // pred_check
      _
    $region3: #{_lambda_.1} parent=1 // pred_check_branch
      %25 = sbr.rel (0) target = $region5
    $region4: #{_lambda_.1} parent=1 // pred_region
      _
    $region5: #{_lambda_.1} parent=1 // pred_fallthru
      _
    // Predicated region
    $region6: #{_lambda_.1} parent=1 // pred_check
      _
    $region7: #{_lambda_.1} parent=1 // pred_check_branch
      %27 = sbr.rel (0) target = $region9
    $region8: #{_lambda_.1} parent=1 // pred_region
      %s29 = ssub.s32 64, 64
      %30 = vsyncadd [#allocation3], %s29
      %s32 = sshll.u32 [#allocation2], 4
      %s33 = int_to_ptr.vmem [resolvable:$true] %s32
      %35 = dma.hbm_to_vmem [thread:$0]  %s1, 64, %s33, [#allocation3]
    $region9: #{_lambda_.1} parent=1 // pred_fallthru
      _
    // Predicated region
    $region10: #{_lambda_.1} parent=1 // pred_check
      _
    $region11: #{_lambda_.1} parent=1 // pred_check_branch
      %37 = sbr.rel (0) target = $region13
    $region12: #{_lambda_.1} parent=1 // pred_region
      _
    $region13: #{_lambda_.1} parent=1 // pred_fallthru
      _
    // Predicated region
    $region14: #{_lambda_.1} parent=1 // pred_check
      _
    $region15: #{_lambda_.1} parent=1 // pred_check_branch
      %39 = sbr.rel (0) target = $region17
    $region16: #{_lambda_.1} parent=1 // pred_region
      _
    $region17: #{_lambda_.1} parent=1 // pred_fallthru
      _
    // Predicated region
    $region18: #{_lambda_.1} parent=1 // pred_check
      _
    $region19: #{_lambda_.1} parent=1 // pred_check_branch
      %41 = sbr.rel (0) target = $region21
    $region20: #{_lambda_.1} parent=1 // pred_region
      _
    $region21: #{_lambda_.1} parent=1 // pred_fallthru
      _
    // Predicated region
    $region22: #{_lambda_.1} parent=1 // pred_check
      _
    $region23: #{_lambda_.1} parent=1 // pred_check_branch
      %43 = sbr.rel (0) target = $region25
    $region24: #{_lambda_.1} parent=1 // pred_region
      _
    $region25: #{_lambda_.1} parent=1 // pred_fallthru
      _
    // Predicated region
    $region26: #{_lambda_.1} parent=1 // pred_check
      _
    $region27: #{_lambda_.1} parent=1 // pred_check_branch
      %45 = sbr.rel (0) target = $region29
    $region28: #{_lambda_.1} parent=1 // pred_region
      _
    $region29: #{_lambda_.1} parent=1 // pred_fallthru
      _
    // Predicated region
    $region30: #{_lambda_.1} parent=1 // pred_check
      _
    $region31: #{_lambda_.1} parent=1 // pred_check_branch
      %47 = sbr.rel (0) target = $region33
    $region32: #{_lambda_.1} parent=1 // pred_region
      %s49 = ssub.s32 4096, 4096
      %50 = vsyncadd [#allocation6], %s49
      %s51 = sshll.u32 [#allocation5], 4
      %s52 = int_to_ptr.vmem [resolvable:$true] %s51
      %57 = dma.hbm_to_vmem [thread:$0]  %s7, 4096, %s52, [#allocation6], 1024, 1024, 64
    $region33: #{_lambda_.1} parent=1 // pred_fallthru
      _
    // Predicated region
    $region34: #{_lambda_.1} parent=1 // pred_check
      _
    $region35: #{_lambda_.1} parent=1 // pred_check_branch
      %59 = sbr.rel (0) target = $region37
    $region36: #{_lambda_.1} parent=1 // pred_region
      %s61 = ssub.s32 16384, 16384
      %62 = vsyncadd [#allocation6], %s61
      %s63 = sshll.u32 [#allocation7], 4
      %s64 = int_to_ptr.vmem [resolvable:$true] %s63
      %69 = dma.hbm_to_vmem [thread:$0]  %s8, 16384, %s64, [#allocation6], 64, 64, 4
    $region37: #{_lambda_.1} parent=1 // pred_fallthru
      _
    // Predicated region
    $region38: #{_lambda_.1} parent=1 // pred_check
      _
    $region39: #{_lambda_.1} parent=1 // pred_check_branch
      %71 = sbr.rel (0) target = $region41
    $region40: #{_lambda_.1} parent=1 // pred_region
      _
    $region41: #{_lambda_.1} parent=1 // pred_fallthru
      _
    // Predicated region
    $region42: #{_lambda_.1} parent=1 // pred_check
      _
    $region43: #{_lambda_.1} parent=1 // pred_check_branch
      %73 = sbr.rel (0) target = $region45
    $region44: #{_lambda_.1} parent=1 // pred_region
      _
    $region45: #{_lambda_.1} parent=1 // pred_fallthru
      _
    // Predicated region
    $region46: #{_lambda_.1} parent=1 // pred_check
      _
    $region47: #{_lambda_.1} parent=1 // pred_check_branch
      %75 = sbr.rel (0) target = $region49
    $region48: #{_lambda_.1} parent=1 // pred_region
      %s77 = ssub.s32 4096, 4096
      %78 = vsyncadd [#allocation9], %s77
      %s79 = sshll.u32 [#allocation8], 4
      %s80 = int_to_ptr.vmem [resolvable:$true] %s79
      %85 = dma.hbm_to_vmem [thread:$0]  %s11, 4096, %s80, [#allocation9], 1024, 1024, 64
    $region49: #{_lambda_.1} parent=1 // pred_fallthru
      _
    // Predicated region
    $region50: #{_lambda_.1} parent=1 // pred_check
      _
    $region51: #{_lambda_.1} parent=1 // pred_check_branch
      %87 = sbr.rel (0) target = $region53
    $region52: #{_lambda_.1} parent=1 // pred_region
      %s89 = ssub.s32 16384, 16384
      %90 = vsyncadd [#allocation9], %s89
      %s91 = sshll.u32 [#allocation10], 4
      %s92 = int_to_ptr.vmem [resolvable:$true] %s91
      %97 = dma.hbm_to_vmem [thread:$0]  %s12, 16384, %s92, [#allocation9], 64, 64, 4
    $region53: #{_lambda_.1} parent=1 // pred_fallthru
      _
    // Predicated region
    $region54: #{_lambda_.1} parent=1 // pred_check
      _
    $region55: #{_lambda_.1} parent=1 // pred_check_branch
      %99 = sbr.rel (0) target = $region57
    $region56: #{_lambda_.1} parent=1 // pred_region
      _
    $region57: #{_lambda_.1} parent=1 // pred_fallthru
      _
    // Predicated region
    $region58: #{_lambda_.1} parent=1 // pred_check
      _
    $region59: #{_lambda_.1} parent=1 // pred_check_branch
      %101 = sbr.rel (0) target = $region61
    $region60: #{_lambda_.1} parent=1 // pred_region
      _
    $region61: #{_lambda_.1} parent=1 // pred_fallthru
      _
    // Predicated region
    $region62: #{_lambda_.1} parent=1 // pred_check
      _
    $region63: #{_lambda_.1} parent=1 // pred_check_branch
      %103 = sbr.rel (0) target = $region65
    $region64: #{_lambda_.1} parent=1 // pred_region
      %104 = dma.done [#allocation3], 64
    $region65: #{_lambda_.1} parent=1 // pred_fallthru
      _
    // Predicated region
    $region66: #{_lambda_.1} parent=1 // pred_check
      _
    $region67: #{_lambda_.1} parent=1 // pred_check_branch
      %106 = sbr.rel (0) target = $region69
    $region68: #{_lambda_.1} parent=1 // pred_region
      %107 = dma.done [#allocation6], 4096
    $region69: #{_lambda_.1} parent=1 // pred_fallthru
      _
    // Predicated region
    $region70: #{_lambda_.1} parent=1 // pred_check
      _
    $region71: #{_lambda_.1} parent=1 // pred_check_branch
      %109 = sbr.rel (0) target = $region73
    $region72: #{_lambda_.1} parent=1 // pred_region
      %110 = dma.done [#allocation6], 16384
    $region73: #{_lambda_.1} parent=1 // pred_fallthru
      _
    // Predicated region
    $region74: #{_lambda_.1} parent=1 // pred_check
      _
    $region75: #{_lambda_.1} parent=1 // pred_check_branch
      %112 = sbr.rel (0) target = $region77
    $region76: #{_lambda_.1} parent=1 // pred_region
      %113 = dma.done [#allocation9], 4096
    $region77: #{_lambda_.1} parent=1 // pred_fallthru
      _
    // Predicated region
    $region78: #{_lambda_.1} parent=1 // pred_check
      _
    $region79: #{_lambda_.1} parent=1 // pred_check_branch
      %115 = sbr.rel (0) target = $region81
    $region80: #{_lambda_.1} parent=1 // pred_region
      %116 = dma.done [#allocation9], 16384
    $region81: #{_lambda_.1} parent=1 // pred_fallthru
      _
    %v118 = vld [vmem:[%s0] sm:$0xff]
    %v119 = vld [vmem:[%s0 + $0x8] sm:$0xff]
    %v120 = vld [vmem:[%s2] sm:$0xf]
    %v121 = vld [vmem:[%s2 + $0x4] sm:$0xf]
    %v122 = vld [vmem:[%s2 + $0x8] sm:$0xf]
    %v123 = vld [vmem:[%s2 + $0xc] sm:$0xf]
    %v124 = vpack.c.bf16 %v119, %v118
    %v125 = vld [vmem:[#allocation2] sm:$0xf]
    %v126 = vld [vmem:[%s14] sm:$0x1]
    %v128 = vlaneseq
    %v129 = vshrl.u32 %v128, 7
    %v130 = vsub.s32 0, %v129
    %v131 = vrot.slane %v126, %v130
    %vm133 = vcmask 64512
    %v135 = vsel %vm133, %v124, 0
    %vm137 = vcmask 1043456
    %v139 = vsel %vm137, %v125, 0
    %141 = vmatprep.subr.bf16.mxu0 0
    %142 = vmatpush1.bf16.msra.mxu0 0
    %143 = vmatprep.subr.bf16.mxu0 0
    %144 = vmatpush1.bf16.msra.mxu0 0
    %145 = vmatprep.subr.bf16.mxu0 0
    %146 = vmatpush1.bf16.msra.mxu0 0
    %147 = vmatprep.subr.bf16.mxu0 0
    %148 = vmatpush1.bf16.msra.mxu0 0
    %149 = vmatprep.subr.bf16.mxu0 0
    %150 = vmatpush1.bf16.msra.mxu0 0
    %151 = vmatprep.subr.bf16.mxu0 0
    %152 = vmatpush1.bf16.msra.mxu0 0
    %153 = vmatprep.subr.bf16.mxu0 0
    %154 = vmatpush1.bf16.msra.mxu0 0
    %155 = vmatprep.subr.bf16.mxu0 0
    %156 = vmatpush1.bf16.msra.mxu0 %v139
    %157 = vmatprep.subr.bf16.mxu0 0
    %158 = vmatpush2.bf16.msra.mxu0 0
    %159 = vmatprep.subr.bf16.mxu0 0
    %160 = vmatpush2.bf16.msra.mxu0 0
    %161 = vmatprep.subr.bf16.mxu0 0
    %162 = vmatpush2.bf16.msra.mxu0 0
    %163 = vmatprep.subr.bf16.mxu0 0
    %164 = vmatpush2.bf16.msra.mxu0 0
    %165 = vmatprep.subr.bf16.mxu0 0
    %166 = vmatpush2.bf16.msra.mxu0 0
    %167 = vmatprep.subr.bf16.mxu0 0
    %168 = vmatpush2.bf16.msra.mxu0 0
    %169 = vmatprep.subr.bf16.mxu0 0
    %170 = vmatpush2.bf16.msra.mxu0 0
    %171 = vmatprep.subr.bf16.mxu0 0
    %172 = vmatpush2.bf16.msra.mxu0 0
    %173 = vmatprep.mubr.bf16.mxu0 0
    %174 = vmatmul.mubr.bf16.gmra.mxu0 %v135
    %v175 = vpop.f32.mrf.mxu0
    %v176 = vadd.f32 %v131, %v175
    %v177 = vpop.f32.mrf.mxu0
    %v178 = vpop.f32.mrf.mxu0
    %v179 = vadd.f32 %v131, %v178
    %v180 = vpop.f32.mrf.mxu0
    %181 = vdwg.mxu0
    %v186 = vunpack.c.l.b16 %v120
    %v187 = vunpack.c.l.b16 %v121
    %v188 = vunpack.c.l.b16 %v122
    %v189 = vunpack.c.l.b16 %v123
    %v190 = vpack.c.b16 %v187, %v186
    %v191 = vpack.c.b16 %v189, %v188
    %vm194 = vcmask 261120
    %v196 = vsel %vm194, 0, 0
    %198 = vmatprep.subr.bf16.mxu0 0
    %199 = vmatpush1.bf16.msra.mxu0 0
    %200 = vmatprep.subr.bf16.mxu0 0
    %201 = vmatpush1.bf16.msra.mxu0 0
    %202 = vmatprep.subr.bf16.mxu0 0
    %203 = vmatpush1.bf16.msra.mxu0 0
    %204 = vmatprep.subr.bf16.mxu0 0
    %205 = vmatpush1.bf16.msra.mxu0 0
    %206 = vmatprep.subr.bf16.mxu0 0
    %207 = vmatpush1.bf16.msra.mxu0 0
    %208 = vmatprep.subr.bf16.mxu0 0
    %209 = vmatpush1.bf16.msra.mxu0 0
    %210 = vmatprep.subr.bf16.mxu0 0
    %211 = vmatpush1.bf16.msra.mxu0 %v191
    %212 = vmatprep.subr.bf16.mxu0 0
    %213 = vmatpush1.bf16.msra.mxu0 %v190
    %214 = vmatprep.subr.bf16.mxu0 0
    %215 = vmatpush2.bf16.msra.mxu0 0
    %216 = vmatprep.subr.bf16.mxu0 0
    %217 = vmatpush2.bf16.msra.mxu0 0
    %218 = vmatprep.subr.bf16.mxu0 0
    %219 = vmatpush2.bf16.msra.mxu0 0
    %220 = vmatprep.subr.bf16.mxu0 0
    %221 = vmatpush2.bf16.msra.mxu0 0
    %222 = vmatprep.subr.bf16.mxu0 0
    %223 = vmatpush2.bf16.msra.mxu0 0
    %224 = vmatprep.subr.bf16.mxu0 0
    %225 = vmatpush2.bf16.msra.mxu0 0
    %226 = vmatprep.subr.bf16.mxu0 0
    %227 = vmatpush2.bf16.msra.mxu0 0
    %228 = vmatprep.subr.bf16.mxu0 0
    %229 = vmatpush2.bf16.msra.mxu0 0
    %230 = vmatprep.mubr.bf16.mxu0 0
    %231 = vmatmul.mubr.bf16.gmra.mxu0 %v196
    %v232 = vpop.f32.mrf.mxu0
    %v233 = vadd.f32 0.0, %v232
    %v234 = vpop.f32.mrf.mxu0
    %v235 = vpop.f32.mrf.mxu0
    %v236 = vpop.f32.mrf.mxu0
    %237 = vdwg.mxu0
    %v238 = vadd.f32 %v176, %v233
    %v239 = vxor.u32 %v238, 2147483648
    %v240 = vmul.f32 %v239, 1.442695
    %v241 = vpow.pop %v240
    %v242 = vadd.f32 %v241, 1.0
    %v243 = vrcp.pop %v242
    %v244 = vmul.f32 1.0, %v243
    %v245 = vtanh.pop %v238
    %v246 = vmul.f32 %v244, 0.0
    %248 = vrot.lane.b32.xlu0 %v245, 64
    %v249 = vpop.permute.xlu0 %248
    %v251 = vmul.f32 %v244, %v249
    %253 = vrot.lane.b32.xlu0 %v251, 32
    %v254 = vpop.permute.xlu0 %253
    %v256 = vadd.f32 %v246, %v254
    %v257 = vtanh.pop %v256
    %259 = vrot.lane.b32.xlu0 %v257, 64
    %v260 = vpop.permute.xlu0 %259
    %v262 = vmul.f32 %v244, %v260
    %v263 = vpack.c.bf16 %v262, %v262
    %265 = vrot.lane.b32.xlu0 %v263, 32
    %v266 = vpop.permute.xlu0 %265
    %v268 = vsel %vm194, %v266, 0
    %270 = vmatprep.subr.bf16.mxu0 0
    %271 = vmatpush1.bf16.msra.mxu0 0
    %272 = vmatprep.subr.bf16.mxu0 0
    %273 = vmatpush1.bf16.msra.mxu0 0
    %274 = vmatprep.subr.bf16.mxu0 0
    %275 = vmatpush1.bf16.msra.mxu0 0
    %276 = vmatprep.subr.bf16.mxu0 0
    %277 = vmatpush1.bf16.msra.mxu0 0
    %278 = vmatprep.subr.bf16.mxu0 0
    %279 = vmatpush1.bf16.msra.mxu0 0
    %280 = vmatprep.subr.bf16.mxu0 0
    %281 = vmatpush1.bf16.msra.mxu0 0
    %282 = vmatprep.subr.bf16.mxu0 0
    %283 = vmatpush1.bf16.msra.mxu0 %v191
    %284 = vmatprep.subr.bf16.mxu0 0
    %285 = vmatpush1.bf16.msra.mxu0 %v190
    %286 = vmatprep.subr.bf16.mxu0 0
    %287 = vmatpush2.bf16.msra.mxu0 0
    %288 = vmatprep.subr.bf16.mxu0 0
    %289 = vmatpush2.bf16.msra.mxu0 0
    %290 = vmatprep.subr.bf16.mxu0 0
    %291 = vmatpush2.bf16.msra.mxu0 0
    %292 = vmatprep.subr.bf16.mxu0 0
    %293 = vmatpush2.bf16.msra.mxu0 0
    %294 = vmatprep.subr.bf16.mxu0 0
    %295 = vmatpush2.bf16.msra.mxu0 0
    %296 = vmatprep.subr.bf16.mxu0 0
    %297 = vmatpush2.bf16.msra.mxu0 0
    %298 = vmatprep.subr.bf16.mxu0 0
    %299 = vmatpush2.bf16.msra.mxu0 0
    %300 = vmatprep.subr.bf16.mxu0 0
    %301 = vmatpush2.bf16.msra.mxu0 0
    %302 = vmatprep.mubr.bf16.mxu0 0
    %303 = vmatmul.mubr.bf16.gmra.mxu0 %v268
    %v304 = vpop.f32.mrf.mxu0
    %v305 = vadd.f32 0.0, %v304
    %v306 = vpop.f32.mrf.mxu0
    %v307 = vpop.f32.mrf.mxu0
    %v308 = vpop.f32.mrf.mxu0
    %309 = vdwg.mxu0
    %v311 = vrot.slane %v305, 6
    %v313 = vadd.f32 %v176, %v311
    %v314 = vxor.u32 %v313, 2147483648
    %v315 = vmul.f32 %v314, 1.442695
    %v316 = vpow.pop %v315
    %v317 = vadd.f32 %v316, 1.0
    %v318 = vrcp.pop %v317
    %v319 = vmul.f32 1.0, %v318
    %v320 = vtanh.pop %v313
    %v322 = vrot.slane %v256, 6
    %v324 = vmul.f32 %v319, %v322
    %326 = vrot.lane.b32.xlu0 %v320, 64
    %v327 = vpop.permute.xlu0 %326
    %v329 = vmul.f32 %v319, %v327
    %331 = vrot.lane.b32.xlu0 %v329, 32
    %v332 = vpop.permute.xlu0 %331
    %v334 = vadd.f32 %v324, %v332
    %v335 = vtanh.pop %v334
    %337 = vrot.lane.b32.xlu0 %v335, 64
    %v338 = vpop.permute.xlu0 %337
    %v340 = vmul.f32 %v319, %v338
    %v341 = vpack.c.bf16 %v340, %v340
    %v343 = vrot.slane %v341, 1
    %344 = vrot.lane.b32.xlu0 %v343, 32
    %v345 = vpop.permute.xlu0 %344
    %v347 = vsel %vm194, %v345, 0
    %349 = vmatprep.subr.bf16.mxu0 0
    %350 = vmatpush1.bf16.msra.mxu0 0
    %351 = vmatprep.subr.bf16.mxu0 0
    %352 = vmatpush1.bf16.msra.mxu0 0
    %353 = vmatprep.subr.bf16.mxu0 0
    %354 = vmatpush1.bf16.msra.mxu0 0
    %355 = vmatprep.subr.bf16.mxu0 0
    %356 = vmatpush1.bf16.msra.mxu0 0
    %357 = vmatprep.subr.bf16.mxu0 0
    %358 = vmatpush1.bf16.msra.mxu0 0
    %359 = vmatprep.subr.bf16.mxu0 0
    %360 = vmatpush1.bf16.msra.mxu0 0
    %361 = vmatprep.subr.bf16.mxu0 0
    %362 = vmatpush1.bf16.msra.mxu0 %v191
    %363 = vmatprep.subr.bf16.mxu0 0
    %364 = vmatpush1.bf16.msra.mxu0 %v190
    %365 = vmatprep.subr.bf16.mxu0 0
    %366 = vmatpush2.bf16.msra.mxu0 0
    %367 = vmatprep.subr.bf16.mxu0 0
    %368 = vmatpush2.bf16.msra.mxu0 0
    %369 = vmatprep.subr.bf16.mxu0 0
    %370 = vmatpush2.bf16.msra.mxu0 0
    %371 = vmatprep.subr.bf16.mxu0 0
    %372 = vmatpush2.bf16.msra.mxu0 0
    %373 = vmatprep.subr.bf16.mxu0 0
    %374 = vmatpush2.bf16.msra.mxu0 0
    %375 = vmatprep.subr.bf16.mxu0 0
    %376 = vmatpush2.bf16.msra.mxu0 0
    %377 = vmatprep.subr.bf16.mxu0 0
    %378 = vmatpush2.bf16.msra.mxu0 0
    %379 = vmatprep.subr.bf16.mxu0 0
    %380 = vmatpush2.bf16.msra.mxu0 0
    %381 = vmatprep.mubr.bf16.mxu0 0
    %382 = vmatmul.mubr.bf16.gmra.mxu0 %v347
    %v383 = vpop.f32.mrf.mxu0
    %v384 = vadd.f32 0.0, %v383
    %v385 = vpop.f32.mrf.mxu0
    %v386 = vpop.f32.mrf.mxu0
    %v387 = vpop.f32.mrf.mxu0
    %388 = vdwg.mxu0
    %v390 = vrot.slane %v384, 4
    %v392 = vadd.f32 %v176, %v390
    %v393 = vxor.u32 %v392, 2147483648
    %v394 = vmul.f32 %v393, 1.442695
    %v395 = vpow.pop %v394
    %v396 = vadd.f32 %v395, 1.0
    %v397 = vrcp.pop %v396
    %v398 = vmul.f32 1.0, %v397
    %v399 = vtanh.pop %v392
    %v401 = vrot.slane %v334, 6
    %v403 = vmul.f32 %v398, %v401
    %405 = vrot.lane.b32.xlu0 %v399, 64
    %v406 = vpop.permute.xlu0 %405
    %v408 = vmul.f32 %v398, %v406
    %410 = vrot.lane.b32.xlu0 %v408, 32
    %v411 = vpop.permute.xlu0 %410
    %v413 = vadd.f32 %v403, %v411
    %v414 = vtanh.pop %v413
    %416 = vrot.lane.b32.xlu0 %v414, 64
    %v417 = vpop.permute.xlu0 %416
    %v419 = vmul.f32 %v398, %v417
    %v420 = vpack.c.bf16 %v419, %v419
    %v422 = vrot.slane %v420, 2
    %423 = vrot.lane.b32.xlu0 %v422, 32
    %v424 = vpop.permute.xlu0 %423
    %v426 = vsel %vm194, %v424, 0
    %428 = vmatprep.subr.bf16.mxu0 0
    %429 = vmatpush1.bf16.msra.mxu0 0
    %430 = vmatprep.subr.bf16.mxu0 0
    %431 = vmatpush1.bf16.msra.mxu0 0
    %432 = vmatprep.subr.bf16.mxu0 0
    %433 = vmatpush1.bf16.msra.mxu0 0
    %434 = vmatprep.subr.bf16.mxu0 0
    %435 = vmatpush1.bf16.msra.mxu0 0
    %436 = vmatprep.subr.bf16.mxu0 0
    %437 = vmatpush1.bf16.msra.mxu0 0
    %438 = vmatprep.subr.bf16.mxu0 0
    %439 = vmatpush1.bf16.msra.mxu0 0
    %440 = vmatprep.subr.bf16.mxu0 0
    %441 = vmatpush1.bf16.msra.mxu0 %v191
    %442 = vmatprep.subr.bf16.mxu0 0
    %443 = vmatpush1.bf16.msra.mxu0 %v190
    %444 = vmatprep.subr.bf16.mxu0 0
    %445 = vmatpush2.bf16.msra.mxu0 0
    %446 = vmatprep.subr.bf16.mxu0 0
    %447 = vmatpush2.bf16.msra.mxu0 0
    %448 = vmatprep.subr.bf16.mxu0 0
    %449 = vmatpush2.bf16.msra.mxu0 0
    %450 = vmatprep.subr.bf16.mxu0 0
    %451 = vmatpush2.bf16.msra.mxu0 0
    %452 = vmatprep.subr.bf16.mxu0 0
    %453 = vmatpush2.bf16.msra.mxu0 0
    %454 = vmatprep.subr.bf16.mxu0 0
    %455 = vmatpush2.bf16.msra.mxu0 0
    %456 = vmatprep.subr.bf16.mxu0 0
    %457 = vmatpush2.bf16.msra.mxu0 0
    %458 = vmatprep.subr.bf16.mxu0 0
    %459 = vmatpush2.bf16.msra.mxu0 0
    %460 = vmatprep.mubr.bf16.mxu0 0
    %461 = vmatmul.mubr.bf16.gmra.mxu0 %v426
    %v462 = vpop.f32.mrf.mxu0
    %v463 = vadd.f32 0.0, %v462
    %v464 = vpop.f32.mrf.mxu0
    %v465 = vpop.f32.mrf.mxu0
    %v466 = vpop.f32.mrf.mxu0
    %467 = vdwg.mxu0
    %v469 = vrot.slane %v463, 2
    %v471 = vadd.f32 %v176, %v469
    %v472 = vxor.u32 %v471, 2147483648
    %v473 = vmul.f32 %v472, 1.442695
    %v474 = vpow.pop %v473
    %v475 = vadd.f32 %v474, 1.0
    %v476 = vrcp.pop %v475
    %v477 = vmul.f32 1.0, %v476
    %v478 = vtanh.pop %v471
    %v480 = vrot.slane %v413, 6
    %v482 = vmul.f32 %v477, %v480
    %484 = vrot.lane.b32.xlu0 %v478, 64
    %v485 = vpop.permute.xlu0 %484
    %v487 = vmul.f32 %v477, %v485
    %489 = vrot.lane.b32.xlu0 %v487, 32
    %v490 = vpop.permute.xlu0 %489
    %v492 = vadd.f32 %v482, %v490
    %v493 = vtanh.pop %v492
    %495 = vrot.lane.b32.xlu0 %v493, 64
    %v496 = vpop.permute.xlu0 %495
    %v498 = vmul.f32 %v477, %v496
    %v499 = vpack.c.bf16 %v498, %v498
    %v501 = vrot.slane %v499, 3
    %502 = vrot.lane.b32.xlu0 %v501, 32
    %v503 = vpop.permute.xlu0 %502
    %v505 = vsel %vm194, %v503, 0
    %507 = vmatprep.subr.bf16.mxu0 0
    %508 = vmatpush1.bf16.msra.mxu0 0
    %509 = vmatprep.subr.bf16.mxu0 0
    %510 = vmatpush1.bf16.msra.mxu0 0
    %511 = vmatprep.subr.bf16.mxu0 0
    %512 = vmatpush1.bf16.msra.mxu0 0
    %513 = vmatprep.subr.bf16.mxu0 0
    %514 = vmatpush1.bf16.msra.mxu0 0
    %515 = vmatprep.subr.bf16.mxu0 0
    %516 = vmatpush1.bf16.msra.mxu0 0
    %517 = vmatprep.subr.bf16.mxu0 0
    %518 = vmatpush1.bf16.msra.mxu0 0
    %519 = vmatprep.subr.bf16.mxu0 0
    %520 = vmatpush1.bf16.msra.mxu0 %v191
    %521 = vmatprep.subr.bf16.mxu0 0
    %522 = vmatpush1.bf16.msra.mxu0 %v190
    %523 = vmatprep.subr.bf16.mxu0 0
    %524 = vmatpush2.bf16.msra.mxu0 0
    %525 = vmatprep.subr.bf16.mxu0 0
    %526 = vmatpush2.bf16.msra.mxu0 0
    %527 = vmatprep.subr.bf16.mxu0 0
    %528 = vmatpush2.bf16.msra.mxu0 0
    %529 = vmatprep.subr.bf16.mxu0 0
    %530 = vmatpush2.bf16.msra.mxu0 0
    %531 = vmatprep.subr.bf16.mxu0 0
    %532 = vmatpush2.bf16.msra.mxu0 0
    %533 = vmatprep.subr.bf16.mxu0 0
    %534 = vmatpush2.bf16.msra.mxu0 0
    %535 = vmatprep.subr.bf16.mxu0 0
    %536 = vmatpush2.bf16.msra.mxu0 0
    %537 = vmatprep.subr.bf16.mxu0 0
    %538 = vmatpush2.bf16.msra.mxu0 0
    %539 = vmatprep.mubr.bf16.mxu0 0
    %540 = vmatmul.mubr.bf16.gmra.mxu0 %v505
    %v541 = vpop.f32.mrf.mxu0
    %v542 = vadd.f32 0.0, %v541
    %v543 = vpop.f32.mrf.mxu0
    %v544 = vpop.f32.mrf.mxu0
    %v545 = vpop.f32.mrf.mxu0
    %546 = vdwg.mxu0
    %v547 = vadd.f32 %v179, %v542
    %v548 = vxor.u32 %v547, 2147483648
    %v549 = vmul.f32 %v548, 1.442695
    %v550 = vpow.pop %v549
    %v551 = vadd.f32 %v550, 1.0
    %v552 = vrcp.pop %v551
    %v553 = vmul.f32 1.0, %v552
    %v554 = vtanh.pop %v547
    %v556 = vrot.slane %v492, 6
    %v558 = vmul.f32 %v553, %v556
    %560 = vrot.lane.b32.xlu0 %v554, 64
    %v561 = vpop.permute.xlu0 %560
    %v563 = vmul.f32 %v553, %v561
    %565 = vrot.lane.b32.xlu0 %v563, 32
    %v566 = vpop.permute.xlu0 %565
    %v568 = vadd.f32 %v558, %v566
    %v569 = vtanh.pop %v568
    %571 = vrot.lane.b32.xlu0 %v569, 64
    %v572 = vpop.permute.xlu0 %571
    %v574 = vmul.f32 %v553, %v572
    %v575 = vpack.c.bf16 %v574, %v574
    %577 = vrot.lane.b32.xlu0 %v575, 32
    %v578 = vpop.permute.xlu0 %577
    %v580 = vsel %vm194, %v578, 0
    %582 = vmatprep.subr.bf16.mxu0 0
    %583 = vmatpush1.bf16.msra.mxu0 0
    %584 = vmatprep.subr.bf16.mxu0 0
    %585 = vmatpush1.bf16.msra.mxu0 0
    %586 = vmatprep.subr.bf16.mxu0 0
    %587 = vmatpush1.bf16.msra.mxu0 0
    %588 = vmatprep.subr.bf16.mxu0 0
    %589 = vmatpush1.bf16.msra.mxu0 0
    %590 = vmatprep.subr.bf16.mxu0 0
    %591 = vmatpush1.bf16.msra.mxu0 0
    %592 = vmatprep.subr.bf16.mxu0 0
    %593 = vmatpush1.bf16.msra.mxu0 0
    %594 = vmatprep.subr.bf16.mxu0 0
    %595 = vmatpush1.bf16.msra.mxu0 %v191
    %596 = vmatprep.subr.bf16.mxu0 0
    %597 = vmatpush1.bf16.msra.mxu0 %v190
    %598 = vmatprep.subr.bf16.mxu0 0
    %599 = vmatpush2.bf16.msra.mxu0 0
    %600 = vmatprep.subr.bf16.mxu0 0
    %601 = vmatpush2.bf16.msra.mxu0 0
    %602 = vmatprep.subr.bf16.mxu0 0
    %603 = vmatpush2.bf16.msra.mxu0 0
    %604 = vmatprep.subr.bf16.mxu0 0
    %605 = vmatpush2.bf16.msra.mxu0 0
    %606 = vmatprep.subr.bf16.mxu0 0
    %607 = vmatpush2.bf16.msra.mxu0 0
    %608 = vmatprep.subr.bf16.mxu0 0
    %609 = vmatpush2.bf16.msra.mxu0 0
    %610 = vmatprep.subr.bf16.mxu0 0
    %611 = vmatpush2.bf16.msra.mxu0 0
    %612 = vmatprep.subr.bf16.mxu0 0
    %613 = vmatpush2.bf16.msra.mxu0 0
    %614 = vmatprep.mubr.bf16.mxu0 0
    %615 = vmatmul.mubr.bf16.gmra.mxu0 %v580
    %v616 = vpop.f32.mrf.mxu0
    %v617 = vadd.f32 0.0, %v616
    %v618 = vpop.f32.mrf.mxu0
    %v619 = vpop.f32.mrf.mxu0
    %v620 = vpop.f32.mrf.mxu0
    %621 = vdwg.mxu0
    %v623 = vrot.slane %v617, 6
    %v625 = vadd.f32 %v179, %v623
    %v626 = vxor.u32 %v625, 2147483648
    %v627 = vmul.f32 %v626, 1.442695
    %v628 = vpow.pop %v627
    %v629 = vadd.f32 %v628, 1.0
    %v630 = vrcp.pop %v629
    %v631 = vmul.f32 1.0, %v630
    %v632 = vtanh.pop %v625
    %v634 = vrot.slane %v568, 6
    %v636 = vmul.f32 %v631, %v634
    %638 = vrot.lane.b32.xlu0 %v632, 64
    %v639 = vpop.permute.xlu0 %638
    %v641 = vmul.f32 %v631, %v639
    %643 = vrot.lane.b32.xlu0 %v641, 32
    %v644 = vpop.permute.xlu0 %643
    %v646 = vadd.f32 %v636, %v644
    %v647 = vtanh.pop %v646
    %649 = vrot.lane.b32.xlu0 %v647, 64
    %v650 = vpop.permute.xlu0 %649
    %v652 = vmul.f32 %v631, %v650
    %v653 = vpack.c.bf16 %v652, %v652
    %v655 = vrot.slane %v653, 1
    %656 = vrot.lane.b32.xlu0 %v655, 32
    %v657 = vpop.permute.xlu0 %656
    %v659 = vsel %vm194, %v657, 0
    %661 = vmatprep.subr.bf16.mxu0 0
    %662 = vmatpush1.bf16.msra.mxu0 0
    %663 = vmatprep.subr.bf16.mxu0 0
    %664 = vmatpush1.bf16.msra.mxu0 0
    %665 = vmatprep.subr.bf16.mxu0 0
    %666 = vmatpush1.bf16.msra.mxu0 0
    %667 = vmatprep.subr.bf16.mxu0 0
    %668 = vmatpush1.bf16.msra.mxu0 0
    %669 = vmatprep.subr.bf16.mxu0 0
    %670 = vmatpush1.bf16.msra.mxu0 0
    %671 = vmatprep.subr.bf16.mxu0 0
    %672 = vmatpush1.bf16.msra.mxu0 0
    %673 = vmatprep.subr.bf16.mxu0 0
    %674 = vmatpush1.bf16.msra.mxu0 %v191
    %675 = vmatprep.subr.bf16.mxu0 0
    %676 = vmatpush1.bf16.msra.mxu0 %v190
    %677 = vmatprep.subr.bf16.mxu0 0
    %678 = vmatpush2.bf16.msra.mxu0 0
    %679 = vmatprep.subr.bf16.mxu0 0
    %680 = vmatpush2.bf16.msra.mxu0 0
    %681 = vmatprep.subr.bf16.mxu0 0
    %682 = vmatpush2.bf16.msra.mxu0 0
    %683 = vmatprep.subr.bf16.mxu0 0
    %684 = vmatpush2.bf16.msra.mxu0 0
    %685 = vmatprep.subr.bf16.mxu0 0
    %686 = vmatpush2.bf16.msra.mxu0 0
    %687 = vmatprep.subr.bf16.mxu0 0
    %688 = vmatpush2.bf16.msra.mxu0 0
    %689 = vmatprep.subr.bf16.mxu0 0
    %690 = vmatpush2.bf16.msra.mxu0 0
    %691 = vmatprep.subr.bf16.mxu0 0
    %692 = vmatpush2.bf16.msra.mxu0 0
    %693 = vmatprep.mubr.bf16.mxu0 0
    %694 = vmatmul.mubr.bf16.gmra.mxu0 %v659
    %v695 = vpop.f32.mrf.mxu0
    %v696 = vadd.f32 0.0, %v695
    %v697 = vpop.f32.mrf.mxu0
    %v698 = vpop.f32.mrf.mxu0
    %v699 = vpop.f32.mrf.mxu0
    %700 = vdwg.mxu0
    %v702 = vrot.slane %v696, 4
    %v704 = vadd.f32 %v179, %v702
    %v705 = vxor.u32 %v704, 2147483648
    %v706 = vmul.f32 %v705, 1.442695
    %v707 = vpow.pop %v706
    %v708 = vadd.f32 %v707, 1.0
    %v709 = vrcp.pop %v708
    %v710 = vmul.f32 1.0, %v709
    %v711 = vtanh.pop %v704
    %v713 = vrot.slane %v646, 6
    %v715 = vmul.f32 %v710, %v713
    %717 = vrot.lane.b32.xlu0 %v711, 64
    %v718 = vpop.permute.xlu0 %717
    %v720 = vmul.f32 %v710, %v718
    %722 = vrot.lane.b32.xlu0 %v720, 32
    %v723 = vpop.permute.xlu0 %722
    %v725 = vadd.f32 %v715, %v723
    %v726 = vtanh.pop %v725
    %728 = vrot.lane.b32.xlu0 %v726, 64
    %v729 = vpop.permute.xlu0 %728
    %v731 = vmul.f32 %v710, %v729
    %v732 = vpack.c.bf16 %v731, %v731
    %v734 = vrot.slane %v732, 2
    %735 = vrot.lane.b32.xlu0 %v734, 32
    %v736 = vpop.permute.xlu0 %735
    %v738 = vsel %vm194, %v736, 0
    %740 = vmatprep.subr.bf16.mxu0 0
    %741 = vmatpush1.bf16.msra.mxu0 0
    %742 = vmatprep.subr.bf16.mxu0 0
    %743 = vmatpush1.bf16.msra.mxu0 0
    %744 = vmatprep.subr.bf16.mxu0 0
    %745 = vmatpush1.bf16.msra.mxu0 0
    %746 = vmatprep.subr.bf16.mxu0 0
    %747 = vmatpush1.bf16.msra.mxu0 0
    %748 = vmatprep.subr.bf16.mxu0 0
    %749 = vmatpush1.bf16.msra.mxu0 0
    %750 = vmatprep.subr.bf16.mxu0 0
    %751 = vmatpush1.bf16.msra.mxu0 0
    %752 = vmatprep.subr.bf16.mxu0 0
    %753 = vmatpush1.bf16.msra.mxu0 %v191
    %754 = vmatprep.subr.bf16.mxu0 0
    %755 = vmatpush1.bf16.msra.mxu0 %v190
    %756 = vmatprep.subr.bf16.mxu0 0
    %757 = vmatpush2.bf16.msra.mxu0 0
    %758 = vmatprep.subr.bf16.mxu0 0
    %759 = vmatpush2.bf16.msra.mxu0 0
    %760 = vmatprep.subr.bf16.mxu0 0
    %761 = vmatpush2.bf16.msra.mxu0 0
    %762 = vmatprep.subr.bf16.mxu0 0
    %763 = vmatpush2.bf16.msra.mxu0 0
    %764 = vmatprep.subr.bf16.mxu0 0
    %765 = vmatpush2.bf16.msra.mxu0 0
    %766 = vmatprep.subr.bf16.mxu0 0
    %767 = vmatpush2.bf16.msra.mxu0 0
    %768 = vmatprep.subr.bf16.mxu0 0
    %769 = vmatpush2.bf16.msra.mxu0 0
    %770 = vmatprep.subr.bf16.mxu0 0
    %771 = vmatpush2.bf16.msra.mxu0 0
    %772 = vmatprep.mubr.bf16.mxu0 0
    %773 = vmatmul.mubr.bf16.gmra.mxu0 %v738
    %v774 = vpop.f32.mrf.mxu0
    %v775 = vadd.f32 0.0, %v774
    %v776 = vpop.f32.mrf.mxu0
    %v777 = vpop.f32.mrf.mxu0
    %v778 = vpop.f32.mrf.mxu0
    %779 = vdwg.mxu0
    %v781 = vrot.slane %v775, 2
    %v783 = vadd.f32 %v179, %v781
    %v784 = vxor.u32 %v783, 2147483648
    %v785 = vmul.f32 %v784, 1.442695
    %v786 = vpow.pop %v785
    %v787 = vadd.f32 %v786, 1.0
    %v788 = vrcp.pop %v787
    %v789 = vmul.f32 1.0, %v788
    %v790 = vtanh.pop %v783
    %v792 = vrot.slane %v725, 6
    %v794 = vmul.f32 %v789, %v792
    %796 = vrot.lane.b32.xlu0 %v790, 64
    %v797 = vpop.permute.xlu0 %796
    %v799 = vmul.f32 %v789, %v797
    %801 = vrot.lane.b32.xlu0 %v799, 32
    %v802 = vpop.permute.xlu0 %801
    %v804 = vadd.f32 %v794, %v802
    %v805 = vtanh.pop %v804
    %807 = vrot.lane.b32.xlu0 %v805, 64
    %v808 = vpop.permute.xlu0 %807
    %v810 = vmul.f32 %v789, %v808
    %vm811 = vcmask 1041408
    %v812 = vsel %vm811, %v262, %v340
    %v813 = vsel %vm137, %v812, %v419
    %vm814 = vcmask 1045504
    %v815 = vsel %vm814, %v813, %v498
    %v816 = vsel %vm811, %v574, %v652
    %v817 = vsel %vm137, %v816, %v731
    %v818 = vsel %vm814, %v817, %v810
    %v819 = vld [vmem:[%s4] sm:$0xf]
    %v820 = vld [vmem:[%s4 + $0x4] sm:$0xf]
    %v821 = vld [vmem:[%s4 + $0x8] sm:$0xf]
    %v822 = vld [vmem:[%s4 + $0xc] sm:$0xf]
    %v823 = vpack.c.bf16 %v818, %v815
    %v824 = vld [vmem:[%s3] sm:$0xf]
    %v825 = vld [vmem:[%s3 + $0x4] sm:$0xf]
    %v826 = vld [vmem:[%s3 + $0x8] sm:$0xf]
    %v827 = vld [vmem:[%s3 + $0xc] sm:$0xf]
    %v828 = vld [vmem:[%s14 + $0x1] sm:$0x1]
    %v830 = vlaneseq
    %v831 = vshrl.u32 %v830, 7
    %v832 = vsub.s32 0, %v831
    %v833 = vrot.slane %v828, %v832
    %836 = vrot.lane.b32.xlu0 %v823, 32
    %v837 = vpop.permute.xlu0 %836
    %v842 = vunpack.c.l.b16 %v824
    %v843 = vunpack.c.l.b16 %v825
    %v844 = vunpack.c.l.b16 %v826
    %v845 = vunpack.c.l.b16 %v827
    %v846 = vpack.c.b16 %v843, %v842
    %v847 = vpack.c.b16 %v845, %v844
    %v851 = vsel %vm194, %v837, 0
    %853 = vmatprep.subr.bf16.mxu0 0
    %854 = vmatpush1.bf16.msra.mxu0 0
    %855 = vmatprep.subr.bf16.mxu0 0
    %856 = vmatpush1.bf16.msra.mxu0 0
    %857 = vmatprep.subr.bf16.mxu0 0
    %858 = vmatpush1.bf16.msra.mxu0 0
    %859 = vmatprep.subr.bf16.mxu0 0
    %860 = vmatpush1.bf16.msra.mxu0 0
    %861 = vmatprep.subr.bf16.mxu0 0
    %862 = vmatpush1.bf16.msra.mxu0 0
    %863 = vmatprep.subr.bf16.mxu0 0
    %864 = vmatpush1.bf16.msra.mxu0 0
    %865 = vmatprep.subr.bf16.mxu0 0
    %866 = vmatpush1.bf16.msra.mxu0 %v847
    %867 = vmatprep.subr.bf16.mxu0 0
    %868 = vmatpush1.bf16.msra.mxu0 %v846
    %869 = vmatprep.subr.bf16.mxu0 0
    %870 = vmatpush2.bf16.msra.mxu0 0
    %871 = vmatprep.subr.bf16.mxu0 0
    %872 = vmatpush2.bf16.msra.mxu0 0
    %873 = vmatprep.subr.bf16.mxu0 0
    %874 = vmatpush2.bf16.msra.mxu0 0
    %875 = vmatprep.subr.bf16.mxu0 0
    %876 = vmatpush2.bf16.msra.mxu0 0
    %877 = vmatprep.subr.bf16.mxu0 0
    %878 = vmatpush2.bf16.msra.mxu0 0
    %879 = vmatprep.subr.bf16.mxu0 0
    %880 = vmatpush2.bf16.msra.mxu0 0
    %881 = vmatprep.subr.bf16.mxu0 0
    %882 = vmatpush2.bf16.msra.mxu0 0
    %883 = vmatprep.subr.bf16.mxu0 0
    %884 = vmatpush2.bf16.msra.mxu0 0
    %885 = vmatprep.mubr.bf16.mxu0 0
    %886 = vmatmul.mubr.bf16.gmra.mxu0 %v851
    %v887 = vpop.f32.mrf.mxu0
    %v888 = vadd.f32 %v833, %v887
    %v889 = vpop.f32.mrf.mxu0
    %v890 = vpop.f32.mrf.mxu0
    %v891 = vadd.f32 %v833, %v890
    %v892 = vpop.f32.mrf.mxu0
    %893 = vdwg.mxu0
    %v898 = vunpack.c.l.b16 %v819
    %v899 = vunpack.c.l.b16 %v820
    %v900 = vunpack.c.l.b16 %v821
    %v901 = vunpack.c.l.b16 %v822
    %v902 = vpack.c.b16 %v899, %v898
    %v903 = vpack.c.b16 %v901, %v900
    %906 = vmatprep.subr.bf16.mxu0 0
    %907 = vmatpush1.bf16.msra.mxu0 0
    %908 = vmatprep.subr.bf16.mxu0 0
    %909 = vmatpush1.bf16.msra.mxu0 0
    %910 = vmatprep.subr.bf16.mxu0 0
    %911 = vmatpush1.bf16.msra.mxu0 0
    %912 = vmatprep.subr.bf16.mxu0 0
    %913 = vmatpush1.bf16.msra.mxu0 0
    %914 = vmatprep.subr.bf16.mxu0 0
    %915 = vmatpush1.bf16.msra.mxu0 0
    %916 = vmatprep.subr.bf16.mxu0 0
    %917 = vmatpush1.bf16.msra.mxu0 0
    %918 = vmatprep.subr.bf16.mxu0 0
    %919 = vmatpush1.bf16.msra.mxu0 %v903
    %920 = vmatprep.subr.bf16.mxu0 0
    %921 = vmatpush1.bf16.msra.mxu0 %v902
    %922 = vmatprep.subr.bf16.mxu0 0
    %923 = vmatpush2.bf16.msra.mxu0 0
    %924 = vmatprep.subr.bf16.mxu0 0
    %925 = vmatpush2.bf16.msra.mxu0 0
    %926 = vmatprep.subr.bf16.mxu0 0
    %927 = vmatpush2.bf16.msra.mxu0 0
    %928 = vmatprep.subr.bf16.mxu0 0
    %929 = vmatpush2.bf16.msra.mxu0 0
    %930 = vmatprep.subr.bf16.mxu0 0
    %931 = vmatpush2.bf16.msra.mxu0 0
    %932 = vmatprep.subr.bf16.mxu0 0
    %933 = vmatpush2.bf16.msra.mxu0 0
    %934 = vmatprep.subr.bf16.mxu0 0
    %935 = vmatpush2.bf16.msra.mxu0 0
    %936 = vmatprep.subr.bf16.mxu0 0
    %937 = vmatpush2.bf16.msra.mxu0 0
    %938 = vmatprep.mubr.bf16.mxu0 0
    %939 = vmatmul.mubr.bf16.gmra.mxu0 %v196
    %v940 = vpop.f32.mrf.mxu0
    %v941 = vadd.f32 0.0, %v940
    %v942 = vpop.f32.mrf.mxu0
    %v943 = vpop.f32.mrf.mxu0
    %v944 = vpop.f32.mrf.mxu0
    %945 = vdwg.mxu0
    %v946 = vadd.f32 %v888, %v941
    %v947 = vxor.u32 %v946, 2147483648
    %v948 = vmul.f32 %v947, 1.442695
    %v949 = vpow.pop %v948
    %v950 = vadd.f32 %v949, 1.0
    %v951 = vrcp.pop %v950
    %v952 = vmul.f32 1.0, %v951
    %v953 = vtanh.pop %v946
    %v954 = vmul.f32 %v952, 0.0
    %956 = vrot.lane.b32.xlu0 %v953, 64
    %v957 = vpop.permute.xlu0 %956
    %v959 = vmul.f32 %v952, %v957
    %961 = vrot.lane.b32.xlu0 %v959, 32
    %v962 = vpop.permute.xlu0 %961
    %v964 = vadd.f32 %v954, %v962
    %v965 = vtanh.pop %v964
    %967 = vrot.lane.b32.xlu0 %v965, 64
    %v968 = vpop.permute.xlu0 %967
    %v970 = vmul.f32 %v952, %v968
    %v971 = vpack.c.bf16 %v970, %v970
    %973 = vrot.lane.b32.xlu0 %v971, 32
    %v974 = vpop.permute.xlu0 %973
    %v976 = vsel %vm194, %v974, 0
    %978 = vmatprep.subr.bf16.mxu0 0
    %979 = vmatpush1.bf16.msra.mxu0 0
    %980 = vmatprep.subr.bf16.mxu0 0
    %981 = vmatpush1.bf16.msra.mxu0 0
    %982 = vmatprep.subr.bf16.mxu0 0
    %983 = vmatpush1.bf16.msra.mxu0 0
    %984 = vmatprep.subr.bf16.mxu0 0
    %985 = vmatpush1.bf16.msra.mxu0 0
    %986 = vmatprep.subr.bf16.mxu0 0
    %987 = vmatpush1.bf16.msra.mxu0 0
    %988 = vmatprep.subr.bf16.mxu0 0
    %989 = vmatpush1.bf16.msra.mxu0 0
    %990 = vmatprep.subr.bf16.mxu0 0
    %991 = vmatpush1.bf16.msra.mxu0 %v903
    %992 = vmatprep.subr.bf16.mxu0 0
    %993 = vmatpush1.bf16.msra.mxu0 %v902
    %994 = vmatprep.subr.bf16.mxu0 0
    %995 = vmatpush2.bf16.msra.mxu0 0
    %996 = vmatprep.subr.bf16.mxu0 0
    %997 = vmatpush2.bf16.msra.mxu0 0
    %998 = vmatprep.subr.bf16.mxu0 0
    %999 = vmatpush2.bf16.msra.mxu0 0
    %1000 = vmatprep.subr.bf16.mxu0 0
    %1001 = vmatpush2.bf16.msra.mxu0 0
    %1002 = vmatprep.subr.bf16.mxu0 0
    %1003 = vmatpush2.bf16.msra.mxu0 0
    %1004 = vmatprep.subr.bf16.mxu0 0
    %1005 = vmatpush2.bf16.msra.mxu0 0
    %1006 = vmatprep.subr.bf16.mxu0 0
    %1007 = vmatpush2.bf16.msra.mxu0 0
    %1008 = vmatprep.subr.bf16.mxu0 0
    %1009 = vmatpush2.bf16.msra.mxu0 0
    %1010 = vmatprep.mubr.bf16.mxu0 0
    %1011 = vmatmul.mubr.bf16.gmra.mxu0 %v976
    %v1012 = vpop.f32.mrf.mxu0
    %v1013 = vadd.f32 0.0, %v1012
    %v1014 = vpop.f32.mrf.mxu0
    %v1015 = vpop.f32.mrf.mxu0
    %v1016 = vpop.f32.mrf.mxu0
    %1017 = vdwg.mxu0
    %v1019 = vrot.slane %v1013, 6
    %v1021 = vadd.f32 %v888, %v1019
    %v1022 = vxor.u32 %v1021, 2147483648
    %v1023 = vmul.f32 %v1022, 1.442695
    %v1024 = vpow.pop %v1023
    %v1025 = vadd.f32 %v1024, 1.0
    %v1026 = vrcp.pop %v1025
    %v1027 = vmul.f32 1.0, %v1026
    %v1028 = vtanh.pop %v1021
    %v1030 = vrot.slane %v964, 6
    %v1032 = vmul.f32 %v1027, %v1030
    %1034 = vrot.lane.b32.xlu0 %v1028, 64
    %v1035 = vpop.permute.xlu0 %1034
    %v1037 = vmul.f32 %v1027, %v1035
    %1039 = vrot.lane.b32.xlu0 %v1037, 32
    %v1040 = vpop.permute.xlu0 %1039
    %v1042 = vadd.f32 %v1032, %v1040
    %v1043 = vtanh.pop %v1042
    %1045 = vrot.lane.b32.xlu0 %v1043, 64
    %v1046 = vpop.permute.xlu0 %1045
    %v1048 = vmul.f32 %v1027, %v1046
    %v1049 = vpack.c.bf16 %v1048, %v1048
    %v1051 = vrot.slane %v1049, 1
    %1052 = vrot.lane.b32.xlu0 %v1051, 32
    %v1053 = vpop.permute.xlu0 %1052
    %v1055 = vsel %vm194, %v1053, 0
    %1057 = vmatprep.subr.bf16.mxu0 0
    %1058 = vmatpush1.bf16.msra.mxu0 0
    %1059 = vmatprep.subr.bf16.mxu0 0
    %1060 = vmatpush1.bf16.msra.mxu0 0
    %1061 = vmatprep.subr.bf16.mxu0 0
    %1062 = vmatpush1.bf16.msra.mxu0 0
    %1063 = vmatprep.subr.bf16.mxu0 0
    %1064 = vmatpush1.bf16.msra.mxu0 0
    %1065 = vmatprep.subr.bf16.mxu0 0
    %1066 = vmatpush1.bf16.msra.mxu0 0
    %1067 = vmatprep.subr.bf16.mxu0 0
    %1068 = vmatpush1.bf16.msra.mxu0 0
    %1069 = vmatprep.subr.bf16.mxu0 0
    %1070 = vmatpush1.bf16.msra.mxu0 %v903
    %1071 = vmatprep.subr.bf16.mxu0 0
    %1072 = vmatpush1.bf16.msra.mxu0 %v902
    %1073 = vmatprep.subr.bf16.mxu0 0
    %1074 = vmatpush2.bf16.msra.mxu0 0
    %1075 = vmatprep.subr.bf16.mxu0 0
    %1076 = vmatpush2.bf16.msra.mxu0 0
    %1077 = vmatprep.subr.bf16.mxu0 0
    %1078 = vmatpush2.bf16.msra.mxu0 0
    %1079 = vmatprep.subr.bf16.mxu0 0
    %1080 = vmatpush2.bf16.msra.mxu0 0
    %1081 = vmatprep.subr.bf16.mxu0 0
    %1082 = vmatpush2.bf16.msra.mxu0 0
    %1083 = vmatprep.subr.bf16.mxu0 0
    %1084 = vmatpush2.bf16.msra.mxu0 0
    %1085 = vmatprep.subr.bf16.mxu0 0
    %1086 = vmatpush2.bf16.msra.mxu0 0
    %1087 = vmatprep.subr.bf16.mxu0 0
    %1088 = vmatpush2.bf16.msra.mxu0 0
    %1089 = vmatprep.mubr.bf16.mxu0 0
    %1090 = vmatmul.mubr.bf16.gmra.mxu0 %v1055
    %v1091 = vpop.f32.mrf.mxu0
    %v1092 = vadd.f32 0.0, %v1091
    %v1093 = vpop.f32.mrf.mxu0
    %v1094 = vpop.f32.mrf.mxu0
    %v1095 = vpop.f32.mrf.mxu0
    %1096 = vdwg.mxu0
    %v1098 = vrot.slane %v1092, 4
    %v1100 = vadd.f32 %v888, %v1098
    %v1101 = vxor.u32 %v1100, 2147483648
    %v1102 = vmul.f32 %v1101, 1.442695
    %v1103 = vpow.pop %v1102
    %v1104 = vadd.f32 %v1103, 1.0
    %v1105 = vrcp.pop %v1104
    %v1106 = vmul.f32 1.0, %v1105
    %v1107 = vtanh.pop %v1100
    %v1109 = vrot.slane %v1042, 6
    %v1111 = vmul.f32 %v1106, %v1109
    %1113 = vrot.lane.b32.xlu0 %v1107, 64
    %v1114 = vpop.permute.xlu0 %1113
    %v1116 = vmul.f32 %v1106, %v1114
    %1118 = vrot.lane.b32.xlu0 %v1116, 32
    %v1119 = vpop.permute.xlu0 %1118
    %v1121 = vadd.f32 %v1111, %v1119
    %v1122 = vtanh.pop %v1121
    %1124 = vrot.lane.b32.xlu0 %v1122, 64
    %v1125 = vpop.permute.xlu0 %1124
    %v1127 = vmul.f32 %v1106, %v1125
    %v1128 = vpack.c.bf16 %v1127, %v1127
    %v1130 = vrot.slane %v1128, 2
    %1131 = vrot.lane.b32.xlu0 %v1130, 32
    %v1132 = vpop.permute.xlu0 %1131
    %v1134 = vsel %vm194, %v1132, 0
    %1136 = vmatprep.subr.bf16.mxu0 0
    %1137 = vmatpush1.bf16.msra.mxu0 0
    %1138 = vmatprep.subr.bf16.mxu0 0
    %1139 = vmatpush1.bf16.msra.mxu0 0
    %1140 = vmatprep.subr.bf16.mxu0 0
    %1141 = vmatpush1.bf16.msra.mxu0 0
    %1142 = vmatprep.subr.bf16.mxu0 0
    %1143 = vmatpush1.bf16.msra.mxu0 0
    %1144 = vmatprep.subr.bf16.mxu0 0
    %1145 = vmatpush1.bf16.msra.mxu0 0
    %1146 = vmatprep.subr.bf16.mxu0 0
    %1147 = vmatpush1.bf16.msra.mxu0 0
    %1148 = vmatprep.subr.bf16.mxu0 0
    %1149 = vmatpush1.bf16.msra.mxu0 %v903
    %1150 = vmatprep.subr.bf16.mxu0 0
    %1151 = vmatpush1.bf16.msra.mxu0 %v902
    %1152 = vmatprep.subr.bf16.mxu0 0
    %1153 = vmatpush2.bf16.msra.mxu0 0
    %1154 = vmatprep.subr.bf16.mxu0 0
    %1155 = vmatpush2.bf16.msra.mxu0 0
    %1156 = vmatprep.subr.bf16.mxu0 0
    %1157 = vmatpush2.bf16.msra.mxu0 0
    %1158 = vmatprep.subr.bf16.mxu0 0
    %1159 = vmatpush2.bf16.msra.mxu0 0
    %1160 = vmatprep.subr.bf16.mxu0 0
    %1161 = vmatpush2.bf16.msra.mxu0 0
    %1162 = vmatprep.subr.bf16.mxu0 0
    %1163 = vmatpush2.bf16.msra.mxu0 0
    %1164 = vmatprep.subr.bf16.mxu0 0
    %1165 = vmatpush2.bf16.msra.mxu0 0
    %1166 = vmatprep.subr.bf16.mxu0 0
    %1167 = vmatpush2.bf16.msra.mxu0 0
    %1168 = vmatprep.mubr.bf16.mxu0 0
    %1169 = vmatmul.mubr.bf16.gmra.mxu0 %v1134
    %v1170 = vpop.f32.mrf.mxu0
    %v1171 = vadd.f32 0.0, %v1170
    %v1172 = vpop.f32.mrf.mxu0
    %v1173 = vpop.f32.mrf.mxu0
    %v1174 = vpop.f32.mrf.mxu0
    %1175 = vdwg.mxu0
    %v1177 = vrot.slane %v1171, 2
    %v1179 = vadd.f32 %v888, %v1177
    %v1180 = vxor.u32 %v1179, 2147483648
    %v1181 = vmul.f32 %v1180, 1.442695
    %v1182 = vpow.pop %v1181
    %v1183 = vadd.f32 %v1182, 1.0
    %v1184 = vrcp.pop %v1183
    %v1185 = vmul.f32 1.0, %v1184
    %v1186 = vtanh.pop %v1179
    %v1188 = vrot.slane %v1121, 6
    %v1190 = vmul.f32 %v1185, %v1188
    %1192 = vrot.lane.b32.xlu0 %v1186, 64
    %v1193 = vpop.permute.xlu0 %1192
    %v1195 = vmul.f32 %v1185, %v1193
    %1197 = vrot.lane.b32.xlu0 %v1195, 32
    %v1198 = vpop.permute.xlu0 %1197
    %v1200 = vadd.f32 %v1190, %v1198
    %v1201 = vtanh.pop %v1200
    %1203 = vrot.lane.b32.xlu0 %v1201, 64
    %v1204 = vpop.permute.xlu0 %1203
    %v1206 = vmul.f32 %v1185, %v1204
    %v1207 = vpack.c.bf16 %v1206, %v1206
    %v1209 = vrot.slane %v1207, 3
    %1210 = vrot.lane.b32.xlu0 %v1209, 32
    %v1211 = vpop.permute.xlu0 %1210
    %v1213 = vsel %vm194, %v1211, 0
    %1215 = vmatprep.subr.bf16.mxu0 0
    %1216 = vmatpush1.bf16.msra.mxu0 0
    %1217 = vmatprep.subr.bf16.mxu0 0
    %1218 = vmatpush1.bf16.msra.mxu0 0
    %1219 = vmatprep.subr.bf16.mxu0 0
    %1220 = vmatpush1.bf16.msra.mxu0 0
    %1221 = vmatprep.subr.bf16.mxu0 0
    %1222 = vmatpush1.bf16.msra.mxu0 0
    %1223 = vmatprep.subr.bf16.mxu0 0
    %1224 = vmatpush1.bf16.msra.mxu0 0
    %1225 = vmatprep.subr.bf16.mxu0 0
    %1226 = vmatpush1.bf16.msra.mxu0 0
    %1227 = vmatprep.subr.bf16.mxu0 0
    %1228 = vmatpush1.bf16.msra.mxu0 %v903
    %1229 = vmatprep.subr.bf16.mxu0 0
    %1230 = vmatpush1.bf16.msra.mxu0 %v902
    %1231 = vmatprep.subr.bf16.mxu0 0
    %1232 = vmatpush2.bf16.msra.mxu0 0
    %1233 = vmatprep.subr.bf16.mxu0 0
    %1234 = vmatpush2.bf16.msra.mxu0 0
    %1235 = vmatprep.subr.bf16.mxu0 0
    %1236 = vmatpush2.bf16.msra.mxu0 0
    %1237 = vmatprep.subr.bf16.mxu0 0
    %1238 = vmatpush2.bf16.msra.mxu0 0
    %1239 = vmatprep.subr.bf16.mxu0 0
    %1240 = vmatpush2.bf16.msra.mxu0 0
    %1241 = vmatprep.subr.bf16.mxu0 0
    %1242 = vmatpush2.bf16.msra.mxu0 0
    %1243 = vmatprep.subr.bf16.mxu0 0
    %1244 = vmatpush2.bf16.msra.mxu0 0
    %1245 = vmatprep.subr.bf16.mxu0 0
    %1246 = vmatpush2.bf16.msra.mxu0 0
    %1247 = vmatprep.mubr.bf16.mxu0 0
    %1248 = vmatmul.mubr.bf16.gmra.mxu0 %v1213
    %v1249 = vpop.f32.mrf.mxu0
    %v1250 = vadd.f32 0.0, %v1249
    %v1251 = vpop.f32.mrf.mxu0
    %v1252 = vpop.f32.mrf.mxu0
    %v1253 = vpop.f32.mrf.mxu0
    %1254 = vdwg.mxu0
    %v1255 = vadd.f32 %v891, %v1250
    %v1256 = vxor.u32 %v1255, 2147483648
    %v1257 = vmul.f32 %v1256, 1.442695
    %v1258 = vpow.pop %v1257
    %v1259 = vadd.f32 %v1258, 1.0
    %v1260 = vrcp.pop %v1259
    %v1261 = vmul.f32 1.0, %v1260
    %v1262 = vtanh.pop %v1255
    %v1264 = vrot.slane %v1200, 6
    %v1266 = vmul.f32 %v1261, %v1264
    %1268 = vrot.lane.b32.xlu0 %v1262, 64
    %v1269 = vpop.permute.xlu0 %1268
    %v1271 = vmul.f32 %v1261, %v1269
    %1273 = vrot.lane.b32.xlu0 %v1271, 32
    %v1274 = vpop.permute.xlu0 %1273
    %v1276 = vadd.f32 %v1266, %v1274
    %v1277 = vtanh.pop %v1276
    %1279 = vrot.lane.b32.xlu0 %v1277, 64
    %v1280 = vpop.permute.xlu0 %1279
    %v1282 = vmul.f32 %v1261, %v1280
    %v1283 = vpack.c.bf16 %v1282, %v1282
    %1285 = vrot.lane.b32.xlu0 %v1283, 32
    %v1286 = vpop.permute.xlu0 %1285
    %v1288 = vsel %vm194, %v1286, 0
    %1290 = vmatprep.subr.bf16.mxu0 0
    %1291 = vmatpush1.bf16.msra.mxu0 0
    %1292 = vmatprep.subr.bf16.mxu0 0
    %1293 = vmatpush1.bf16.msra.mxu0 0
    %1294 = vmatprep.subr.bf16.mxu0 0
    %1295 = vmatpush1.bf16.msra.mxu0 0
    %1296 = vmatprep.subr.bf16.mxu0 0
    %1297 = vmatpush1.bf16.msra.mxu0 0
    %1298 = vmatprep.subr.bf16.mxu0 0
    %1299 = vmatpush1.bf16.msra.mxu0 0
    %1300 = vmatprep.subr.bf16.mxu0 0
    %1301 = vmatpush1.bf16.msra.mxu0 0
    %1302 = vmatprep.subr.bf16.mxu0 0
    %1303 = vmatpush1.bf16.msra.mxu0 %v903
    %1304 = vmatprep.subr.bf16.mxu0 0
    %1305 = vmatpush1.bf16.msra.mxu0 %v902
    %1306 = vmatprep.subr.bf16.mxu0 0
    %1307 = vmatpush2.bf16.msra.mxu0 0
    %1308 = vmatprep.subr.bf16.mxu0 0
    %1309 = vmatpush2.bf16.msra.mxu0 0
    %1310 = vmatprep.subr.bf16.mxu0 0
    %1311 = vmatpush2.bf16.msra.mxu0 0
    %1312 = vmatprep.subr.bf16.mxu0 0
    %1313 = vmatpush2.bf16.msra.mxu0 0
    %1314 = vmatprep.subr.bf16.mxu0 0
    %1315 = vmatpush2.bf16.msra.mxu0 0
    %1316 = vmatprep.subr.bf16.mxu0 0
    %1317 = vmatpush2.bf16.msra.mxu0 0
    %1318 = vmatprep.subr.bf16.mxu0 0
    %1319 = vmatpush2.bf16.msra.mxu0 0
    %1320 = vmatprep.subr.bf16.mxu0 0
    %1321 = vmatpush2.bf16.msra.mxu0 0
    %1322 = vmatprep.mubr.bf16.mxu0 0
    %1323 = vmatmul.mubr.bf16.gmra.mxu0 %v1288
    %v1324 = vpop.f32.mrf.mxu0
    %v1325 = vadd.f32 0.0, %v1324
    %v1326 = vpop.f32.mrf.mxu0
    %v1327 = vpop.f32.mrf.mxu0
    %v1328 = vpop.f32.mrf.mxu0
    %1329 = vdwg.mxu0
    %v1331 = vrot.slane %v1325, 6
    %v1333 = vadd.f32 %v891, %v1331
    %v1334 = vxor.u32 %v1333, 2147483648
    %v1335 = vmul.f32 %v1334, 1.442695
    %v1336 = vpow.pop %v1335
    %v1337 = vadd.f32 %v1336, 1.0
    %v1338 = vrcp.pop %v1337
    %v1339 = vmul.f32 1.0, %v1338
    %v1340 = vtanh.pop %v1333
    %v1342 = vrot.slane %v1276, 6
    %v1344 = vmul.f32 %v1339, %v1342
    %1346 = vrot.lane.b32.xlu0 %v1340, 64
    %v1347 = vpop.permute.xlu0 %1346
    %v1349 = vmul.f32 %v1339, %v1347
    %1351 = vrot.lane.b32.xlu0 %v1349, 32
    %v1352 = vpop.permute.xlu0 %1351
    %v1354 = vadd.f32 %v1344, %v1352
    %v1355 = vtanh.pop %v1354
    %1357 = vrot.lane.b32.xlu0 %v1355, 64
    %v1358 = vpop.permute.xlu0 %1357
    %v1360 = vmul.f32 %v1339, %v1358
    %v1361 = vpack.c.bf16 %v1360, %v1360
    %v1363 = vrot.slane %v1361, 1
    %1364 = vrot.lane.b32.xlu0 %v1363, 32
    %v1365 = vpop.permute.xlu0 %1364
    %v1367 = vsel %vm194, %v1365, 0
    %1369 = vmatprep.subr.bf16.mxu0 0
    %1370 = vmatpush1.bf16.msra.mxu0 0
    %1371 = vmatprep.subr.bf16.mxu0 0
    %1372 = vmatpush1.bf16.msra.mxu0 0
    %1373 = vmatprep.subr.bf16.mxu0 0
    %1374 = vmatpush1.bf16.msra.mxu0 0
    %1375 = vmatprep.subr.bf16.mxu0 0
    %1376 = vmatpush1.bf16.msra.mxu0 0
    %1377 = vmatprep.subr.bf16.mxu0 0
    %1378 = vmatpush1.bf16.msra.mxu0 0
    %1379 = vmatprep.subr.bf16.mxu0 0
    %1380 = vmatpush1.bf16.msra.mxu0 0
    %1381 = vmatprep.subr.bf16.mxu0 0
    %1382 = vmatpush1.bf16.msra.mxu0 %v903
    %1383 = vmatprep.subr.bf16.mxu0 0
    %1384 = vmatpush1.bf16.msra.mxu0 %v902
    %1385 = vmatprep.subr.bf16.mxu0 0
    %1386 = vmatpush2.bf16.msra.mxu0 0
    %1387 = vmatprep.subr.bf16.mxu0 0
    %1388 = vmatpush2.bf16.msra.mxu0 0
    %1389 = vmatprep.subr.bf16.mxu0 0
    %1390 = vmatpush2.bf16.msra.mxu0 0
    %1391 = vmatprep.subr.bf16.mxu0 0
    %1392 = vmatpush2.bf16.msra.mxu0 0
    %1393 = vmatprep.subr.bf16.mxu0 0
    %1394 = vmatpush2.bf16.msra.mxu0 0
    %1395 = vmatprep.subr.bf16.mxu0 0
    %1396 = vmatpush2.bf16.msra.mxu0 0
    %1397 = vmatprep.subr.bf16.mxu0 0
    %1398 = vmatpush2.bf16.msra.mxu0 0
    %1399 = vmatprep.subr.bf16.mxu0 0
    %1400 = vmatpush2.bf16.msra.mxu0 0
    %1401 = vmatprep.mubr.bf16.mxu0 0
    %1402 = vmatmul.mubr.bf16.gmra.mxu0 %v1367
    %v1403 = vpop.f32.mrf.mxu0
    %v1404 = vadd.f32 0.0, %v1403
    %v1405 = vpop.f32.mrf.mxu0
    %v1406 = vpop.f32.mrf.mxu0
    %v1407 = vpop.f32.mrf.mxu0
    %1408 = vdwg.mxu0
    %v1410 = vrot.slane %v1404, 4
    %v1412 = vadd.f32 %v891, %v1410
    %v1413 = vxor.u32 %v1412, 2147483648
    %v1414 = vmul.f32 %v1413, 1.442695
    %v1415 = vpow.pop %v1414
    %v1416 = vadd.f32 %v1415, 1.0
    %v1417 = vrcp.pop %v1416
    %v1418 = vmul.f32 1.0, %v1417
    %v1419 = vtanh.pop %v1412
    %v1421 = vrot.slane %v1354, 6
    %v1423 = vmul.f32 %v1418, %v1421
    %1425 = vrot.lane.b32.xlu0 %v1419, 64
    %v1426 = vpop.permute.xlu0 %1425
    %v1428 = vmul.f32 %v1418, %v1426
    %1430 = vrot.lane.b32.xlu0 %v1428, 32
    %v1431 = vpop.permute.xlu0 %1430
    %v1433 = vadd.f32 %v1423, %v1431
    %v1434 = vtanh.pop %v1433
    %1436 = vrot.lane.b32.xlu0 %v1434, 64
    %v1437 = vpop.permute.xlu0 %1436
    %v1439 = vmul.f32 %v1418, %v1437
    %v1440 = vpack.c.bf16 %v1439, %v1439
    %v1442 = vrot.slane %v1440, 2
    %1443 = vrot.lane.b32.xlu0 %v1442, 32
    %v1444 = vpop.permute.xlu0 %1443
    %v1446 = vsel %vm194, %v1444, 0
    %1448 = vmatprep.subr.bf16.mxu0 0
    %1449 = vmatpush1.bf16.msra.mxu0 0
    %1450 = vmatprep.subr.bf16.mxu0 0
    %1451 = vmatpush1.bf16.msra.mxu0 0
    %1452 = vmatprep.subr.bf16.mxu0 0
    %1453 = vmatpush1.bf16.msra.mxu0 0
    %1454 = vmatprep.subr.bf16.mxu0 0
    %1455 = vmatpush1.bf16.msra.mxu0 0
    %1456 = vmatprep.subr.bf16.mxu0 0
    %1457 = vmatpush1.bf16.msra.mxu0 0
    %1458 = vmatprep.subr.bf16.mxu0 0
    %1459 = vmatpush1.bf16.msra.mxu0 0
    %1460 = vmatprep.subr.bf16.mxu0 0
    %1461 = vmatpush1.bf16.msra.mxu0 %v903
    %1462 = vmatprep.subr.bf16.mxu0 0
    %1463 = vmatpush1.bf16.msra.mxu0 %v902
    %1464 = vmatprep.subr.bf16.mxu0 0
    %1465 = vmatpush2.bf16.msra.mxu0 0
    %1466 = vmatprep.subr.bf16.mxu0 0
    %1467 = vmatpush2.bf16.msra.mxu0 0
    %1468 = vmatprep.subr.bf16.mxu0 0
    %1469 = vmatpush2.bf16.msra.mxu0 0
    %1470 = vmatprep.subr.bf16.mxu0 0
    %1471 = vmatpush2.bf16.msra.mxu0 0
    %1472 = vmatprep.subr.bf16.mxu0 0
    %1473 = vmatpush2.bf16.msra.mxu0 0
    %1474 = vmatprep.subr.bf16.mxu0 0
    %1475 = vmatpush2.bf16.msra.mxu0 0
    %1476 = vmatprep.subr.bf16.mxu0 0
    %1477 = vmatpush2.bf16.msra.mxu0 0
    %1478 = vmatprep.subr.bf16.mxu0 0
    %1479 = vmatpush2.bf16.msra.mxu0 0
    %1480 = vmatprep.mubr.bf16.mxu0 0
    %1481 = vmatmul.mubr.bf16.gmra.mxu0 %v1446
    %v1482 = vpop.f32.mrf.mxu0
    %v1483 = vadd.f32 0.0, %v1482
    %v1484 = vpop.f32.mrf.mxu0
    %v1485 = vpop.f32.mrf.mxu0
    %v1486 = vpop.f32.mrf.mxu0
    %1487 = vdwg.mxu0
    %v1489 = vrot.slane %v1483, 2
    %v1491 = vadd.f32 %v891, %v1489
    %v1492 = vxor.u32 %v1491, 2147483648
    %v1493 = vmul.f32 %v1492, 1.442695
    %v1494 = vpow.pop %v1493
    %v1495 = vadd.f32 %v1494, 1.0
    %v1496 = vrcp.pop %v1495
    %v1497 = vmul.f32 1.0, %v1496
    %v1498 = vtanh.pop %v1491
    %v1500 = vrot.slane %v1433, 6
    %v1502 = vmul.f32 %v1497, %v1500
    %1504 = vrot.lane.b32.xlu0 %v1498, 64
    %v1505 = vpop.permute.xlu0 %1504
    %v1507 = vmul.f32 %v1497, %v1505
    %1509 = vrot.lane.b32.xlu0 %v1507, 32
    %v1510 = vpop.permute.xlu0 %1509
    %v1512 = vadd.f32 %v1502, %v1510
    %v1513 = vtanh.pop %v1512
    %1515 = vrot.lane.b32.xlu0 %v1513, 64
    %v1516 = vpop.permute.xlu0 %1515
    %v1518 = vmul.f32 %v1497, %v1516
    %v1521 = vunpack.c.l.s4 1966171168
    %v1522 = vunpack.c.0.s8 %v1521
    %v1523 = vlaneseq
    %v1524 = vshrl.u32 %v1523, 7
    %v1525 = vsub.s32 %v1522, %v1524
    %v1526 = vrot.slane %v970, %v1525
    %v1527 = vcombine.high %v1526, %v1526
    %v1529 = vunpack.c.l.s4 1966171168
    %v1530 = vunpack.c.0.s8 %v1529
    %v1531 = vlaneseq
    %v1532 = vshrl.u32 %v1531, 7
    %v1533 = vsub.s32 %v1530, %v1532
    %v1534 = vrot.slane %v1526, %v1533
    %v1536 = vunpack.c.l.s4 1966171168
    %v1537 = vunpack.c.0.s8 %v1536
    %v1538 = vlaneseq
    %v1539 = vshrl.u32 %v1538, 7
    %v1540 = vsub.s32 %v1537, %v1539
    %v1541 = vrot.slane %v1527, %v1540
    %v1546 = vunpack.c.l.s4 1966171168
    %v1547 = vunpack.c.0.s8 %v1546
    %v1548 = vlaneseq
    %v1549 = vshrl.u32 %v1548, 7
    %v1550 = vsub.s32 %v1547, %v1549
    %v1551 = vrot.slane %v1048, %v1550
    %v1552 = vcombine.high %v1551, %v1551
    %v1554 = vunpack.c.l.s4 1966171168
    %v1555 = vunpack.c.0.s8 %v1554
    %v1556 = vlaneseq
    %v1557 = vshrl.u32 %v1556, 7
    %v1558 = vsub.s32 %v1555, %v1557
    %v1559 = vrot.slane %v1551, %v1558
    %v1561 = vunpack.c.l.s4 1966171168
    %v1562 = vunpack.c.0.s8 %v1561
    %v1563 = vlaneseq
    %v1564 = vshrl.u32 %v1563, 7
    %v1565 = vsub.s32 %v1562, %v1564
    %v1566 = vrot.slane %v1552, %v1565
    %v1567 = vcombine.high %v1559, %v1559
    %v1568 = vcombine.high %v1566, %v1566
    %v1570 = vcombine.high %v1127, %v1127
    %v1572 = vunpack.c.l.s4 1966171168
    %v1573 = vunpack.c.0.s8 %v1572
    %v1574 = vlaneseq
    %v1575 = vshrl.u32 %v1574, 7
    %v1576 = vsub.s32 %v1573, %v1575
    %v1577 = vrot.slane %v1570, %v1576
    %v1578 = vcombine.high %v1577, %v1577
    %v1580 = vunpack.c.l.s4 1966171168
    %v1581 = vunpack.c.0.s8 %v1580
    %v1582 = vlaneseq
    %v1583 = vshrl.u32 %v1582, 7
    %v1584 = vsub.s32 %v1581, %v1583
    %v1585 = vrot.slane %v1577, %v1584
    %v1587 = vunpack.c.l.s4 1966171168
    %v1588 = vunpack.c.0.s8 %v1587
    %v1589 = vlaneseq
    %v1590 = vshrl.u32 %v1589, 7
    %v1591 = vsub.s32 %v1588, %v1590
    %v1592 = vrot.slane %v1578, %v1591
    %v1594 = vcombine.high %v1206, %v1206
    %v1596 = vunpack.c.l.s4 1966171168
    %v1597 = vunpack.c.0.s8 %v1596
    %v1598 = vlaneseq
    %v1599 = vshrl.u32 %v1598, 7
    %v1600 = vsub.s32 %v1597, %v1599
    %v1601 = vrot.slane %v1594, %v1600
    %v1602 = vcombine.high %v1601, %v1601
    %v1604 = vunpack.c.l.s4 1966171168
    %v1605 = vunpack.c.0.s8 %v1604
    %v1606 = vlaneseq
    %v1607 = vshrl.u32 %v1606, 7
    %v1608 = vsub.s32 %v1605, %v1607
    %v1609 = vrot.slane %v1601, %v1608
    %v1611 = vunpack.c.l.s4 1966171168
    %v1612 = vunpack.c.0.s8 %v1611
    %v1613 = vlaneseq
    %v1614 = vshrl.u32 %v1613, 7
    %v1615 = vsub.s32 %v1612, %v1614
    %v1616 = vrot.slane %v1602, %v1615
    %v1617 = vcombine.high %v1609, %v1609
    %v1618 = vcombine.high %v1616, %v1616
    %v1621 = vunpack.c.l.s4 1966171168
    %v1622 = vunpack.c.0.s8 %v1621
    %v1623 = vlaneseq
    %v1624 = vshrl.u32 %v1623, 7
    %v1625 = vsub.s32 %v1622, %v1624
    %v1626 = vrot.slane %v1282, %v1625
    %v1627 = vcombine.high %v1626, %v1626
    %v1629 = vunpack.c.l.s4 1966171168
    %v1630 = vunpack.c.0.s8 %v1629
    %v1631 = vlaneseq
    %v1632 = vshrl.u32 %v1631, 7
    %v1633 = vsub.s32 %v1630, %v1632
    %v1634 = vrot.slane %v1626, %v1633
    %v1636 = vunpack.c.l.s4 1966171168
    %v1637 = vunpack.c.0.s8 %v1636
    %v1638 = vlaneseq
    %v1639 = vshrl.u32 %v1638, 7
    %v1640 = vsub.s32 %v1637, %v1639
    %v1641 = vrot.slane %v1627, %v1640
    %v1644 = vunpack.c.l.s4 1966171168
    %v1645 = vunpack.c.0.s8 %v1644
    %v1646 = vlaneseq
    %v1647 = vshrl.u32 %v1646, 7
    %v1648 = vsub.s32 %v1645, %v1647
    %v1649 = vrot.slane %v1360, %v1648
    %v1650 = vcombine.high %v1649, %v1649
    %v1652 = vunpack.c.l.s4 1966171168
    %v1653 = vunpack.c.0.s8 %v1652
    %v1654 = vlaneseq
    %v1655 = vshrl.u32 %v1654, 7
    %v1656 = vsub.s32 %v1653, %v1655
    %v1657 = vrot.slane %v1649, %v1656
    %v1659 = vunpack.c.l.s4 1966171168
    %v1660 = vunpack.c.0.s8 %v1659
    %v1661 = vlaneseq
    %v1662 = vshrl.u32 %v1661, 7
    %v1663 = vsub.s32 %v1660, %v1662
    %v1664 = vrot.slane %v1650, %v1663
    %v1665 = vcombine.high %v1657, %v1657
    %v1666 = vcombine.high %v1664, %v1664
    %v1668 = vcombine.high %v1439, %v1439
    %v1670 = vunpack.c.l.s4 1966171168
    %v1671 = vunpack.c.0.s8 %v1670
    %v1672 = vlaneseq
    %v1673 = vshrl.u32 %v1672, 7
    %v1674 = vsub.s32 %v1671, %v1673
    %v1675 = vrot.slane %v1668, %v1674
    %v1676 = vcombine.high %v1675, %v1675
    %v1678 = vunpack.c.l.s4 1966171168
    %v1679 = vunpack.c.0.s8 %v1678
    %v1680 = vlaneseq
    %v1681 = vshrl.u32 %v1680, 7
    %v1682 = vsub.s32 %v1679, %v1681
    %v1683 = vrot.slane %v1675, %v1682
    %v1685 = vunpack.c.l.s4 1966171168
    %v1686 = vunpack.c.0.s8 %v1685
    %v1687 = vlaneseq
    %v1688 = vshrl.u32 %v1687, 7
    %v1689 = vsub.s32 %v1686, %v1688
    %v1690 = vrot.slane %v1676, %v1689
    %v1692 = vcombine.high %v1518, %v1518
    %v1694 = vunpack.c.l.s4 1966171168
    %v1695 = vunpack.c.0.s8 %v1694
    %v1696 = vlaneseq
    %v1697 = vshrl.u32 %v1696, 7
    %v1698 = vsub.s32 %v1695, %v1697
    %v1699 = vrot.slane %v1692, %v1698
    %v1700 = vcombine.high %v1699, %v1699
    %v1702 = vunpack.c.l.s4 1966171168
    %v1703 = vunpack.c.0.s8 %v1702
    %v1704 = vlaneseq
    %v1705 = vshrl.u32 %v1704, 7
    %v1706 = vsub.s32 %v1703, %v1705
    %v1707 = vrot.slane %v1699, %v1706
    %v1709 = vunpack.c.l.s4 1966171168
    %v1710 = vunpack.c.0.s8 %v1709
    %v1711 = vlaneseq
    %v1712 = vshrl.u32 %v1711, 7
    %v1713 = vsub.s32 %v1710, %v1712
    %v1714 = vrot.slane %v1700, %v1713
    %v1715 = vcombine.high %v1707, %v1707
    %v1716 = vcombine.high %v1714, %v1714
    %v1717 = vlaneseq
    %v1718 = vshrl.u32 %v1717, 7
    %v1719 = vsub.s32 0, %v1718
    %v1720 = vrot.slane %v1567, %v1719
    %v1721 = vlaneseq
    %v1722 = vshrl.u32 %v1721, 7
    %v1723 = vsub.s32 0, %v1722
    %v1724 = vrot.slane %v1568, %v1723
    %v1727 = vlaneseq
    %v1728 = vshrl.u32 %v1727, 7
    %v1729 = vsub.s32 0, %v1728
    %v1730 = vrot.slane %v1585, %v1729
    %v1731 = vlaneseq
    %v1732 = vshrl.u32 %v1731, 7
    %v1733 = vsub.s32 0, %v1732
    %v1734 = vrot.slane %v1592, %v1733
    %v1737 = vlaneseq
    %v1738 = vshrl.u32 %v1737, 7
    %v1739 = vsub.s32 0, %v1738
    %v1740 = vrot.slane %v1617, %v1739
    %v1741 = vlaneseq
    %v1742 = vshrl.u32 %v1741, 7
    %v1743 = vsub.s32 0, %v1742
    %v1744 = vrot.slane %v1618, %v1743
    %v1747 = vlaneseq
    %v1748 = vshrl.u32 %v1747, 7
    %v1749 = vsub.s32 0, %v1748
    %v1750 = vrot.slane %v1634, %v1749
    %v1751 = vlaneseq
    %v1752 = vshrl.u32 %v1751, 7
    %v1753 = vsub.s32 0, %v1752
    %v1754 = vrot.slane %v1641, %v1753
    %v1757 = vlaneseq
    %v1758 = vshrl.u32 %v1757, 7
    %v1759 = vsub.s32 0, %v1758
    %v1760 = vrot.slane %v1665, %v1759
    %v1761 = vlaneseq
    %v1762 = vshrl.u32 %v1761, 7
    %v1763 = vsub.s32 0, %v1762
    %v1764 = vrot.slane %v1666, %v1763
    %v1767 = vlaneseq
    %v1768 = vshrl.u32 %v1767, 7
    %v1769 = vsub.s32 0, %v1768
    %v1770 = vrot.slane %v1683, %v1769
    %v1771 = vlaneseq
    %v1772 = vshrl.u32 %v1771, 7
    %v1773 = vsub.s32 0, %v1772
    %v1774 = vrot.slane %v1690, %v1773
    %v1777 = vlaneseq
    %v1778 = vshrl.u32 %v1777, 7
    %v1779 = vsub.s32 0, %v1778
    %v1780 = vrot.slane %v1715, %v1779
    %v1781 = vlaneseq
    %v1782 = vshrl.u32 %v1781, 7
    %v1783 = vsub.s32 0, %v1782
    %v1784 = vrot.slane %v1716, %v1783
    %vm1787 = vcmask 1040384
    %v1788 = vsel %vm1787, %v1534, %v1720
    %v1789 = vsel %vm1787, %v1541, %v1724
    %v1790 = vsel %vm811, %v1788, %v1730
    %v1791 = vsel %vm811, %v1789, %v1734
    %vm1792 = vcmask 1042432
    %v1793 = vsel %vm1792, %v1790, %v1740
    %v1794 = vsel %vm1792, %v1791, %v1744
    %v1795 = vsel %vm137, %v1793, %v1750
    %v1796 = vsel %vm137, %v1794, %v1754
    %vm1797 = vcmask 1044480
    %v1798 = vsel %vm1797, %v1795, %v1760
    %v1799 = vsel %vm1797, %v1796, %v1764
    %v1800 = vsel %vm814, %v1798, %v1770
    %v1801 = vsel %vm814, %v1799, %v1774
    %vm1802 = vcmask 1046528
    %v1803 = vsel %vm1802, %v1800, %v1780
    %v1804 = vsel %vm1802, %v1801, %v1784
    %v1805 = vpack.c.bf16 %v1804, %v1803
    %v1806 = vld [vmem:[%s5] sm:$0xf]
    %v1807 = vld [vmem:[%s5 + $0x4] sm:$0xf]
    %v1808 = vld [vmem:[%s5 + $0x8] sm:$0xf]
    %v1809 = vld [vmem:[%s5 + $0xc] sm:$0xf]
    %v1810 = vld [vmem:[%s14 + $0x2] sm:$0x1]
    %v1812 = vlaneseq
    %v1813 = vshrl.u32 %v1812, 7
    %v1814 = vsub.s32 0, %v1813
    %v1815 = vrot.slane %v1810, %v1814
    %1818 = vrot.lane.b32.xlu0 %v1805, 32
    %v1819 = vpop.permute.xlu0 %1818
    %v1824 = vunpack.c.l.b16 %v1806
    %v1825 = vunpack.c.l.b16 %v1807
    %v1826 = vunpack.c.l.b16 %v1808
    %v1827 = vunpack.c.l.b16 %v1809
    %v1828 = vpack.c.b16 %v1825, %v1824
    %v1829 = vpack.c.b16 %v1827, %v1826
    %v1833 = vsel %vm194, %v1819, 0
    %1835 = vmatprep.subr.bf16.mxu0 0
    %1836 = vmatpush1.bf16.msra.mxu0 0
    %1837 = vmatprep.subr.bf16.mxu0 0
    %1838 = vmatpush1.bf16.msra.mxu0 0
    %1839 = vmatprep.subr.bf16.mxu0 0
    %1840 = vmatpush1.bf16.msra.mxu0 0
    %1841 = vmatprep.subr.bf16.mxu0 0
    %1842 = vmatpush1.bf16.msra.mxu0 0
    %1843 = vmatprep.subr.bf16.mxu0 0
    %1844 = vmatpush1.bf16.msra.mxu0 0
    %1845 = vmatprep.subr.bf16.mxu0 0
    %1846 = vmatpush1.bf16.msra.mxu0 0
    %1847 = vmatprep.subr.bf16.mxu0 0
    %1848 = vmatpush1.bf16.msra.mxu0 %v1829
    %1849 = vmatprep.subr.bf16.mxu0 0
    %1850 = vmatpush1.bf16.msra.mxu0 %v1828
    %1851 = vmatprep.subr.bf16.mxu0 0
    %1852 = vmatpush2.bf16.msra.mxu0 0
    %1853 = vmatprep.subr.bf16.mxu0 0
    %1854 = vmatpush2.bf16.msra.mxu0 0
    %1855 = vmatprep.subr.bf16.mxu0 0
    %1856 = vmatpush2.bf16.msra.mxu0 0
    %1857 = vmatprep.subr.bf16.mxu0 0
    %1858 = vmatpush2.bf16.msra.mxu0 0
    %1859 = vmatprep.subr.bf16.mxu0 0
    %1860 = vmatpush2.bf16.msra.mxu0 0
    %1861 = vmatprep.subr.bf16.mxu0 0
    %1862 = vmatpush2.bf16.msra.mxu0 0
    %1863 = vmatprep.subr.bf16.mxu0 0
    %1864 = vmatpush2.bf16.msra.mxu0 0
    %1865 = vmatprep.subr.bf16.mxu0 0
    %1866 = vmatpush2.bf16.msra.mxu0 0
    %1867 = vmatprep.mubr.bf16.mxu0 0
    %1868 = vmatmul.mubr.bf16.gmra.mxu0 %v1833
    %v1869 = vpop.f32.mrf.mxu0
    %v1870 = vadd.f32 %v1815, %v1869
    %v1871 = vpop.f32.mrf.mxu0
    %v1872 = vpop.f32.mrf.mxu0
    %v1873 = vadd.f32 %v1815, %v1872
    %v1874 = vpop.f32.mrf.mxu0
    %1875 = vdwg.mxu0
    %1877 = vrot.lane.b32.xlu0 %v1870, 96
    %v1878 = vpop.permute.xlu0 %1877
    %v1879 = vsel %vm133, %v1870, 0
    %v1881 = vsel %vm133, %v1878, 0
    %1883 = vmatprep.subr.mxu0 0.0
    %1884 = vmatpush1.xpose.msra.mxu0 0.0
    %1885 = vmatprep.subr.mxu0 0.0
    %1886 = vmatpush1.xpose.msra.mxu0 0.0
    %1887 = vmatprep.subr.mxu0 0.0
    %1888 = vmatpush1.xpose.msra.mxu0 0.0
    %1889 = vmatprep.subr.mxu0 0.0
    %1890 = vmatpush1.xpose.msra.mxu0 0.0
    %1891 = vmatprep.subr.mxu0 0.0
    %1892 = vmatpush1.xpose.msra.mxu0 0.0
    %1893 = vmatprep.subr.mxu0 0.0
    %1894 = vmatpush1.xpose.msra.mxu0 0.0
    %1895 = vmatprep.subr.mxu0 0.0
    %1896 = vmatpush1.xpose.msra.mxu0 0.0
    %1897 = vmatprep.subr.mxu0 0.0
    %1898 = vmatpush1.xpose.msra.mxu0 0.0
    %1899 = vmatprep.subr.mxu0 0.0
    %1900 = vmatpush1.xpose.msra.mxu0 0.0
    %1901 = vmatprep.subr.mxu0 0.0
    %1902 = vmatpush1.xpose.msra.mxu0 0.0
    %1903 = vmatprep.subr.mxu0 0.0
    %1904 = vmatpush1.xpose.msra.mxu0 0.0
    %1905 = vmatprep.subr.mxu0 0.0
    %1906 = vmatpush1.xpose.msra.mxu0 0.0
    %1907 = vmatprep.subr.mxu0 0.0
    %1908 = vmatpush1.xpose.msra.mxu0 0.0
    %1909 = vmatprep.subr.mxu0 0.0
    %1910 = vmatpush1.xpose.msra.mxu0 0.0
    %1911 = vmatprep.subr.mxu0 0.0
    %1912 = vmatpush1.xpose.msra.mxu0 0.0
    %1913 = vmatprep.subr.mxu0 0.0
    %1914 = vmatpush1.xpose.msra.mxu0 %v1881
    %1915 = vmatprep.subr.mxu0 0.0
    %1916 = vmatpush2.xpose.msra.mxu0 0.0
    %1917 = vmatprep.subr.mxu0 0.0
    %1918 = vmatpush2.xpose.msra.mxu0 0.0
    %1919 = vmatprep.subr.mxu0 0.0
    %1920 = vmatpush2.xpose.msra.mxu0 0.0
    %1921 = vmatprep.subr.mxu0 0.0
    %1922 = vmatpush2.xpose.msra.mxu0 0.0
    %1923 = vmatprep.subr.mxu0 0.0
    %1924 = vmatpush2.xpose.msra.mxu0 0.0
    %1925 = vmatprep.subr.mxu0 0.0
    %1926 = vmatpush2.xpose.msra.mxu0 0.0
    %1927 = vmatprep.subr.mxu0 0.0
    %1928 = vmatpush2.xpose.msra.mxu0 0.0
    %1929 = vmatprep.subr.mxu0 0.0
    %1930 = vmatpush2.xpose.msra.mxu0 0.0
    %1931 = vmatprep.subr.mxu0 0.0
    %1932 = vmatpush2.xpose.msra.mxu0 0.0
    %1933 = vmatprep.subr.mxu0 0.0
    %1934 = vmatpush2.xpose.msra.mxu0 0.0
    %1935 = vmatprep.subr.mxu0 0.0
    %1936 = vmatpush2.xpose.msra.mxu0 0.0
    %1937 = vmatprep.subr.mxu0 0.0
    %1938 = vmatpush2.xpose.msra.mxu0 0.0
    %1939 = vmatprep.subr.mxu0 0.0
    %1940 = vmatpush2.xpose.msra.mxu0 0.0
    %1941 = vmatprep.subr.mxu0 0.0
    %1942 = vmatpush2.xpose.msra.mxu0 0.0
    %1943 = vmatprep.subr.mxu0 0.0
    %1944 = vmatpush2.xpose.msra.mxu0 0.0
    %1945 = vmatprep.subr.mxu0 0.0
    %1946 = vmatpush2.xpose.msra.mxu0 0.0
    %1947 = vmatprep.mubr.f32.mxu0 0.0
    %1948 = vmatmul.mubr.f32.gmra.mxu0 %v1879
    %v1949 = vpop.f32.mrf.mxu0
    %v1950 = vadd.f32 0.0, %v1949
    %v1951 = vpop.f32.mrf.mxu0
    %1952 = vdwg.mxu0
    %1954 = vrot.lane.b32.xlu0 %v1873, 96
    %v1955 = vpop.permute.xlu0 %1954
    %v1956 = vsel %vm133, %v1873, 0
    %v1958 = vsel %vm133, %v1955, 0
    %1960 = vmatprep.subr.mxu0 0.0
    %1961 = vmatpush1.xpose.msra.mxu0 0.0
    %1962 = vmatprep.subr.mxu0 0.0
    %1963 = vmatpush1.xpose.msra.mxu0 0.0
    %1964 = vmatprep.subr.mxu0 0.0
    %1965 = vmatpush1.xpose.msra.mxu0 0.0
    %1966 = vmatprep.subr.mxu0 0.0
    %1967 = vmatpush1.xpose.msra.mxu0 0.0
    %1968 = vmatprep.subr.mxu0 0.0
    %1969 = vmatpush1.xpose.msra.mxu0 0.0
    %1970 = vmatprep.subr.mxu0 0.0
    %1971 = vmatpush1.xpose.msra.mxu0 0.0
    %1972 = vmatprep.subr.mxu0 0.0
    %1973 = vmatpush1.xpose.msra.mxu0 0.0
    %1974 = vmatprep.subr.mxu0 0.0
    %1975 = vmatpush1.xpose.msra.mxu0 0.0
    %1976 = vmatprep.subr.mxu0 0.0
    %1977 = vmatpush1.xpose.msra.mxu0 0.0
    %1978 = vmatprep.subr.mxu0 0.0
    %1979 = vmatpush1.xpose.msra.mxu0 0.0
    %1980 = vmatprep.subr.mxu0 0.0
    %1981 = vmatpush1.xpose.msra.mxu0 0.0
    %1982 = vmatprep.subr.mxu0 0.0
    %1983 = vmatpush1.xpose.msra.mxu0 0.0
    %1984 = vmatprep.subr.mxu0 0.0
    %1985 = vmatpush1.xpose.msra.mxu0 0.0
    %1986 = vmatprep.subr.mxu0 0.0
    %1987 = vmatpush1.xpose.msra.mxu0 0.0
    %1988 = vmatprep.subr.mxu0 0.0
    %1989 = vmatpush1.xpose.msra.mxu0 0.0
    %1990 = vmatprep.subr.mxu0 0.0
    %1991 = vmatpush1.xpose.msra.mxu0 %v1958
    %1992 = vmatprep.subr.mxu0 0.0
    %1993 = vmatpush2.xpose.msra.mxu0 0.0
    %1994 = vmatprep.subr.mxu0 0.0
    %1995 = vmatpush2.xpose.msra.mxu0 0.0
    %1996 = vmatprep.subr.mxu0 0.0
    %1997 = vmatpush2.xpose.msra.mxu0 0.0
    %1998 = vmatprep.subr.mxu0 0.0
    %1999 = vmatpush2.xpose.msra.mxu0 0.0
    %2000 = vmatprep.subr.mxu0 0.0
    %2001 = vmatpush2.xpose.msra.mxu0 0.0
    %2002 = vmatprep.subr.mxu0 0.0
    %2003 = vmatpush2.xpose.msra.mxu0 0.0
    %2004 = vmatprep.subr.mxu0 0.0
    %2005 = vmatpush2.xpose.msra.mxu0 0.0
    %2006 = vmatprep.subr.mxu0 0.0
    %2007 = vmatpush2.xpose.msra.mxu0 0.0
    %2008 = vmatprep.subr.mxu0 0.0
    %2009 = vmatpush2.xpose.msra.mxu0 0.0
    %2010 = vmatprep.subr.mxu0 0.0
    %2011 = vmatpush2.xpose.msra.mxu0 0.0
    %2012 = vmatprep.subr.mxu0 0.0
    %2013 = vmatpush2.xpose.msra.mxu0 0.0
    %2014 = vmatprep.subr.mxu0 0.0
    %2015 = vmatpush2.xpose.msra.mxu0 0.0
    %2016 = vmatprep.subr.mxu0 0.0
    %2017 = vmatpush2.xpose.msra.mxu0 0.0
    %2018 = vmatprep.subr.mxu0 0.0
    %2019 = vmatpush2.xpose.msra.mxu0 0.0
    %2020 = vmatprep.subr.mxu0 0.0
    %2021 = vmatpush2.xpose.msra.mxu0 0.0
    %2022 = vmatprep.subr.mxu0 0.0
    %2023 = vmatpush2.xpose.msra.mxu0 0.0
    %2024 = vmatprep.mubr.f32.mxu0 0.0
    %2025 = vmatmul.mubr.f32.gmra.mxu0 %v1956
    %v2026 = vpop.f32.mrf.mxu0
    %v2027 = vadd.f32 0.0, %v2026
    %v2028 = vpop.f32.mrf.mxu0
    %2029 = vdwg.mxu0
    %v2030 = vsel %vm133, %v1950, -inf
    %2031 = vmax.xlane.f32.xlu0 %v2030
    %v2032 = vpop.xlane.xlu0 %2031
    %v2033 = vsel %vm133, %v2027, -inf
    %2034 = vmax.xlane.f32.xlu0 %v2033
    %v2035 = vpop.xlane.xlu0 %2034
    %v2036 = vsub.f32 %v1950, %v2032
    %v2037 = vsub.f32 %v2027, %v2035
    %v2038 = vmul.f32 %v2036, 1.442695
    %v2039 = vpow.pop %v2038
    %v2040 = vmul.f32 %v2037, 1.442695
    %v2041 = vpow.pop %v2040
    %v2042 = vsel %vm133, %v2039, 0.0
    %2043 = vadd.xlane.f32.xlu0 %v2042
    %v2044 = vpop.xlane.xlu0 %2043
    %v2045 = vsel %vm133, %v2041, 0.0
    %2046 = vadd.xlane.f32.xlu0 %v2045
    %v2047 = vpop.xlane.xlu0 %2046
    %v2048 = vrcp.pop %v2044
    %v2049 = vrcp.pop %v2047
    %v2050 = vmul.f32 %v2039, %v2048
    %v2051 = vmul.f32 %v2041, %v2049
    %2052 = vrot.lane.b32.xlu0 %v1870, 64
    %v2053 = vpop.permute.xlu0 %2052
    %v2056 = vsel %vm133, %v2050, 0
    %2058 = vmatprep.subr.mxu0 0.0
    %2059 = vmatpush1.msra.mxu0 0.0
    %2060 = vmatprep.subr.mxu0 0.0
    %2061 = vmatpush1.msra.mxu0 0.0
    %2062 = vmatprep.subr.mxu0 0.0
    %2063 = vmatpush1.msra.mxu0 0.0
    %2064 = vmatprep.subr.mxu0 0.0
    %2065 = vmatpush1.msra.mxu0 0.0
    %2066 = vmatprep.subr.mxu0 0.0
    %2067 = vmatpush1.msra.mxu0 0.0
    %2068 = vmatprep.subr.mxu0 0.0
    %2069 = vmatpush1.msra.mxu0 0.0
    %2070 = vmatprep.subr.mxu0 0.0
    %2071 = vmatpush1.msra.mxu0 0.0
    %2072 = vmatprep.subr.mxu0 0.0
    %2073 = vmatpush1.msra.mxu0 0.0
    %2074 = vmatprep.subr.mxu0 0.0
    %2075 = vmatpush1.msra.mxu0 0.0
    %2076 = vmatprep.subr.mxu0 0.0
    %2077 = vmatpush1.msra.mxu0 0.0
    %2078 = vmatprep.subr.mxu0 0.0
    %2079 = vmatpush1.msra.mxu0 0.0
    %2080 = vmatprep.subr.mxu0 0.0
    %2081 = vmatpush1.msra.mxu0 0.0
    %2082 = vmatprep.subr.mxu0 0.0
    %2083 = vmatpush1.msra.mxu0 0.0
    %2084 = vmatprep.subr.mxu0 0.0
    %2085 = vmatpush1.msra.mxu0 0.0
    %2086 = vmatprep.subr.mxu0 0.0
    %2087 = vmatpush1.msra.mxu0 0.0
    %2088 = vmatprep.subr.mxu0 0.0
    %2089 = vmatpush1.msra.mxu0 %v2053
    %2090 = vmatprep.subr.mxu0 0.0
    %2091 = vmatpush2.msra.mxu0 0.0
    %2092 = vmatprep.subr.mxu0 0.0
    %2093 = vmatpush2.msra.mxu0 0.0
    %2094 = vmatprep.subr.mxu0 0.0
    %2095 = vmatpush2.msra.mxu0 0.0
    %2096 = vmatprep.subr.mxu0 0.0
    %2097 = vmatpush2.msra.mxu0 0.0
    %2098 = vmatprep.subr.mxu0 0.0
    %2099 = vmatpush2.msra.mxu0 0.0
    %2100 = vmatprep.subr.mxu0 0.0
    %2101 = vmatpush2.msra.mxu0 0.0
    %2102 = vmatprep.subr.mxu0 0.0
    %2103 = vmatpush2.msra.mxu0 0.0
    %2104 = vmatprep.subr.mxu0 0.0
    %2105 = vmatpush2.msra.mxu0 0.0
    %2106 = vmatprep.subr.mxu0 0.0
    %2107 = vmatpush2.msra.mxu0 0.0
    %2108 = vmatprep.subr.mxu0 0.0
    %2109 = vmatpush2.msra.mxu0 0.0
    %2110 = vmatprep.subr.mxu0 0.0
    %2111 = vmatpush2.msra.mxu0 0.0
    %2112 = vmatprep.subr.mxu0 0.0
    %2113 = vmatpush2.msra.mxu0 0.0
    %2114 = vmatprep.subr.mxu0 0.0
    %2115 = vmatpush2.msra.mxu0 0.0
    %2116 = vmatprep.subr.mxu0 0.0
    %2117 = vmatpush2.msra.mxu0 0.0
    %2118 = vmatprep.subr.mxu0 0.0
    %2119 = vmatpush2.msra.mxu0 0.0
    %2120 = vmatprep.subr.mxu0 0.0
    %2121 = vmatpush2.msra.mxu0 0.0
    %2122 = vmatprep.mubr.f32.mxu0 0.0
    %2123 = vmatmul.mubr.f32.gmra.mxu0 %v2056
    %v2124 = vpop.f32.mrf.mxu0
    %v2125 = vadd.f32 0.0, %v2124
    %v2126 = vpop.f32.mrf.mxu0
    %2127 = vdwg.mxu0
    %2128 = vrot.lane.b32.xlu0 %v1873, 64
    %v2129 = vpop.permute.xlu0 %2128
    %v2132 = vsel %vm133, %v2051, 0
    %2134 = vmatprep.subr.mxu0 0.0
    %2135 = vmatpush1.msra.mxu0 0.0
    %2136 = vmatprep.subr.mxu0 0.0
    %2137 = vmatpush1.msra.mxu0 0.0
    %2138 = vmatprep.subr.mxu0 0.0
    %2139 = vmatpush1.msra.mxu0 0.0
    %2140 = vmatprep.subr.mxu0 0.0
    %2141 = vmatpush1.msra.mxu0 0.0
    %2142 = vmatprep.subr.mxu0 0.0
    %2143 = vmatpush1.msra.mxu0 0.0
    %2144 = vmatprep.subr.mxu0 0.0
    %2145 = vmatpush1.msra.mxu0 0.0
    %2146 = vmatprep.subr.mxu0 0.0
    %2147 = vmatpush1.msra.mxu0 0.0
    %2148 = vmatprep.subr.mxu0 0.0
    %2149 = vmatpush1.msra.mxu0 0.0
    %2150 = vmatprep.subr.mxu0 0.0
    %2151 = vmatpush1.msra.mxu0 0.0
    %2152 = vmatprep.subr.mxu0 0.0
    %2153 = vmatpush1.msra.mxu0 0.0
    %2154 = vmatprep.subr.mxu0 0.0
    %2155 = vmatpush1.msra.mxu0 0.0
    %2156 = vmatprep.subr.mxu0 0.0
    %2157 = vmatpush1.msra.mxu0 0.0
    %2158 = vmatprep.subr.mxu0 0.0
    %2159 = vmatpush1.msra.mxu0 0.0
    %2160 = vmatprep.subr.mxu0 0.0
    %2161 = vmatpush1.msra.mxu0 0.0
    %2162 = vmatprep.subr.mxu0 0.0
    %2163 = vmatpush1.msra.mxu0 0.0
    %2164 = vmatprep.subr.mxu0 0.0
    %2165 = vmatpush1.msra.mxu0 %v2129
    %2166 = vmatprep.subr.mxu0 0.0
    %2167 = vmatpush2.msra.mxu0 0.0
    %2168 = vmatprep.subr.mxu0 0.0
    %2169 = vmatpush2.msra.mxu0 0.0
    %2170 = vmatprep.subr.mxu0 0.0
    %2171 = vmatpush2.msra.mxu0 0.0
    %2172 = vmatprep.subr.mxu0 0.0
    %2173 = vmatpush2.msra.mxu0 0.0
    %2174 = vmatprep.subr.mxu0 0.0
    %2175 = vmatpush2.msra.mxu0 0.0
    %2176 = vmatprep.subr.mxu0 0.0
    %2177 = vmatpush2.msra.mxu0 0.0
    %2178 = vmatprep.subr.mxu0 0.0
    %2179 = vmatpush2.msra.mxu0 0.0
    %2180 = vmatprep.subr.mxu0 0.0
    %2181 = vmatpush2.msra.mxu0 0.0
    %2182 = vmatprep.subr.mxu0 0.0
    %2183 = vmatpush2.msra.mxu0 0.0
    %2184 = vmatprep.subr.mxu0 0.0
    %2185 = vmatpush2.msra.mxu0 0.0
    %2186 = vmatprep.subr.mxu0 0.0
    %2187 = vmatpush2.msra.mxu0 0.0
    %2188 = vmatprep.subr.mxu0 0.0
    %2189 = vmatpush2.msra.mxu0 0.0
    %2190 = vmatprep.subr.mxu0 0.0
    %2191 = vmatpush2.msra.mxu0 0.0
    %2192 = vmatprep.subr.mxu0 0.0
    %2193 = vmatpush2.msra.mxu0 0.0
    %2194 = vmatprep.subr.mxu0 0.0
    %2195 = vmatpush2.msra.mxu0 0.0
    %2196 = vmatprep.subr.mxu0 0.0
    %2197 = vmatpush2.msra.mxu0 0.0
    %2198 = vmatprep.mubr.f32.mxu0 0.0
    %2199 = vmatmul.mubr.f32.gmra.mxu0 %v2132
    %v2200 = vpop.f32.mrf.mxu0
    %v2201 = vadd.f32 0.0, %v2200
    %v2202 = vpop.f32.mrf.mxu0
    %2203 = vdwg.mxu0
    %2204 = vrot.lane.b32.xlu0 %v1870, 120
    %v2205 = vpop.permute.xlu0 %2204
    %2206 = vrot.lane.b32.xlu0 %v1870, 88
    %v2207 = vpop.permute.xlu0 %2206
    %v2208 = vsel %vm133, %v2205, 0
    %v2210 = vsel %vm133, %v2207, 0
    %2212 = vmatprep.subr.mxu0 0.0
    %2213 = vmatpush1.xpose.msra.mxu0 0.0
    %2214 = vmatprep.subr.mxu0 0.0
    %2215 = vmatpush1.xpose.msra.mxu0 0.0
    %2216 = vmatprep.subr.mxu0 0.0
    %2217 = vmatpush1.xpose.msra.mxu0 0.0
    %2218 = vmatprep.subr.mxu0 0.0
    %2219 = vmatpush1.xpose.msra.mxu0 0.0
    %2220 = vmatprep.subr.mxu0 0.0
    %2221 = vmatpush1.xpose.msra.mxu0 0.0
    %2222 = vmatprep.subr.mxu0 0.0
    %2223 = vmatpush1.xpose.msra.mxu0 0.0
    %2224 = vmatprep.subr.mxu0 0.0
    %2225 = vmatpush1.xpose.msra.mxu0 0.0
    %2226 = vmatprep.subr.mxu0 0.0
    %2227 = vmatpush1.xpose.msra.mxu0 0.0
    %2228 = vmatprep.subr.mxu0 0.0
    %2229 = vmatpush1.xpose.msra.mxu0 0.0
    %2230 = vmatprep.subr.mxu0 0.0
    %2231 = vmatpush1.xpose.msra.mxu0 0.0
    %2232 = vmatprep.subr.mxu0 0.0
    %2233 = vmatpush1.xpose.msra.mxu0 0.0
    %2234 = vmatprep.subr.mxu0 0.0
    %2235 = vmatpush1.xpose.msra.mxu0 0.0
    %2236 = vmatprep.subr.mxu0 0.0
    %2237 = vmatpush1.xpose.msra.mxu0 0.0
    %2238 = vmatprep.subr.mxu0 0.0
    %2239 = vmatpush1.xpose.msra.mxu0 0.0
    %2240 = vmatprep.subr.mxu0 0.0
    %2241 = vmatpush1.xpose.msra.mxu0 0.0
    %2242 = vmatprep.subr.mxu0 0.0
    %2243 = vmatpush1.xpose.msra.mxu0 %v2210
    %2244 = vmatprep.subr.mxu0 0.0
    %2245 = vmatpush2.xpose.msra.mxu0 0.0
    %2246 = vmatprep.subr.mxu0 0.0
    %2247 = vmatpush2.xpose.msra.mxu0 0.0
    %2248 = vmatprep.subr.mxu0 0.0
    %2249 = vmatpush2.xpose.msra.mxu0 0.0
    %2250 = vmatprep.subr.mxu0 0.0
    %2251 = vmatpush2.xpose.msra.mxu0 0.0
    %2252 = vmatprep.subr.mxu0 0.0
    %2253 = vmatpush2.xpose.msra.mxu0 0.0
    %2254 = vmatprep.subr.mxu0 0.0
    %2255 = vmatpush2.xpose.msra.mxu0 0.0
    %2256 = vmatprep.subr.mxu0 0.0
    %2257 = vmatpush2.xpose.msra.mxu0 0.0
    %2258 = vmatprep.subr.mxu0 0.0
    %2259 = vmatpush2.xpose.msra.mxu0 0.0
    %2260 = vmatprep.subr.mxu0 0.0
    %2261 = vmatpush2.xpose.msra.mxu0 0.0
    %2262 = vmatprep.subr.mxu0 0.0
    %2263 = vmatpush2.xpose.msra.mxu0 0.0
    %2264 = vmatprep.subr.mxu0 0.0
    %2265 = vmatpush2.xpose.msra.mxu0 0.0
    %2266 = vmatprep.subr.mxu0 0.0
    %2267 = vmatpush2.xpose.msra.mxu0 0.0
    %2268 = vmatprep.subr.mxu0 0.0
    %2269 = vmatpush2.xpose.msra.mxu0 0.0
    %2270 = vmatprep.subr.mxu0 0.0
    %2271 = vmatpush2.xpose.msra.mxu0 0.0
    %2272 = vmatprep.subr.mxu0 0.0
    %2273 = vmatpush2.xpose.msra.mxu0 0.0
    %2274 = vmatprep.subr.mxu0 0.0
    %2275 = vmatpush2.xpose.msra.mxu0 0.0
    %2276 = vmatprep.mubr.f32.mxu0 0.0
    %2277 = vmatmul.mubr.f32.gmra.mxu0 %v2208
    %v2278 = vpop.f32.mrf.mxu0
    %v2279 = vadd.f32 0.0, %v2278
    %v2280 = vpop.f32.mrf.mxu0
    %2281 = vdwg.mxu0
    %2282 = vrot.lane.b32.xlu0 %v1873, 120
    %v2283 = vpop.permute.xlu0 %2282
    %2284 = vrot.lane.b32.xlu0 %v1873, 88
    %v2285 = vpop.permute.xlu0 %2284
    %v2286 = vsel %vm133, %v2283, 0
    %v2288 = vsel %vm133, %v2285, 0
    %2290 = vmatprep.subr.mxu0 0.0
    %2291 = vmatpush1.xpose.msra.mxu0 0.0
    %2292 = vmatprep.subr.mxu0 0.0
    %2293 = vmatpush1.xpose.msra.mxu0 0.0
    %2294 = vmatprep.subr.mxu0 0.0
    %2295 = vmatpush1.xpose.msra.mxu0 0.0
    %2296 = vmatprep.subr.mxu0 0.0
    %2297 = vmatpush1.xpose.msra.mxu0 0.0
    %2298 = vmatprep.subr.mxu0 0.0
    %2299 = vmatpush1.xpose.msra.mxu0 0.0
    %2300 = vmatprep.subr.mxu0 0.0
    %2301 = vmatpush1.xpose.msra.mxu0 0.0
    %2302 = vmatprep.subr.mxu0 0.0
    %2303 = vmatpush1.xpose.msra.mxu0 0.0
    %2304 = vmatprep.subr.mxu0 0.0
    %2305 = vmatpush1.xpose.msra.mxu0 0.0
    %2306 = vmatprep.subr.mxu0 0.0
    %2307 = vmatpush1.xpose.msra.mxu0 0.0
    %2308 = vmatprep.subr.mxu0 0.0
    %2309 = vmatpush1.xpose.msra.mxu0 0.0
    %2310 = vmatprep.subr.mxu0 0.0
    %2311 = vmatpush1.xpose.msra.mxu0 0.0
    %2312 = vmatprep.subr.mxu0 0.0
    %2313 = vmatpush1.xpose.msra.mxu0 0.0
    %2314 = vmatprep.subr.mxu0 0.0
    %2315 = vmatpush1.xpose.msra.mxu0 0.0
    %2316 = vmatprep.subr.mxu0 0.0
    %2317 = vmatpush1.xpose.msra.mxu0 0.0
    %2318 = vmatprep.subr.mxu0 0.0
    %2319 = vmatpush1.xpose.msra.mxu0 0.0
    %2320 = vmatprep.subr.mxu0 0.0
    %2321 = vmatpush1.xpose.msra.mxu0 %v2288
    %2322 = vmatprep.subr.mxu0 0.0
    %2323 = vmatpush2.xpose.msra.mxu0 0.0
    %2324 = vmatprep.subr.mxu0 0.0
    %2325 = vmatpush2.xpose.msra.mxu0 0.0
    %2326 = vmatprep.subr.mxu0 0.0
    %2327 = vmatpush2.xpose.msra.mxu0 0.0
    %2328 = vmatprep.subr.mxu0 0.0
    %2329 = vmatpush2.xpose.msra.mxu0 0.0
    %2330 = vmatprep.subr.mxu0 0.0
    %2331 = vmatpush2.xpose.msra.mxu0 0.0
    %2332 = vmatprep.subr.mxu0 0.0
    %2333 = vmatpush2.xpose.msra.mxu0 0.0
    %2334 = vmatprep.subr.mxu0 0.0
    %2335 = vmatpush2.xpose.msra.mxu0 0.0
    %2336 = vmatprep.subr.mxu0 0.0
    %2337 = vmatpush2.xpose.msra.mxu0 0.0
    %2338 = vmatprep.subr.mxu0 0.0
    %2339 = vmatpush2.xpose.msra.mxu0 0.0
    %2340 = vmatprep.subr.mxu0 0.0
    %2341 = vmatpush2.xpose.msra.mxu0 0.0
    %2342 = vmatprep.subr.mxu0 0.0
    %2343 = vmatpush2.xpose.msra.mxu0 0.0
    %2344 = vmatprep.subr.mxu0 0.0
    %2345 = vmatpush2.xpose.msra.mxu0 0.0
    %2346 = vmatprep.subr.mxu0 0.0
    %2347 = vmatpush2.xpose.msra.mxu0 0.0
    %2348 = vmatprep.subr.mxu0 0.0
    %2349 = vmatpush2.xpose.msra.mxu0 0.0
    %2350 = vmatprep.subr.mxu0 0.0
    %2351 = vmatpush2.xpose.msra.mxu0 0.0
    %2352 = vmatprep.subr.mxu0 0.0
    %2353 = vmatpush2.xpose.msra.mxu0 0.0
    %2354 = vmatprep.mubr.f32.mxu0 0.0
    %2355 = vmatmul.mubr.f32.gmra.mxu0 %v2286
    %v2356 = vpop.f32.mrf.mxu0
    %v2357 = vadd.f32 0.0, %v2356
    %v2358 = vpop.f32.mrf.mxu0
    %2359 = vdwg.mxu0
    %v2360 = vsel %vm133, %v2279, -inf
    %2361 = vmax.xlane.f32.xlu0 %v2360
    %v2362 = vpop.xlane.xlu0 %2361
    %v2363 = vsel %vm133, %v2357, -inf
    %2364 = vmax.xlane.f32.xlu0 %v2363
    %v2365 = vpop.xlane.xlu0 %2364
    %v2366 = vsub.f32 %v2279, %v2362
    %v2367 = vsub.f32 %v2357, %v2365
    %v2368 = vmul.f32 %v2366, 1.442695
    %v2369 = vpow.pop %v2368
    %v2370 = vmul.f32 %v2367, 1.442695
    %v2371 = vpow.pop %v2370
    %v2372 = vsel %vm133, %v2369, 0.0
    %2373 = vadd.xlane.f32.xlu0 %v2372
    %v2374 = vpop.xlane.xlu0 %2373
    %v2375 = vsel %vm133, %v2371, 0.0
    %2376 = vadd.xlane.f32.xlu0 %v2375
    %v2377 = vpop.xlane.xlu0 %2376
    %v2378 = vrcp.pop %v2374
    %v2379 = vrcp.pop %v2377
    %v2380 = vmul.f32 %v2369, %v2378
    %v2381 = vmul.f32 %v2371, %v2379
    %2382 = vrot.lane.b32.xlu0 %v1870, 56
    %v2383 = vpop.permute.xlu0 %2382
    %v2386 = vsel %vm133, %v2380, 0
    %2388 = vmatprep.subr.mxu0 0.0
    %2389 = vmatpush1.msra.mxu0 0.0
    %2390 = vmatprep.subr.mxu0 0.0
    %2391 = vmatpush1.msra.mxu0 0.0
    %2392 = vmatprep.subr.mxu0 0.0
    %2393 = vmatpush1.msra.mxu0 0.0
    %2394 = vmatprep.subr.mxu0 0.0
    %2395 = vmatpush1.msra.mxu0 0.0
    %2396 = vmatprep.subr.mxu0 0.0
    %2397 = vmatpush1.msra.mxu0 0.0
    %2398 = vmatprep.subr.mxu0 0.0
    %2399 = vmatpush1.msra.mxu0 0.0
    %2400 = vmatprep.subr.mxu0 0.0
    %2401 = vmatpush1.msra.mxu0 0.0
    %2402 = vmatprep.subr.mxu0 0.0
    %2403 = vmatpush1.msra.mxu0 0.0
    %2404 = vmatprep.subr.mxu0 0.0
    %2405 = vmatpush1.msra.mxu0 0.0
    %2406 = vmatprep.subr.mxu0 0.0
    %2407 = vmatpush1.msra.mxu0 0.0
    %2408 = vmatprep.subr.mxu0 0.0
    %2409 = vmatpush1.msra.mxu0 0.0
    %2410 = vmatprep.subr.mxu0 0.0
    %2411 = vmatpush1.msra.mxu0 0.0
    %2412 = vmatprep.subr.mxu0 0.0
    %2413 = vmatpush1.msra.mxu0 0.0
    %2414 = vmatprep.subr.mxu0 0.0
    %2415 = vmatpush1.msra.mxu0 0.0
    %2416 = vmatprep.subr.mxu0 0.0
    %2417 = vmatpush1.msra.mxu0 0.0
    %2418 = vmatprep.subr.mxu0 0.0
    %2419 = vmatpush1.msra.mxu0 %v2383
    %2420 = vmatprep.subr.mxu0 0.0
    %2421 = vmatpush2.msra.mxu0 0.0
    %2422 = vmatprep.subr.mxu0 0.0
    %2423 = vmatpush2.msra.mxu0 0.0
    %2424 = vmatprep.subr.mxu0 0.0
    %2425 = vmatpush2.msra.mxu0 0.0
    %2426 = vmatprep.subr.mxu0 0.0
    %2427 = vmatpush2.msra.mxu0 0.0
    %2428 = vmatprep.subr.mxu0 0.0
    %2429 = vmatpush2.msra.mxu0 0.0
    %2430 = vmatprep.subr.mxu0 0.0
    %2431 = vmatpush2.msra.mxu0 0.0
    %2432 = vmatprep.subr.mxu0 0.0
    %2433 = vmatpush2.msra.mxu0 0.0
    %2434 = vmatprep.subr.mxu0 0.0
    %2435 = vmatpush2.msra.mxu0 0.0
    %2436 = vmatprep.subr.mxu0 0.0
    %2437 = vmatpush2.msra.mxu0 0.0
    %2438 = vmatprep.subr.mxu0 0.0
    %2439 = vmatpush2.msra.mxu0 0.0
    %2440 = vmatprep.subr.mxu0 0.0
    %2441 = vmatpush2.msra.mxu0 0.0
    %2442 = vmatprep.subr.mxu0 0.0
    %2443 = vmatpush2.msra.mxu0 0.0
    %2444 = vmatprep.subr.mxu0 0.0
    %2445 = vmatpush2.msra.mxu0 0.0
    %2446 = vmatprep.subr.mxu0 0.0
    %2447 = vmatpush2.msra.mxu0 0.0
    %2448 = vmatprep.subr.mxu0 0.0
    %2449 = vmatpush2.msra.mxu0 0.0
    %2450 = vmatprep.subr.mxu0 0.0
    %2451 = vmatpush2.msra.mxu0 0.0
    %2452 = vmatprep.mubr.f32.mxu0 0.0
    %2453 = vmatmul.mubr.f32.gmra.mxu0 %v2386
    %v2454 = vpop.f32.mrf.mxu0
    %v2455 = vadd.f32 0.0, %v2454
    %v2456 = vpop.f32.mrf.mxu0
    %2457 = vdwg.mxu0
    %2458 = vrot.lane.b32.xlu0 %v1873, 56
    %v2459 = vpop.permute.xlu0 %2458
    %v2462 = vsel %vm133, %v2381, 0
    %2464 = vmatprep.subr.mxu0 0.0
    %2465 = vmatpush1.msra.mxu0 0.0
    %2466 = vmatprep.subr.mxu0 0.0
    %2467 = vmatpush1.msra.mxu0 0.0
    %2468 = vmatprep.subr.mxu0 0.0
    %2469 = vmatpush1.msra.mxu0 0.0
    %2470 = vmatprep.subr.mxu0 0.0
    %2471 = vmatpush1.msra.mxu0 0.0
    %2472 = vmatprep.subr.mxu0 0.0
    %2473 = vmatpush1.msra.mxu0 0.0
    %2474 = vmatprep.subr.mxu0 0.0
    %2475 = vmatpush1.msra.mxu0 0.0
    %2476 = vmatprep.subr.mxu0 0.0
    %2477 = vmatpush1.msra.mxu0 0.0
    %2478 = vmatprep.subr.mxu0 0.0
    %2479 = vmatpush1.msra.mxu0 0.0
    %2480 = vmatprep.subr.mxu0 0.0
    %2481 = vmatpush1.msra.mxu0 0.0
    %2482 = vmatprep.subr.mxu0 0.0
    %2483 = vmatpush1.msra.mxu0 0.0
    %2484 = vmatprep.subr.mxu0 0.0
    %2485 = vmatpush1.msra.mxu0 0.0
    %2486 = vmatprep.subr.mxu0 0.0
    %2487 = vmatpush1.msra.mxu0 0.0
    %2488 = vmatprep.subr.mxu0 0.0
    %2489 = vmatpush1.msra.mxu0 0.0
    %2490 = vmatprep.subr.mxu0 0.0
    %2491 = vmatpush1.msra.mxu0 0.0
    %2492 = vmatprep.subr.mxu0 0.0
    %2493 = vmatpush1.msra.mxu0 0.0
    %2494 = vmatprep.subr.mxu0 0.0
    %2495 = vmatpush1.msra.mxu0 %v2459
    %2496 = vmatprep.subr.mxu0 0.0
    %2497 = vmatpush2.msra.mxu0 0.0
    %2498 = vmatprep.subr.mxu0 0.0
    %2499 = vmatpush2.msra.mxu0 0.0
    %2500 = vmatprep.subr.mxu0 0.0
    %2501 = vmatpush2.msra.mxu0 0.0
    %2502 = vmatprep.subr.mxu0 0.0
    %2503 = vmatpush2.msra.mxu0 0.0
    %2504 = vmatprep.subr.mxu0 0.0
    %2505 = vmatpush2.msra.mxu0 0.0
    %2506 = vmatprep.subr.mxu0 0.0
    %2507 = vmatpush2.msra.mxu0 0.0
    %2508 = vmatprep.subr.mxu0 0.0
    %2509 = vmatpush2.msra.mxu0 0.0
    %2510 = vmatprep.subr.mxu0 0.0
    %2511 = vmatpush2.msra.mxu0 0.0
    %2512 = vmatprep.subr.mxu0 0.0
    %2513 = vmatpush2.msra.mxu0 0.0
    %2514 = vmatprep.subr.mxu0 0.0
    %2515 = vmatpush2.msra.mxu0 0.0
    %2516 = vmatprep.subr.mxu0 0.0
    %2517 = vmatpush2.msra.mxu0 0.0
    %2518 = vmatprep.subr.mxu0 0.0
    %2519 = vmatpush2.msra.mxu0 0.0
    %2520 = vmatprep.subr.mxu0 0.0
    %2521 = vmatpush2.msra.mxu0 0.0
    %2522 = vmatprep.subr.mxu0 0.0
    %2523 = vmatpush2.msra.mxu0 0.0
    %2524 = vmatprep.subr.mxu0 0.0
    %2525 = vmatpush2.msra.mxu0 0.0
    %2526 = vmatprep.subr.mxu0 0.0
    %2527 = vmatpush2.msra.mxu0 0.0
    %2528 = vmatprep.mubr.f32.mxu0 0.0
    %2529 = vmatmul.mubr.f32.gmra.mxu0 %v2462
    %v2530 = vpop.f32.mrf.mxu0
    %v2531 = vadd.f32 0.0, %v2530
    %v2532 = vpop.f32.mrf.mxu0
    %2533 = vdwg.mxu0
    %2534 = vrot.lane.b32.xlu0 %v1870, 112
    %v2535 = vpop.permute.xlu0 %2534
    %2536 = vrot.lane.b32.xlu0 %v1870, 80
    %v2537 = vpop.permute.xlu0 %2536
    %v2538 = vsel %vm133, %v2535, 0
    %v2540 = vsel %vm133, %v2537, 0
    %2542 = vmatprep.subr.mxu0 0.0
    %2543 = vmatpush1.xpose.msra.mxu0 0.0
    %2544 = vmatprep.subr.mxu0 0.0
    %2545 = vmatpush1.xpose.msra.mxu0 0.0
    %2546 = vmatprep.subr.mxu0 0.0
    %2547 = vmatpush1.xpose.msra.mxu0 0.0
    %2548 = vmatprep.subr.mxu0 0.0
    %2549 = vmatpush1.xpose.msra.mxu0 0.0
    %2550 = vmatprep.subr.mxu0 0.0
    %2551 = vmatpush1.xpose.msra.mxu0 0.0
    %2552 = vmatprep.subr.mxu0 0.0
    %2553 = vmatpush1.xpose.msra.mxu0 0.0
    %2554 = vmatprep.subr.mxu0 0.0
    %2555 = vmatpush1.xpose.msra.mxu0 0.0
    %2556 = vmatprep.subr.mxu0 0.0
    %2557 = vmatpush1.xpose.msra.mxu0 0.0
    %2558 = vmatprep.subr.mxu0 0.0
    %2559 = vmatpush1.xpose.msra.mxu0 0.0
    %2560 = vmatprep.subr.mxu0 0.0
    %2561 = vmatpush1.xpose.msra.mxu0 0.0
    %2562 = vmatprep.subr.mxu0 0.0
    %2563 = vmatpush1.xpose.msra.mxu0 0.0
    %2564 = vmatprep.subr.mxu0 0.0
    %2565 = vmatpush1.xpose.msra.mxu0 0.0
    %2566 = vmatprep.subr.mxu0 0.0
    %2567 = vmatpush1.xpose.msra.mxu0 0.0
    %2568 = vmatprep.subr.mxu0 0.0
    %2569 = vmatpush1.xpose.msra.mxu0 0.0
    %2570 = vmatprep.subr.mxu0 0.0
    %2571 = vmatpush1.xpose.msra.mxu0 0.0
    %2572 = vmatprep.subr.mxu0 0.0
    %2573 = vmatpush1.xpose.msra.mxu0 %v2540
    %2574 = vmatprep.subr.mxu0 0.0
    %2575 = vmatpush2.xpose.msra.mxu0 0.0
    %2576 = vmatprep.subr.mxu0 0.0
    %2577 = vmatpush2.xpose.msra.mxu0 0.0
    %2578 = vmatprep.subr.mxu0 0.0
    %2579 = vmatpush2.xpose.msra.mxu0 0.0
    %2580 = vmatprep.subr.mxu0 0.0
    %2581 = vmatpush2.xpose.msra.mxu0 0.0
    %2582 = vmatprep.subr.mxu0 0.0
    %2583 = vmatpush2.xpose.msra.mxu0 0.0
    %2584 = vmatprep.subr.mxu0 0.0
    %2585 = vmatpush2.xpose.msra.mxu0 0.0
    %2586 = vmatprep.subr.mxu0 0.0
    %2587 = vmatpush2.xpose.msra.mxu0 0.0
    %2588 = vmatprep.subr.mxu0 0.0
    %2589 = vmatpush2.xpose.msra.mxu0 0.0
    %2590 = vmatprep.subr.mxu0 0.0
    %2591 = vmatpush2.xpose.msra.mxu0 0.0
    %2592 = vmatprep.subr.mxu0 0.0
    %2593 = vmatpush2.xpose.msra.mxu0 0.0
    %2594 = vmatprep.subr.mxu0 0.0
    %2595 = vmatpush2.xpose.msra.mxu0 0.0
    %2596 = vmatprep.subr.mxu0 0.0
    %2597 = vmatpush2.xpose.msra.mxu0 0.0
    %2598 = vmatprep.subr.mxu0 0.0
    %2599 = vmatpush2.xpose.msra.mxu0 0.0
    %2600 = vmatprep.subr.mxu0 0.0
    %2601 = vmatpush2.xpose.msra.mxu0 0.0
    %2602 = vmatprep.subr.mxu0 0.0
    %2603 = vmatpush2.xpose.msra.mxu0 0.0
    %2604 = vmatprep.subr.mxu0 0.0
    %2605 = vmatpush2.xpose.msra.mxu0 0.0
    %2606 = vmatprep.mubr.f32.mxu0 0.0
    %2607 = vmatmul.mubr.f32.gmra.mxu0 %v2538
    %v2608 = vpop.f32.mrf.mxu0
    %v2609 = vadd.f32 0.0, %v2608
    %v2610 = vpop.f32.mrf.mxu0
    %2611 = vdwg.mxu0
    %2612 = vrot.lane.b32.xlu0 %v1873, 112
    %v2613 = vpop.permute.xlu0 %2612
    %2614 = vrot.lane.b32.xlu0 %v1873, 80
    %v2615 = vpop.permute.xlu0 %2614
    %v2616 = vsel %vm133, %v2613, 0
    %v2618 = vsel %vm133, %v2615, 0
    %2620 = vmatprep.subr.mxu0 0.0
    %2621 = vmatpush1.xpose.msra.mxu0 0.0
    %2622 = vmatprep.subr.mxu0 0.0
    %2623 = vmatpush1.xpose.msra.mxu0 0.0
    %2624 = vmatprep.subr.mxu0 0.0
    %2625 = vmatpush1.xpose.msra.mxu0 0.0
    %2626 = vmatprep.subr.mxu0 0.0
    %2627 = vmatpush1.xpose.msra.mxu0 0.0
    %2628 = vmatprep.subr.mxu0 0.0
    %2629 = vmatpush1.xpose.msra.mxu0 0.0
    %2630 = vmatprep.subr.mxu0 0.0
    %2631 = vmatpush1.xpose.msra.mxu0 0.0
    %2632 = vmatprep.subr.mxu0 0.0
    %2633 = vmatpush1.xpose.msra.mxu0 0.0
    %2634 = vmatprep.subr.mxu0 0.0
    %2635 = vmatpush1.xpose.msra.mxu0 0.0
    %2636 = vmatprep.subr.mxu0 0.0
    %2637 = vmatpush1.xpose.msra.mxu0 0.0
    %2638 = vmatprep.subr.mxu0 0.0
    %2639 = vmatpush1.xpose.msra.mxu0 0.0
    %2640 = vmatprep.subr.mxu0 0.0
    %2641 = vmatpush1.xpose.msra.mxu0 0.0
    %2642 = vmatprep.subr.mxu0 0.0
    %2643 = vmatpush1.xpose.msra.mxu0 0.0
    %2644 = vmatprep.subr.mxu0 0.0
    %2645 = vmatpush1.xpose.msra.mxu0 0.0
    %2646 = vmatprep.subr.mxu0 0.0
    %2647 = vmatpush1.xpose.msra.mxu0 0.0
    %2648 = vmatprep.subr.mxu0 0.0
    %2649 = vmatpush1.xpose.msra.mxu0 0.0
    %2650 = vmatprep.subr.mxu0 0.0
    %2651 = vmatpush1.xpose.msra.mxu0 %v2618
    %2652 = vmatprep.subr.mxu0 0.0
    %2653 = vmatpush2.xpose.msra.mxu0 0.0
    %2654 = vmatprep.subr.mxu0 0.0
    %2655 = vmatpush2.xpose.msra.mxu0 0.0
    %2656 = vmatprep.subr.mxu0 0.0
    %2657 = vmatpush2.xpose.msra.mxu0 0.0
    %2658 = vmatprep.subr.mxu0 0.0
    %2659 = vmatpush2.xpose.msra.mxu0 0.0
    %2660 = vmatprep.subr.mxu0 0.0
    %2661 = vmatpush2.xpose.msra.mxu0 0.0
    %2662 = vmatprep.subr.mxu0 0.0
    %2663 = vmatpush2.xpose.msra.mxu0 0.0
    %2664 = vmatprep.subr.mxu0 0.0
    %2665 = vmatpush2.xpose.msra.mxu0 0.0
    %2666 = vmatprep.subr.mxu0 0.0
    %2667 = vmatpush2.xpose.msra.mxu0 0.0
    %2668 = vmatprep.subr.mxu0 0.0
    %2669 = vmatpush2.xpose.msra.mxu0 0.0
    %2670 = vmatprep.subr.mxu0 0.0
    %2671 = vmatpush2.xpose.msra.mxu0 0.0
    %2672 = vmatprep.subr.mxu0 0.0
    %2673 = vmatpush2.xpose.msra.mxu0 0.0
    %2674 = vmatprep.subr.mxu0 0.0
    %2675 = vmatpush2.xpose.msra.mxu0 0.0
    %2676 = vmatprep.subr.mxu0 0.0
    %2677 = vmatpush2.xpose.msra.mxu0 0.0
    %2678 = vmatprep.subr.mxu0 0.0
    %2679 = vmatpush2.xpose.msra.mxu0 0.0
    %2680 = vmatprep.subr.mxu0 0.0
    %2681 = vmatpush2.xpose.msra.mxu0 0.0
    %2682 = vmatprep.subr.mxu0 0.0
    %2683 = vmatpush2.xpose.msra.mxu0 0.0
    %2684 = vmatprep.mubr.f32.mxu0 0.0
    %2685 = vmatmul.mubr.f32.gmra.mxu0 %v2616
    %v2686 = vpop.f32.mrf.mxu0
    %v2687 = vadd.f32 0.0, %v2686
    %v2688 = vpop.f32.mrf.mxu0
    %2689 = vdwg.mxu0
    %v2690 = vsel %vm133, %v2609, -inf
    %2691 = vmax.xlane.f32.xlu0 %v2690
    %v2692 = vpop.xlane.xlu0 %2691
    %v2693 = vsel %vm133, %v2687, -inf
    %2694 = vmax.xlane.f32.xlu0 %v2693
    %v2695 = vpop.xlane.xlu0 %2694
    %v2696 = vsub.f32 %v2609, %v2692
    %v2697 = vsub.f32 %v2687, %v2695
    %v2698 = vmul.f32 %v2696, 1.442695
    %v2699 = vpow.pop %v2698
    %v2700 = vmul.f32 %v2697, 1.442695
    %v2701 = vpow.pop %v2700
    %v2702 = vsel %vm133, %v2699, 0.0
    %2703 = vadd.xlane.f32.xlu0 %v2702
    %v2704 = vpop.xlane.xlu0 %2703
    %v2705 = vsel %vm133, %v2701, 0.0
    %2706 = vadd.xlane.f32.xlu0 %v2705
    %v2707 = vpop.xlane.xlu0 %2706
    %v2708 = vrcp.pop %v2704
    %v2709 = vrcp.pop %v2707
    %v2710 = vmul.f32 %v2699, %v2708
    %v2711 = vmul.f32 %v2701, %v2709
    %2712 = vrot.lane.b32.xlu0 %v1870, 48
    %v2713 = vpop.permute.xlu0 %2712
    %v2716 = vsel %vm133, %v2710, 0
    %2718 = vmatprep.subr.mxu0 0.0
    %2719 = vmatpush1.msra.mxu0 0.0
    %2720 = vmatprep.subr.mxu0 0.0
    %2721 = vmatpush1.msra.mxu0 0.0
    %2722 = vmatprep.subr.mxu0 0.0
    %2723 = vmatpush1.msra.mxu0 0.0
    %2724 = vmatprep.subr.mxu0 0.0
    %2725 = vmatpush1.msra.mxu0 0.0
    %2726 = vmatprep.subr.mxu0 0.0
    %2727 = vmatpush1.msra.mxu0 0.0
    %2728 = vmatprep.subr.mxu0 0.0
    %2729 = vmatpush1.msra.mxu0 0.0
    %2730 = vmatprep.subr.mxu0 0.0
    %2731 = vmatpush1.msra.mxu0 0.0
    %2732 = vmatprep.subr.mxu0 0.0
    %2733 = vmatpush1.msra.mxu0 0.0
    %2734 = vmatprep.subr.mxu0 0.0
    %2735 = vmatpush1.msra.mxu0 0.0
    %2736 = vmatprep.subr.mxu0 0.0
    %2737 = vmatpush1.msra.mxu0 0.0
    %2738 = vmatprep.subr.mxu0 0.0
    %2739 = vmatpush1.msra.mxu0 0.0
    %2740 = vmatprep.subr.mxu0 0.0
    %2741 = vmatpush1.msra.mxu0 0.0
    %2742 = vmatprep.subr.mxu0 0.0
    %2743 = vmatpush1.msra.mxu0 0.0
    %2744 = vmatprep.subr.mxu0 0.0
    %2745 = vmatpush1.msra.mxu0 0.0
    %2746 = vmatprep.subr.mxu0 0.0
    %2747 = vmatpush1.msra.mxu0 0.0
    %2748 = vmatprep.subr.mxu0 0.0
    %2749 = vmatpush1.msra.mxu0 %v2713
    %2750 = vmatprep.subr.mxu0 0.0
    %2751 = vmatpush2.msra.mxu0 0.0
    %2752 = vmatprep.subr.mxu0 0.0
    %2753 = vmatpush2.msra.mxu0 0.0
    %2754 = vmatprep.subr.mxu0 0.0
    %2755 = vmatpush2.msra.mxu0 0.0
    %2756 = vmatprep.subr.mxu0 0.0
    %2757 = vmatpush2.msra.mxu0 0.0
    %2758 = vmatprep.subr.mxu0 0.0
    %2759 = vmatpush2.msra.mxu0 0.0
    %2760 = vmatprep.subr.mxu0 0.0
    %2761 = vmatpush2.msra.mxu0 0.0
    %2762 = vmatprep.subr.mxu0 0.0
    %2763 = vmatpush2.msra.mxu0 0.0
    %2764 = vmatprep.subr.mxu0 0.0
    %2765 = vmatpush2.msra.mxu0 0.0
    %2766 = vmatprep.subr.mxu0 0.0
    %2767 = vmatpush2.msra.mxu0 0.0
    %2768 = vmatprep.subr.mxu0 0.0
    %2769 = vmatpush2.msra.mxu0 0.0
    %2770 = vmatprep.subr.mxu0 0.0
    %2771 = vmatpush2.msra.mxu0 0.0
    %2772 = vmatprep.subr.mxu0 0.0
    %2773 = vmatpush2.msra.mxu0 0.0
    %2774 = vmatprep.subr.mxu0 0.0
    %2775 = vmatpush2.msra.mxu0 0.0
    %2776 = vmatprep.subr.mxu0 0.0
    %2777 = vmatpush2.msra.mxu0 0.0
    %2778 = vmatprep.subr.mxu0 0.0
    %2779 = vmatpush2.msra.mxu0 0.0
    %2780 = vmatprep.subr.mxu0 0.0
    %2781 = vmatpush2.msra.mxu0 0.0
    %2782 = vmatprep.mubr.f32.mxu0 0.0
    %2783 = vmatmul.mubr.f32.gmra.mxu0 %v2716
    %v2784 = vpop.f32.mrf.mxu0
    %v2785 = vadd.f32 0.0, %v2784
    %v2786 = vpop.f32.mrf.mxu0
    %2787 = vdwg.mxu0
    %2788 = vrot.lane.b32.xlu0 %v1873, 48
    %v2789 = vpop.permute.xlu0 %2788
    %v2792 = vsel %vm133, %v2711, 0
    %2794 = vmatprep.subr.mxu0 0.0
    %2795 = vmatpush1.msra.mxu0 0.0
    %2796 = vmatprep.subr.mxu0 0.0
    %2797 = vmatpush1.msra.mxu0 0.0
    %2798 = vmatprep.subr.mxu0 0.0
    %2799 = vmatpush1.msra.mxu0 0.0
    %2800 = vmatprep.subr.mxu0 0.0
    %2801 = vmatpush1.msra.mxu0 0.0
    %2802 = vmatprep.subr.mxu0 0.0
    %2803 = vmatpush1.msra.mxu0 0.0
    %2804 = vmatprep.subr.mxu0 0.0
    %2805 = vmatpush1.msra.mxu0 0.0
    %2806 = vmatprep.subr.mxu0 0.0
    %2807 = vmatpush1.msra.mxu0 0.0
    %2808 = vmatprep.subr.mxu0 0.0
    %2809 = vmatpush1.msra.mxu0 0.0
    %2810 = vmatprep.subr.mxu0 0.0
    %2811 = vmatpush1.msra.mxu0 0.0
    %2812 = vmatprep.subr.mxu0 0.0
    %2813 = vmatpush1.msra.mxu0 0.0
    %2814 = vmatprep.subr.mxu0 0.0
    %2815 = vmatpush1.msra.mxu0 0.0
    %2816 = vmatprep.subr.mxu0 0.0
    %2817 = vmatpush1.msra.mxu0 0.0
    %2818 = vmatprep.subr.mxu0 0.0
    %2819 = vmatpush1.msra.mxu0 0.0
    %2820 = vmatprep.subr.mxu0 0.0
    %2821 = vmatpush1.msra.mxu0 0.0
    %2822 = vmatprep.subr.mxu0 0.0
    %2823 = vmatpush1.msra.mxu0 0.0
    %2824 = vmatprep.subr.mxu0 0.0
    %2825 = vmatpush1.msra.mxu0 %v2789
    %2826 = vmatprep.subr.mxu0 0.0
    %2827 = vmatpush2.msra.mxu0 0.0
    %2828 = vmatprep.subr.mxu0 0.0
    %2829 = vmatpush2.msra.mxu0 0.0
    %2830 = vmatprep.subr.mxu0 0.0
    %2831 = vmatpush2.msra.mxu0 0.0
    %2832 = vmatprep.subr.mxu0 0.0
    %2833 = vmatpush2.msra.mxu0 0.0
    %2834 = vmatprep.subr.mxu0 0.0
    %2835 = vmatpush2.msra.mxu0 0.0
    %2836 = vmatprep.subr.mxu0 0.0
    %2837 = vmatpush2.msra.mxu0 0.0
    %2838 = vmatprep.subr.mxu0 0.0
    %2839 = vmatpush2.msra.mxu0 0.0
    %2840 = vmatprep.subr.mxu0 0.0
    %2841 = vmatpush2.msra.mxu0 0.0
    %2842 = vmatprep.subr.mxu0 0.0
    %2843 = vmatpush2.msra.mxu0 0.0
    %2844 = vmatprep.subr.mxu0 0.0
    %2845 = vmatpush2.msra.mxu0 0.0
    %2846 = vmatprep.subr.mxu0 0.0
    %2847 = vmatpush2.msra.mxu0 0.0
    %2848 = vmatprep.subr.mxu0 0.0
    %2849 = vmatpush2.msra.mxu0 0.0
    %2850 = vmatprep.subr.mxu0 0.0
    %2851 = vmatpush2.msra.mxu0 0.0
    %2852 = vmatprep.subr.mxu0 0.0
    %2853 = vmatpush2.msra.mxu0 0.0
    %2854 = vmatprep.subr.mxu0 0.0
    %2855 = vmatpush2.msra.mxu0 0.0
    %2856 = vmatprep.subr.mxu0 0.0
    %2857 = vmatpush2.msra.mxu0 0.0
    %2858 = vmatprep.mubr.f32.mxu0 0.0
    %2859 = vmatmul.mubr.f32.gmra.mxu0 %v2792
    %v2860 = vpop.f32.mrf.mxu0
    %v2861 = vadd.f32 0.0, %v2860
    %v2862 = vpop.f32.mrf.mxu0
    %2863 = vdwg.mxu0
    %2864 = vrot.lane.b32.xlu0 %v1870, 104
    %v2865 = vpop.permute.xlu0 %2864
    %2866 = vrot.lane.b32.xlu0 %v1870, 72
    %v2867 = vpop.permute.xlu0 %2866
    %v2868 = vsel %vm133, %v2865, 0
    %v2870 = vsel %vm133, %v2867, 0
    %2872 = vmatprep.subr.mxu0 0.0
    %2873 = vmatpush1.xpose.msra.mxu0 0.0
    %2874 = vmatprep.subr.mxu0 0.0
    %2875 = vmatpush1.xpose.msra.mxu0 0.0
    %2876 = vmatprep.subr.mxu0 0.0
    %2877 = vmatpush1.xpose.msra.mxu0 0.0
    %2878 = vmatprep.subr.mxu0 0.0
    %2879 = vmatpush1.xpose.msra.mxu0 0.0
    %2880 = vmatprep.subr.mxu0 0.0
    %2881 = vmatpush1.xpose.msra.mxu0 0.0
    %2882 = vmatprep.subr.mxu0 0.0
    %2883 = vmatpush1.xpose.msra.mxu0 0.0
    %2884 = vmatprep.subr.mxu0 0.0
    %2885 = vmatpush1.xpose.msra.mxu0 0.0
    %2886 = vmatprep.subr.mxu0 0.0
    %2887 = vmatpush1.xpose.msra.mxu0 0.0
    %2888 = vmatprep.subr.mxu0 0.0
    %2889 = vmatpush1.xpose.msra.mxu0 0.0
    %2890 = vmatprep.subr.mxu0 0.0
    %2891 = vmatpush1.xpose.msra.mxu0 0.0
    %2892 = vmatprep.subr.mxu0 0.0
    %2893 = vmatpush1.xpose.msra.mxu0 0.0
    %2894 = vmatprep.subr.mxu0 0.0
    %2895 = vmatpush1.xpose.msra.mxu0 0.0
    %2896 = vmatprep.subr.mxu0 0.0
    %2897 = vmatpush1.xpose.msra.mxu0 0.0
    %2898 = vmatprep.subr.mxu0 0.0
    %2899 = vmatpush1.xpose.msra.mxu0 0.0
    %2900 = vmatprep.subr.mxu0 0.0
    %2901 = vmatpush1.xpose.msra.mxu0 0.0
    %2902 = vmatprep.subr.mxu0 0.0
    %2903 = vmatpush1.xpose.msra.mxu0 %v2870
    %2904 = vmatprep.subr.mxu0 0.0
    %2905 = vmatpush2.xpose.msra.mxu0 0.0
    %2906 = vmatprep.subr.mxu0 0.0
    %2907 = vmatpush2.xpose.msra.mxu0 0.0
    %2908 = vmatprep.subr.mxu0 0.0
    %2909 = vmatpush2.xpose.msra.mxu0 0.0
    %2910 = vmatprep.subr.mxu0 0.0
    %2911 = vmatpush2.xpose.msra.mxu0 0.0
    %2912 = vmatprep.subr.mxu0 0.0
    %2913 = vmatpush2.xpose.msra.mxu0 0.0
    %2914 = vmatprep.subr.mxu0 0.0
    %2915 = vmatpush2.xpose.msra.mxu0 0.0
    %2916 = vmatprep.subr.mxu0 0.0
    %2917 = vmatpush2.xpose.msra.mxu0 0.0
    %2918 = vmatprep.subr.mxu0 0.0
    %2919 = vmatpush2.xpose.msra.mxu0 0.0
    %2920 = vmatprep.subr.mxu0 0.0
    %2921 = vmatpush2.xpose.msra.mxu0 0.0
    %2922 = vmatprep.subr.mxu0 0.0
    %2923 = vmatpush2.xpose.msra.mxu0 0.0
    %2924 = vmatprep.subr.mxu0 0.0
    %2925 = vmatpush2.xpose.msra.mxu0 0.0
    %2926 = vmatprep.subr.mxu0 0.0
    %2927 = vmatpush2.xpose.msra.mxu0 0.0
    %2928 = vmatprep.subr.mxu0 0.0
    %2929 = vmatpush2.xpose.msra.mxu0 0.0
    %2930 = vmatprep.subr.mxu0 0.0
    %2931 = vmatpush2.xpose.msra.mxu0 0.0
    %2932 = vmatprep.subr.mxu0 0.0
    %2933 = vmatpush2.xpose.msra.mxu0 0.0
    %2934 = vmatprep.subr.mxu0 0.0
    %2935 = vmatpush2.xpose.msra.mxu0 0.0
    %2936 = vmatprep.mubr.f32.mxu0 0.0
    %2937 = vmatmul.mubr.f32.gmra.mxu0 %v2868
    %v2938 = vpop.f32.mrf.mxu0
    %v2939 = vadd.f32 0.0, %v2938
    %v2940 = vpop.f32.mrf.mxu0
    %2941 = vdwg.mxu0
    %2942 = vrot.lane.b32.xlu0 %v1873, 104
    %v2943 = vpop.permute.xlu0 %2942
    %2944 = vrot.lane.b32.xlu0 %v1873, 72
    %v2945 = vpop.permute.xlu0 %2944
    %v2946 = vsel %vm133, %v2943, 0
    %v2948 = vsel %vm133, %v2945, 0
    %2950 = vmatprep.subr.mxu0 0.0
    %2951 = vmatpush1.xpose.msra.mxu0 0.0
    %2952 = vmatprep.subr.mxu0 0.0
    %2953 = vmatpush1.xpose.msra.mxu0 0.0
    %2954 = vmatprep.subr.mxu0 0.0
    %2955 = vmatpush1.xpose.msra.mxu0 0.0
    %2956 = vmatprep.subr.mxu0 0.0
    %2957 = vmatpush1.xpose.msra.mxu0 0.0
    %2958 = vmatprep.subr.mxu0 0.0
    %2959 = vmatpush1.xpose.msra.mxu0 0.0
    %2960 = vmatprep.subr.mxu0 0.0
    %2961 = vmatpush1.xpose.msra.mxu0 0.0
    %2962 = vmatprep.subr.mxu0 0.0
    %2963 = vmatpush1.xpose.msra.mxu0 0.0
    %2964 = vmatprep.subr.mxu0 0.0
    %2965 = vmatpush1.xpose.msra.mxu0 0.0
    %2966 = vmatprep.subr.mxu0 0.0
    %2967 = vmatpush1.xpose.msra.mxu0 0.0
    %2968 = vmatprep.subr.mxu0 0.0
    %2969 = vmatpush1.xpose.msra.mxu0 0.0
    %2970 = vmatprep.subr.mxu0 0.0
    %2971 = vmatpush1.xpose.msra.mxu0 0.0
    %2972 = vmatprep.subr.mxu0 0.0
    %2973 = vmatpush1.xpose.msra.mxu0 0.0
    %2974 = vmatprep.subr.mxu0 0.0
    %2975 = vmatpush1.xpose.msra.mxu0 0.0
    %2976 = vmatprep.subr.mxu0 0.0
    %2977 = vmatpush1.xpose.msra.mxu0 0.0
    %2978 = vmatprep.subr.mxu0 0.0
    %2979 = vmatpush1.xpose.msra.mxu0 0.0
    %2980 = vmatprep.subr.mxu0 0.0
    %2981 = vmatpush1.xpose.msra.mxu0 %v2948
    %2982 = vmatprep.subr.mxu0 0.0
    %2983 = vmatpush2.xpose.msra.mxu0 0.0
    %2984 = vmatprep.subr.mxu0 0.0
    %2985 = vmatpush2.xpose.msra.mxu0 0.0
    %2986 = vmatprep.subr.mxu0 0.0
    %2987 = vmatpush2.xpose.msra.mxu0 0.0
    %2988 = vmatprep.subr.mxu0 0.0
    %2989 = vmatpush2.xpose.msra.mxu0 0.0
    %2990 = vmatprep.subr.mxu0 0.0
    %2991 = vmatpush2.xpose.msra.mxu0 0.0
    %2992 = vmatprep.subr.mxu0 0.0
    %2993 = vmatpush2.xpose.msra.mxu0 0.0
    %2994 = vmatprep.subr.mxu0 0.0
    %2995 = vmatpush2.xpose.msra.mxu0 0.0
    %2996 = vmatprep.subr.mxu0 0.0
    %2997 = vmatpush2.xpose.msra.mxu0 0.0
    %2998 = vmatprep.subr.mxu0 0.0
    %2999 = vmatpush2.xpose.msra.mxu0 0.0
    %3000 = vmatprep.subr.mxu0 0.0
    %3001 = vmatpush2.xpose.msra.mxu0 0.0
    %3002 = vmatprep.subr.mxu0 0.0
    %3003 = vmatpush2.xpose.msra.mxu0 0.0
    %3004 = vmatprep.subr.mxu0 0.0
    %3005 = vmatpush2.xpose.msra.mxu0 0.0
    %3006 = vmatprep.subr.mxu0 0.0
    %3007 = vmatpush2.xpose.msra.mxu0 0.0
    %3008 = vmatprep.subr.mxu0 0.0
    %3009 = vmatpush2.xpose.msra.mxu0 0.0
    %3010 = vmatprep.subr.mxu0 0.0
    %3011 = vmatpush2.xpose.msra.mxu0 0.0
    %3012 = vmatprep.subr.mxu0 0.0
    %3013 = vmatpush2.xpose.msra.mxu0 0.0
    %3014 = vmatprep.mubr.f32.mxu0 0.0
    %3015 = vmatmul.mubr.f32.gmra.mxu0 %v2946
    %v3016 = vpop.f32.mrf.mxu0
    %v3017 = vadd.f32 0.0, %v3016
    %v3018 = vpop.f32.mrf.mxu0
    %3019 = vdwg.mxu0
    %v3020 = vsel %vm133, %v2939, -inf
    %3021 = vmax.xlane.f32.xlu0 %v3020
    %v3022 = vpop.xlane.xlu0 %3021
    %v3023 = vsel %vm133, %v3017, -inf
    %3024 = vmax.xlane.f32.xlu0 %v3023
    %v3025 = vpop.xlane.xlu0 %3024
    %v3026 = vsub.f32 %v2939, %v3022
    %v3027 = vsub.f32 %v3017, %v3025
    %v3028 = vmul.f32 %v3026, 1.442695
    %v3029 = vpow.pop %v3028
    %v3030 = vmul.f32 %v3027, 1.442695
    %v3031 = vpow.pop %v3030
    %v3032 = vsel %vm133, %v3029, 0.0
    %3033 = vadd.xlane.f32.xlu0 %v3032
    %v3034 = vpop.xlane.xlu0 %3033
    %v3035 = vsel %vm133, %v3031, 0.0
    %3036 = vadd.xlane.f32.xlu0 %v3035
    %v3037 = vpop.xlane.xlu0 %3036
    %v3038 = vrcp.pop %v3034
    %v3039 = vrcp.pop %v3037
    %v3040 = vmul.f32 %v3029, %v3038
    %v3041 = vmul.f32 %v3031, %v3039
    %3042 = vrot.lane.b32.xlu0 %v1870, 40
    %v3043 = vpop.permute.xlu0 %3042
    %v3046 = vsel %vm133, %v3040, 0
    %3048 = vmatprep.subr.mxu0 0.0
    %3049 = vmatpush1.msra.mxu0 0.0
    %3050 = vmatprep.subr.mxu0 0.0
    %3051 = vmatpush1.msra.mxu0 0.0
    %3052 = vmatprep.subr.mxu0 0.0
    %3053 = vmatpush1.msra.mxu0 0.0
    %3054 = vmatprep.subr.mxu0 0.0
    %3055 = vmatpush1.msra.mxu0 0.0
    %3056 = vmatprep.subr.mxu0 0.0
    %3057 = vmatpush1.msra.mxu0 0.0
    %3058 = vmatprep.subr.mxu0 0.0
    %3059 = vmatpush1.msra.mxu0 0.0
    %3060 = vmatprep.subr.mxu0 0.0
    %3061 = vmatpush1.msra.mxu0 0.0
    %3062 = vmatprep.subr.mxu0 0.0
    %3063 = vmatpush1.msra.mxu0 0.0
    %3064 = vmatprep.subr.mxu0 0.0
    %3065 = vmatpush1.msra.mxu0 0.0
    %3066 = vmatprep.subr.mxu0 0.0
    %3067 = vmatpush1.msra.mxu0 0.0
    %3068 = vmatprep.subr.mxu0 0.0
    %3069 = vmatpush1.msra.mxu0 0.0
    %3070 = vmatprep.subr.mxu0 0.0
    %3071 = vmatpush1.msra.mxu0 0.0
    %3072 = vmatprep.subr.mxu0 0.0
    %3073 = vmatpush1.msra.mxu0 0.0
    %3074 = vmatprep.subr.mxu0 0.0
    %3075 = vmatpush1.msra.mxu0 0.0
    %3076 = vmatprep.subr.mxu0 0.0
    %3077 = vmatpush1.msra.mxu0 0.0
    %3078 = vmatprep.subr.mxu0 0.0
    %3079 = vmatpush1.msra.mxu0 %v3043
    %3080 = vmatprep.subr.mxu0 0.0
    %3081 = vmatpush2.msra.mxu0 0.0
    %3082 = vmatprep.subr.mxu0 0.0
    %3083 = vmatpush2.msra.mxu0 0.0
    %3084 = vmatprep.subr.mxu0 0.0
    %3085 = vmatpush2.msra.mxu0 0.0
    %3086 = vmatprep.subr.mxu0 0.0
    %3087 = vmatpush2.msra.mxu0 0.0
    %3088 = vmatprep.subr.mxu0 0.0
    %3089 = vmatpush2.msra.mxu0 0.0
    %3090 = vmatprep.subr.mxu0 0.0
    %3091 = vmatpush2.msra.mxu0 0.0
    %3092 = vmatprep.subr.mxu0 0.0
    %3093 = vmatpush2.msra.mxu0 0.0
    %3094 = vmatprep.subr.mxu0 0.0
    %3095 = vmatpush2.msra.mxu0 0.0
    %3096 = vmatprep.subr.mxu0 0.0
    %3097 = vmatpush2.msra.mxu0 0.0
    %3098 = vmatprep.subr.mxu0 0.0
    %3099 = vmatpush2.msra.mxu0 0.0
    %3100 = vmatprep.subr.mxu0 0.0
    %3101 = vmatpush2.msra.mxu0 0.0
    %3102 = vmatprep.subr.mxu0 0.0
    %3103 = vmatpush2.msra.mxu0 0.0
    %3104 = vmatprep.subr.mxu0 0.0
    %3105 = vmatpush2.msra.mxu0 0.0
    %3106 = vmatprep.subr.mxu0 0.0
    %3107 = vmatpush2.msra.mxu0 0.0
    %3108 = vmatprep.subr.mxu0 0.0
    %3109 = vmatpush2.msra.mxu0 0.0
    %3110 = vmatprep.subr.mxu0 0.0
    %3111 = vmatpush2.msra.mxu0 0.0
    %3112 = vmatprep.mubr.f32.mxu0 0.0
    %3113 = vmatmul.mubr.f32.gmra.mxu0 %v3046
    %v3114 = vpop.f32.mrf.mxu0
    %v3115 = vadd.f32 0.0, %v3114
    %v3116 = vpop.f32.mrf.mxu0
    %3117 = vdwg.mxu0
    %3118 = vrot.lane.b32.xlu0 %v1873, 40
    %v3119 = vpop.permute.xlu0 %3118
    %v3122 = vsel %vm133, %v3041, 0
    %3124 = vmatprep.subr.mxu0 0.0
    %3125 = vmatpush1.msra.mxu0 0.0
    %3126 = vmatprep.subr.mxu0 0.0
    %3127 = vmatpush1.msra.mxu0 0.0
    %3128 = vmatprep.subr.mxu0 0.0
    %3129 = vmatpush1.msra.mxu0 0.0
    %3130 = vmatprep.subr.mxu0 0.0
    %3131 = vmatpush1.msra.mxu0 0.0
    %3132 = vmatprep.subr.mxu0 0.0
    %3133 = vmatpush1.msra.mxu0 0.0
    %3134 = vmatprep.subr.mxu0 0.0
    %3135 = vmatpush1.msra.mxu0 0.0
    %3136 = vmatprep.subr.mxu0 0.0
    %3137 = vmatpush1.msra.mxu0 0.0
    %3138 = vmatprep.subr.mxu0 0.0
    %3139 = vmatpush1.msra.mxu0 0.0
    %3140 = vmatprep.subr.mxu0 0.0
    %3141 = vmatpush1.msra.mxu0 0.0
    %3142 = vmatprep.subr.mxu0 0.0
    %3143 = vmatpush1.msra.mxu0 0.0
    %3144 = vmatprep.subr.mxu0 0.0
    %3145 = vmatpush1.msra.mxu0 0.0
    %3146 = vmatprep.subr.mxu0 0.0
    %3147 = vmatpush1.msra.mxu0 0.0
    %3148 = vmatprep.subr.mxu0 0.0
    %3149 = vmatpush1.msra.mxu0 0.0
    %3150 = vmatprep.subr.mxu0 0.0
    %3151 = vmatpush1.msra.mxu0 0.0
    %3152 = vmatprep.subr.mxu0 0.0
    %3153 = vmatpush1.msra.mxu0 0.0
    %3154 = vmatprep.subr.mxu0 0.0
    %3155 = vmatpush1.msra.mxu0 %v3119
    %3156 = vmatprep.subr.mxu0 0.0
    %3157 = vmatpush2.msra.mxu0 0.0
    %3158 = vmatprep.subr.mxu0 0.0
    %3159 = vmatpush2.msra.mxu0 0.0
    %3160 = vmatprep.subr.mxu0 0.0
    %3161 = vmatpush2.msra.mxu0 0.0
    %3162 = vmatprep.subr.mxu0 0.0
    %3163 = vmatpush2.msra.mxu0 0.0
    %3164 = vmatprep.subr.mxu0 0.0
    %3165 = vmatpush2.msra.mxu0 0.0
    %3166 = vmatprep.subr.mxu0 0.0
    %3167 = vmatpush2.msra.mxu0 0.0
    %3168 = vmatprep.subr.mxu0 0.0
    %3169 = vmatpush2.msra.mxu0 0.0
    %3170 = vmatprep.subr.mxu0 0.0
    %3171 = vmatpush2.msra.mxu0 0.0
    %3172 = vmatprep.subr.mxu0 0.0
    %3173 = vmatpush2.msra.mxu0 0.0
    %3174 = vmatprep.subr.mxu0 0.0
    %3175 = vmatpush2.msra.mxu0 0.0
    %3176 = vmatprep.subr.mxu0 0.0
    %3177 = vmatpush2.msra.mxu0 0.0
    %3178 = vmatprep.subr.mxu0 0.0
    %3179 = vmatpush2.msra.mxu0 0.0
    %3180 = vmatprep.subr.mxu0 0.0
    %3181 = vmatpush2.msra.mxu0 0.0
    %3182 = vmatprep.subr.mxu0 0.0
    %3183 = vmatpush2.msra.mxu0 0.0
    %3184 = vmatprep.subr.mxu0 0.0
    %3185 = vmatpush2.msra.mxu0 0.0
    %3186 = vmatprep.subr.mxu0 0.0
    %3187 = vmatpush2.msra.mxu0 0.0
    %3188 = vmatprep.mubr.f32.mxu0 0.0
    %3189 = vmatmul.mubr.f32.gmra.mxu0 %v3122
    %v3190 = vpop.f32.mrf.mxu0
    %v3191 = vadd.f32 0.0, %v3190
    %v3192 = vpop.f32.mrf.mxu0
    %3193 = vdwg.mxu0
    %3196 = vrot.lane.b32.xlu0 %v2455, 8
    %v3197 = vpop.permute.xlu0 %3196
    %3198 = vrot.lane.b32.xlu0 %v2531, 8
    %v3199 = vpop.permute.xlu0 %3198
    %3204 = vrot.lane.b32.xlu0 %v2785, 16
    %v3205 = vpop.permute.xlu0 %3204
    %3206 = vrot.lane.b32.xlu0 %v2861, 16
    %v3207 = vpop.permute.xlu0 %3206
    %3212 = vrot.lane.b32.xlu0 %v3115, 24
    %v3213 = vpop.permute.xlu0 %3212
    %3214 = vrot.lane.b32.xlu0 %v3191, 24
    %v3215 = vpop.permute.xlu0 %3214
    %v3218 = vsel %vm133, %v2125, %v3197
    %v3219 = vsel %vm133, %v2201, %v3199
    %vm3220 = vcmask 130048
    %v3221 = vsel %vm3220, %v3218, %v3205
    %v3222 = vsel %vm3220, %v3219, %v3207
    %vm3223 = vcmask 195584
    %v3224 = vsel %vm3223, %v3221, %v3213
    %v3225 = vsel %vm3223, %v3222, %v3215
    %v3226 = vpack.c.bf16 %v3225, %v3224
    %v3227 = vld [vmem:[%s6] sm:$0xf]
    %v3228 = vld [vmem:[%s6 + $0x4] sm:$0xf]
    %v3229 = vld [vmem:[%s6 + $0x8] sm:$0xf]
    %v3230 = vld [vmem:[%s6 + $0xc] sm:$0xf]
    %v3231 = vld [vmem:[%s14 + $0x3] sm:$0x1]
    %v3233 = vlaneseq
    %v3234 = vshrl.u32 %v3233, 7
    %v3235 = vsub.s32 0, %v3234
    %v3236 = vrot.slane %v3231, %v3235
    %v3242 = vunpack.c.l.b16 %v3227
    %v3243 = vunpack.c.l.b16 %v3228
    %v3244 = vunpack.c.l.b16 %v3229
    %v3245 = vunpack.c.l.b16 %v3230
    %v3246 = vpack.c.b16 %v3243, %v3242
    %v3247 = vpack.c.b16 %v3245, %v3244
    %v3251 = vsel %vm194, %v3226, 0
    %3253 = vmatprep.subr.bf16.mxu0 0
    %3254 = vmatpush1.bf16.msra.mxu0 0
    %3255 = vmatprep.subr.bf16.mxu0 0
    %3256 = vmatpush1.bf16.msra.mxu0 0
    %3257 = vmatprep.subr.bf16.mxu0 0
    %3258 = vmatpush1.bf16.msra.mxu0 0
    %3259 = vmatprep.subr.bf16.mxu0 0
    %3260 = vmatpush1.bf16.msra.mxu0 0
    %3261 = vmatprep.subr.bf16.mxu0 0
    %3262 = vmatpush1.bf16.msra.mxu0 0
    %3263 = vmatprep.subr.bf16.mxu0 0
    %3264 = vmatpush1.bf16.msra.mxu0 0
    %3265 = vmatprep.subr.bf16.mxu0 0
    %3266 = vmatpush1.bf16.msra.mxu0 %v3247
    %3267 = vmatprep.subr.bf16.mxu0 0
    %3268 = vmatpush1.bf16.msra.mxu0 %v3246
    %3269 = vmatprep.subr.bf16.mxu0 0
    %3270 = vmatpush2.bf16.msra.mxu0 0
    %3271 = vmatprep.subr.bf16.mxu0 0
    %3272 = vmatpush2.bf16.msra.mxu0 0
    %3273 = vmatprep.subr.bf16.mxu0 0
    %3274 = vmatpush2.bf16.msra.mxu0 0
    %3275 = vmatprep.subr.bf16.mxu0 0
    %3276 = vmatpush2.bf16.msra.mxu0 0
    %3277 = vmatprep.subr.bf16.mxu0 0
    %3278 = vmatpush2.bf16.msra.mxu0 0
    %3279 = vmatprep.subr.bf16.mxu0 0
    %3280 = vmatpush2.bf16.msra.mxu0 0
    %3281 = vmatprep.subr.bf16.mxu0 0
    %3282 = vmatpush2.bf16.msra.mxu0 0
    %3283 = vmatprep.subr.bf16.mxu0 0
    %3284 = vmatpush2.bf16.msra.mxu0 0
    %3285 = vmatprep.mubr.bf16.mxu0 0
    %3286 = vmatmul.mubr.bf16.gmra.mxu0 %v3251
    %v3287 = vpop.f32.mrf.mxu0
    %v3288 = vadd.f32 %v3236, %v3287
    %v3289 = vpop.f32.mrf.mxu0
    %v3290 = vpop.f32.mrf.mxu0
    %v3291 = vadd.f32 %v3236, %v3290
    %v3292 = vpop.f32.mrf.mxu0
    %3293 = vdwg.mxu0
    %3296 = vrot.lane.b32.xlu0 %v3288, 96
    %v3297 = vpop.permute.xlu0 %3296
    %3298 = vrot.lane.b32.xlu0 %v3291, 96
    %v3299 = vpop.permute.xlu0 %3298
    %v3302 = vadd.f32 %v1803, %v3297
    %v3303 = vadd.f32 %v1804, %v3299
    %v3304 = vld [vmem:[%s14 + $0x4] sm:$0x1]
    %v3305 = vld [vmem:[%s14 + $0x5] sm:$0x1]
    %3308 = vrot.lane.b32.xlu0 %v3302, 32
    %v3309 = vpop.permute.xlu0 %3308
    %3310 = vrot.lane.b32.xlu0 %v3303, 32
    %v3311 = vpop.permute.xlu0 %3310
    %v3314 = vsel %vm194, %v3309, 0.0
    %3315 = vadd.xlane.f32.xlu0 %v3314
    %v3316 = vpop.xlane.xlu0 %3315
    %v3317 = vsel %vm194, %v3311, 0.0
    %3318 = vadd.xlane.f32.xlu0 %v3317
    %v3319 = vpop.xlane.xlu0 %3318
    %v3320 = vrcp.pop 32.0
    %v3321 = vmul.f32 %v3316, %v3320
    %v3322 = vmul.f32 %v3319, %v3320
    %v3323 = vsub.f32 %v3302, %v3321
    %v3324 = vsub.f32 %v3303, %v3322
    %v3325 = vmul.f32 %v3323, %v3323
    %v3326 = vmul.f32 %v3324, %v3324
    %3329 = vrot.lane.b32.xlu0 %v3325, 32
    %v3330 = vpop.permute.xlu0 %3329
    %3331 = vrot.lane.b32.xlu0 %v3326, 32
    %v3332 = vpop.permute.xlu0 %3331
    %v3335 = vsel %vm194, %v3330, 0.0
    %3336 = vadd.xlane.f32.xlu0 %v3335
    %v3337 = vpop.xlane.xlu0 %3336
    %v3338 = vsel %vm194, %v3332, 0.0
    %3339 = vadd.xlane.f32.xlu0 %v3338
    %v3340 = vpop.xlane.xlu0 %3339
    %v3341 = vmul.f32 %v3337, %v3320
    %v3342 = vmul.f32 %v3340, %v3320
    %v3343 = vadd.f32 %v3341, 1e-05
    %v3344 = vadd.f32 %v3342, 1e-05
    %v3345 = vrsqrt.pop %v3343
    %v3346 = vrsqrt.pop %v3344
    %v3347 = vmul.f32 %v3323, %v3345
    %v3348 = vmul.f32 %v3324, %v3346
    %v3350 = vlaneseq
    %v3351 = vshrl.u32 %v3350, 7
    %v3352 = vsub.s32 0, %v3351
    %v3353 = vrot.slane %v3304, %v3352
    %3354 = vrot.lane.b32.xlu0 %v3353, 96
    %v3355 = vpop.permute.xlu0 %3354
    %v3357 = vmul.f32 %v3347, %v3355
    %v3358 = vmul.f32 %v3348, %v3355
    %v3360 = vlaneseq
    %v3361 = vshrl.u32 %v3360, 7
    %v3362 = vsub.s32 0, %v3361
    %v3363 = vrot.slane %v3305, %v3362
    %3364 = vrot.lane.b32.xlu0 %v3363, 96
    %v3365 = vpop.permute.xlu0 %3364
    %v3367 = vadd.f32 %v3357, %v3365
    %v3368 = vadd.f32 %v3358, %v3365
    %v3369 = vpack.c.bf16 %v3368, %v3367
    %v3370 = vld [vmem:[#allocation5] sm:$0xff]
    %v3371 = vld [vmem:[#allocation5 + $0x8] sm:$0xff]
    %v3372 = vld [vmem:[#allocation5 + $0x40] sm:$0xff]
    %v3373 = vld [vmem:[#allocation5 + $0x48] sm:$0xff]
    %v3374 = vld [vmem:[#allocation5 + $0x80] sm:$0xff]
    %v3375 = vld [vmem:[#allocation5 + $0x88] sm:$0xff]
    %v3376 = vld [vmem:[#allocation5 + $0xc0] sm:$0xff]
    %v3377 = vld [vmem:[#allocation5 + $0xc8] sm:$0xff]
    %v3378 = vld [vmem:[%s14 + $0x6] sm:$0xf]
    %v3380 = vlaneseq
    %v3381 = vshrl.u32 %v3380, 7
    %v3382 = vsub.s32 0, %v3381
    %v3383 = vrot.slane %v3378, %v3382
    %v3384 = vlaneseq
    %v3385 = vshrl.u32 %v3384, 7
    %v3386 = vsub.s32 1, %v3385
    %v3387 = vrot.slane %v3378, %v3386
    %v3388 = vlaneseq
    %v3389 = vshrl.u32 %v3388, 7
    %v3390 = vsub.s32 2, %v3389
    %v3391 = vrot.slane %v3378, %v3390
    %v3392 = vlaneseq
    %v3393 = vshrl.u32 %v3392, 7
    %v3394 = vsub.s32 3, %v3393
    %v3395 = vrot.slane %v3378, %v3394
    %3401 = vrot.lane.b32.xlu0 %v3369, 32
    %v3402 = vpop.permute.xlu0 %3401
    %v3411 = vunpack.c.l.b16 %v3370
    %v3412 = vunpack.c.h.b16 %v3370
    %v3413 = vunpack.c.l.b16 %v3371
    %v3414 = vunpack.c.h.b16 %v3371
    %v3415 = vunpack.c.l.b16 %v3372
    %v3416 = vunpack.c.h.b16 %v3372
    %v3417 = vunpack.c.l.b16 %v3373
    %v3418 = vunpack.c.h.b16 %v3373
    %v3419 = vunpack.c.l.b16 %v3374
    %v3420 = vunpack.c.h.b16 %v3374
    %v3421 = vunpack.c.l.b16 %v3375
    %v3422 = vunpack.c.h.b16 %v3375
    %v3423 = vunpack.c.l.b16 %v3376
    %v3424 = vunpack.c.h.b16 %v3376
    %v3425 = vunpack.c.l.b16 %v3377
    %v3426 = vunpack.c.h.b16 %v3377
    %v3427 = vpack.c.b16 %v3415, %v3411
    %v3428 = vpack.c.b16 %v3416, %v3412
    %v3429 = vpack.c.b16 %v3417, %v3413
    %v3430 = vpack.c.b16 %v3418, %v3414
    %v3431 = vpack.c.b16 %v3423, %v3419
    %v3432 = vpack.c.b16 %v3424, %v3420
    %v3433 = vpack.c.b16 %v3425, %v3421
    %v3434 = vpack.c.b16 %v3426, %v3422
    %v3444 = vsel %vm194, %v3402, 0
    %3446 = vmatprep.subr.bf16.mxu0 0
    %3447 = vmatpush1.bf16.msra.mxu0 0
    %3448 = vmatprep.subr.bf16.mxu0 0
    %3449 = vmatpush1.bf16.msra.mxu0 0
    %3450 = vmatprep.subr.bf16.mxu0 0
    %3451 = vmatpush1.bf16.msra.mxu0 0
    %3452 = vmatprep.subr.bf16.mxu0 0
    %3453 = vmatpush1.bf16.msra.mxu0 0
    %3454 = vmatprep.subr.bf16.mxu0 0
    %3455 = vmatpush1.bf16.msra.mxu0 0
    %3456 = vmatprep.subr.bf16.mxu0 0
    %3457 = vmatpush1.bf16.msra.mxu0 0
    %3458 = vmatprep.subr.bf16.mxu0 %v3432
    %3459 = vmatpush1.bf16.msra.mxu0 %v3431
    %3460 = vmatprep.subr.bf16.mxu0 %v3428
    %3461 = vmatpush1.bf16.msra.mxu0 %v3427
    %3462 = vmatprep.subr.bf16.mxu0 0
    %3463 = vmatpush2.bf16.msra.mxu0 0
    %3464 = vmatprep.subr.bf16.mxu0 0
    %3465 = vmatpush2.bf16.msra.mxu0 0
    %3466 = vmatprep.subr.bf16.mxu0 0
    %3467 = vmatpush2.bf16.msra.mxu0 0
    %3468 = vmatprep.subr.bf16.mxu0 0
    %3469 = vmatpush2.bf16.msra.mxu0 0
    %3470 = vmatprep.subr.bf16.mxu0 0
    %3471 = vmatpush2.bf16.msra.mxu0 0
    %3472 = vmatprep.subr.bf16.mxu0 0
    %3473 = vmatpush2.bf16.msra.mxu0 0
    %3474 = vmatprep.subr.bf16.mxu0 0
    %3475 = vmatpush2.bf16.msra.mxu0 0
    %3476 = vmatprep.subr.bf16.mxu0 0
    %3477 = vmatpush2.bf16.msra.mxu0 0
    %3478 = vmatprep.mubr.bf16.mxu0 0
    %3479 = vmatmul.mubr.bf16.gmra.mxu0 %v3444
    %v3480 = vpop.f32.mrf.mxu0
    %v3481 = vadd.f32 %v3383, %v3480
    %v3482 = vpop.f32.mrf.mxu0
    %v3483 = vadd.f32 %v3387, %v3482
    %v3484 = vpop.f32.mrf.mxu0
    %v3485 = vadd.f32 %v3383, %v3484
    %v3486 = vpop.f32.mrf.mxu0
    %v3487 = vadd.f32 %v3387, %v3486
    %3488 = vdwg.mxu0
    %3489 = vmatprep.subr.bf16.mxu0 0
    %3490 = vmatpush1.bf16.msra.mxu0 0
    %3491 = vmatprep.subr.bf16.mxu0 0
    %3492 = vmatpush1.bf16.msra.mxu0 0
    %3493 = vmatprep.subr.bf16.mxu0 0
    %3494 = vmatpush1.bf16.msra.mxu0 0
    %3495 = vmatprep.subr.bf16.mxu0 0
    %3496 = vmatpush1.bf16.msra.mxu0 0
    %3497 = vmatprep.subr.bf16.mxu0 0
    %3498 = vmatpush1.bf16.msra.mxu0 0
    %3499 = vmatprep.subr.bf16.mxu0 0
    %3500 = vmatpush1.bf16.msra.mxu0 0
    %3501 = vmatprep.subr.bf16.mxu0 %v3434
    %3502 = vmatpush1.bf16.msra.mxu0 %v3433
    %3503 = vmatprep.subr.bf16.mxu0 %v3430
    %3504 = vmatpush1.bf16.msra.mxu0 %v3429
    %3505 = vmatprep.subr.bf16.mxu0 0
    %3506 = vmatpush2.bf16.msra.mxu0 0
    %3507 = vmatprep.subr.bf16.mxu0 0
    %3508 = vmatpush2.bf16.msra.mxu0 0
    %3509 = vmatprep.subr.bf16.mxu0 0
    %3510 = vmatpush2.bf16.msra.mxu0 0
    %3511 = vmatprep.subr.bf16.mxu0 0
    %3512 = vmatpush2.bf16.msra.mxu0 0
    %3513 = vmatprep.subr.bf16.mxu0 0
    %3514 = vmatpush2.bf16.msra.mxu0 0
    %3515 = vmatprep.subr.bf16.mxu0 0
    %3516 = vmatpush2.bf16.msra.mxu0 0
    %3517 = vmatprep.subr.bf16.mxu0 0
    %3518 = vmatpush2.bf16.msra.mxu0 0
    %3519 = vmatprep.subr.bf16.mxu0 0
    %3520 = vmatpush2.bf16.msra.mxu0 0
    %3521 = vmatprep.mubr.bf16.mxu0 0
    %3522 = vmatmul.mubr.bf16.gmra.mxu0 %v3444
    %v3523 = vpop.f32.mrf.mxu0
    %v3524 = vadd.f32 %v3391, %v3523
    %v3525 = vpop.f32.mrf.mxu0
    %v3526 = vadd.f32 %v3395, %v3525
    %v3527 = vpop.f32.mrf.mxu0
    %v3528 = vadd.f32 %v3391, %v3527
    %v3529 = vpop.f32.mrf.mxu0
    %v3530 = vadd.f32 %v3395, %v3529
    %3531 = vdwg.mxu0
    %v3532 = vmax.f32 %v3481, 0.0
    %v3533 = vmax.f32 %v3483, 0.0
    %v3534 = vmax.f32 %v3524, 0.0
    %v3535 = vmax.f32 %v3526, 0.0
    %v3536 = vmax.f32 %v3485, 0.0
    %v3537 = vmax.f32 %v3487, 0.0
    %v3538 = vmax.f32 %v3528, 0.0
    %v3539 = vmax.f32 %v3530, 0.0
    %v3540 = vpack.c.bf16 %v3536, %v3532
    %v3541 = vpack.c.bf16 %v3537, %v3533
    %v3542 = vpack.c.bf16 %v3538, %v3534
    %v3543 = vpack.c.bf16 %v3539, %v3535
    %v3544 = vld [vmem:[#allocation7] sm:$0xf]
    %v3545 = vld [vmem:[#allocation7 + $0x4] sm:$0xf]
    %v3546 = vld [vmem:[#allocation7 + $0x8] sm:$0xf]
    %v3547 = vld [vmem:[#allocation7 + $0xc] sm:$0xf]
    %v3548 = vld [vmem:[#allocation7 + $0x10] sm:$0xf]
    %v3549 = vld [vmem:[#allocation7 + $0x14] sm:$0xf]
    %v3550 = vld [vmem:[#allocation7 + $0x18] sm:$0xf]
    %v3551 = vld [vmem:[#allocation7 + $0x1c] sm:$0xf]
    %v3552 = vld [vmem:[#allocation7 + $0x20] sm:$0xf]
    %v3553 = vld [vmem:[#allocation7 + $0x24] sm:$0xf]
    %v3554 = vld [vmem:[#allocation7 + $0x28] sm:$0xf]
    %v3555 = vld [vmem:[#allocation7 + $0x2c] sm:$0xf]
    %v3556 = vld [vmem:[#allocation7 + $0x30] sm:$0xf]
    %v3557 = vld [vmem:[#allocation7 + $0x34] sm:$0xf]
    %v3558 = vld [vmem:[#allocation7 + $0x38] sm:$0xf]
    %v3559 = vld [vmem:[#allocation7 + $0x3c] sm:$0xf]
    %v3560 = vld [vmem:[#allocation7 + $0x40] sm:$0xf]
    %v3561 = vld [vmem:[#allocation7 + $0x44] sm:$0xf]
    %v3562 = vld [vmem:[#allocation7 + $0x48] sm:$0xf]
    %v3563 = vld [vmem:[#allocation7 + $0x4c] sm:$0xf]
    %v3564 = vld [vmem:[#allocation7 + $0x50] sm:$0xf]
    %v3565 = vld [vmem:[#allocation7 + $0x54] sm:$0xf]
    %v3566 = vld [vmem:[#allocation7 + $0x58] sm:$0xf]
    %v3567 = vld [vmem:[#allocation7 + $0x5c] sm:$0xf]
    %v3568 = vld [vmem:[#allocation7 + $0x60] sm:$0xf]
    %v3569 = vld [vmem:[#allocation7 + $0x64] sm:$0xf]
    %v3570 = vld [vmem:[#allocation7 + $0x68] sm:$0xf]
    %v3571 = vld [vmem:[#allocation7 + $0x6c] sm:$0xf]
    %v3572 = vld [vmem:[#allocation7 + $0x70] sm:$0xf]
    %v3573 = vld [vmem:[#allocation7 + $0x74] sm:$0xf]
    %v3574 = vld [vmem:[#allocation7 + $0x78] sm:$0xf]
    %v3575 = vld [vmem:[#allocation7 + $0x7c] sm:$0xf]
    %v3576 = vld [vmem:[#allocation7 + $0x80] sm:$0xf]
    %v3577 = vld [vmem:[#allocation7 + $0x84] sm:$0xf]
    %v3578 = vld [vmem:[#allocation7 + $0x88] sm:$0xf]
    %v3579 = vld [vmem:[#allocation7 + $0x8c] sm:$0xf]
    %v3580 = vld [vmem:[#allocation7 + $0x90] sm:$0xf]
    %v3581 = vld [vmem:[#allocation7 + $0x94] sm:$0xf]
    %v3582 = vld [vmem:[#allocation7 + $0x98] sm:$0xf]
    %v3583 = vld [vmem:[#allocation7 + $0x9c] sm:$0xf]
    %v3584 = vld [vmem:[#allocation7 + $0xa0] sm:$0xf]
    %v3585 = vld [vmem:[#allocation7 + $0xa4] sm:$0xf]
    %v3586 = vld [vmem:[#allocation7 + $0xa8] sm:$0xf]
    %v3587 = vld [vmem:[#allocation7 + $0xac] sm:$0xf]
    %v3588 = vld [vmem:[#allocation7 + $0xb0] sm:$0xf]
    %v3589 = vld [vmem:[#allocation7 + $0xb4] sm:$0xf]
    %v3590 = vld [vmem:[#allocation7 + $0xb8] sm:$0xf]
    %v3591 = vld [vmem:[#allocation7 + $0xbc] sm:$0xf]
    %v3592 = vld [vmem:[#allocation7 + $0xc0] sm:$0xf]
    %v3593 = vld [vmem:[#allocation7 + $0xc4] sm:$0xf]
    %v3594 = vld [vmem:[#allocation7 + $0xc8] sm:$0xf]
    %v3595 = vld [vmem:[#allocation7 + $0xcc] sm:$0xf]
    %v3596 = vld [vmem:[#allocation7 + $0xd0] sm:$0xf]
    %v3597 = vld [vmem:[#allocation7 + $0xd4] sm:$0xf]
    %v3598 = vld [vmem:[#allocation7 + $0xd8] sm:$0xf]
    %v3599 = vld [vmem:[#allocation7 + $0xdc] sm:$0xf]
    %v3600 = vld [vmem:[#allocation7 + $0xe0] sm:$0xf]
    %v3601 = vld [vmem:[#allocation7 + $0xe4] sm:$0xf]
    %v3602 = vld [vmem:[#allocation7 + $0xe8] sm:$0xf]
    %v3603 = vld [vmem:[#allocation7 + $0xec] sm:$0xf]
    %v3604 = vld [vmem:[#allocation7 + $0xf0] sm:$0xf]
    %v3605 = vld [vmem:[#allocation7 + $0xf4] sm:$0xf]
    %v3606 = vld [vmem:[#allocation7 + $0xf8] sm:$0xf]
    %v3607 = vld [vmem:[#allocation7 + $0xfc] sm:$0xf]
    %v3608 = vld [vmem:[#allocation5 + $0x10] sm:$0xff]
    %v3609 = vld [vmem:[#allocation5 + $0x18] sm:$0xff]
    %v3610 = vld [vmem:[#allocation5 + $0x50] sm:$0xff]
    %v3611 = vld [vmem:[#allocation5 + $0x58] sm:$0xff]
    %v3612 = vld [vmem:[#allocation5 + $0x90] sm:$0xff]
    %v3613 = vld [vmem:[#allocation5 + $0x98] sm:$0xff]
    %v3614 = vld [vmem:[#allocation5 + $0xd0] sm:$0xff]
    %v3615 = vld [vmem:[#allocation5 + $0xd8] sm:$0xff]
    %v3616 = vld [vmem:[%s14 + $0xa] sm:$0xf]
    %v3618 = vlaneseq
    %v3619 = vshrl.u32 %v3618, 7
    %v3620 = vsub.s32 0, %v3619
    %v3621 = vrot.slane %v3616, %v3620
    %v3622 = vlaneseq
    %v3623 = vshrl.u32 %v3622, 7
    %v3624 = vsub.s32 1, %v3623
    %v3625 = vrot.slane %v3616, %v3624
    %v3626 = vlaneseq
    %v3627 = vshrl.u32 %v3626, 7
    %v3628 = vsub.s32 2, %v3627
    %v3629 = vrot.slane %v3616, %v3628
    %v3630 = vlaneseq
    %v3631 = vshrl.u32 %v3630, 7
    %v3632 = vsub.s32 3, %v3631
    %v3633 = vrot.slane %v3616, %v3632
    %v3646 = vunpack.c.l.b16 %v3608
    %v3647 = vunpack.c.h.b16 %v3608
    %v3648 = vunpack.c.l.b16 %v3609
    %v3649 = vunpack.c.h.b16 %v3609
    %v3650 = vunpack.c.l.b16 %v3610
    %v3651 = vunpack.c.h.b16 %v3610
    %v3652 = vunpack.c.l.b16 %v3611
    %v3653 = vunpack.c.h.b16 %v3611
    %v3654 = vunpack.c.l.b16 %v3612
    %v3655 = vunpack.c.h.b16 %v3612
    %v3656 = vunpack.c.l.b16 %v3613
    %v3657 = vunpack.c.h.b16 %v3613
    %v3658 = vunpack.c.l.b16 %v3614
    %v3659 = vunpack.c.h.b16 %v3614
    %v3660 = vunpack.c.l.b16 %v3615
    %v3661 = vunpack.c.h.b16 %v3615
    %v3662 = vpack.c.b16 %v3650, %v3646
    %v3663 = vpack.c.b16 %v3651, %v3647
    %v3664 = vpack.c.b16 %v3652, %v3648
    %v3665 = vpack.c.b16 %v3653, %v3649
    %v3666 = vpack.c.b16 %v3658, %v3654
    %v3667 = vpack.c.b16 %v3659, %v3655
    %v3668 = vpack.c.b16 %v3660, %v3656
    %v3669 = vpack.c.b16 %v3661, %v3657
    %3678 = vmatprep.subr.bf16.mxu0 0
    %3679 = vmatpush1.bf16.msra.mxu0 0
    %3680 = vmatprep.subr.bf16.mxu0 0
    %3681 = vmatpush1.bf16.msra.mxu0 0
    %3682 = vmatprep.subr.bf16.mxu0 0
    %3683 = vmatpush1.bf16.msra.mxu0 0
    %3684 = vmatprep.subr.bf16.mxu0 0
    %3685 = vmatpush1.bf16.msra.mxu0 0
    %3686 = vmatprep.subr.bf16.mxu0 0
    %3687 = vmatpush1.bf16.msra.mxu0 0
    %3688 = vmatprep.subr.bf16.mxu0 0
    %3689 = vmatpush1.bf16.msra.mxu0 0
    %3690 = vmatprep.subr.bf16.mxu0 %v3667
    %3691 = vmatpush1.bf16.msra.mxu0 %v3666
    %3692 = vmatprep.subr.bf16.mxu0 %v3663
    %3693 = vmatpush1.bf16.msra.mxu0 %v3662
    %3694 = vmatprep.subr.bf16.mxu0 0
    %3695 = vmatpush2.bf16.msra.mxu0 0
    %3696 = vmatprep.subr.bf16.mxu0 0
    %3697 = vmatpush2.bf16.msra.mxu0 0
    %3698 = vmatprep.subr.bf16.mxu0 0
    %3699 = vmatpush2.bf16.msra.mxu0 0
    %3700 = vmatprep.subr.bf16.mxu0 0
    %3701 = vmatpush2.bf16.msra.mxu0 0
    %3702 = vmatprep.subr.bf16.mxu0 0
    %3703 = vmatpush2.bf16.msra.mxu0 0
    %3704 = vmatprep.subr.bf16.mxu0 0
    %3705 = vmatpush2.bf16.msra.mxu0 0
    %3706 = vmatprep.subr.bf16.mxu0 0
    %3707 = vmatpush2.bf16.msra.mxu0 0
    %3708 = vmatprep.subr.bf16.mxu0 0
    %3709 = vmatpush2.bf16.msra.mxu0 0
    %3710 = vmatprep.mubr.bf16.mxu0 0
    %3711 = vmatmul.mubr.bf16.gmra.mxu0 %v3444
    %v3712 = vpop.f32.mrf.mxu0
    %v3713 = vadd.f32 %v3621, %v3712
    %v3714 = vpop.f32.mrf.mxu0
    %v3715 = vadd.f32 %v3625, %v3714
    %v3716 = vpop.f32.mrf.mxu0
    %v3717 = vadd.f32 %v3621, %v3716
    %v3718 = vpop.f32.mrf.mxu0
    %v3719 = vadd.f32 %v3625, %v3718
    %3720 = vdwg.mxu0
    %3721 = vmatprep.subr.bf16.mxu0 0
    %3722 = vmatpush1.bf16.msra.mxu0 0
    %3723 = vmatprep.subr.bf16.mxu0 0
    %3724 = vmatpush1.bf16.msra.mxu0 0
    %3725 = vmatprep.subr.bf16.mxu0 0
    %3726 = vmatpush1.bf16.msra.mxu0 0
    %3727 = vmatprep.subr.bf16.mxu0 0
    %3728 = vmatpush1.bf16.msra.mxu0 0
    %3729 = vmatprep.subr.bf16.mxu0 0
    %3730 = vmatpush1.bf16.msra.mxu0 0
    %3731 = vmatprep.subr.bf16.mxu0 0
    %3732 = vmatpush1.bf16.msra.mxu0 0
    %3733 = vmatprep.subr.bf16.mxu0 %v3669
    %3734 = vmatpush1.bf16.msra.mxu0 %v3668
    %3735 = vmatprep.subr.bf16.mxu0 %v3665
    %3736 = vmatpush1.bf16.msra.mxu0 %v3664
    %3737 = vmatprep.subr.bf16.mxu0 0
    %3738 = vmatpush2.bf16.msra.mxu0 0
    %3739 = vmatprep.subr.bf16.mxu0 0
    %3740 = vmatpush2.bf16.msra.mxu0 0
    %3741 = vmatprep.subr.bf16.mxu0 0
    %3742 = vmatpush2.bf16.msra.mxu0 0
    %3743 = vmatprep.subr.bf16.mxu0 0
    %3744 = vmatpush2.bf16.msra.mxu0 0
    %3745 = vmatprep.subr.bf16.mxu0 0
    %3746 = vmatpush2.bf16.msra.mxu0 0
    %3747 = vmatprep.subr.bf16.mxu0 0
    %3748 = vmatpush2.bf16.msra.mxu0 0
    %3749 = vmatprep.subr.bf16.mxu0 0
    %3750 = vmatpush2.bf16.msra.mxu0 0
    %3751 = vmatprep.subr.bf16.mxu0 0
    %3752 = vmatpush2.bf16.msra.mxu0 0
    %3753 = vmatprep.mubr.bf16.mxu0 0
    %3754 = vmatmul.mubr.bf16.gmra.mxu0 %v3444
    %v3755 = vpop.f32.mrf.mxu0
    %v3756 = vadd.f32 %v3629, %v3755
    %v3757 = vpop.f32.mrf.mxu0
    %v3758 = vadd.f32 %v3633, %v3757
    %v3759 = vpop.f32.mrf.mxu0
    %v3760 = vadd.f32 %v3629, %v3759
    %v3761 = vpop.f32.mrf.mxu0
    %v3762 = vadd.f32 %v3633, %v3761
    %3763 = vdwg.mxu0
    %v3764 = vmax.f32 %v3713, 0.0
    %v3765 = vmax.f32 %v3715, 0.0
    %v3766 = vmax.f32 %v3756, 0.0
    %v3767 = vmax.f32 %v3758, 0.0
    %v3768 = vmax.f32 %v3717, 0.0
    %v3769 = vmax.f32 %v3719, 0.0
    %v3770 = vmax.f32 %v3760, 0.0
    %v3771 = vmax.f32 %v3762, 0.0
    %v3772 = vpack.c.bf16 %v3768, %v3764
    %v3773 = vpack.c.bf16 %v3769, %v3765
    %v3774 = vpack.c.bf16 %v3770, %v3766
    %v3775 = vpack.c.bf16 %v3771, %v3767
    %v3776 = vld [vmem:[#allocation7 + $0x100] sm:$0xf]
    %v3777 = vld [vmem:[#allocation7 + $0x104] sm:$0xf]
    %v3778 = vld [vmem:[#allocation7 + $0x108] sm:$0xf]
    %v3779 = vld [vmem:[#allocation7 + $0x10c] sm:$0xf]
    %v3780 = vld [vmem:[#allocation7 + $0x110] sm:$0xf]
    %v3781 = vld [vmem:[#allocation7 + $0x114] sm:$0xf]
    %v3782 = vld [vmem:[#allocation7 + $0x118] sm:$0xf]
    %v3783 = vld [vmem:[#allocation7 + $0x11c] sm:$0xf]
    %v3784 = vld [vmem:[#allocation7 + $0x120] sm:$0xf]
    %v3785 = vld [vmem:[#allocation7 + $0x124] sm:$0xf]
    %v3786 = vld [vmem:[#allocation7 + $0x128] sm:$0xf]
    %v3787 = vld [vmem:[#allocation7 + $0x12c] sm:$0xf]
    %v3788 = vld [vmem:[#allocation7 + $0x130] sm:$0xf]
    %v3789 = vld [vmem:[#allocation7 + $0x134] sm:$0xf]
    %v3790 = vld [vmem:[#allocation7 + $0x138] sm:$0xf]
    %v3791 = vld [vmem:[#allocation7 + $0x13c] sm:$0xf]
    %v3792 = vld [vmem:[#allocation7 + $0x140] sm:$0xf]
    %v3793 = vld [vmem:[#allocation7 + $0x144] sm:$0xf]
    %v3794 = vld [vmem:[#allocation7 + $0x148] sm:$0xf]
    %v3795 = vld [vmem:[#allocation7 + $0x14c] sm:$0xf]
    %v3796 = vld [vmem:[#allocation7 + $0x150] sm:$0xf]
    %v3797 = vld [vmem:[#allocation7 + $0x154] sm:$0xf]
    %v3798 = vld [vmem:[#allocation7 + $0x158] sm:$0xf]
    %v3799 = vld [vmem:[#allocation7 + $0x15c] sm:$0xf]
    %v3800 = vld [vmem:[#allocation7 + $0x160] sm:$0xf]
    %v3801 = vld [vmem:[#allocation7 + $0x164] sm:$0xf]
    %v3802 = vld [vmem:[#allocation7 + $0x168] sm:$0xf]
    %v3803 = vld [vmem:[#allocation7 + $0x16c] sm:$0xf]
    %v3804 = vld [vmem:[#allocation7 + $0x170] sm:$0xf]
    %v3805 = vld [vmem:[#allocation7 + $0x174] sm:$0xf]
    %v3806 = vld [vmem:[#allocation7 + $0x178] sm:$0xf]
    %v3807 = vld [vmem:[#allocation7 + $0x17c] sm:$0xf]
    %v3808 = vld [vmem:[#allocation7 + $0x180] sm:$0xf]
    %v3809 = vld [vmem:[#allocation7 + $0x184] sm:$0xf]
    %v3810 = vld [vmem:[#allocation7 + $0x188] sm:$0xf]
    %v3811 = vld [vmem:[#allocation7 + $0x18c] sm:$0xf]
    %v3812 = vld [vmem:[#allocation7 + $0x190] sm:$0xf]
    %v3813 = vld [vmem:[#allocation7 + $0x194] sm:$0xf]
    %v3814 = vld [vmem:[#allocation7 + $0x198] sm:$0xf]
    %v3815 = vld [vmem:[#allocation7 + $0x19c] sm:$0xf]
    %v3816 = vld [vmem:[#allocation7 + $0x1a0] sm:$0xf]
    %v3817 = vld [vmem:[#allocation7 + $0x1a4] sm:$0xf]
    %v3818 = vld [vmem:[#allocation7 + $0x1a8] sm:$0xf]
    %v3819 = vld [vmem:[#allocation7 + $0x1ac] sm:$0xf]
    %v3820 = vld [vmem:[#allocation7 + $0x1b0] sm:$0xf]
    %v3821 = vld [vmem:[#allocation7 + $0x1b4] sm:$0xf]
    %v3822 = vld [vmem:[#allocation7 + $0x1b8] sm:$0xf]
    %v3823 = vld [vmem:[#allocation7 + $0x1bc] sm:$0xf]
    %v3824 = vld [vmem:[#allocation7 + $0x1c0] sm:$0xf]
    %v3825 = vld [vmem:[#allocation7 + $0x1c4] sm:$0xf]
    %v3826 = vld [vmem:[#allocation7 + $0x1c8] sm:$0xf]
    %v3827 = vld [vmem:[#allocation7 + $0x1cc] sm:$0xf]
    %v3828 = vld [vmem:[#allocation7 + $0x1d0] sm:$0xf]
    %v3829 = vld [vmem:[#allocation7 + $0x1d4] sm:$0xf]
    %v3830 = vld [vmem:[#allocation7 + $0x1d8] sm:$0xf]
    %v3831 = vld [vmem:[#allocation7 + $0x1dc] sm:$0xf]
    %v3832 = vld [vmem:[#allocation7 + $0x1e0] sm:$0xf]
    %v3833 = vld [vmem:[#allocation7 + $0x1e4] sm:$0xf]
    %v3834 = vld [vmem:[#allocation7 + $0x1e8] sm:$0xf]
    %v3835 = vld [vmem:[#allocation7 + $0x1ec] sm:$0xf]
    %v3836 = vld [vmem:[#allocation7 + $0x1f0] sm:$0xf]
    %v3837 = vld [vmem:[#allocation7 + $0x1f4] sm:$0xf]
    %v3838 = vld [vmem:[#allocation7 + $0x1f8] sm:$0xf]
    %v3839 = vld [vmem:[#allocation7 + $0x1fc] sm:$0xf]
    %v3904 = vunpack.c.l.b16 %v3776
    %v3905 = vunpack.c.l.b16 %v3777
    %v3906 = vunpack.c.l.b16 %v3778
    %v3907 = vunpack.c.l.b16 %v3779
    %v3908 = vunpack.c.l.b16 %v3780
    %v3909 = vunpack.c.l.b16 %v3781
    %v3910 = vunpack.c.l.b16 %v3782
    %v3911 = vunpack.c.l.b16 %v3783
    %v3912 = vunpack.c.l.b16 %v3784
    %v3913 = vunpack.c.l.b16 %v3785
    %v3914 = vunpack.c.l.b16 %v3786
    %v3915 = vunpack.c.l.b16 %v3787
    %v3916 = vunpack.c.l.b16 %v3788
    %v3917 = vunpack.c.l.b16 %v3789
    %v3918 = vunpack.c.l.b16 %v3790
    %v3919 = vunpack.c.l.b16 %v3791
    %v3920 = vunpack.c.l.b16 %v3792
    %v3921 = vunpack.c.l.b16 %v3793
    %v3922 = vunpack.c.l.b16 %v3794
    %v3923 = vunpack.c.l.b16 %v3795
    %v3924 = vunpack.c.l.b16 %v3796
    %v3925 = vunpack.c.l.b16 %v3797
    %v3926 = vunpack.c.l.b16 %v3798
    %v3927 = vunpack.c.l.b16 %v3799
    %v3928 = vunpack.c.l.b16 %v3800
    %v3929 = vunpack.c.l.b16 %v3801
    %v3930 = vunpack.c.l.b16 %v3802
    %v3931 = vunpack.c.l.b16 %v3803
    %v3932 = vunpack.c.l.b16 %v3804
    %v3933 = vunpack.c.l.b16 %v3805
    %v3934 = vunpack.c.l.b16 %v3806
    %v3935 = vunpack.c.l.b16 %v3807
    %v3936 = vunpack.c.l.b16 %v3808
    %v3937 = vunpack.c.l.b16 %v3809
    %v3938 = vunpack.c.l.b16 %v3810
    %v3939 = vunpack.c.l.b16 %v3811
    %v3940 = vunpack.c.l.b16 %v3812
    %v3941 = vunpack.c.l.b16 %v3813
    %v3942 = vunpack.c.l.b16 %v3814
    %v3943 = vunpack.c.l.b16 %v3815
    %v3944 = vunpack.c.l.b16 %v3816
    %v3945 = vunpack.c.l.b16 %v3817
    %v3946 = vunpack.c.l.b16 %v3818
    %v3947 = vunpack.c.l.b16 %v3819
    %v3948 = vunpack.c.l.b16 %v3820
    %v3949 = vunpack.c.l.b16 %v3821
    %v3950 = vunpack.c.l.b16 %v3822
    %v3951 = vunpack.c.l.b16 %v3823
    %v3952 = vunpack.c.l.b16 %v3824
    %v3953 = vunpack.c.l.b16 %v3825
    %v3954 = vunpack.c.l.b16 %v3826
    %v3955 = vunpack.c.l.b16 %v3827
    %v3956 = vunpack.c.l.b16 %v3828
    %v3957 = vunpack.c.l.b16 %v3829
    %v3958 = vunpack.c.l.b16 %v3830
    %v3959 = vunpack.c.l.b16 %v3831
    %v3960 = vunpack.c.l.b16 %v3832
    %v3961 = vunpack.c.l.b16 %v3833
    %v3962 = vunpack.c.l.b16 %v3834
    %v3963 = vunpack.c.l.b16 %v3835
    %v3964 = vunpack.c.l.b16 %v3836
    %v3965 = vunpack.c.l.b16 %v3837
    %v3966 = vunpack.c.l.b16 %v3838
    %v3967 = vunpack.c.l.b16 %v3839
    %v3968 = vpack.c.b16 %v3905, %v3904
    %v3969 = vpack.c.b16 %v3907, %v3906
    %v3970 = vpack.c.b16 %v3909, %v3908
    %v3971 = vpack.c.b16 %v3911, %v3910
    %v3972 = vpack.c.b16 %v3913, %v3912
    %v3973 = vpack.c.b16 %v3915, %v3914
    %v3974 = vpack.c.b16 %v3917, %v3916
    %v3975 = vpack.c.b16 %v3919, %v3918
    %v3976 = vpack.c.b16 %v3921, %v3920
    %v3977 = vpack.c.b16 %v3923, %v3922
    %v3978 = vpack.c.b16 %v3925, %v3924
    %v3979 = vpack.c.b16 %v3927, %v3926
    %v3980 = vpack.c.b16 %v3929, %v3928
    %v3981 = vpack.c.b16 %v3931, %v3930
    %v3982 = vpack.c.b16 %v3933, %v3932
    %v3983 = vpack.c.b16 %v3935, %v3934
    %v3984 = vpack.c.b16 %v3937, %v3936
    %v3985 = vpack.c.b16 %v3939, %v3938
    %v3986 = vpack.c.b16 %v3941, %v3940
    %v3987 = vpack.c.b16 %v3943, %v3942
    %v3988 = vpack.c.b16 %v3945, %v3944
    %v3989 = vpack.c.b16 %v3947, %v3946
    %v3990 = vpack.c.b16 %v3949, %v3948
    %v3991 = vpack.c.b16 %v3951, %v3950
    %v3992 = vpack.c.b16 %v3953, %v3952
    %v3993 = vpack.c.b16 %v3955, %v3954
    %v3994 = vpack.c.b16 %v3957, %v3956
    %v3995 = vpack.c.b16 %v3959, %v3958
    %v3996 = vpack.c.b16 %v3961, %v3960
    %v3997 = vpack.c.b16 %v3963, %v3962
    %v3998 = vpack.c.b16 %v3965, %v3964
    %v3999 = vpack.c.b16 %v3967, %v3966
    %4032 = vmatprep.subr.bf16.mxu0 0
    %4033 = vmatpush1.bf16.msra.mxu0 %v3975
    %4034 = vmatprep.subr.bf16.mxu0 0
    %4035 = vmatpush1.bf16.msra.mxu0 %v3974
    %4036 = vmatprep.subr.bf16.mxu0 0
    %4037 = vmatpush1.bf16.msra.mxu0 %v3973
    %4038 = vmatprep.subr.bf16.mxu0 0
    %4039 = vmatpush1.bf16.msra.mxu0 %v3972
    %4040 = vmatprep.subr.bf16.mxu0 0
    %4041 = vmatpush1.bf16.msra.mxu0 %v3971
    %4042 = vmatprep.subr.bf16.mxu0 0
    %4043 = vmatpush1.bf16.msra.mxu0 %v3970
    %4044 = vmatprep.subr.bf16.mxu0 0
    %4045 = vmatpush1.bf16.msra.mxu0 %v3969
    %4046 = vmatprep.subr.bf16.mxu0 0
    %4047 = vmatpush1.bf16.msra.mxu0 %v3968
    %4048 = vmatprep.subr.bf16.mxu0 0
    %4049 = vmatpush2.bf16.msra.mxu0 %v3983
    %4050 = vmatprep.subr.bf16.mxu0 0
    %4051 = vmatpush2.bf16.msra.mxu0 %v3982
    %4052 = vmatprep.subr.bf16.mxu0 0
    %4053 = vmatpush2.bf16.msra.mxu0 %v3981
    %4054 = vmatprep.subr.bf16.mxu0 0
    %4055 = vmatpush2.bf16.msra.mxu0 %v3980
    %4056 = vmatprep.subr.bf16.mxu0 0
    %4057 = vmatpush2.bf16.msra.mxu0 %v3979
    %4058 = vmatprep.subr.bf16.mxu0 0
    %4059 = vmatpush2.bf16.msra.mxu0 %v3978
    %4060 = vmatprep.subr.bf16.mxu0 0
    %4061 = vmatpush2.bf16.msra.mxu0 %v3977
    %4062 = vmatprep.subr.bf16.mxu0 0
    %4063 = vmatpush2.bf16.msra.mxu0 %v3976
    %4064 = vmatprep.mubr.bf16.mxu0 %v3773
    %4065 = vmatmul.mubr.bf16.gmra.mxu0 %v3772
    %v4066 = vpop.f32.mrf.mxu0
    %v4067 = vadd.f32 0.0, %v4066
    %v4068 = vpop.f32.mrf.mxu0
    %v4069 = vpop.f32.mrf.mxu0
    %v4070 = vadd.f32 0.0, %v4069
    %v4071 = vpop.f32.mrf.mxu0
    %4072 = vdwg.mxu0
    %4073 = vmatprep.subr.bf16.mxu0 0
    %4074 = vmatpush1.bf16.msra.mxu0 %v3991
    %4075 = vmatprep.subr.bf16.mxu0 0
    %4076 = vmatpush1.bf16.msra.mxu0 %v3990
    %4077 = vmatprep.subr.bf16.mxu0 0
    %4078 = vmatpush1.bf16.msra.mxu0 %v3989
    %4079 = vmatprep.subr.bf16.mxu0 0
    %4080 = vmatpush1.bf16.msra.mxu0 %v3988
    %4081 = vmatprep.subr.bf16.mxu0 0
    %4082 = vmatpush1.bf16.msra.mxu0 %v3987
    %4083 = vmatprep.subr.bf16.mxu0 0
    %4084 = vmatpush1.bf16.msra.mxu0 %v3986
    %4085 = vmatprep.subr.bf16.mxu0 0
    %4086 = vmatpush1.bf16.msra.mxu0 %v3985
    %4087 = vmatprep.subr.bf16.mxu0 0
    %4088 = vmatpush1.bf16.msra.mxu0 %v3984
    %4089 = vmatprep.subr.bf16.mxu0 0
    %4090 = vmatpush2.bf16.msra.mxu0 %v3999
    %4091 = vmatprep.subr.bf16.mxu0 0
    %4092 = vmatpush2.bf16.msra.mxu0 %v3998
    %4093 = vmatprep.subr.bf16.mxu0 0
    %4094 = vmatpush2.bf16.msra.mxu0 %v3997
    %4095 = vmatprep.subr.bf16.mxu0 0
    %4096 = vmatpush2.bf16.msra.mxu0 %v3996
    %4097 = vmatprep.subr.bf16.mxu0 0
    %4098 = vmatpush2.bf16.msra.mxu0 %v3995
    %4099 = vmatprep.subr.bf16.mxu0 0
    %4100 = vmatpush2.bf16.msra.mxu0 %v3994
    %4101 = vmatprep.subr.bf16.mxu0 0
    %4102 = vmatpush2.bf16.msra.mxu0 %v3993
    %4103 = vmatprep.subr.bf16.mxu0 0
    %4104 = vmatpush2.bf16.msra.mxu0 %v3992
    %4105 = vmatprep.mubr.bf16.mxu0 %v3775
    %4106 = vmatmul.mubr.bf16.gmra.mxu0 %v3774
    %v4107 = vpop.f32.mrf.mxu0
    %v4108 = vadd.f32 %v4067, %v4107
    %v4109 = vpop.f32.mrf.mxu0
    %v4110 = vpop.f32.mrf.mxu0
    %v4111 = vadd.f32 %v4070, %v4110
    %v4112 = vpop.f32.mrf.mxu0
    %4113 = vdwg.mxu0
    %v4178 = vunpack.c.l.b16 %v3544
    %v4179 = vunpack.c.l.b16 %v3545
    %v4180 = vunpack.c.l.b16 %v3546
    %v4181 = vunpack.c.l.b16 %v3547
    %v4182 = vunpack.c.l.b16 %v3548
    %v4183 = vunpack.c.l.b16 %v3549
    %v4184 = vunpack.c.l.b16 %v3550
    %v4185 = vunpack.c.l.b16 %v3551
    %v4186 = vunpack.c.l.b16 %v3552
    %v4187 = vunpack.c.l.b16 %v3553
    %v4188 = vunpack.c.l.b16 %v3554
    %v4189 = vunpack.c.l.b16 %v3555
    %v4190 = vunpack.c.l.b16 %v3556
    %v4191 = vunpack.c.l.b16 %v3557
    %v4192 = vunpack.c.l.b16 %v3558
    %v4193 = vunpack.c.l.b16 %v3559
    %v4194 = vunpack.c.l.b16 %v3560
    %v4195 = vunpack.c.l.b16 %v3561
    %v4196 = vunpack.c.l.b16 %v3562
    %v4197 = vunpack.c.l.b16 %v3563
    %v4198 = vunpack.c.l.b16 %v3564
    %v4199 = vunpack.c.l.b16 %v3565
    %v4200 = vunpack.c.l.b16 %v3566
    %v4201 = vunpack.c.l.b16 %v3567
    %v4202 = vunpack.c.l.b16 %v3568
    %v4203 = vunpack.c.l.b16 %v3569
    %v4204 = vunpack.c.l.b16 %v3570
    %v4205 = vunpack.c.l.b16 %v3571
    %v4206 = vunpack.c.l.b16 %v3572
    %v4207 = vunpack.c.l.b16 %v3573
    %v4208 = vunpack.c.l.b16 %v3574
    %v4209 = vunpack.c.l.b16 %v3575
    %v4210 = vunpack.c.l.b16 %v3576
    %v4211 = vunpack.c.l.b16 %v3577
    %v4212 = vunpack.c.l.b16 %v3578
    %v4213 = vunpack.c.l.b16 %v3579
    %v4214 = vunpack.c.l.b16 %v3580
    %v4215 = vunpack.c.l.b16 %v3581
    %v4216 = vunpack.c.l.b16 %v3582
    %v4217 = vunpack.c.l.b16 %v3583
    %v4218 = vunpack.c.l.b16 %v3584
    %v4219 = vunpack.c.l.b16 %v3585
    %v4220 = vunpack.c.l.b16 %v3586
    %v4221 = vunpack.c.l.b16 %v3587
    %v4222 = vunpack.c.l.b16 %v3588
    %v4223 = vunpack.c.l.b16 %v3589
    %v4224 = vunpack.c.l.b16 %v3590
    %v4225 = vunpack.c.l.b16 %v3591
    %v4226 = vunpack.c.l.b16 %v3592
    %v4227 = vunpack.c.l.b16 %v3593
    %v4228 = vunpack.c.l.b16 %v3594
    %v4229 = vunpack.c.l.b16 %v3595
    %v4230 = vunpack.c.l.b16 %v3596
    %v4231 = vunpack.c.l.b16 %v3597
    %v4232 = vunpack.c.l.b16 %v3598
    %v4233 = vunpack.c.l.b16 %v3599
    %v4234 = vunpack.c.l.b16 %v3600
    %v4235 = vunpack.c.l.b16 %v3601
    %v4236 = vunpack.c.l.b16 %v3602
    %v4237 = vunpack.c.l.b16 %v3603
    %v4238 = vunpack.c.l.b16 %v3604
    %v4239 = vunpack.c.l.b16 %v3605
    %v4240 = vunpack.c.l.b16 %v3606
    %v4241 = vunpack.c.l.b16 %v3607
    %v4242 = vpack.c.b16 %v4179, %v4178
    %v4243 = vpack.c.b16 %v4181, %v4180
    %v4244 = vpack.c.b16 %v4183, %v4182
    %v4245 = vpack.c.b16 %v4185, %v4184
    %v4246 = vpack.c.b16 %v4187, %v4186
    %v4247 = vpack.c.b16 %v4189, %v4188
    %v4248 = vpack.c.b16 %v4191, %v4190
    %v4249 = vpack.c.b16 %v4193, %v4192
    %v4250 = vpack.c.b16 %v4195, %v4194
    %v4251 = vpack.c.b16 %v4197, %v4196
    %v4252 = vpack.c.b16 %v4199, %v4198
    %v4253 = vpack.c.b16 %v4201, %v4200
    %v4254 = vpack.c.b16 %v4203, %v4202
    %v4255 = vpack.c.b16 %v4205, %v4204
    %v4256 = vpack.c.b16 %v4207, %v4206
    %v4257 = vpack.c.b16 %v4209, %v4208
    %v4258 = vpack.c.b16 %v4211, %v4210
    %v4259 = vpack.c.b16 %v4213, %v4212
    %v4260 = vpack.c.b16 %v4215, %v4214
    %v4261 = vpack.c.b16 %v4217, %v4216
    %v4262 = vpack.c.b16 %v4219, %v4218
    %v4263 = vpack.c.b16 %v4221, %v4220
    %v4264 = vpack.c.b16 %v4223, %v4222
    %v4265 = vpack.c.b16 %v4225, %v4224
    %v4266 = vpack.c.b16 %v4227, %v4226
    %v4267 = vpack.c.b16 %v4229, %v4228
    %v4268 = vpack.c.b16 %v4231, %v4230
    %v4269 = vpack.c.b16 %v4233, %v4232
    %v4270 = vpack.c.b16 %v4235, %v4234
    %v4271 = vpack.c.b16 %v4237, %v4236
    %v4272 = vpack.c.b16 %v4239, %v4238
    %v4273 = vpack.c.b16 %v4241, %v4240
    %4306 = vmatprep.subr.bf16.mxu0 0
    %4307 = vmatpush1.bf16.msra.mxu0 %v4249
    %4308 = vmatprep.subr.bf16.mxu0 0
    %4309 = vmatpush1.bf16.msra.mxu0 %v4248
    %4310 = vmatprep.subr.bf16.mxu0 0
    %4311 = vmatpush1.bf16.msra.mxu0 %v4247
    %4312 = vmatprep.subr.bf16.mxu0 0
    %4313 = vmatpush1.bf16.msra.mxu0 %v4246
    %4314 = vmatprep.subr.bf16.mxu0 0
    %4315 = vmatpush1.bf16.msra.mxu0 %v4245
    %4316 = vmatprep.subr.bf16.mxu0 0
    %4317 = vmatpush1.bf16.msra.mxu0 %v4244
    %4318 = vmatprep.subr.bf16.mxu0 0
    %4319 = vmatpush1.bf16.msra.mxu0 %v4243
    %4320 = vmatprep.subr.bf16.mxu0 0
    %4321 = vmatpush1.bf16.msra.mxu0 %v4242
    %4322 = vmatprep.subr.bf16.mxu0 0
    %4323 = vmatpush2.bf16.msra.mxu0 %v4257
    %4324 = vmatprep.subr.bf16.mxu0 0
    %4325 = vmatpush2.bf16.msra.mxu0 %v4256
    %4326 = vmatprep.subr.bf16.mxu0 0
    %4327 = vmatpush2.bf16.msra.mxu0 %v4255
    %4328 = vmatprep.subr.bf16.mxu0 0
    %4329 = vmatpush2.bf16.msra.mxu0 %v4254
    %4330 = vmatprep.subr.bf16.mxu0 0
    %4331 = vmatpush2.bf16.msra.mxu0 %v4253
    %4332 = vmatprep.subr.bf16.mxu0 0
    %4333 = vmatpush2.bf16.msra.mxu0 %v4252
    %4334 = vmatprep.subr.bf16.mxu0 0
    %4335 = vmatpush2.bf16.msra.mxu0 %v4251
    %4336 = vmatprep.subr.bf16.mxu0 0
    %4337 = vmatpush2.bf16.msra.mxu0 %v4250
    %4338 = vmatprep.mubr.bf16.mxu0 %v3541
    %4339 = vmatmul.mubr.bf16.gmra.mxu0 %v3540
    %v4340 = vpop.f32.mrf.mxu0
    %v4341 = vadd.f32 %v4108, %v4340
    %v4342 = vpop.f32.mrf.mxu0
    %v4343 = vpop.f32.mrf.mxu0
    %v4344 = vadd.f32 %v4111, %v4343
    %v4345 = vpop.f32.mrf.mxu0
    %4346 = vdwg.mxu0
    %4347 = vmatprep.subr.bf16.mxu0 0
    %4348 = vmatpush1.bf16.msra.mxu0 %v4265
    %4349 = vmatprep.subr.bf16.mxu0 0
    %4350 = vmatpush1.bf16.msra.mxu0 %v4264
    %4351 = vmatprep.subr.bf16.mxu0 0
    %4352 = vmatpush1.bf16.msra.mxu0 %v4263
    %4353 = vmatprep.subr.bf16.mxu0 0
    %4354 = vmatpush1.bf16.msra.mxu0 %v4262
    %4355 = vmatprep.subr.bf16.mxu0 0
    %4356 = vmatpush1.bf16.msra.mxu0 %v4261
    %4357 = vmatprep.subr.bf16.mxu0 0
    %4358 = vmatpush1.bf16.msra.mxu0 %v4260
    %4359 = vmatprep.subr.bf16.mxu0 0
    %4360 = vmatpush1.bf16.msra.mxu0 %v4259
    %4361 = vmatprep.subr.bf16.mxu0 0
    %4362 = vmatpush1.bf16.msra.mxu0 %v4258
    %4363 = vmatprep.subr.bf16.mxu0 0
    %4364 = vmatpush2.bf16.msra.mxu0 %v4273
    %4365 = vmatprep.subr.bf16.mxu0 0
    %4366 = vmatpush2.bf16.msra.mxu0 %v4272
    %4367 = vmatprep.subr.bf16.mxu0 0
    %4368 = vmatpush2.bf16.msra.mxu0 %v4271
    %4369 = vmatprep.subr.bf16.mxu0 0
    %4370 = vmatpush2.bf16.msra.mxu0 %v4270
    %4371 = vmatprep.subr.bf16.mxu0 0
    %4372 = vmatpush2.bf16.msra.mxu0 %v4269
    %4373 = vmatprep.subr.bf16.mxu0 0
    %4374 = vmatpush2.bf16.msra.mxu0 %v4268
    %4375 = vmatprep.subr.bf16.mxu0 0
    %4376 = vmatpush2.bf16.msra.mxu0 %v4267
    %4377 = vmatprep.subr.bf16.mxu0 0
    %4378 = vmatpush2.bf16.msra.mxu0 %v4266
    %4379 = vmatprep.mubr.bf16.mxu0 %v3543
    %4380 = vmatmul.mubr.bf16.gmra.mxu0 %v3542
    %v4381 = vpop.f32.mrf.mxu0
    %v4382 = vadd.f32 %v4341, %v4381
    %v4383 = vpop.f32.mrf.mxu0
    %v4384 = vpop.f32.mrf.mxu0
    %v4385 = vadd.f32 %v4344, %v4384
    %v4386 = vpop.f32.mrf.mxu0
    %4387 = vdwg.mxu0
    %v4388 = vld [vmem:[#allocation5 + $0x20] sm:$0xff]
    %v4389 = vld [vmem:[#allocation5 + $0x28] sm:$0xff]
    %v4390 = vld [vmem:[#allocation5 + $0x60] sm:$0xff]
    %v4391 = vld [vmem:[#allocation5 + $0x68] sm:$0xff]
    %v4392 = vld [vmem:[#allocation5 + $0xa0] sm:$0xff]
    %v4393 = vld [vmem:[#allocation5 + $0xa8] sm:$0xff]
    %v4394 = vld [vmem:[#allocation5 + $0xe0] sm:$0xff]
    %v4395 = vld [vmem:[#allocation5 + $0xe8] sm:$0xff]
    %v4396 = vld [vmem:[%s14 + $0xe] sm:$0xf]
    %v4398 = vlaneseq
    %v4399 = vshrl.u32 %v4398, 7
    %v4400 = vsub.s32 0, %v4399
    %v4401 = vrot.slane %v4396, %v4400
    %v4402 = vlaneseq
    %v4403 = vshrl.u32 %v4402, 7
    %v4404 = vsub.s32 1, %v4403
    %v4405 = vrot.slane %v4396, %v4404
    %v4406 = vlaneseq
    %v4407 = vshrl.u32 %v4406, 7
    %v4408 = vsub.s32 2, %v4407
    %v4409 = vrot.slane %v4396, %v4408
    %v4410 = vlaneseq
    %v4411 = vshrl.u32 %v4410, 7
    %v4412 = vsub.s32 3, %v4411
    %v4413 = vrot.slane %v4396, %v4412
    %v4426 = vunpack.c.l.b16 %v4388
    %v4427 = vunpack.c.h.b16 %v4388
    %v4428 = vunpack.c.l.b16 %v4389
    %v4429 = vunpack.c.h.b16 %v4389
    %v4430 = vunpack.c.l.b16 %v4390
    %v4431 = vunpack.c.h.b16 %v4390
    %v4432 = vunpack.c.l.b16 %v4391
    %v4433 = vunpack.c.h.b16 %v4391
    %v4434 = vunpack.c.l.b16 %v4392
    %v4435 = vunpack.c.h.b16 %v4392
    %v4436 = vunpack.c.l.b16 %v4393
    %v4437 = vunpack.c.h.b16 %v4393
    %v4438 = vunpack.c.l.b16 %v4394
    %v4439 = vunpack.c.h.b16 %v4394
    %v4440 = vunpack.c.l.b16 %v4395
    %v4441 = vunpack.c.h.b16 %v4395
    %v4442 = vpack.c.b16 %v4430, %v4426
    %v4443 = vpack.c.b16 %v4431, %v4427
    %v4444 = vpack.c.b16 %v4432, %v4428
    %v4445 = vpack.c.b16 %v4433, %v4429
    %v4446 = vpack.c.b16 %v4438, %v4434
    %v4447 = vpack.c.b16 %v4439, %v4435
    %v4448 = vpack.c.b16 %v4440, %v4436
    %v4449 = vpack.c.b16 %v4441, %v4437
    %4458 = vmatprep.subr.bf16.mxu0 0
    %4459 = vmatpush1.bf16.msra.mxu0 0
    %4460 = vmatprep.subr.bf16.mxu0 0
    %4461 = vmatpush1.bf16.msra.mxu0 0
    %4462 = vmatprep.subr.bf16.mxu0 0
    %4463 = vmatpush1.bf16.msra.mxu0 0
    %4464 = vmatprep.subr.bf16.mxu0 0
    %4465 = vmatpush1.bf16.msra.mxu0 0
    %4466 = vmatprep.subr.bf16.mxu0 0
    %4467 = vmatpush1.bf16.msra.mxu0 0
    %4468 = vmatprep.subr.bf16.mxu0 0
    %4469 = vmatpush1.bf16.msra.mxu0 0
    %4470 = vmatprep.subr.bf16.mxu0 %v4447
    %4471 = vmatpush1.bf16.msra.mxu0 %v4446
    %4472 = vmatprep.subr.bf16.mxu0 %v4443
    %4473 = vmatpush1.bf16.msra.mxu0 %v4442
    %4474 = vmatprep.subr.bf16.mxu0 0
    %4475 = vmatpush2.bf16.msra.mxu0 0
    %4476 = vmatprep.subr.bf16.mxu0 0
    %4477 = vmatpush2.bf16.msra.mxu0 0
    %4478 = vmatprep.subr.bf16.mxu0 0
    %4479 = vmatpush2.bf16.msra.mxu0 0
    %4480 = vmatprep.subr.bf16.mxu0 0
    %4481 = vmatpush2.bf16.msra.mxu0 0
    %4482 = vmatprep.subr.bf16.mxu0 0
    %4483 = vmatpush2.bf16.msra.mxu0 0
    %4484 = vmatprep.subr.bf16.mxu0 0
    %4485 = vmatpush2.bf16.msra.mxu0 0
    %4486 = vmatprep.subr.bf16.mxu0 0
    %4487 = vmatpush2.bf16.msra.mxu0 0
    %4488 = vmatprep.subr.bf16.mxu0 0
    %4489 = vmatpush2.bf16.msra.mxu0 0
    %4490 = vmatprep.mubr.bf16.mxu0 0
    %4491 = vmatmul.mubr.bf16.gmra.mxu0 %v3444
    %v4492 = vpop.f32.mrf.mxu0
    %v4493 = vadd.f32 %v4401, %v4492
    %v4494 = vpop.f32.mrf.mxu0
    %v4495 = vadd.f32 %v4405, %v4494
    %v4496 = vpop.f32.mrf.mxu0
    %v4497 = vadd.f32 %v4401, %v4496
    %v4498 = vpop.f32.mrf.mxu0
    %v4499 = vadd.f32 %v4405, %v4498
    %4500 = vdwg.mxu0
    %4501 = vmatprep.subr.bf16.mxu0 0
    %4502 = vmatpush1.bf16.msra.mxu0 0
    %4503 = vmatprep.subr.bf16.mxu0 0
    %4504 = vmatpush1.bf16.msra.mxu0 0
    %4505 = vmatprep.subr.bf16.mxu0 0
    %4506 = vmatpush1.bf16.msra.mxu0 0
    %4507 = vmatprep.subr.bf16.mxu0 0
    %4508 = vmatpush1.bf16.msra.mxu0 0
    %4509 = vmatprep.subr.bf16.mxu0 0
    %4510 = vmatpush1.bf16.msra.mxu0 0
    %4511 = vmatprep.subr.bf16.mxu0 0
    %4512 = vmatpush1.bf16.msra.mxu0 0
    %4513 = vmatprep.subr.bf16.mxu0 %v4449
    %4514 = vmatpush1.bf16.msra.mxu0 %v4448
    %4515 = vmatprep.subr.bf16.mxu0 %v4445
    %4516 = vmatpush1.bf16.msra.mxu0 %v4444
    %4517 = vmatprep.subr.bf16.mxu0 0
    %4518 = vmatpush2.bf16.msra.mxu0 0
    %4519 = vmatprep.subr.bf16.mxu0 0
    %4520 = vmatpush2.bf16.msra.mxu0 0
    %4521 = vmatprep.subr.bf16.mxu0 0
    %4522 = vmatpush2.bf16.msra.mxu0 0
    %4523 = vmatprep.subr.bf16.mxu0 0
    %4524 = vmatpush2.bf16.msra.mxu0 0
    %4525 = vmatprep.subr.bf16.mxu0 0
    %4526 = vmatpush2.bf16.msra.mxu0 0
    %4527 = vmatprep.subr.bf16.mxu0 0
    %4528 = vmatpush2.bf16.msra.mxu0 0
    %4529 = vmatprep.subr.bf16.mxu0 0
    %4530 = vmatpush2.bf16.msra.mxu0 0
    %4531 = vmatprep.subr.bf16.mxu0 0
    %4532 = vmatpush2.bf16.msra.mxu0 0
    %4533 = vmatprep.mubr.bf16.mxu0 0
    %4534 = vmatmul.mubr.bf16.gmra.mxu0 %v3444
    %v4535 = vpop.f32.mrf.mxu0
    %v4536 = vadd.f32 %v4409, %v4535
    %v4537 = vpop.f32.mrf.mxu0
    %v4538 = vadd.f32 %v4413, %v4537
    %v4539 = vpop.f32.mrf.mxu0
    %v4540 = vadd.f32 %v4409, %v4539
    %v4541 = vpop.f32.mrf.mxu0
    %v4542 = vadd.f32 %v4413, %v4541
    %4543 = vdwg.mxu0
    %v4544 = vmax.f32 %v4493, 0.0
    %v4545 = vmax.f32 %v4495, 0.0
    %v4546 = vmax.f32 %v4536, 0.0
    %v4547 = vmax.f32 %v4538, 0.0
    %v4548 = vmax.f32 %v4497, 0.0
    %v4549 = vmax.f32 %v4499, 0.0
    %v4550 = vmax.f32 %v4540, 0.0
    %v4551 = vmax.f32 %v4542, 0.0
    %v4552 = vpack.c.bf16 %v4548, %v4544
    %v4553 = vpack.c.bf16 %v4549, %v4545
    %v4554 = vpack.c.bf16 %v4550, %v4546
    %v4555 = vpack.c.bf16 %v4551, %v4547
    %v4556 = vld [vmem:[#allocation7 + $0x200] sm:$0xf]
    %v4557 = vld [vmem:[#allocation7 + $0x204] sm:$0xf]
    %v4558 = vld [vmem:[#allocation7 + $0x208] sm:$0xf]
    %v4559 = vld [vmem:[#allocation7 + $0x20c] sm:$0xf]
    %v4560 = vld [vmem:[#allocation7 + $0x210] sm:$0xf]
    %v4561 = vld [vmem:[#allocation7 + $0x214] sm:$0xf]
    %v4562 = vld [vmem:[#allocation7 + $0x218] sm:$0xf]
    %v4563 = vld [vmem:[#allocation7 + $0x21c] sm:$0xf]
    %v4564 = vld [vmem:[#allocation7 + $0x220] sm:$0xf]
    %v4565 = vld [vmem:[#allocation7 + $0x224] sm:$0xf]
    %v4566 = vld [vmem:[#allocation7 + $0x228] sm:$0xf]
    %v4567 = vld [vmem:[#allocation7 + $0x22c] sm:$0xf]
    %v4568 = vld [vmem:[#allocation7 + $0x230] sm:$0xf]
    %v4569 = vld [vmem:[#allocation7 + $0x234] sm:$0xf]
    %v4570 = vld [vmem:[#allocation7 + $0x238] sm:$0xf]
    %v4571 = vld [vmem:[#allocation7 + $0x23c] sm:$0xf]
    %v4572 = vld [vmem:[#allocation7 + $0x240] sm:$0xf]
    %v4573 = vld [vmem:[#allocation7 + $0x244] sm:$0xf]
    %v4574 = vld [vmem:[#allocation7 + $0x248] sm:$0xf]
    %v4575 = vld [vmem:[#allocation7 + $0x24c] sm:$0xf]
    %v4576 = vld [vmem:[#allocation7 + $0x250] sm:$0xf]
    %v4577 = vld [vmem:[#allocation7 + $0x254] sm:$0xf]
    %v4578 = vld [vmem:[#allocation7 + $0x258] sm:$0xf]
    %v4579 = vld [vmem:[#allocation7 + $0x25c] sm:$0xf]
    %v4580 = vld [vmem:[#allocation7 + $0x260] sm:$0xf]
    %v4581 = vld [vmem:[#allocation7 + $0x264] sm:$0xf]
    %v4582 = vld [vmem:[#allocation7 + $0x268] sm:$0xf]
    %v4583 = vld [vmem:[#allocation7 + $0x26c] sm:$0xf]
    %v4584 = vld [vmem:[#allocation7 + $0x270] sm:$0xf]
    %v4585 = vld [vmem:[#allocation7 + $0x274] sm:$0xf]
    %v4586 = vld [vmem:[#allocation7 + $0x278] sm:$0xf]
    %v4587 = vld [vmem:[#allocation7 + $0x27c] sm:$0xf]
    %v4588 = vld [vmem:[#allocation7 + $0x280] sm:$0xf]
    %v4589 = vld [vmem:[#allocation7 + $0x284] sm:$0xf]
    %v4590 = vld [vmem:[#allocation7 + $0x288] sm:$0xf]
    %v4591 = vld [vmem:[#allocation7 + $0x28c] sm:$0xf]
    %v4592 = vld [vmem:[#allocation7 + $0x290] sm:$0xf]
    %v4593 = vld [vmem:[#allocation7 + $0x294] sm:$0xf]
    %v4594 = vld [vmem:[#allocation7 + $0x298] sm:$0xf]
    %v4595 = vld [vmem:[#allocation7 + $0x29c] sm:$0xf]
    %v4596 = vld [vmem:[#allocation7 + $0x2a0] sm:$0xf]
    %v4597 = vld [vmem:[#allocation7 + $0x2a4] sm:$0xf]
    %v4598 = vld [vmem:[#allocation7 + $0x2a8] sm:$0xf]
    %v4599 = vld [vmem:[#allocation7 + $0x2ac] sm:$0xf]
    %v4600 = vld [vmem:[#allocation7 + $0x2b0] sm:$0xf]
    %v4601 = vld [vmem:[#allocation7 + $0x2b4] sm:$0xf]
    %v4602 = vld [vmem:[#allocation7 + $0x2b8] sm:$0xf]
    %v4603 = vld [vmem:[#allocation7 + $0x2bc] sm:$0xf]
    %v4604 = vld [vmem:[#allocation7 + $0x2c0] sm:$0xf]
    %v4605 = vld [vmem:[#allocation7 + $0x2c4] sm:$0xf]
    %v4606 = vld [vmem:[#allocation7 + $0x2c8] sm:$0xf]
    %v4607 = vld [vmem:[#allocation7 + $0x2cc] sm:$0xf]
    %v4608 = vld [vmem:[#allocation7 + $0x2d0] sm:$0xf]
    %v4609 = vld [vmem:[#allocation7 + $0x2d4] sm:$0xf]
    %v4610 = vld [vmem:[#allocation7 + $0x2d8] sm:$0xf]
    %v4611 = vld [vmem:[#allocation7 + $0x2dc] sm:$0xf]
    %v4612 = vld [vmem:[#allocation7 + $0x2e0] sm:$0xf]
    %v4613 = vld [vmem:[#allocation7 + $0x2e4] sm:$0xf]
    %v4614 = vld [vmem:[#allocation7 + $0x2e8] sm:$0xf]
    %v4615 = vld [vmem:[#allocation7 + $0x2ec] sm:$0xf]
    %v4616 = vld [vmem:[#allocation7 + $0x2f0] sm:$0xf]
    %v4617 = vld [vmem:[#allocation7 + $0x2f4] sm:$0xf]
    %v4618 = vld [vmem:[#allocation7 + $0x2f8] sm:$0xf]
    %v4619 = vld [vmem:[#allocation7 + $0x2fc] sm:$0xf]
    %v4684 = vunpack.c.l.b16 %v4556
    %v4685 = vunpack.c.l.b16 %v4557
    %v4686 = vunpack.c.l.b16 %v4558
    %v4687 = vunpack.c.l.b16 %v4559
    %v4688 = vunpack.c.l.b16 %v4560
    %v4689 = vunpack.c.l.b16 %v4561
    %v4690 = vunpack.c.l.b16 %v4562
    %v4691 = vunpack.c.l.b16 %v4563
    %v4692 = vunpack.c.l.b16 %v4564
    %v4693 = vunpack.c.l.b16 %v4565
    %v4694 = vunpack.c.l.b16 %v4566
    %v4695 = vunpack.c.l.b16 %v4567
    %v4696 = vunpack.c.l.b16 %v4568
    %v4697 = vunpack.c.l.b16 %v4569
    %v4698 = vunpack.c.l.b16 %v4570
    %v4699 = vunpack.c.l.b16 %v4571
    %v4700 = vunpack.c.l.b16 %v4572
    %v4701 = vunpack.c.l.b16 %v4573
    %v4702 = vunpack.c.l.b16 %v4574
    %v4703 = vunpack.c.l.b16 %v4575
    %v4704 = vunpack.c.l.b16 %v4576
    %v4705 = vunpack.c.l.b16 %v4577
    %v4706 = vunpack.c.l.b16 %v4578
    %v4707 = vunpack.c.l.b16 %v4579
    %v4708 = vunpack.c.l.b16 %v4580
    %v4709 = vunpack.c.l.b16 %v4581
    %v4710 = vunpack.c.l.b16 %v4582
    %v4711 = vunpack.c.l.b16 %v4583
    %v4712 = vunpack.c.l.b16 %v4584
    %v4713 = vunpack.c.l.b16 %v4585
    %v4714 = vunpack.c.l.b16 %v4586
    %v4715 = vunpack.c.l.b16 %v4587
    %v4716 = vunpack.c.l.b16 %v4588
    %v4717 = vunpack.c.l.b16 %v4589
    %v4718 = vunpack.c.l.b16 %v4590
    %v4719 = vunpack.c.l.b16 %v4591
    %v4720 = vunpack.c.l.b16 %v4592
    %v4721 = vunpack.c.l.b16 %v4593
    %v4722 = vunpack.c.l.b16 %v4594
    %v4723 = vunpack.c.l.b16 %v4595
    %v4724 = vunpack.c.l.b16 %v4596
    %v4725 = vunpack.c.l.b16 %v4597
    %v4726 = vunpack.c.l.b16 %v4598
    %v4727 = vunpack.c.l.b16 %v4599
    %v4728 = vunpack.c.l.b16 %v4600
    %v4729 = vunpack.c.l.b16 %v4601
    %v4730 = vunpack.c.l.b16 %v4602
    %v4731 = vunpack.c.l.b16 %v4603
    %v4732 = vunpack.c.l.b16 %v4604
    %v4733 = vunpack.c.l.b16 %v4605
    %v4734 = vunpack.c.l.b16 %v4606
    %v4735 = vunpack.c.l.b16 %v4607
    %v4736 = vunpack.c.l.b16 %v4608
    %v4737 = vunpack.c.l.b16 %v4609
    %v4738 = vunpack.c.l.b16 %v4610
    %v4739 = vunpack.c.l.b16 %v4611
    %v4740 = vunpack.c.l.b16 %v4612
    %v4741 = vunpack.c.l.b16 %v4613
    %v4742 = vunpack.c.l.b16 %v4614
    %v4743 = vunpack.c.l.b16 %v4615
    %v4744 = vunpack.c.l.b16 %v4616
    %v4745 = vunpack.c.l.b16 %v4617
    %v4746 = vunpack.c.l.b16 %v4618
    %v4747 = vunpack.c.l.b16 %v4619
    %v4748 = vpack.c.b16 %v4685, %v4684
    %v4749 = vpack.c.b16 %v4687, %v4686
    %v4750 = vpack.c.b16 %v4689, %v4688
    %v4751 = vpack.c.b16 %v4691, %v4690
    %v4752 = vpack.c.b16 %v4693, %v4692
    %v4753 = vpack.c.b16 %v4695, %v4694
    %v4754 = vpack.c.b16 %v4697, %v4696
    %v4755 = vpack.c.b16 %v4699, %v4698
    %v4756 = vpack.c.b16 %v4701, %v4700
    %v4757 = vpack.c.b16 %v4703, %v4702
    %v4758 = vpack.c.b16 %v4705, %v4704
    %v4759 = vpack.c.b16 %v4707, %v4706
    %v4760 = vpack.c.b16 %v4709, %v4708
    %v4761 = vpack.c.b16 %v4711, %v4710
    %v4762 = vpack.c.b16 %v4713, %v4712
    %v4763 = vpack.c.b16 %v4715, %v4714
    %v4764 = vpack.c.b16 %v4717, %v4716
    %v4765 = vpack.c.b16 %v4719, %v4718
    %v4766 = vpack.c.b16 %v4721, %v4720
    %v4767 = vpack.c.b16 %v4723, %v4722
    %v4768 = vpack.c.b16 %v4725, %v4724
    %v4769 = vpack.c.b16 %v4727, %v4726
    %v4770 = vpack.c.b16 %v4729, %v4728
    %v4771 = vpack.c.b16 %v4731, %v4730
    %v4772 = vpack.c.b16 %v4733, %v4732
    %v4773 = vpack.c.b16 %v4735, %v4734
    %v4774 = vpack.c.b16 %v4737, %v4736
    %v4775 = vpack.c.b16 %v4739, %v4738
    %v4776 = vpack.c.b16 %v4741, %v4740
    %v4777 = vpack.c.b16 %v4743, %v4742
    %v4778 = vpack.c.b16 %v4745, %v4744
    %v4779 = vpack.c.b16 %v4747, %v4746
    %4812 = vmatprep.subr.bf16.mxu0 0
    %4813 = vmatpush1.bf16.msra.mxu0 %v4755
    %4814 = vmatprep.subr.bf16.mxu0 0
    %4815 = vmatpush1.bf16.msra.mxu0 %v4754
    %4816 = vmatprep.subr.bf16.mxu0 0
    %4817 = vmatpush1.bf16.msra.mxu0 %v4753
    %4818 = vmatprep.subr.bf16.mxu0 0
    %4819 = vmatpush1.bf16.msra.mxu0 %v4752
    %4820 = vmatprep.subr.bf16.mxu0 0
    %4821 = vmatpush1.bf16.msra.mxu0 %v4751
    %4822 = vmatprep.subr.bf16.mxu0 0
    %4823 = vmatpush1.bf16.msra.mxu0 %v4750
    %4824 = vmatprep.subr.bf16.mxu0 0
    %4825 = vmatpush1.bf16.msra.mxu0 %v4749
    %4826 = vmatprep.subr.bf16.mxu0 0
    %4827 = vmatpush1.bf16.msra.mxu0 %v4748
    %4828 = vmatprep.subr.bf16.mxu0 0
    %4829 = vmatpush2.bf16.msra.mxu0 %v4763
    %4830 = vmatprep.subr.bf16.mxu0 0
    %4831 = vmatpush2.bf16.msra.mxu0 %v4762
    %4832 = vmatprep.subr.bf16.mxu0 0
    %4833 = vmatpush2.bf16.msra.mxu0 %v4761
    %4834 = vmatprep.subr.bf16.mxu0 0
    %4835 = vmatpush2.bf16.msra.mxu0 %v4760
    %4836 = vmatprep.subr.bf16.mxu0 0
    %4837 = vmatpush2.bf16.msra.mxu0 %v4759
    %4838 = vmatprep.subr.bf16.mxu0 0
    %4839 = vmatpush2.bf16.msra.mxu0 %v4758
    %4840 = vmatprep.subr.bf16.mxu0 0
    %4841 = vmatpush2.bf16.msra.mxu0 %v4757
    %4842 = vmatprep.subr.bf16.mxu0 0
    %4843 = vmatpush2.bf16.msra.mxu0 %v4756
    %4844 = vmatprep.mubr.bf16.mxu0 %v4553
    %4845 = vmatmul.mubr.bf16.gmra.mxu0 %v4552
    %v4846 = vpop.f32.mrf.mxu0
    %v4847 = vadd.f32 0.0, %v4846
    %v4848 = vpop.f32.mrf.mxu0
    %v4849 = vpop.f32.mrf.mxu0
    %v4850 = vadd.f32 0.0, %v4849
    %v4851 = vpop.f32.mrf.mxu0
    %4852 = vdwg.mxu0
    %4853 = vmatprep.subr.bf16.mxu0 0
    %4854 = vmatpush1.bf16.msra.mxu0 %v4771
    %4855 = vmatprep.subr.bf16.mxu0 0
    %4856 = vmatpush1.bf16.msra.mxu0 %v4770
    %4857 = vmatprep.subr.bf16.mxu0 0
    %4858 = vmatpush1.bf16.msra.mxu0 %v4769
    %4859 = vmatprep.subr.bf16.mxu0 0
    %4860 = vmatpush1.bf16.msra.mxu0 %v4768
    %4861 = vmatprep.subr.bf16.mxu0 0
    %4862 = vmatpush1.bf16.msra.mxu0 %v4767
    %4863 = vmatprep.subr.bf16.mxu0 0
    %4864 = vmatpush1.bf16.msra.mxu0 %v4766
    %4865 = vmatprep.subr.bf16.mxu0 0
    %4866 = vmatpush1.bf16.msra.mxu0 %v4765
    %4867 = vmatprep.subr.bf16.mxu0 0
    %4868 = vmatpush1.bf16.msra.mxu0 %v4764
    %4869 = vmatprep.subr.bf16.mxu0 0
    %4870 = vmatpush2.bf16.msra.mxu0 %v4779
    %4871 = vmatprep.subr.bf16.mxu0 0
    %4872 = vmatpush2.bf16.msra.mxu0 %v4778
    %4873 = vmatprep.subr.bf16.mxu0 0
    %4874 = vmatpush2.bf16.msra.mxu0 %v4777
    %4875 = vmatprep.subr.bf16.mxu0 0
    %4876 = vmatpush2.bf16.msra.mxu0 %v4776
    %4877 = vmatprep.subr.bf16.mxu0 0
    %4878 = vmatpush2.bf16.msra.mxu0 %v4775
    %4879 = vmatprep.subr.bf16.mxu0 0
    %4880 = vmatpush2.bf16.msra.mxu0 %v4774
    %4881 = vmatprep.subr.bf16.mxu0 0
    %4882 = vmatpush2.bf16.msra.mxu0 %v4773
    %4883 = vmatprep.subr.bf16.mxu0 0
    %4884 = vmatpush2.bf16.msra.mxu0 %v4772
    %4885 = vmatprep.mubr.bf16.mxu0 %v4555
    %4886 = vmatmul.mubr.bf16.gmra.mxu0 %v4554
    %v4887 = vpop.f32.mrf.mxu0
    %v4888 = vadd.f32 %v4847, %v4887
    %v4889 = vpop.f32.mrf.mxu0
    %v4890 = vpop.f32.mrf.mxu0
    %v4891 = vadd.f32 %v4850, %v4890
    %v4892 = vpop.f32.mrf.mxu0
    %4893 = vdwg.mxu0
    %v4894 = vadd.f32 %v4382, %v4888
    %v4895 = vadd.f32 %v4385, %v4891
    %v4896 = vld [vmem:[#allocation5 + $0x30] sm:$0xff]
    %v4897 = vld [vmem:[#allocation5 + $0x38] sm:$0xff]
    %v4898 = vld [vmem:[#allocation5 + $0x70] sm:$0xff]
    %v4899 = vld [vmem:[#allocation5 + $0x78] sm:$0xff]
    %v4900 = vld [vmem:[#allocation5 + $0xb0] sm:$0xff]
    %v4901 = vld [vmem:[#allocation5 + $0xb8] sm:$0xff]
    %v4902 = vld [vmem:[#allocation5 + $0xf0] sm:$0xff]
    %v4903 = vld [vmem:[#allocation5 + $0xf8] sm:$0xff]
    %v4904 = vld [vmem:[%s14 + $0x12] sm:$0xf]
    %v4906 = vlaneseq
    %v4907 = vshrl.u32 %v4906, 7
    %v4908 = vsub.s32 0, %v4907
    %v4909 = vrot.slane %v4904, %v4908
    %v4910 = vlaneseq
    %v4911 = vshrl.u32 %v4910, 7
    %v4912 = vsub.s32 1, %v4911
    %v4913 = vrot.slane %v4904, %v4912
    %v4914 = vlaneseq
    %v4915 = vshrl.u32 %v4914, 7
    %v4916 = vsub.s32 2, %v4915
    %v4917 = vrot.slane %v4904, %v4916
    %v4918 = vlaneseq
    %v4919 = vshrl.u32 %v4918, 7
    %v4920 = vsub.s32 3, %v4919
    %v4921 = vrot.slane %v4904, %v4920
    %v4934 = vunpack.c.l.b16 %v4896
    %v4935 = vunpack.c.h.b16 %v4896
    %v4936 = vunpack.c.l.b16 %v4897
    %v4937 = vunpack.c.h.b16 %v4897
    %v4938 = vunpack.c.l.b16 %v4898
    %v4939 = vunpack.c.h.b16 %v4898
    %v4940 = vunpack.c.l.b16 %v4899
    %v4941 = vunpack.c.h.b16 %v4899
    %v4942 = vunpack.c.l.b16 %v4900
    %v4943 = vunpack.c.h.b16 %v4900
    %v4944 = vunpack.c.l.b16 %v4901
    %v4945 = vunpack.c.h.b16 %v4901
    %v4946 = vunpack.c.l.b16 %v4902
    %v4947 = vunpack.c.h.b16 %v4902
    %v4948 = vunpack.c.l.b16 %v4903
    %v4949 = vunpack.c.h.b16 %v4903
    %v4950 = vpack.c.b16 %v4938, %v4934
    %v4951 = vpack.c.b16 %v4939, %v4935
    %v4952 = vpack.c.b16 %v4940, %v4936
    %v4953 = vpack.c.b16 %v4941, %v4937
    %v4954 = vpack.c.b16 %v4946, %v4942
    %v4955 = vpack.c.b16 %v4947, %v4943
    %v4956 = vpack.c.b16 %v4948, %v4944
    %v4957 = vpack.c.b16 %v4949, %v4945
    %4966 = vmatprep.subr.bf16.mxu0 0
    %4967 = vmatpush1.bf16.msra.mxu0 0
    %4968 = vmatprep.subr.bf16.mxu0 0
    %4969 = vmatpush1.bf16.msra.mxu0 0
    %4970 = vmatprep.subr.bf16.mxu0 0
    %4971 = vmatpush1.bf16.msra.mxu0 0
    %4972 = vmatprep.subr.bf16.mxu0 0
    %4973 = vmatpush1.bf16.msra.mxu0 0
    %4974 = vmatprep.subr.bf16.mxu0 0
    %4975 = vmatpush1.bf16.msra.mxu0 0
    %4976 = vmatprep.subr.bf16.mxu0 0
    %4977 = vmatpush1.bf16.msra.mxu0 0
    %4978 = vmatprep.subr.bf16.mxu0 %v4955
    %4979 = vmatpush1.bf16.msra.mxu0 %v4954
    %4980 = vmatprep.subr.bf16.mxu0 %v4951
    %4981 = vmatpush1.bf16.msra.mxu0 %v4950
    %4982 = vmatprep.subr.bf16.mxu0 0
    %4983 = vmatpush2.bf16.msra.mxu0 0
    %4984 = vmatprep.subr.bf16.mxu0 0
    %4985 = vmatpush2.bf16.msra.mxu0 0
    %4986 = vmatprep.subr.bf16.mxu0 0
    %4987 = vmatpush2.bf16.msra.mxu0 0
    %4988 = vmatprep.subr.bf16.mxu0 0
    %4989 = vmatpush2.bf16.msra.mxu0 0
    %4990 = vmatprep.subr.bf16.mxu0 0
    %4991 = vmatpush2.bf16.msra.mxu0 0
    %4992 = vmatprep.subr.bf16.mxu0 0
    %4993 = vmatpush2.bf16.msra.mxu0 0
    %4994 = vmatprep.subr.bf16.mxu0 0
    %4995 = vmatpush2.bf16.msra.mxu0 0
    %4996 = vmatprep.subr.bf16.mxu0 0
    %4997 = vmatpush2.bf16.msra.mxu0 0
    %4998 = vmatprep.mubr.bf16.mxu0 0
    %4999 = vmatmul.mubr.bf16.gmra.mxu0 %v3444
    %v5000 = vpop.f32.mrf.mxu0
    %v5001 = vadd.f32 %v4909, %v5000
    %v5002 = vpop.f32.mrf.mxu0
    %v5003 = vadd.f32 %v4913, %v5002
    %v5004 = vpop.f32.mrf.mxu0
    %v5005 = vadd.f32 %v4909, %v5004
    %v5006 = vpop.f32.mrf.mxu0
    %v5007 = vadd.f32 %v4913, %v5006
    %5008 = vdwg.mxu0
    %5009 = vmatprep.subr.bf16.mxu0 0
    %5010 = vmatpush1.bf16.msra.mxu0 0
    %5011 = vmatprep.subr.bf16.mxu0 0
    %5012 = vmatpush1.bf16.msra.mxu0 0
    %5013 = vmatprep.subr.bf16.mxu0 0
    %5014 = vmatpush1.bf16.msra.mxu0 0
    %5015 = vmatprep.subr.bf16.mxu0 0
    %5016 = vmatpush1.bf16.msra.mxu0 0
    %5017 = vmatprep.subr.bf16.mxu0 0
    %5018 = vmatpush1.bf16.msra.mxu0 0
    %5019 = vmatprep.subr.bf16.mxu0 0
    %5020 = vmatpush1.bf16.msra.mxu0 0
    %5021 = vmatprep.subr.bf16.mxu0 %v4957
    %5022 = vmatpush1.bf16.msra.mxu0 %v4956
    %5023 = vmatprep.subr.bf16.mxu0 %v4953
    %5024 = vmatpush1.bf16.msra.mxu0 %v4952
    %5025 = vmatprep.subr.bf16.mxu0 0
    %5026 = vmatpush2.bf16.msra.mxu0 0
    %5027 = vmatprep.subr.bf16.mxu0 0
    %5028 = vmatpush2.bf16.msra.mxu0 0
    %5029 = vmatprep.subr.bf16.mxu0 0
    %5030 = vmatpush2.bf16.msra.mxu0 0
    %5031 = vmatprep.subr.bf16.mxu0 0
    %5032 = vmatpush2.bf16.msra.mxu0 0
    %5033 = vmatprep.subr.bf16.mxu0 0
    %5034 = vmatpush2.bf16.msra.mxu0 0
    %5035 = vmatprep.subr.bf16.mxu0 0
    %5036 = vmatpush2.bf16.msra.mxu0 0
    %5037 = vmatprep.subr.bf16.mxu0 0
    %5038 = vmatpush2.bf16.msra.mxu0 0
    %5039 = vmatprep.subr.bf16.mxu0 0
    %5040 = vmatpush2.bf16.msra.mxu0 0
    %5041 = vmatprep.mubr.bf16.mxu0 0
    %5042 = vmatmul.mubr.bf16.gmra.mxu0 %v3444
    %v5043 = vpop.f32.mrf.mxu0
    %v5044 = vadd.f32 %v4917, %v5043
    %v5045 = vpop.f32.mrf.mxu0
    %v5046 = vadd.f32 %v4921, %v5045
    %v5047 = vpop.f32.mrf.mxu0
    %v5048 = vadd.f32 %v4917, %v5047
    %v5049 = vpop.f32.mrf.mxu0
    %v5050 = vadd.f32 %v4921, %v5049
    %5051 = vdwg.mxu0
    %v5052 = vmax.f32 %v5001, 0.0
    %v5053 = vmax.f32 %v5003, 0.0
    %v5054 = vmax.f32 %v5044, 0.0
    %v5055 = vmax.f32 %v5046, 0.0
    %v5056 = vmax.f32 %v5005, 0.0
    %v5057 = vmax.f32 %v5007, 0.0
    %v5058 = vmax.f32 %v5048, 0.0
    %v5059 = vmax.f32 %v5050, 0.0
    %v5060 = vpack.c.bf16 %v5056, %v5052
    %v5061 = vpack.c.bf16 %v5057, %v5053
    %v5062 = vpack.c.bf16 %v5058, %v5054
    %v5063 = vpack.c.bf16 %v5059, %v5055
    %v5064 = vld [vmem:[#allocation7 + $0x300] sm:$0xf]
    %v5065 = vld [vmem:[#allocation7 + $0x304] sm:$0xf]
    %v5066 = vld [vmem:[#allocation7 + $0x308] sm:$0xf]
    %v5067 = vld [vmem:[#allocation7 + $0x30c] sm:$0xf]
    %v5068 = vld [vmem:[#allocation7 + $0x310] sm:$0xf]
    %v5069 = vld [vmem:[#allocation7 + $0x314] sm:$0xf]
    %v5070 = vld [vmem:[#allocation7 + $0x318] sm:$0xf]
    %v5071 = vld [vmem:[#allocation7 + $0x31c] sm:$0xf]
    %v5072 = vld [vmem:[#allocation7 + $0x320] sm:$0xf]
    %v5073 = vld [vmem:[#allocation7 + $0x324] sm:$0xf]
    %v5074 = vld [vmem:[#allocation7 + $0x328] sm:$0xf]
    %v5075 = vld [vmem:[#allocation7 + $0x32c] sm:$0xf]
    %v5076 = vld [vmem:[#allocation7 + $0x330] sm:$0xf]
    %v5077 = vld [vmem:[#allocation7 + $0x334] sm:$0xf]
    %v5078 = vld [vmem:[#allocation7 + $0x338] sm:$0xf]
    %v5079 = vld [vmem:[#allocation7 + $0x33c] sm:$0xf]
    %v5080 = vld [vmem:[#allocation7 + $0x340] sm:$0xf]
    %v5081 = vld [vmem:[#allocation7 + $0x344] sm:$0xf]
    %v5082 = vld [vmem:[#allocation7 + $0x348] sm:$0xf]
    %v5083 = vld [vmem:[#allocation7 + $0x34c] sm:$0xf]
    %v5084 = vld [vmem:[#allocation7 + $0x350] sm:$0xf]
    %v5085 = vld [vmem:[#allocation7 + $0x354] sm:$0xf]
    %v5086 = vld [vmem:[#allocation7 + $0x358] sm:$0xf]
    %v5087 = vld [vmem:[#allocation7 + $0x35c] sm:$0xf]
    %v5088 = vld [vmem:[#allocation7 + $0x360] sm:$0xf]
    %v5089 = vld [vmem:[#allocation7 + $0x364] sm:$0xf]
    %v5090 = vld [vmem:[#allocation7 + $0x368] sm:$0xf]
    %v5091 = vld [vmem:[#allocation7 + $0x36c] sm:$0xf]
    %v5092 = vld [vmem:[#allocation7 + $0x370] sm:$0xf]
    %v5093 = vld [vmem:[#allocation7 + $0x374] sm:$0xf]
    %v5094 = vld [vmem:[#allocation7 + $0x378] sm:$0xf]
    %v5095 = vld [vmem:[#allocation7 + $0x37c] sm:$0xf]
    %v5096 = vld [vmem:[#allocation7 + $0x380] sm:$0xf]
    %v5097 = vld [vmem:[#allocation7 + $0x384] sm:$0xf]
    %v5098 = vld [vmem:[#allocation7 + $0x388] sm:$0xf]
    %v5099 = vld [vmem:[#allocation7 + $0x38c] sm:$0xf]
    %v5100 = vld [vmem:[#allocation7 + $0x390] sm:$0xf]
    %v5101 = vld [vmem:[#allocation7 + $0x394] sm:$0xf]
    %v5102 = vld [vmem:[#allocation7 + $0x398] sm:$0xf]
    %v5103 = vld [vmem:[#allocation7 + $0x39c] sm:$0xf]
    %v5104 = vld [vmem:[#allocation7 + $0x3a0] sm:$0xf]
    %v5105 = vld [vmem:[#allocation7 + $0x3a4] sm:$0xf]
    %v5106 = vld [vmem:[#allocation7 + $0x3a8] sm:$0xf]
    %v5107 = vld [vmem:[#allocation7 + $0x3ac] sm:$0xf]
    %v5108 = vld [vmem:[#allocation7 + $0x3b0] sm:$0xf]
    %v5109 = vld [vmem:[#allocation7 + $0x3b4] sm:$0xf]
    %v5110 = vld [vmem:[#allocation7 + $0x3b8] sm:$0xf]
    %v5111 = vld [vmem:[#allocation7 + $0x3bc] sm:$0xf]
    %v5112 = vld [vmem:[#allocation7 + $0x3c0] sm:$0xf]
    %v5113 = vld [vmem:[#allocation7 + $0x3c4] sm:$0xf]
    %v5114 = vld [vmem:[#allocation7 + $0x3c8] sm:$0xf]
    %v5115 = vld [vmem:[#allocation7 + $0x3cc] sm:$0xf]
    %v5116 = vld [vmem:[#allocation7 + $0x3d0] sm:$0xf]
    %v5117 = vld [vmem:[#allocation7 + $0x3d4] sm:$0xf]
    %v5118 = vld [vmem:[#allocation7 + $0x3d8] sm:$0xf]
    %v5119 = vld [vmem:[#allocation7 + $0x3dc] sm:$0xf]
    %v5120 = vld [vmem:[#allocation7 + $0x3e0] sm:$0xf]
    %v5121 = vld [vmem:[#allocation7 + $0x3e4] sm:$0xf]
    %v5122 = vld [vmem:[#allocation7 + $0x3e8] sm:$0xf]
    %v5123 = vld [vmem:[#allocation7 + $0x3ec] sm:$0xf]
    %v5124 = vld [vmem:[#allocation7 + $0x3f0] sm:$0xf]
    %v5125 = vld [vmem:[#allocation7 + $0x3f4] sm:$0xf]
    %v5126 = vld [vmem:[#allocation7 + $0x3f8] sm:$0xf]
    %v5127 = vld [vmem:[#allocation7 + $0x3fc] sm:$0xf]
    %v5192 = vunpack.c.l.b16 %v5064
    %v5193 = vunpack.c.l.b16 %v5065
    %v5194 = vunpack.c.l.b16 %v5066
    %v5195 = vunpack.c.l.b16 %v5067
    %v5196 = vunpack.c.l.b16 %v5068
    %v5197 = vunpack.c.l.b16 %v5069
    %v5198 = vunpack.c.l.b16 %v5070
    %v5199 = vunpack.c.l.b16 %v5071
    %v5200 = vunpack.c.l.b16 %v5072
    %v5201 = vunpack.c.l.b16 %v5073
    %v5202 = vunpack.c.l.b16 %v5074
    %v5203 = vunpack.c.l.b16 %v5075
    %v5204 = vunpack.c.l.b16 %v5076
    %v5205 = vunpack.c.l.b16 %v5077
    %v5206 = vunpack.c.l.b16 %v5078
    %v5207 = vunpack.c.l.b16 %v5079
    %v5208 = vunpack.c.l.b16 %v5080
    %v5209 = vunpack.c.l.b16 %v5081
    %v5210 = vunpack.c.l.b16 %v5082
    %v5211 = vunpack.c.l.b16 %v5083
    %v5212 = vunpack.c.l.b16 %v5084
    %v5213 = vunpack.c.l.b16 %v5085
    %v5214 = vunpack.c.l.b16 %v5086
    %v5215 = vunpack.c.l.b16 %v5087
    %v5216 = vunpack.c.l.b16 %v5088
    %v5217 = vunpack.c.l.b16 %v5089
    %v5218 = vunpack.c.l.b16 %v5090
    %v5219 = vunpack.c.l.b16 %v5091
    %v5220 = vunpack.c.l.b16 %v5092
    %v5221 = vunpack.c.l.b16 %v5093
    %v5222 = vunpack.c.l.b16 %v5094
    %v5223 = vunpack.c.l.b16 %v5095
    %v5224 = vunpack.c.l.b16 %v5096
    %v5225 = vunpack.c.l.b16 %v5097
    %v5226 = vunpack.c.l.b16 %v5098
    %v5227 = vunpack.c.l.b16 %v5099
    %v5228 = vunpack.c.l.b16 %v5100
    %v5229 = vunpack.c.l.b16 %v5101
    %v5230 = vunpack.c.l.b16 %v5102
    %v5231 = vunpack.c.l.b16 %v5103
    %v5232 = vunpack.c.l.b16 %v5104
    %v5233 = vunpack.c.l.b16 %v5105
    %v5234 = vunpack.c.l.b16 %v5106
    %v5235 = vunpack.c.l.b16 %v5107
    %v5236 = vunpack.c.l.b16 %v5108
    %v5237 = vunpack.c.l.b16 %v5109
    %v5238 = vunpack.c.l.b16 %v5110
    %v5239 = vunpack.c.l.b16 %v5111
    %v5240 = vunpack.c.l.b16 %v5112
    %v5241 = vunpack.c.l.b16 %v5113
    %v5242 = vunpack.c.l.b16 %v5114
    %v5243 = vunpack.c.l.b16 %v5115
    %v5244 = vunpack.c.l.b16 %v5116
    %v5245 = vunpack.c.l.b16 %v5117
    %v5246 = vunpack.c.l.b16 %v5118
    %v5247 = vunpack.c.l.b16 %v5119
    %v5248 = vunpack.c.l.b16 %v5120
    %v5249 = vunpack.c.l.b16 %v5121
    %v5250 = vunpack.c.l.b16 %v5122
    %v5251 = vunpack.c.l.b16 %v5123
    %v5252 = vunpack.c.l.b16 %v5124
    %v5253 = vunpack.c.l.b16 %v5125
    %v5254 = vunpack.c.l.b16 %v5126
    %v5255 = vunpack.c.l.b16 %v5127
    %v5256 = vpack.c.b16 %v5193, %v5192
    %v5257 = vpack.c.b16 %v5195, %v5194
    %v5258 = vpack.c.b16 %v5197, %v5196
    %v5259 = vpack.c.b16 %v5199, %v5198
    %v5260 = vpack.c.b16 %v5201, %v5200
    %v5261 = vpack.c.b16 %v5203, %v5202
    %v5262 = vpack.c.b16 %v5205, %v5204
    %v5263 = vpack.c.b16 %v5207, %v5206
    %v5264 = vpack.c.b16 %v5209, %v5208
    %v5265 = vpack.c.b16 %v5211, %v5210
    %v5266 = vpack.c.b16 %v5213, %v5212
    %v5267 = vpack.c.b16 %v5215, %v5214
    %v5268 = vpack.c.b16 %v5217, %v5216
    %v5269 = vpack.c.b16 %v5219, %v5218
    %v5270 = vpack.c.b16 %v5221, %v5220
    %v5271 = vpack.c.b16 %v5223, %v5222
    %v5272 = vpack.c.b16 %v5225, %v5224
    %v5273 = vpack.c.b16 %v5227, %v5226
    %v5274 = vpack.c.b16 %v5229, %v5228
    %v5275 = vpack.c.b16 %v5231, %v5230
    %v5276 = vpack.c.b16 %v5233, %v5232
    %v5277 = vpack.c.b16 %v5235, %v5234
    %v5278 = vpack.c.b16 %v5237, %v5236
    %v5279 = vpack.c.b16 %v5239, %v5238
    %v5280 = vpack.c.b16 %v5241, %v5240
    %v5281 = vpack.c.b16 %v5243, %v5242
    %v5282 = vpack.c.b16 %v5245, %v5244
    %v5283 = vpack.c.b16 %v5247, %v5246
    %v5284 = vpack.c.b16 %v5249, %v5248
    %v5285 = vpack.c.b16 %v5251, %v5250
    %v5286 = vpack.c.b16 %v5253, %v5252
    %v5287 = vpack.c.b16 %v5255, %v5254
    %5320 = vmatprep.subr.bf16.mxu0 0
    %5321 = vmatpush1.bf16.msra.mxu0 %v5263
    %5322 = vmatprep.subr.bf16.mxu0 0
    %5323 = vmatpush1.bf16.msra.mxu0 %v5262
    %5324 = vmatprep.subr.bf16.mxu0 0
    %5325 = vmatpush1.bf16.msra.mxu0 %v5261
    %5326 = vmatprep.subr.bf16.mxu0 0
    %5327 = vmatpush1.bf16.msra.mxu0 %v5260
    %5328 = vmatprep.subr.bf16.mxu0 0
    %5329 = vmatpush1.bf16.msra.mxu0 %v5259
    %5330 = vmatprep.subr.bf16.mxu0 0
    %5331 = vmatpush1.bf16.msra.mxu0 %v5258
    %5332 = vmatprep.subr.bf16.mxu0 0
    %5333 = vmatpush1.bf16.msra.mxu0 %v5257
    %5334 = vmatprep.subr.bf16.mxu0 0
    %5335 = vmatpush1.bf16.msra.mxu0 %v5256
    %5336 = vmatprep.subr.bf16.mxu0 0
    %5337 = vmatpush2.bf16.msra.mxu0 %v5271
    %5338 = vmatprep.subr.bf16.mxu0 0
    %5339 = vmatpush2.bf16.msra.mxu0 %v5270
    %5340 = vmatprep.subr.bf16.mxu0 0
    %5341 = vmatpush2.bf16.msra.mxu0 %v5269
    %5342 = vmatprep.subr.bf16.mxu0 0
    %5343 = vmatpush2.bf16.msra.mxu0 %v5268
    %5344 = vmatprep.subr.bf16.mxu0 0
    %5345 = vmatpush2.bf16.msra.mxu0 %v5267
    %5346 = vmatprep.subr.bf16.mxu0 0
    %5347 = vmatpush2.bf16.msra.mxu0 %v5266
    %5348 = vmatprep.subr.bf16.mxu0 0
    %5349 = vmatpush2.bf16.msra.mxu0 %v5265
    %5350 = vmatprep.subr.bf16.mxu0 0
    %5351 = vmatpush2.bf16.msra.mxu0 %v5264
    %5352 = vmatprep.mubr.bf16.mxu0 %v5061
    %5353 = vmatmul.mubr.bf16.gmra.mxu0 %v5060
    %v5354 = vpop.f32.mrf.mxu0
    %v5355 = vadd.f32 0.0, %v5354
    %v5356 = vpop.f32.mrf.mxu0
    %v5357 = vpop.f32.mrf.mxu0
    %v5358 = vadd.f32 0.0, %v5357
    %v5359 = vpop.f32.mrf.mxu0
    %5360 = vdwg.mxu0
    %5361 = vmatprep.subr.bf16.mxu0 0
    %5362 = vmatpush1.bf16.msra.mxu0 %v5279
    %5363 = vmatprep.subr.bf16.mxu0 0
    %5364 = vmatpush1.bf16.msra.mxu0 %v5278
    %5365 = vmatprep.subr.bf16.mxu0 0
    %5366 = vmatpush1.bf16.msra.mxu0 %v5277
    %5367 = vmatprep.subr.bf16.mxu0 0
    %5368 = vmatpush1.bf16.msra.mxu0 %v5276
    %5369 = vmatprep.subr.bf16.mxu0 0
    %5370 = vmatpush1.bf16.msra.mxu0 %v5275
    %5371 = vmatprep.subr.bf16.mxu0 0
    %5372 = vmatpush1.bf16.msra.mxu0 %v5274
    %5373 = vmatprep.subr.bf16.mxu0 0
    %5374 = vmatpush1.bf16.msra.mxu0 %v5273
    %5375 = vmatprep.subr.bf16.mxu0 0
    %5376 = vmatpush1.bf16.msra.mxu0 %v5272
    %5377 = vmatprep.subr.bf16.mxu0 0
    %5378 = vmatpush2.bf16.msra.mxu0 %v5287
    %5379 = vmatprep.subr.bf16.mxu0 0
    %5380 = vmatpush2.bf16.msra.mxu0 %v5286
    %5381 = vmatprep.subr.bf16.mxu0 0
    %5382 = vmatpush2.bf16.msra.mxu0 %v5285
    %5383 = vmatprep.subr.bf16.mxu0 0
    %5384 = vmatpush2.bf16.msra.mxu0 %v5284
    %5385 = vmatprep.subr.bf16.mxu0 0
    %5386 = vmatpush2.bf16.msra.mxu0 %v5283
    %5387 = vmatprep.subr.bf16.mxu0 0
    %5388 = vmatpush2.bf16.msra.mxu0 %v5282
    %5389 = vmatprep.subr.bf16.mxu0 0
    %5390 = vmatpush2.bf16.msra.mxu0 %v5281
    %5391 = vmatprep.subr.bf16.mxu0 0
    %5392 = vmatpush2.bf16.msra.mxu0 %v5280
    %5393 = vmatprep.mubr.bf16.mxu0 %v5063
    %5394 = vmatmul.mubr.bf16.gmra.mxu0 %v5062
    %v5395 = vpop.f32.mrf.mxu0
    %v5396 = vadd.f32 %v5355, %v5395
    %v5397 = vpop.f32.mrf.mxu0
    %v5398 = vpop.f32.mrf.mxu0
    %v5399 = vadd.f32 %v5358, %v5398
    %v5400 = vpop.f32.mrf.mxu0
    %5401 = vdwg.mxu0
    %v5402 = vadd.f32 %v4894, %v5396
    %v5403 = vadd.f32 %v4895, %v5399
    %v5404 = vld [vmem:[%s14 + $0x16] sm:$0x1]
    %v5406 = vlaneseq
    %v5407 = vshrl.u32 %v5406, 7
    %v5408 = vsub.s32 0, %v5407
    %v5409 = vrot.slane %v5404, %v5408
    %v5411 = vadd.f32 %v5402, %v5409
    %v5412 = vadd.f32 %v5403, %v5409
    %5415 = vrot.lane.b32.xlu0 %v5411, 96
    %v5416 = vpop.permute.xlu0 %5415
    %5417 = vrot.lane.b32.xlu0 %v5412, 96
    %v5418 = vpop.permute.xlu0 %5417
    %v5421 = vadd.f32 %v3367, %v5416
    %v5422 = vadd.f32 %v3368, %v5418
    %v5423 = vld [vmem:[%s14 + $0x17] sm:$0x1]
    %v5424 = vld [vmem:[%s14 + $0x18] sm:$0x1]
    %5427 = vrot.lane.b32.xlu0 %v5421, 32
    %v5428 = vpop.permute.xlu0 %5427
    %5429 = vrot.lane.b32.xlu0 %v5422, 32
    %v5430 = vpop.permute.xlu0 %5429
    %v5433 = vsel %vm194, %v5428, 0.0
    %5434 = vadd.xlane.f32.xlu0 %v5433
    %v5435 = vpop.xlane.xlu0 %5434
    %v5436 = vsel %vm194, %v5430, 0.0
    %5437 = vadd.xlane.f32.xlu0 %v5436
    %v5438 = vpop.xlane.xlu0 %5437
    %v5439 = vmul.f32 %v5435, %v3320
    %v5440 = vmul.f32 %v5438, %v3320
    %v5441 = vsub.f32 %v5421, %v5439
    %v5442 = vsub.f32 %v5422, %v5440
    %v5443 = vmul.f32 %v5441, %v5441
    %v5444 = vmul.f32 %v5442, %v5442
    %5447 = vrot.lane.b32.xlu0 %v5443, 32
    %v5448 = vpop.permute.xlu0 %5447
    %5449 = vrot.lane.b32.xlu0 %v5444, 32
    %v5450 = vpop.permute.xlu0 %5449
    %v5453 = vsel %vm194, %v5448, 0.0
    %5454 = vadd.xlane.f32.xlu0 %v5453
    %v5455 = vpop.xlane.xlu0 %5454
    %v5456 = vsel %vm194, %v5450, 0.0
    %5457 = vadd.xlane.f32.xlu0 %v5456
    %v5458 = vpop.xlane.xlu0 %5457
    %v5459 = vmul.f32 %v5455, %v3320
    %v5460 = vmul.f32 %v5458, %v3320
    %v5461 = vadd.f32 %v5459, 1e-05
    %v5462 = vadd.f32 %v5460, 1e-05
    %v5463 = vrsqrt.pop %v5461
    %v5464 = vrsqrt.pop %v5462
    %v5465 = vmul.f32 %v5441, %v5463
    %v5466 = vmul.f32 %v5442, %v5464
    %v5468 = vlaneseq
    %v5469 = vshrl.u32 %v5468, 7
    %v5470 = vsub.s32 0, %v5469
    %v5471 = vrot.slane %v5423, %v5470
    %5472 = vrot.lane.b32.xlu0 %v5471, 96
    %v5473 = vpop.permute.xlu0 %5472
    %v5475 = vmul.f32 %v5465, %v5473
    %v5476 = vmul.f32 %v5466, %v5473
    %v5478 = vlaneseq
    %v5479 = vshrl.u32 %v5478, 7
    %v5480 = vsub.s32 0, %v5479
    %v5481 = vrot.slane %v5424, %v5480
    %5482 = vrot.lane.b32.xlu0 %v5481, 96
    %v5483 = vpop.permute.xlu0 %5482
    %v5485 = vadd.f32 %v5475, %v5483
    %v5486 = vadd.f32 %v5476, %v5483
    %v5487 = vpack.c.bf16 %v5486, %v5485
    %v5488 = vld [vmem:[%s9] sm:$0xf]
    %v5489 = vld [vmem:[%s9 + $0x4] sm:$0xf]
    %v5490 = vld [vmem:[%s9 + $0x8] sm:$0xf]
    %v5491 = vld [vmem:[%s9 + $0xc] sm:$0xf]
    %v5492 = vld [vmem:[%s14 + $0x19] sm:$0x1]
    %v5494 = vlaneseq
    %v5495 = vshrl.u32 %v5494, 7
    %v5496 = vsub.s32 0, %v5495
    %v5497 = vrot.slane %v5492, %v5496
    %5500 = vrot.lane.b32.xlu0 %v5487, 32
    %v5501 = vpop.permute.xlu0 %5500
    %v5506 = vunpack.c.l.b16 %v5488
    %v5507 = vunpack.c.l.b16 %v5489
    %v5508 = vunpack.c.l.b16 %v5490
    %v5509 = vunpack.c.l.b16 %v5491
    %v5510 = vpack.c.b16 %v5507, %v5506
    %v5511 = vpack.c.b16 %v5509, %v5508
    %v5515 = vsel %vm194, %v5501, 0
    %5517 = vmatprep.subr.bf16.mxu0 0
    %5518 = vmatpush1.bf16.msra.mxu0 0
    %5519 = vmatprep.subr.bf16.mxu0 0
    %5520 = vmatpush1.bf16.msra.mxu0 0
    %5521 = vmatprep.subr.bf16.mxu0 0
    %5522 = vmatpush1.bf16.msra.mxu0 0
    %5523 = vmatprep.subr.bf16.mxu0 0
    %5524 = vmatpush1.bf16.msra.mxu0 0
    %5525 = vmatprep.subr.bf16.mxu0 0
    %5526 = vmatpush1.bf16.msra.mxu0 0
    %5527 = vmatprep.subr.bf16.mxu0 0
    %5528 = vmatpush1.bf16.msra.mxu0 0
    %5529 = vmatprep.subr.bf16.mxu0 0
    %5530 = vmatpush1.bf16.msra.mxu0 %v5511
    %5531 = vmatprep.subr.bf16.mxu0 0
    %5532 = vmatpush1.bf16.msra.mxu0 %v5510
    %5533 = vmatprep.subr.bf16.mxu0 0
    %5534 = vmatpush2.bf16.msra.mxu0 0
    %5535 = vmatprep.subr.bf16.mxu0 0
    %5536 = vmatpush2.bf16.msra.mxu0 0
    %5537 = vmatprep.subr.bf16.mxu0 0
    %5538 = vmatpush2.bf16.msra.mxu0 0
    %5539 = vmatprep.subr.bf16.mxu0 0
    %5540 = vmatpush2.bf16.msra.mxu0 0
    %5541 = vmatprep.subr.bf16.mxu0 0
    %5542 = vmatpush2.bf16.msra.mxu0 0
    %5543 = vmatprep.subr.bf16.mxu0 0
    %5544 = vmatpush2.bf16.msra.mxu0 0
    %5545 = vmatprep.subr.bf16.mxu0 0
    %5546 = vmatpush2.bf16.msra.mxu0 0
    %5547 = vmatprep.subr.bf16.mxu0 0
    %5548 = vmatpush2.bf16.msra.mxu0 0
    %5549 = vmatprep.mubr.bf16.mxu0 0
    %5550 = vmatmul.mubr.bf16.gmra.mxu0 %v5515
    %v5551 = vpop.f32.mrf.mxu0
    %v5552 = vadd.f32 %v5497, %v5551
    %v5553 = vpop.f32.mrf.mxu0
    %v5554 = vpop.f32.mrf.mxu0
    %v5555 = vadd.f32 %v5497, %v5554
    %v5556 = vpop.f32.mrf.mxu0
    %5557 = vdwg.mxu0
    %5559 = vrot.lane.b32.xlu0 %v5552, 96
    %v5560 = vpop.permute.xlu0 %5559
    %v5561 = vsel %vm133, %v5552, 0
    %v5563 = vsel %vm133, %v5560, 0
    %5565 = vmatprep.subr.mxu0 0.0
    %5566 = vmatpush1.xpose.msra.mxu0 0.0
    %5567 = vmatprep.subr.mxu0 0.0
    %5568 = vmatpush1.xpose.msra.mxu0 0.0
    %5569 = vmatprep.subr.mxu0 0.0
    %5570 = vmatpush1.xpose.msra.mxu0 0.0
    %5571 = vmatprep.subr.mxu0 0.0
    %5572 = vmatpush1.xpose.msra.mxu0 0.0
    %5573 = vmatprep.subr.mxu0 0.0
    %5574 = vmatpush1.xpose.msra.mxu0 0.0
    %5575 = vmatprep.subr.mxu0 0.0
    %5576 = vmatpush1.xpose.msra.mxu0 0.0
    %5577 = vmatprep.subr.mxu0 0.0
    %5578 = vmatpush1.xpose.msra.mxu0 0.0
    %5579 = vmatprep.subr.mxu0 0.0
    %5580 = vmatpush1.xpose.msra.mxu0 0.0
    %5581 = vmatprep.subr.mxu0 0.0
    %5582 = vmatpush1.xpose.msra.mxu0 0.0
    %5583 = vmatprep.subr.mxu0 0.0
    %5584 = vmatpush1.xpose.msra.mxu0 0.0
    %5585 = vmatprep.subr.mxu0 0.0
    %5586 = vmatpush1.xpose.msra.mxu0 0.0
    %5587 = vmatprep.subr.mxu0 0.0
    %5588 = vmatpush1.xpose.msra.mxu0 0.0
    %5589 = vmatprep.subr.mxu0 0.0
    %5590 = vmatpush1.xpose.msra.mxu0 0.0
    %5591 = vmatprep.subr.mxu0 0.0
    %5592 = vmatpush1.xpose.msra.mxu0 0.0
    %5593 = vmatprep.subr.mxu0 0.0
    %5594 = vmatpush1.xpose.msra.mxu0 0.0
    %5595 = vmatprep.subr.mxu0 0.0
    %5596 = vmatpush1.xpose.msra.mxu0 %v5563
    %5597 = vmatprep.subr.mxu0 0.0
    %5598 = vmatpush2.xpose.msra.mxu0 0.0
    %5599 = vmatprep.subr.mxu0 0.0
    %5600 = vmatpush2.xpose.msra.mxu0 0.0
    %5601 = vmatprep.subr.mxu0 0.0
    %5602 = vmatpush2.xpose.msra.mxu0 0.0
    %5603 = vmatprep.subr.mxu0 0.0
    %5604 = vmatpush2.xpose.msra.mxu0 0.0
    %5605 = vmatprep.subr.mxu0 0.0
    %5606 = vmatpush2.xpose.msra.mxu0 0.0
    %5607 = vmatprep.subr.mxu0 0.0
    %5608 = vmatpush2.xpose.msra.mxu0 0.0
    %5609 = vmatprep.subr.mxu0 0.0
    %5610 = vmatpush2.xpose.msra.mxu0 0.0
    %5611 = vmatprep.subr.mxu0 0.0
    %5612 = vmatpush2.xpose.msra.mxu0 0.0
    %5613 = vmatprep.subr.mxu0 0.0
    %5614 = vmatpush2.xpose.msra.mxu0 0.0
    %5615 = vmatprep.subr.mxu0 0.0
    %5616 = vmatpush2.xpose.msra.mxu0 0.0
    %5617 = vmatprep.subr.mxu0 0.0
    %5618 = vmatpush2.xpose.msra.mxu0 0.0
    %5619 = vmatprep.subr.mxu0 0.0
    %5620 = vmatpush2.xpose.msra.mxu0 0.0
    %5621 = vmatprep.subr.mxu0 0.0
    %5622 = vmatpush2.xpose.msra.mxu0 0.0
    %5623 = vmatprep.subr.mxu0 0.0
    %5624 = vmatpush2.xpose.msra.mxu0 0.0
    %5625 = vmatprep.subr.mxu0 0.0
    %5626 = vmatpush2.xpose.msra.mxu0 0.0
    %5627 = vmatprep.subr.mxu0 0.0
    %5628 = vmatpush2.xpose.msra.mxu0 0.0
    %5629 = vmatprep.mubr.f32.mxu0 0.0
    %5630 = vmatmul.mubr.f32.gmra.mxu0 %v5561
    %v5631 = vpop.f32.mrf.mxu0
    %v5632 = vadd.f32 0.0, %v5631
    %v5633 = vpop.f32.mrf.mxu0
    %5634 = vdwg.mxu0
    %5636 = vrot.lane.b32.xlu0 %v5555, 96
    %v5637 = vpop.permute.xlu0 %5636
    %v5638 = vsel %vm133, %v5555, 0
    %v5640 = vsel %vm133, %v5637, 0
    %5642 = vmatprep.subr.mxu0 0.0
    %5643 = vmatpush1.xpose.msra.mxu0 0.0
    %5644 = vmatprep.subr.mxu0 0.0
    %5645 = vmatpush1.xpose.msra.mxu0 0.0
    %5646 = vmatprep.subr.mxu0 0.0
    %5647 = vmatpush1.xpose.msra.mxu0 0.0
    %5648 = vmatprep.subr.mxu0 0.0
    %5649 = vmatpush1.xpose.msra.mxu0 0.0
    %5650 = vmatprep.subr.mxu0 0.0
    %5651 = vmatpush1.xpose.msra.mxu0 0.0
    %5652 = vmatprep.subr.mxu0 0.0
    %5653 = vmatpush1.xpose.msra.mxu0 0.0
    %5654 = vmatprep.subr.mxu0 0.0
    %5655 = vmatpush1.xpose.msra.mxu0 0.0
    %5656 = vmatprep.subr.mxu0 0.0
    %5657 = vmatpush1.xpose.msra.mxu0 0.0
    %5658 = vmatprep.subr.mxu0 0.0
    %5659 = vmatpush1.xpose.msra.mxu0 0.0
    %5660 = vmatprep.subr.mxu0 0.0
    %5661 = vmatpush1.xpose.msra.mxu0 0.0
    %5662 = vmatprep.subr.mxu0 0.0
    %5663 = vmatpush1.xpose.msra.mxu0 0.0
    %5664 = vmatprep.subr.mxu0 0.0
    %5665 = vmatpush1.xpose.msra.mxu0 0.0
    %5666 = vmatprep.subr.mxu0 0.0
    %5667 = vmatpush1.xpose.msra.mxu0 0.0
    %5668 = vmatprep.subr.mxu0 0.0
    %5669 = vmatpush1.xpose.msra.mxu0 0.0
    %5670 = vmatprep.subr.mxu0 0.0
    %5671 = vmatpush1.xpose.msra.mxu0 0.0
    %5672 = vmatprep.subr.mxu0 0.0
    %5673 = vmatpush1.xpose.msra.mxu0 %v5640
    %5674 = vmatprep.subr.mxu0 0.0
    %5675 = vmatpush2.xpose.msra.mxu0 0.0
    %5676 = vmatprep.subr.mxu0 0.0
    %5677 = vmatpush2.xpose.msra.mxu0 0.0
    %5678 = vmatprep.subr.mxu0 0.0
    %5679 = vmatpush2.xpose.msra.mxu0 0.0
    %5680 = vmatprep.subr.mxu0 0.0
    %5681 = vmatpush2.xpose.msra.mxu0 0.0
    %5682 = vmatprep.subr.mxu0 0.0
    %5683 = vmatpush2.xpose.msra.mxu0 0.0
    %5684 = vmatprep.subr.mxu0 0.0
    %5685 = vmatpush2.xpose.msra.mxu0 0.0
    %5686 = vmatprep.subr.mxu0 0.0
    %5687 = vmatpush2.xpose.msra.mxu0 0.0
    %5688 = vmatprep.subr.mxu0 0.0
    %5689 = vmatpush2.xpose.msra.mxu0 0.0
    %5690 = vmatprep.subr.mxu0 0.0
    %5691 = vmatpush2.xpose.msra.mxu0 0.0
    %5692 = vmatprep.subr.mxu0 0.0
    %5693 = vmatpush2.xpose.msra.mxu0 0.0
    %5694 = vmatprep.subr.mxu0 0.0
    %5695 = vmatpush2.xpose.msra.mxu0 0.0
    %5696 = vmatprep.subr.mxu0 0.0
    %5697 = vmatpush2.xpose.msra.mxu0 0.0
    %5698 = vmatprep.subr.mxu0 0.0
    %5699 = vmatpush2.xpose.msra.mxu0 0.0
    %5700 = vmatprep.subr.mxu0 0.0
    %5701 = vmatpush2.xpose.msra.mxu0 0.0
    %5702 = vmatprep.subr.mxu0 0.0
    %5703 = vmatpush2.xpose.msra.mxu0 0.0
    %5704 = vmatprep.subr.mxu0 0.0
    %5705 = vmatpush2.xpose.msra.mxu0 0.0
    %5706 = vmatprep.mubr.f32.mxu0 0.0
    %5707 = vmatmul.mubr.f32.gmra.mxu0 %v5638
    %v5708 = vpop.f32.mrf.mxu0
    %v5709 = vadd.f32 0.0, %v5708
    %v5710 = vpop.f32.mrf.mxu0
    %5711 = vdwg.mxu0
    %v5712 = vsel %vm133, %v5632, -inf
    %5713 = vmax.xlane.f32.xlu0 %v5712
    %v5714 = vpop.xlane.xlu0 %5713
    %v5715 = vsel %vm133, %v5709, -inf
    %5716 = vmax.xlane.f32.xlu0 %v5715
    %v5717 = vpop.xlane.xlu0 %5716
    %v5718 = vsub.f32 %v5632, %v5714
    %v5719 = vsub.f32 %v5709, %v5717
    %v5720 = vmul.f32 %v5718, 1.442695
    %v5721 = vpow.pop %v5720
    %v5722 = vmul.f32 %v5719, 1.442695
    %v5723 = vpow.pop %v5722
    %v5724 = vsel %vm133, %v5721, 0.0
    %5725 = vadd.xlane.f32.xlu0 %v5724
    %v5726 = vpop.xlane.xlu0 %5725
    %v5727 = vsel %vm133, %v5723, 0.0
    %5728 = vadd.xlane.f32.xlu0 %v5727
    %v5729 = vpop.xlane.xlu0 %5728
    %v5730 = vrcp.pop %v5726
    %v5731 = vrcp.pop %v5729
    %v5732 = vmul.f32 %v5721, %v5730
    %v5733 = vmul.f32 %v5723, %v5731
    %5734 = vrot.lane.b32.xlu0 %v5552, 64
    %v5735 = vpop.permute.xlu0 %5734
    %v5738 = vsel %vm133, %v5732, 0
    %5740 = vmatprep.subr.mxu0 0.0
    %5741 = vmatpush1.msra.mxu0 0.0
    %5742 = vmatprep.subr.mxu0 0.0
    %5743 = vmatpush1.msra.mxu0 0.0
    %5744 = vmatprep.subr.mxu0 0.0
    %5745 = vmatpush1.msra.mxu0 0.0
    %5746 = vmatprep.subr.mxu0 0.0
    %5747 = vmatpush1.msra.mxu0 0.0
    %5748 = vmatprep.subr.mxu0 0.0
    %5749 = vmatpush1.msra.mxu0 0.0
    %5750 = vmatprep.subr.mxu0 0.0
    %5751 = vmatpush1.msra.mxu0 0.0
    %5752 = vmatprep.subr.mxu0 0.0
    %5753 = vmatpush1.msra.mxu0 0.0
    %5754 = vmatprep.subr.mxu0 0.0
    %5755 = vmatpush1.msra.mxu0 0.0
    %5756 = vmatprep.subr.mxu0 0.0
    %5757 = vmatpush1.msra.mxu0 0.0
    %5758 = vmatprep.subr.mxu0 0.0
    %5759 = vmatpush1.msra.mxu0 0.0
    %5760 = vmatprep.subr.mxu0 0.0
    %5761 = vmatpush1.msra.mxu0 0.0
    %5762 = vmatprep.subr.mxu0 0.0
    %5763 = vmatpush1.msra.mxu0 0.0
    %5764 = vmatprep.subr.mxu0 0.0
    %5765 = vmatpush1.msra.mxu0 0.0
    %5766 = vmatprep.subr.mxu0 0.0
    %5767 = vmatpush1.msra.mxu0 0.0
    %5768 = vmatprep.subr.mxu0 0.0
    %5769 = vmatpush1.msra.mxu0 0.0
    %5770 = vmatprep.subr.mxu0 0.0
    %5771 = vmatpush1.msra.mxu0 %v5735
    %5772 = vmatprep.subr.mxu0 0.0
    %5773 = vmatpush2.msra.mxu0 0.0
    %5774 = vmatprep.subr.mxu0 0.0
    %5775 = vmatpush2.msra.mxu0 0.0
    %5776 = vmatprep.subr.mxu0 0.0
    %5777 = vmatpush2.msra.mxu0 0.0
    %5778 = vmatprep.subr.mxu0 0.0
    %5779 = vmatpush2.msra.mxu0 0.0
    %5780 = vmatprep.subr.mxu0 0.0
    %5781 = vmatpush2.msra.mxu0 0.0
    %5782 = vmatprep.subr.mxu0 0.0
    %5783 = vmatpush2.msra.mxu0 0.0
    %5784 = vmatprep.subr.mxu0 0.0
    %5785 = vmatpush2.msra.mxu0 0.0
    %5786 = vmatprep.subr.mxu0 0.0
    %5787 = vmatpush2.msra.mxu0 0.0
    %5788 = vmatprep.subr.mxu0 0.0
    %5789 = vmatpush2.msra.mxu0 0.0
    %5790 = vmatprep.subr.mxu0 0.0
    %5791 = vmatpush2.msra.mxu0 0.0
    %5792 = vmatprep.subr.mxu0 0.0
    %5793 = vmatpush2.msra.mxu0 0.0
    %5794 = vmatprep.subr.mxu0 0.0
    %5795 = vmatpush2.msra.mxu0 0.0
    %5796 = vmatprep.subr.mxu0 0.0
    %5797 = vmatpush2.msra.mxu0 0.0
    %5798 = vmatprep.subr.mxu0 0.0
    %5799 = vmatpush2.msra.mxu0 0.0
    %5800 = vmatprep.subr.mxu0 0.0
    %5801 = vmatpush2.msra.mxu0 0.0
    %5802 = vmatprep.subr.mxu0 0.0
    %5803 = vmatpush2.msra.mxu0 0.0
    %5804 = vmatprep.mubr.f32.mxu0 0.0
    %5805 = vmatmul.mubr.f32.gmra.mxu0 %v5738
    %v5806 = vpop.f32.mrf.mxu0
    %v5807 = vadd.f32 0.0, %v5806
    %v5808 = vpop.f32.mrf.mxu0
    %5809 = vdwg.mxu0
    %5810 = vrot.lane.b32.xlu0 %v5555, 64
    %v5811 = vpop.permute.xlu0 %5810
    %v5814 = vsel %vm133, %v5733, 0
    %5816 = vmatprep.subr.mxu0 0.0
    %5817 = vmatpush1.msra.mxu0 0.0
    %5818 = vmatprep.subr.mxu0 0.0
    %5819 = vmatpush1.msra.mxu0 0.0
    %5820 = vmatprep.subr.mxu0 0.0
    %5821 = vmatpush1.msra.mxu0 0.0
    %5822 = vmatprep.subr.mxu0 0.0
    %5823 = vmatpush1.msra.mxu0 0.0
    %5824 = vmatprep.subr.mxu0 0.0
    %5825 = vmatpush1.msra.mxu0 0.0
    %5826 = vmatprep.subr.mxu0 0.0
    %5827 = vmatpush1.msra.mxu0 0.0
    %5828 = vmatprep.subr.mxu0 0.0
    %5829 = vmatpush1.msra.mxu0 0.0
    %5830 = vmatprep.subr.mxu0 0.0
    %5831 = vmatpush1.msra.mxu0 0.0
    %5832 = vmatprep.subr.mxu0 0.0
    %5833 = vmatpush1.msra.mxu0 0.0
    %5834 = vmatprep.subr.mxu0 0.0
    %5835 = vmatpush1.msra.mxu0 0.0
    %5836 = vmatprep.subr.mxu0 0.0
    %5837 = vmatpush1.msra.mxu0 0.0
    %5838 = vmatprep.subr.mxu0 0.0
    %5839 = vmatpush1.msra.mxu0 0.0
    %5840 = vmatprep.subr.mxu0 0.0
    %5841 = vmatpush1.msra.mxu0 0.0
    %5842 = vmatprep.subr.mxu0 0.0
    %5843 = vmatpush1.msra.mxu0 0.0
    %5844 = vmatprep.subr.mxu0 0.0
    %5845 = vmatpush1.msra.mxu0 0.0
    %5846 = vmatprep.subr.mxu0 0.0
    %5847 = vmatpush1.msra.mxu0 %v5811
    %5848 = vmatprep.subr.mxu0 0.0
    %5849 = vmatpush2.msra.mxu0 0.0
    %5850 = vmatprep.subr.mxu0 0.0
    %5851 = vmatpush2.msra.mxu0 0.0
    %5852 = vmatprep.subr.mxu0 0.0
    %5853 = vmatpush2.msra.mxu0 0.0
    %5854 = vmatprep.subr.mxu0 0.0
    %5855 = vmatpush2.msra.mxu0 0.0
    %5856 = vmatprep.subr.mxu0 0.0
    %5857 = vmatpush2.msra.mxu0 0.0
    %5858 = vmatprep.subr.mxu0 0.0
    %5859 = vmatpush2.msra.mxu0 0.0
    %5860 = vmatprep.subr.mxu0 0.0
    %5861 = vmatpush2.msra.mxu0 0.0
    %5862 = vmatprep.subr.mxu0 0.0
    %5863 = vmatpush2.msra.mxu0 0.0
    %5864 = vmatprep.subr.mxu0 0.0
    %5865 = vmatpush2.msra.mxu0 0.0
    %5866 = vmatprep.subr.mxu0 0.0
    %5867 = vmatpush2.msra.mxu0 0.0
    %5868 = vmatprep.subr.mxu0 0.0
    %5869 = vmatpush2.msra.mxu0 0.0
    %5870 = vmatprep.subr.mxu0 0.0
    %5871 = vmatpush2.msra.mxu0 0.0
    %5872 = vmatprep.subr.mxu0 0.0
    %5873 = vmatpush2.msra.mxu0 0.0
    %5874 = vmatprep.subr.mxu0 0.0
    %5875 = vmatpush2.msra.mxu0 0.0
    %5876 = vmatprep.subr.mxu0 0.0
    %5877 = vmatpush2.msra.mxu0 0.0
    %5878 = vmatprep.subr.mxu0 0.0
    %5879 = vmatpush2.msra.mxu0 0.0
    %5880 = vmatprep.mubr.f32.mxu0 0.0
    %5881 = vmatmul.mubr.f32.gmra.mxu0 %v5814
    %v5882 = vpop.f32.mrf.mxu0
    %v5883 = vadd.f32 0.0, %v5882
    %v5884 = vpop.f32.mrf.mxu0
    %5885 = vdwg.mxu0
    %5886 = vrot.lane.b32.xlu0 %v5552, 120
    %v5887 = vpop.permute.xlu0 %5886
    %5888 = vrot.lane.b32.xlu0 %v5552, 88
    %v5889 = vpop.permute.xlu0 %5888
    %v5890 = vsel %vm133, %v5887, 0
    %v5892 = vsel %vm133, %v5889, 0
    %5894 = vmatprep.subr.mxu0 0.0
    %5895 = vmatpush1.xpose.msra.mxu0 0.0
    %5896 = vmatprep.subr.mxu0 0.0
    %5897 = vmatpush1.xpose.msra.mxu0 0.0
    %5898 = vmatprep.subr.mxu0 0.0
    %5899 = vmatpush1.xpose.msra.mxu0 0.0
    %5900 = vmatprep.subr.mxu0 0.0
    %5901 = vmatpush1.xpose.msra.mxu0 0.0
    %5902 = vmatprep.subr.mxu0 0.0
    %5903 = vmatpush1.xpose.msra.mxu0 0.0
    %5904 = vmatprep.subr.mxu0 0.0
    %5905 = vmatpush1.xpose.msra.mxu0 0.0
    %5906 = vmatprep.subr.mxu0 0.0
    %5907 = vmatpush1.xpose.msra.mxu0 0.0
    %5908 = vmatprep.subr.mxu0 0.0
    %5909 = vmatpush1.xpose.msra.mxu0 0.0
    %5910 = vmatprep.subr.mxu0 0.0
    %5911 = vmatpush1.xpose.msra.mxu0 0.0
    %5912 = vmatprep.subr.mxu0 0.0
    %5913 = vmatpush1.xpose.msra.mxu0 0.0
    %5914 = vmatprep.subr.mxu0 0.0
    %5915 = vmatpush1.xpose.msra.mxu0 0.0
    %5916 = vmatprep.subr.mxu0 0.0
    %5917 = vmatpush1.xpose.msra.mxu0 0.0
    %5918 = vmatprep.subr.mxu0 0.0
    %5919 = vmatpush1.xpose.msra.mxu0 0.0
    %5920 = vmatprep.subr.mxu0 0.0
    %5921 = vmatpush1.xpose.msra.mxu0 0.0
    %5922 = vmatprep.subr.mxu0 0.0
    %5923 = vmatpush1.xpose.msra.mxu0 0.0
    %5924 = vmatprep.subr.mxu0 0.0
    %5925 = vmatpush1.xpose.msra.mxu0 %v5892
    %5926 = vmatprep.subr.mxu0 0.0
    %5927 = vmatpush2.xpose.msra.mxu0 0.0
    %5928 = vmatprep.subr.mxu0 0.0
    %5929 = vmatpush2.xpose.msra.mxu0 0.0
    %5930 = vmatprep.subr.mxu0 0.0
    %5931 = vmatpush2.xpose.msra.mxu0 0.0
    %5932 = vmatprep.subr.mxu0 0.0
    %5933 = vmatpush2.xpose.msra.mxu0 0.0
    %5934 = vmatprep.subr.mxu0 0.0
    %5935 = vmatpush2.xpose.msra.mxu0 0.0
    %5936 = vmatprep.subr.mxu0 0.0
    %5937 = vmatpush2.xpose.msra.mxu0 0.0
    %5938 = vmatprep.subr.mxu0 0.0
    %5939 = vmatpush2.xpose.msra.mxu0 0.0
    %5940 = vmatprep.subr.mxu0 0.0
    %5941 = vmatpush2.xpose.msra.mxu0 0.0
    %5942 = vmatprep.subr.mxu0 0.0
    %5943 = vmatpush2.xpose.msra.mxu0 0.0
    %5944 = vmatprep.subr.mxu0 0.0
    %5945 = vmatpush2.xpose.msra.mxu0 0.0
    %5946 = vmatprep.subr.mxu0 0.0
    %5947 = vmatpush2.xpose.msra.mxu0 0.0
    %5948 = vmatprep.subr.mxu0 0.0
    %5949 = vmatpush2.xpose.msra.mxu0 0.0
    %5950 = vmatprep.subr.mxu0 0.0
    %5951 = vmatpush2.xpose.msra.mxu0 0.0
    %5952 = vmatprep.subr.mxu0 0.0
    %5953 = vmatpush2.xpose.msra.mxu0 0.0
    %5954 = vmatprep.subr.mxu0 0.0
    %5955 = vmatpush2.xpose.msra.mxu0 0.0
    %5956 = vmatprep.subr.mxu0 0.0
    %5957 = vmatpush2.xpose.msra.mxu0 0.0
    %5958 = vmatprep.mubr.f32.mxu0 0.0
    %5959 = vmatmul.mubr.f32.gmra.mxu0 %v5890
    %v5960 = vpop.f32.mrf.mxu0
    %v5961 = vadd.f32 0.0, %v5960
    %v5962 = vpop.f32.mrf.mxu0
    %5963 = vdwg.mxu0
    %5964 = vrot.lane.b32.xlu0 %v5555, 120
    %v5965 = vpop.permute.xlu0 %5964
    %5966 = vrot.lane.b32.xlu0 %v5555, 88
    %v5967 = vpop.permute.xlu0 %5966
    %v5968 = vsel %vm133, %v5965, 0
    %v5970 = vsel %vm133, %v5967, 0
    %5972 = vmatprep.subr.mxu0 0.0
    %5973 = vmatpush1.xpose.msra.mxu0 0.0
    %5974 = vmatprep.subr.mxu0 0.0
    %5975 = vmatpush1.xpose.msra.mxu0 0.0
    %5976 = vmatprep.subr.mxu0 0.0
    %5977 = vmatpush1.xpose.msra.mxu0 0.0
    %5978 = vmatprep.subr.mxu0 0.0
    %5979 = vmatpush1.xpose.msra.mxu0 0.0
    %5980 = vmatprep.subr.mxu0 0.0
    %5981 = vmatpush1.xpose.msra.mxu0 0.0
    %5982 = vmatprep.subr.mxu0 0.0
    %5983 = vmatpush1.xpose.msra.mxu0 0.0
    %5984 = vmatprep.subr.mxu0 0.0
    %5985 = vmatpush1.xpose.msra.mxu0 0.0
    %5986 = vmatprep.subr.mxu0 0.0
    %5987 = vmatpush1.xpose.msra.mxu0 0.0
    %5988 = vmatprep.subr.mxu0 0.0
    %5989 = vmatpush1.xpose.msra.mxu0 0.0
    %5990 = vmatprep.subr.mxu0 0.0
    %5991 = vmatpush1.xpose.msra.mxu0 0.0
    %5992 = vmatprep.subr.mxu0 0.0
    %5993 = vmatpush1.xpose.msra.mxu0 0.0
    %5994 = vmatprep.subr.mxu0 0.0
    %5995 = vmatpush1.xpose.msra.mxu0 0.0
    %5996 = vmatprep.subr.mxu0 0.0
    %5997 = vmatpush1.xpose.msra.mxu0 0.0
    %5998 = vmatprep.subr.mxu0 0.0
    %5999 = vmatpush1.xpose.msra.mxu0 0.0
    %6000 = vmatprep.subr.mxu0 0.0
    %6001 = vmatpush1.xpose.msra.mxu0 0.0
    %6002 = vmatprep.subr.mxu0 0.0
    %6003 = vmatpush1.xpose.msra.mxu0 %v5970
    %6004 = vmatprep.subr.mxu0 0.0
    %6005 = vmatpush2.xpose.msra.mxu0 0.0
    %6006 = vmatprep.subr.mxu0 0.0
    %6007 = vmatpush2.xpose.msra.mxu0 0.0
    %6008 = vmatprep.subr.mxu0 0.0
    %6009 = vmatpush2.xpose.msra.mxu0 0.0
    %6010 = vmatprep.subr.mxu0 0.0
    %6011 = vmatpush2.xpose.msra.mxu0 0.0
    %6012 = vmatprep.subr.mxu0 0.0
    %6013 = vmatpush2.xpose.msra.mxu0 0.0
    %6014 = vmatprep.subr.mxu0 0.0
    %6015 = vmatpush2.xpose.msra.mxu0 0.0
    %6016 = vmatprep.subr.mxu0 0.0
    %6017 = vmatpush2.xpose.msra.mxu0 0.0
    %6018 = vmatprep.subr.mxu0 0.0
    %6019 = vmatpush2.xpose.msra.mxu0 0.0
    %6020 = vmatprep.subr.mxu0 0.0
    %6021 = vmatpush2.xpose.msra.mxu0 0.0
    %6022 = vmatprep.subr.mxu0 0.0
    %6023 = vmatpush2.xpose.msra.mxu0 0.0
    %6024 = vmatprep.subr.mxu0 0.0
    %6025 = vmatpush2.xpose.msra.mxu0 0.0
    %6026 = vmatprep.subr.mxu0 0.0
    %6027 = vmatpush2.xpose.msra.mxu0 0.0
    %6028 = vmatprep.subr.mxu0 0.0
    %6029 = vmatpush2.xpose.msra.mxu0 0.0
    %6030 = vmatprep.subr.mxu0 0.0
    %6031 = vmatpush2.xpose.msra.mxu0 0.0
    %6032 = vmatprep.subr.mxu0 0.0
    %6033 = vmatpush2.xpose.msra.mxu0 0.0
    %6034 = vmatprep.subr.mxu0 0.0
    %6035 = vmatpush2.xpose.msra.mxu0 0.0
    %6036 = vmatprep.mubr.f32.mxu0 0.0
    %6037 = vmatmul.mubr.f32.gmra.mxu0 %v5968
    %v6038 = vpop.f32.mrf.mxu0
    %v6039 = vadd.f32 0.0, %v6038
    %v6040 = vpop.f32.mrf.mxu0
    %6041 = vdwg.mxu0
    %v6042 = vsel %vm133, %v5961, -inf
    %6043 = vmax.xlane.f32.xlu0 %v6042
    %v6044 = vpop.xlane.xlu0 %6043
    %v6045 = vsel %vm133, %v6039, -inf
    %6046 = vmax.xlane.f32.xlu0 %v6045
    %v6047 = vpop.xlane.xlu0 %6046
    %v6048 = vsub.f32 %v5961, %v6044
    %v6049 = vsub.f32 %v6039, %v6047
    %v6050 = vmul.f32 %v6048, 1.442695
    %v6051 = vpow.pop %v6050
    %v6052 = vmul.f32 %v6049, 1.442695
    %v6053 = vpow.pop %v6052
    %v6054 = vsel %vm133, %v6051, 0.0
    %6055 = vadd.xlane.f32.xlu0 %v6054
    %v6056 = vpop.xlane.xlu0 %6055
    %v6057 = vsel %vm133, %v6053, 0.0
    %6058 = vadd.xlane.f32.xlu0 %v6057
    %v6059 = vpop.xlane.xlu0 %6058
    %v6060 = vrcp.pop %v6056
    %v6061 = vrcp.pop %v6059
    %v6062 = vmul.f32 %v6051, %v6060
    %v6063 = vmul.f32 %v6053, %v6061
    %6064 = vrot.lane.b32.xlu0 %v5552, 56
    %v6065 = vpop.permute.xlu0 %6064
    %v6068 = vsel %vm133, %v6062, 0
    %6070 = vmatprep.subr.mxu0 0.0
    %6071 = vmatpush1.msra.mxu0 0.0
    %6072 = vmatprep.subr.mxu0 0.0
    %6073 = vmatpush1.msra.mxu0 0.0
    %6074 = vmatprep.subr.mxu0 0.0
    %6075 = vmatpush1.msra.mxu0 0.0
    %6076 = vmatprep.subr.mxu0 0.0
    %6077 = vmatpush1.msra.mxu0 0.0
    %6078 = vmatprep.subr.mxu0 0.0
    %6079 = vmatpush1.msra.mxu0 0.0
    %6080 = vmatprep.subr.mxu0 0.0
    %6081 = vmatpush1.msra.mxu0 0.0
    %6082 = vmatprep.subr.mxu0 0.0
    %6083 = vmatpush1.msra.mxu0 0.0
    %6084 = vmatprep.subr.mxu0 0.0
    %6085 = vmatpush1.msra.mxu0 0.0
    %6086 = vmatprep.subr.mxu0 0.0
    %6087 = vmatpush1.msra.mxu0 0.0
    %6088 = vmatprep.subr.mxu0 0.0
    %6089 = vmatpush1.msra.mxu0 0.0
    %6090 = vmatprep.subr.mxu0 0.0
    %6091 = vmatpush1.msra.mxu0 0.0
    %6092 = vmatprep.subr.mxu0 0.0
    %6093 = vmatpush1.msra.mxu0 0.0
    %6094 = vmatprep.subr.mxu0 0.0
    %6095 = vmatpush1.msra.mxu0 0.0
    %6096 = vmatprep.subr.mxu0 0.0
    %6097 = vmatpush1.msra.mxu0 0.0
    %6098 = vmatprep.subr.mxu0 0.0
    %6099 = vmatpush1.msra.mxu0 0.0
    %6100 = vmatprep.subr.mxu0 0.0
    %6101 = vmatpush1.msra.mxu0 %v6065
    %6102 = vmatprep.subr.mxu0 0.0
    %6103 = vmatpush2.msra.mxu0 0.0
    %6104 = vmatprep.subr.mxu0 0.0
    %6105 = vmatpush2.msra.mxu0 0.0
    %6106 = vmatprep.subr.mxu0 0.0
    %6107 = vmatpush2.msra.mxu0 0.0
    %6108 = vmatprep.subr.mxu0 0.0
    %6109 = vmatpush2.msra.mxu0 0.0
    %6110 = vmatprep.subr.mxu0 0.0
    %6111 = vmatpush2.msra.mxu0 0.0
    %6112 = vmatprep.subr.mxu0 0.0
    %6113 = vmatpush2.msra.mxu0 0.0
    %6114 = vmatprep.subr.mxu0 0.0
    %6115 = vmatpush2.msra.mxu0 0.0
    %6116 = vmatprep.subr.mxu0 0.0
    %6117 = vmatpush2.msra.mxu0 0.0
    %6118 = vmatprep.subr.mxu0 0.0
    %6119 = vmatpush2.msra.mxu0 0.0
    %6120 = vmatprep.subr.mxu0 0.0
    %6121 = vmatpush2.msra.mxu0 0.0
    %6122 = vmatprep.subr.mxu0 0.0
    %6123 = vmatpush2.msra.mxu0 0.0
    %6124 = vmatprep.subr.mxu0 0.0
    %6125 = vmatpush2.msra.mxu0 0.0
    %6126 = vmatprep.subr.mxu0 0.0
    %6127 = vmatpush2.msra.mxu0 0.0
    %6128 = vmatprep.subr.mxu0 0.0
    %6129 = vmatpush2.msra.mxu0 0.0
    %6130 = vmatprep.subr.mxu0 0.0
    %6131 = vmatpush2.msra.mxu0 0.0
    %6132 = vmatprep.subr.mxu0 0.0
    %6133 = vmatpush2.msra.mxu0 0.0
    %6134 = vmatprep.mubr.f32.mxu0 0.0
    %6135 = vmatmul.mubr.f32.gmra.mxu0 %v6068
    %v6136 = vpop.f32.mrf.mxu0
    %v6137 = vadd.f32 0.0, %v6136
    %v6138 = vpop.f32.mrf.mxu0
    %6139 = vdwg.mxu0
    %6140 = vrot.lane.b32.xlu0 %v5555, 56
    %v6141 = vpop.permute.xlu0 %6140
    %v6144 = vsel %vm133, %v6063, 0
    %6146 = vmatprep.subr.mxu0 0.0
    %6147 = vmatpush1.msra.mxu0 0.0
    %6148 = vmatprep.subr.mxu0 0.0
    %6149 = vmatpush1.msra.mxu0 0.0
    %6150 = vmatprep.subr.mxu0 0.0
    %6151 = vmatpush1.msra.mxu0 0.0
    %6152 = vmatprep.subr.mxu0 0.0
    %6153 = vmatpush1.msra.mxu0 0.0
    %6154 = vmatprep.subr.mxu0 0.0
    %6155 = vmatpush1.msra.mxu0 0.0
    %6156 = vmatprep.subr.mxu0 0.0
    %6157 = vmatpush1.msra.mxu0 0.0
    %6158 = vmatprep.subr.mxu0 0.0
    %6159 = vmatpush1.msra.mxu0 0.0
    %6160 = vmatprep.subr.mxu0 0.0
    %6161 = vmatpush1.msra.mxu0 0.0
    %6162 = vmatprep.subr.mxu0 0.0
    %6163 = vmatpush1.msra.mxu0 0.0
    %6164 = vmatprep.subr.mxu0 0.0
    %6165 = vmatpush1.msra.mxu0 0.0
    %6166 = vmatprep.subr.mxu0 0.0
    %6167 = vmatpush1.msra.mxu0 0.0
    %6168 = vmatprep.subr.mxu0 0.0
    %6169 = vmatpush1.msra.mxu0 0.0
    %6170 = vmatprep.subr.mxu0 0.0
    %6171 = vmatpush1.msra.mxu0 0.0
    %6172 = vmatprep.subr.mxu0 0.0
    %6173 = vmatpush1.msra.mxu0 0.0
    %6174 = vmatprep.subr.mxu0 0.0
    %6175 = vmatpush1.msra.mxu0 0.0
    %6176 = vmatprep.subr.mxu0 0.0
    %6177 = vmatpush1.msra.mxu0 %v6141
    %6178 = vmatprep.subr.mxu0 0.0
    %6179 = vmatpush2.msra.mxu0 0.0
    %6180 = vmatprep.subr.mxu0 0.0
    %6181 = vmatpush2.msra.mxu0 0.0
    %6182 = vmatprep.subr.mxu0 0.0
    %6183 = vmatpush2.msra.mxu0 0.0
    %6184 = vmatprep.subr.mxu0 0.0
    %6185 = vmatpush2.msra.mxu0 0.0
    %6186 = vmatprep.subr.mxu0 0.0
    %6187 = vmatpush2.msra.mxu0 0.0
    %6188 = vmatprep.subr.mxu0 0.0
    %6189 = vmatpush2.msra.mxu0 0.0
    %6190 = vmatprep.subr.mxu0 0.0
    %6191 = vmatpush2.msra.mxu0 0.0
    %6192 = vmatprep.subr.mxu0 0.0
    %6193 = vmatpush2.msra.mxu0 0.0
    %6194 = vmatprep.subr.mxu0 0.0
    %6195 = vmatpush2.msra.mxu0 0.0
    %6196 = vmatprep.subr.mxu0 0.0
    %6197 = vmatpush2.msra.mxu0 0.0
    %6198 = vmatprep.subr.mxu0 0.0
    %6199 = vmatpush2.msra.mxu0 0.0
    %6200 = vmatprep.subr.mxu0 0.0
    %6201 = vmatpush2.msra.mxu0 0.0
    %6202 = vmatprep.subr.mxu0 0.0
    %6203 = vmatpush2.msra.mxu0 0.0
    %6204 = vmatprep.subr.mxu0 0.0
    %6205 = vmatpush2.msra.mxu0 0.0
    %6206 = vmatprep.subr.mxu0 0.0
    %6207 = vmatpush2.msra.mxu0 0.0
    %6208 = vmatprep.subr.mxu0 0.0
    %6209 = vmatpush2.msra.mxu0 0.0
    %6210 = vmatprep.mubr.f32.mxu0 0.0
    %6211 = vmatmul.mubr.f32.gmra.mxu0 %v6144
    %v6212 = vpop.f32.mrf.mxu0
    %v6213 = vadd.f32 0.0, %v6212
    %v6214 = vpop.f32.mrf.mxu0
    %6215 = vdwg.mxu0
    %6216 = vrot.lane.b32.xlu0 %v5552, 112
    %v6217 = vpop.permute.xlu0 %6216
    %6218 = vrot.lane.b32.xlu0 %v5552, 80
    %v6219 = vpop.permute.xlu0 %6218
    %v6220 = vsel %vm133, %v6217, 0
    %v6222 = vsel %vm133, %v6219, 0
    %6224 = vmatprep.subr.mxu0 0.0
    %6225 = vmatpush1.xpose.msra.mxu0 0.0
    %6226 = vmatprep.subr.mxu0 0.0
    %6227 = vmatpush1.xpose.msra.mxu0 0.0
    %6228 = vmatprep.subr.mxu0 0.0
    %6229 = vmatpush1.xpose.msra.mxu0 0.0
    %6230 = vmatprep.subr.mxu0 0.0
    %6231 = vmatpush1.xpose.msra.mxu0 0.0
    %6232 = vmatprep.subr.mxu0 0.0
    %6233 = vmatpush1.xpose.msra.mxu0 0.0
    %6234 = vmatprep.subr.mxu0 0.0
    %6235 = vmatpush1.xpose.msra.mxu0 0.0
    %6236 = vmatprep.subr.mxu0 0.0
    %6237 = vmatpush1.xpose.msra.mxu0 0.0
    %6238 = vmatprep.subr.mxu0 0.0
    %6239 = vmatpush1.xpose.msra.mxu0 0.0
    %6240 = vmatprep.subr.mxu0 0.0
    %6241 = vmatpush1.xpose.msra.mxu0 0.0
    %6242 = vmatprep.subr.mxu0 0.0
    %6243 = vmatpush1.xpose.msra.mxu0 0.0
    %6244 = vmatprep.subr.mxu0 0.0
    %6245 = vmatpush1.xpose.msra.mxu0 0.0
    %6246 = vmatprep.subr.mxu0 0.0
    %6247 = vmatpush1.xpose.msra.mxu0 0.0
    %6248 = vmatprep.subr.mxu0 0.0
    %6249 = vmatpush1.xpose.msra.mxu0 0.0
    %6250 = vmatprep.subr.mxu0 0.0
    %6251 = vmatpush1.xpose.msra.mxu0 0.0
    %6252 = vmatprep.subr.mxu0 0.0
    %6253 = vmatpush1.xpose.msra.mxu0 0.0
    %6254 = vmatprep.subr.mxu0 0.0
    %6255 = vmatpush1.xpose.msra.mxu0 %v6222
    %6256 = vmatprep.subr.mxu0 0.0
    %6257 = vmatpush2.xpose.msra.mxu0 0.0
    %6258 = vmatprep.subr.mxu0 0.0
    %6259 = vmatpush2.xpose.msra.mxu0 0.0
    %6260 = vmatprep.subr.mxu0 0.0
    %6261 = vmatpush2.xpose.msra.mxu0 0.0
    %6262 = vmatprep.subr.mxu0 0.0
    %6263 = vmatpush2.xpose.msra.mxu0 0.0
    %6264 = vmatprep.subr.mxu0 0.0
    %6265 = vmatpush2.xpose.msra.mxu0 0.0
    %6266 = vmatprep.subr.mxu0 0.0
    %6267 = vmatpush2.xpose.msra.mxu0 0.0
    %6268 = vmatprep.subr.mxu0 0.0
    %6269 = vmatpush2.xpose.msra.mxu0 0.0
    %6270 = vmatprep.subr.mxu0 0.0
    %6271 = vmatpush2.xpose.msra.mxu0 0.0
    %6272 = vmatprep.subr.mxu0 0.0
    %6273 = vmatpush2.xpose.msra.mxu0 0.0
    %6274 = vmatprep.subr.mxu0 0.0
    %6275 = vmatpush2.xpose.msra.mxu0 0.0
    %6276 = vmatprep.subr.mxu0 0.0
    %6277 = vmatpush2.xpose.msra.mxu0 0.0
    %6278 = vmatprep.subr.mxu0 0.0
    %6279 = vmatpush2.xpose.msra.mxu0 0.0
    %6280 = vmatprep.subr.mxu0 0.0
    %6281 = vmatpush2.xpose.msra.mxu0 0.0
    %6282 = vmatprep.subr.mxu0 0.0
    %6283 = vmatpush2.xpose.msra.mxu0 0.0
    %6284 = vmatprep.subr.mxu0 0.0
    %6285 = vmatpush2.xpose.msra.mxu0 0.0
    %6286 = vmatprep.subr.mxu0 0.0
    %6287 = vmatpush2.xpose.msra.mxu0 0.0
    %6288 = vmatprep.mubr.f32.mxu0 0.0
    %6289 = vmatmul.mubr.f32.gmra.mxu0 %v6220
    %v6290 = vpop.f32.mrf.mxu0
    %v6291 = vadd.f32 0.0, %v6290
    %v6292 = vpop.f32.mrf.mxu0
    %6293 = vdwg.mxu0
    %6294 = vrot.lane.b32.xlu0 %v5555, 112
    %v6295 = vpop.permute.xlu0 %6294
    %6296 = vrot.lane.b32.xlu0 %v5555, 80
    %v6297 = vpop.permute.xlu0 %6296
    %v6298 = vsel %vm133, %v6295, 0
    %v6300 = vsel %vm133, %v6297, 0
    %6302 = vmatprep.subr.mxu0 0.0
    %6303 = vmatpush1.xpose.msra.mxu0 0.0
    %6304 = vmatprep.subr.mxu0 0.0
    %6305 = vmatpush1.xpose.msra.mxu0 0.0
    %6306 = vmatprep.subr.mxu0 0.0
    %6307 = vmatpush1.xpose.msra.mxu0 0.0
    %6308 = vmatprep.subr.mxu0 0.0
    %6309 = vmatpush1.xpose.msra.mxu0 0.0
    %6310 = vmatprep.subr.mxu0 0.0
    %6311 = vmatpush1.xpose.msra.mxu0 0.0
    %6312 = vmatprep.subr.mxu0 0.0
    %6313 = vmatpush1.xpose.msra.mxu0 0.0
    %6314 = vmatprep.subr.mxu0 0.0
    %6315 = vmatpush1.xpose.msra.mxu0 0.0
    %6316 = vmatprep.subr.mxu0 0.0
    %6317 = vmatpush1.xpose.msra.mxu0 0.0
    %6318 = vmatprep.subr.mxu0 0.0
    %6319 = vmatpush1.xpose.msra.mxu0 0.0
    %6320 = vmatprep.subr.mxu0 0.0
    %6321 = vmatpush1.xpose.msra.mxu0 0.0
    %6322 = vmatprep.subr.mxu0 0.0
    %6323 = vmatpush1.xpose.msra.mxu0 0.0
    %6324 = vmatprep.subr.mxu0 0.0
    %6325 = vmatpush1.xpose.msra.mxu0 0.0
    %6326 = vmatprep.subr.mxu0 0.0
    %6327 = vmatpush1.xpose.msra.mxu0 0.0
    %6328 = vmatprep.subr.mxu0 0.0
    %6329 = vmatpush1.xpose.msra.mxu0 0.0
    %6330 = vmatprep.subr.mxu0 0.0
    %6331 = vmatpush1.xpose.msra.mxu0 0.0
    %6332 = vmatprep.subr.mxu0 0.0
    %6333 = vmatpush1.xpose.msra.mxu0 %v6300
    %6334 = vmatprep.subr.mxu0 0.0
    %6335 = vmatpush2.xpose.msra.mxu0 0.0
    %6336 = vmatprep.subr.mxu0 0.0
    %6337 = vmatpush2.xpose.msra.mxu0 0.0
    %6338 = vmatprep.subr.mxu0 0.0
    %6339 = vmatpush2.xpose.msra.mxu0 0.0
    %6340 = vmatprep.subr.mxu0 0.0
    %6341 = vmatpush2.xpose.msra.mxu0 0.0
    %6342 = vmatprep.subr.mxu0 0.0
    %6343 = vmatpush2.xpose.msra.mxu0 0.0
    %6344 = vmatprep.subr.mxu0 0.0
    %6345 = vmatpush2.xpose.msra.mxu0 0.0
    %6346 = vmatprep.subr.mxu0 0.0
    %6347 = vmatpush2.xpose.msra.mxu0 0.0
    %6348 = vmatprep.subr.mxu0 0.0
    %6349 = vmatpush2.xpose.msra.mxu0 0.0
    %6350 = vmatprep.subr.mxu0 0.0
    %6351 = vmatpush2.xpose.msra.mxu0 0.0
    %6352 = vmatprep.subr.mxu0 0.0
    %6353 = vmatpush2.xpose.msra.mxu0 0.0
    %6354 = vmatprep.subr.mxu0 0.0
    %6355 = vmatpush2.xpose.msra.mxu0 0.0
    %6356 = vmatprep.subr.mxu0 0.0
    %6357 = vmatpush2.xpose.msra.mxu0 0.0
    %6358 = vmatprep.subr.mxu0 0.0
    %6359 = vmatpush2.xpose.msra.mxu0 0.0
    %6360 = vmatprep.subr.mxu0 0.0
    %6361 = vmatpush2.xpose.msra.mxu0 0.0
    %6362 = vmatprep.subr.mxu0 0.0
    %6363 = vmatpush2.xpose.msra.mxu0 0.0
    %6364 = vmatprep.subr.mxu0 0.0
    %6365 = vmatpush2.xpose.msra.mxu0 0.0
    %6366 = vmatprep.mubr.f32.mxu0 0.0
    %6367 = vmatmul.mubr.f32.gmra.mxu0 %v6298
    %v6368 = vpop.f32.mrf.mxu0
    %v6369 = vadd.f32 0.0, %v6368
    %v6370 = vpop.f32.mrf.mxu0
    %6371 = vdwg.mxu0
    %v6372 = vsel %vm133, %v6291, -inf
    %6373 = vmax.xlane.f32.xlu0 %v6372
    %v6374 = vpop.xlane.xlu0 %6373
    %v6375 = vsel %vm133, %v6369, -inf
    %6376 = vmax.xlane.f32.xlu0 %v6375
    %v6377 = vpop.xlane.xlu0 %6376
    %v6378 = vsub.f32 %v6291, %v6374
    %v6379 = vsub.f32 %v6369, %v6377
    %v6380 = vmul.f32 %v6378, 1.442695
    %v6381 = vpow.pop %v6380
    %v6382 = vmul.f32 %v6379, 1.442695
    %v6383 = vpow.pop %v6382
    %v6384 = vsel %vm133, %v6381, 0.0
    %6385 = vadd.xlane.f32.xlu0 %v6384
    %v6386 = vpop.xlane.xlu0 %6385
    %v6387 = vsel %vm133, %v6383, 0.0
    %6388 = vadd.xlane.f32.xlu0 %v6387
    %v6389 = vpop.xlane.xlu0 %6388
    %v6390 = vrcp.pop %v6386
    %v6391 = vrcp.pop %v6389
    %v6392 = vmul.f32 %v6381, %v6390
    %v6393 = vmul.f32 %v6383, %v6391
    %6394 = vrot.lane.b32.xlu0 %v5552, 48
    %v6395 = vpop.permute.xlu0 %6394
    %v6398 = vsel %vm133, %v6392, 0
    %6400 = vmatprep.subr.mxu0 0.0
    %6401 = vmatpush1.msra.mxu0 0.0
    %6402 = vmatprep.subr.mxu0 0.0
    %6403 = vmatpush1.msra.mxu0 0.0
    %6404 = vmatprep.subr.mxu0 0.0
    %6405 = vmatpush1.msra.mxu0 0.0
    %6406 = vmatprep.subr.mxu0 0.0
    %6407 = vmatpush1.msra.mxu0 0.0
    %6408 = vmatprep.subr.mxu0 0.0
    %6409 = vmatpush1.msra.mxu0 0.0
    %6410 = vmatprep.subr.mxu0 0.0
    %6411 = vmatpush1.msra.mxu0 0.0
    %6412 = vmatprep.subr.mxu0 0.0
    %6413 = vmatpush1.msra.mxu0 0.0
    %6414 = vmatprep.subr.mxu0 0.0
    %6415 = vmatpush1.msra.mxu0 0.0
    %6416 = vmatprep.subr.mxu0 0.0
    %6417 = vmatpush1.msra.mxu0 0.0
    %6418 = vmatprep.subr.mxu0 0.0
    %6419 = vmatpush1.msra.mxu0 0.0
    %6420 = vmatprep.subr.mxu0 0.0
    %6421 = vmatpush1.msra.mxu0 0.0
    %6422 = vmatprep.subr.mxu0 0.0
    %6423 = vmatpush1.msra.mxu0 0.0
    %6424 = vmatprep.subr.mxu0 0.0
    %6425 = vmatpush1.msra.mxu0 0.0
    %6426 = vmatprep.subr.mxu0 0.0
    %6427 = vmatpush1.msra.mxu0 0.0
    %6428 = vmatprep.subr.mxu0 0.0
    %6429 = vmatpush1.msra.mxu0 0.0
    %6430 = vmatprep.subr.mxu0 0.0
    %6431 = vmatpush1.msra.mxu0 %v6395
    %6432 = vmatprep.subr.mxu0 0.0
    %6433 = vmatpush2.msra.mxu0 0.0
    %6434 = vmatprep.subr.mxu0 0.0
    %6435 = vmatpush2.msra.mxu0 0.0
    %6436 = vmatprep.subr.mxu0 0.0
    %6437 = vmatpush2.msra.mxu0 0.0
    %6438 = vmatprep.subr.mxu0 0.0
    %6439 = vmatpush2.msra.mxu0 0.0
    %6440 = vmatprep.subr.mxu0 0.0
    %6441 = vmatpush2.msra.mxu0 0.0
    %6442 = vmatprep.subr.mxu0 0.0
    %6443 = vmatpush2.msra.mxu0 0.0
    %6444 = vmatprep.subr.mxu0 0.0
    %6445 = vmatpush2.msra.mxu0 0.0
    %6446 = vmatprep.subr.mxu0 0.0
    %6447 = vmatpush2.msra.mxu0 0.0
    %6448 = vmatprep.subr.mxu0 0.0
    %6449 = vmatpush2.msra.mxu0 0.0
    %6450 = vmatprep.subr.mxu0 0.0
    %6451 = vmatpush2.msra.mxu0 0.0
    %6452 = vmatprep.subr.mxu0 0.0
    %6453 = vmatpush2.msra.mxu0 0.0
    %6454 = vmatprep.subr.mxu0 0.0
    %6455 = vmatpush2.msra.mxu0 0.0
    %6456 = vmatprep.subr.mxu0 0.0
    %6457 = vmatpush2.msra.mxu0 0.0
    %6458 = vmatprep.subr.mxu0 0.0
    %6459 = vmatpush2.msra.mxu0 0.0
    %6460 = vmatprep.subr.mxu0 0.0
    %6461 = vmatpush2.msra.mxu0 0.0
    %6462 = vmatprep.subr.mxu0 0.0
    %6463 = vmatpush2.msra.mxu0 0.0
    %6464 = vmatprep.mubr.f32.mxu0 0.0
    %6465 = vmatmul.mubr.f32.gmra.mxu0 %v6398
    %v6466 = vpop.f32.mrf.mxu0
    %v6467 = vadd.f32 0.0, %v6466
    %v6468 = vpop.f32.mrf.mxu0
    %6469 = vdwg.mxu0
    %6470 = vrot.lane.b32.xlu0 %v5555, 48
    %v6471 = vpop.permute.xlu0 %6470
    %v6474 = vsel %vm133, %v6393, 0
    %6476 = vmatprep.subr.mxu0 0.0
    %6477 = vmatpush1.msra.mxu0 0.0
    %6478 = vmatprep.subr.mxu0 0.0
    %6479 = vmatpush1.msra.mxu0 0.0
    %6480 = vmatprep.subr.mxu0 0.0
    %6481 = vmatpush1.msra.mxu0 0.0
    %6482 = vmatprep.subr.mxu0 0.0
    %6483 = vmatpush1.msra.mxu0 0.0
    %6484 = vmatprep.subr.mxu0 0.0
    %6485 = vmatpush1.msra.mxu0 0.0
    %6486 = vmatprep.subr.mxu0 0.0
    %6487 = vmatpush1.msra.mxu0 0.0
    %6488 = vmatprep.subr.mxu0 0.0
    %6489 = vmatpush1.msra.mxu0 0.0
    %6490 = vmatprep.subr.mxu0 0.0
    %6491 = vmatpush1.msra.mxu0 0.0
    %6492 = vmatprep.subr.mxu0 0.0
    %6493 = vmatpush1.msra.mxu0 0.0
    %6494 = vmatprep.subr.mxu0 0.0
    %6495 = vmatpush1.msra.mxu0 0.0
    %6496 = vmatprep.subr.mxu0 0.0
    %6497 = vmatpush1.msra.mxu0 0.0
    %6498 = vmatprep.subr.mxu0 0.0
    %6499 = vmatpush1.msra.mxu0 0.0
    %6500 = vmatprep.subr.mxu0 0.0
    %6501 = vmatpush1.msra.mxu0 0.0
    %6502 = vmatprep.subr.mxu0 0.0
    %6503 = vmatpush1.msra.mxu0 0.0
    %6504 = vmatprep.subr.mxu0 0.0
    %6505 = vmatpush1.msra.mxu0 0.0
    %6506 = vmatprep.subr.mxu0 0.0
    %6507 = vmatpush1.msra.mxu0 %v6471
    %6508 = vmatprep.subr.mxu0 0.0
    %6509 = vmatpush2.msra.mxu0 0.0
    %6510 = vmatprep.subr.mxu0 0.0
    %6511 = vmatpush2.msra.mxu0 0.0
    %6512 = vmatprep.subr.mxu0 0.0
    %6513 = vmatpush2.msra.mxu0 0.0
    %6514 = vmatprep.subr.mxu0 0.0
    %6515 = vmatpush2.msra.mxu0 0.0
    %6516 = vmatprep.subr.mxu0 0.0
    %6517 = vmatpush2.msra.mxu0 0.0
    %6518 = vmatprep.subr.mxu0 0.0
    %6519 = vmatpush2.msra.mxu0 0.0
    %6520 = vmatprep.subr.mxu0 0.0
    %6521 = vmatpush2.msra.mxu0 0.0
    %6522 = vmatprep.subr.mxu0 0.0
    %6523 = vmatpush2.msra.mxu0 0.0
    %6524 = vmatprep.subr.mxu0 0.0
    %6525 = vmatpush2.msra.mxu0 0.0
    %6526 = vmatprep.subr.mxu0 0.0
    %6527 = vmatpush2.msra.mxu0 0.0
    %6528 = vmatprep.subr.mxu0 0.0
    %6529 = vmatpush2.msra.mxu0 0.0
    %6530 = vmatprep.subr.mxu0 0.0
    %6531 = vmatpush2.msra.mxu0 0.0
    %6532 = vmatprep.subr.mxu0 0.0
    %6533 = vmatpush2.msra.mxu0 0.0
    %6534 = vmatprep.subr.mxu0 0.0
    %6535 = vmatpush2.msra.mxu0 0.0
    %6536 = vmatprep.subr.mxu0 0.0
    %6537 = vmatpush2.msra.mxu0 0.0
    %6538 = vmatprep.subr.mxu0 0.0
    %6539 = vmatpush2.msra.mxu0 0.0
    %6540 = vmatprep.mubr.f32.mxu0 0.0
    %6541 = vmatmul.mubr.f32.gmra.mxu0 %v6474
    %v6542 = vpop.f32.mrf.mxu0
    %v6543 = vadd.f32 0.0, %v6542
    %v6544 = vpop.f32.mrf.mxu0
    %6545 = vdwg.mxu0
    %6546 = vrot.lane.b32.xlu0 %v5552, 104
    %v6547 = vpop.permute.xlu0 %6546
    %6548 = vrot.lane.b32.xlu0 %v5552, 72
    %v6549 = vpop.permute.xlu0 %6548
    %v6550 = vsel %vm133, %v6547, 0
    %v6552 = vsel %vm133, %v6549, 0
    %6554 = vmatprep.subr.mxu0 0.0
    %6555 = vmatpush1.xpose.msra.mxu0 0.0
    %6556 = vmatprep.subr.mxu0 0.0
    %6557 = vmatpush1.xpose.msra.mxu0 0.0
    %6558 = vmatprep.subr.mxu0 0.0
    %6559 = vmatpush1.xpose.msra.mxu0 0.0
    %6560 = vmatprep.subr.mxu0 0.0
    %6561 = vmatpush1.xpose.msra.mxu0 0.0
    %6562 = vmatprep.subr.mxu0 0.0
    %6563 = vmatpush1.xpose.msra.mxu0 0.0
    %6564 = vmatprep.subr.mxu0 0.0
    %6565 = vmatpush1.xpose.msra.mxu0 0.0
    %6566 = vmatprep.subr.mxu0 0.0
    %6567 = vmatpush1.xpose.msra.mxu0 0.0
    %6568 = vmatprep.subr.mxu0 0.0
    %6569 = vmatpush1.xpose.msra.mxu0 0.0
    %6570 = vmatprep.subr.mxu0 0.0
    %6571 = vmatpush1.xpose.msra.mxu0 0.0
    %6572 = vmatprep.subr.mxu0 0.0
    %6573 = vmatpush1.xpose.msra.mxu0 0.0
    %6574 = vmatprep.subr.mxu0 0.0
    %6575 = vmatpush1.xpose.msra.mxu0 0.0
    %6576 = vmatprep.subr.mxu0 0.0
    %6577 = vmatpush1.xpose.msra.mxu0 0.0
    %6578 = vmatprep.subr.mxu0 0.0
    %6579 = vmatpush1.xpose.msra.mxu0 0.0
    %6580 = vmatprep.subr.mxu0 0.0
    %6581 = vmatpush1.xpose.msra.mxu0 0.0
    %6582 = vmatprep.subr.mxu0 0.0
    %6583 = vmatpush1.xpose.msra.mxu0 0.0
    %6584 = vmatprep.subr.mxu0 0.0
    %6585 = vmatpush1.xpose.msra.mxu0 %v6552
    %6586 = vmatprep.subr.mxu0 0.0
    %6587 = vmatpush2.xpose.msra.mxu0 0.0
    %6588 = vmatprep.subr.mxu0 0.0
    %6589 = vmatpush2.xpose.msra.mxu0 0.0
    %6590 = vmatprep.subr.mxu0 0.0
    %6591 = vmatpush2.xpose.msra.mxu0 0.0
    %6592 = vmatprep.subr.mxu0 0.0
    %6593 = vmatpush2.xpose.msra.mxu0 0.0
    %6594 = vmatprep.subr.mxu0 0.0
    %6595 = vmatpush2.xpose.msra.mxu0 0.0
    %6596 = vmatprep.subr.mxu0 0.0
    %6597 = vmatpush2.xpose.msra.mxu0 0.0
    %6598 = vmatprep.subr.mxu0 0.0
    %6599 = vmatpush2.xpose.msra.mxu0 0.0
    %6600 = vmatprep.subr.mxu0 0.0
    %6601 = vmatpush2.xpose.msra.mxu0 0.0
    %6602 = vmatprep.subr.mxu0 0.0
    %6603 = vmatpush2.xpose.msra.mxu0 0.0
    %6604 = vmatprep.subr.mxu0 0.0
    %6605 = vmatpush2.xpose.msra.mxu0 0.0
    %6606 = vmatprep.subr.mxu0 0.0
    %6607 = vmatpush2.xpose.msra.mxu0 0.0
    %6608 = vmatprep.subr.mxu0 0.0
    %6609 = vmatpush2.xpose.msra.mxu0 0.0
    %6610 = vmatprep.subr.mxu0 0.0
    %6611 = vmatpush2.xpose.msra.mxu0 0.0
    %6612 = vmatprep.subr.mxu0 0.0
    %6613 = vmatpush2.xpose.msra.mxu0 0.0
    %6614 = vmatprep.subr.mxu0 0.0
    %6615 = vmatpush2.xpose.msra.mxu0 0.0
    %6616 = vmatprep.subr.mxu0 0.0
    %6617 = vmatpush2.xpose.msra.mxu0 0.0
    %6618 = vmatprep.mubr.f32.mxu0 0.0
    %6619 = vmatmul.mubr.f32.gmra.mxu0 %v6550
    %v6620 = vpop.f32.mrf.mxu0
    %v6621 = vadd.f32 0.0, %v6620
    %v6622 = vpop.f32.mrf.mxu0
    %6623 = vdwg.mxu0
    %6624 = vrot.lane.b32.xlu0 %v5555, 104
    %v6625 = vpop.permute.xlu0 %6624
    %6626 = vrot.lane.b32.xlu0 %v5555, 72
    %v6627 = vpop.permute.xlu0 %6626
    %v6628 = vsel %vm133, %v6625, 0
    %v6630 = vsel %vm133, %v6627, 0
    %6632 = vmatprep.subr.mxu0 0.0
    %6633 = vmatpush1.xpose.msra.mxu0 0.0
    %6634 = vmatprep.subr.mxu0 0.0
    %6635 = vmatpush1.xpose.msra.mxu0 0.0
    %6636 = vmatprep.subr.mxu0 0.0
    %6637 = vmatpush1.xpose.msra.mxu0 0.0
    %6638 = vmatprep.subr.mxu0 0.0
    %6639 = vmatpush1.xpose.msra.mxu0 0.0
    %6640 = vmatprep.subr.mxu0 0.0
    %6641 = vmatpush1.xpose.msra.mxu0 0.0
    %6642 = vmatprep.subr.mxu0 0.0
    %6643 = vmatpush1.xpose.msra.mxu0 0.0
    %6644 = vmatprep.subr.mxu0 0.0
    %6645 = vmatpush1.xpose.msra.mxu0 0.0
    %6646 = vmatprep.subr.mxu0 0.0
    %6647 = vmatpush1.xpose.msra.mxu0 0.0
    %6648 = vmatprep.subr.mxu0 0.0
    %6649 = vmatpush1.xpose.msra.mxu0 0.0
    %6650 = vmatprep.subr.mxu0 0.0
    %6651 = vmatpush1.xpose.msra.mxu0 0.0
    %6652 = vmatprep.subr.mxu0 0.0
    %6653 = vmatpush1.xpose.msra.mxu0 0.0
    %6654 = vmatprep.subr.mxu0 0.0
    %6655 = vmatpush1.xpose.msra.mxu0 0.0
    %6656 = vmatprep.subr.mxu0 0.0
    %6657 = vmatpush1.xpose.msra.mxu0 0.0
    %6658 = vmatprep.subr.mxu0 0.0
    %6659 = vmatpush1.xpose.msra.mxu0 0.0
    %6660 = vmatprep.subr.mxu0 0.0
    %6661 = vmatpush1.xpose.msra.mxu0 0.0
    %6662 = vmatprep.subr.mxu0 0.0
    %6663 = vmatpush1.xpose.msra.mxu0 %v6630
    %6664 = vmatprep.subr.mxu0 0.0
    %6665 = vmatpush2.xpose.msra.mxu0 0.0
    %6666 = vmatprep.subr.mxu0 0.0
    %6667 = vmatpush2.xpose.msra.mxu0 0.0
    %6668 = vmatprep.subr.mxu0 0.0
    %6669 = vmatpush2.xpose.msra.mxu0 0.0
    %6670 = vmatprep.subr.mxu0 0.0
    %6671 = vmatpush2.xpose.msra.mxu0 0.0
    %6672 = vmatprep.subr.mxu0 0.0
    %6673 = vmatpush2.xpose.msra.mxu0 0.0
    %6674 = vmatprep.subr.mxu0 0.0
    %6675 = vmatpush2.xpose.msra.mxu0 0.0
    %6676 = vmatprep.subr.mxu0 0.0
    %6677 = vmatpush2.xpose.msra.mxu0 0.0
    %6678 = vmatprep.subr.mxu0 0.0
    %6679 = vmatpush2.xpose.msra.mxu0 0.0
    %6680 = vmatprep.subr.mxu0 0.0
    %6681 = vmatpush2.xpose.msra.mxu0 0.0
    %6682 = vmatprep.subr.mxu0 0.0
    %6683 = vmatpush2.xpose.msra.mxu0 0.0
    %6684 = vmatprep.subr.mxu0 0.0
    %6685 = vmatpush2.xpose.msra.mxu0 0.0
    %6686 = vmatprep.subr.mxu0 0.0
    %6687 = vmatpush2.xpose.msra.mxu0 0.0
    %6688 = vmatprep.subr.mxu0 0.0
    %6689 = vmatpush2.xpose.msra.mxu0 0.0
    %6690 = vmatprep.subr.mxu0 0.0
    %6691 = vmatpush2.xpose.msra.mxu0 0.0
    %6692 = vmatprep.subr.mxu0 0.0
    %6693 = vmatpush2.xpose.msra.mxu0 0.0
    %6694 = vmatprep.subr.mxu0 0.0
    %6695 = vmatpush2.xpose.msra.mxu0 0.0
    %6696 = vmatprep.mubr.f32.mxu0 0.0
    %6697 = vmatmul.mubr.f32.gmra.mxu0 %v6628
    %v6698 = vpop.f32.mrf.mxu0
    %v6699 = vadd.f32 0.0, %v6698
    %v6700 = vpop.f32.mrf.mxu0
    %6701 = vdwg.mxu0
    %v6702 = vsel %vm133, %v6621, -inf
    %6703 = vmax.xlane.f32.xlu0 %v6702
    %v6704 = vpop.xlane.xlu0 %6703
    %v6705 = vsel %vm133, %v6699, -inf
    %6706 = vmax.xlane.f32.xlu0 %v6705
    %v6707 = vpop.xlane.xlu0 %6706
    %v6708 = vsub.f32 %v6621, %v6704
    %v6709 = vsub.f32 %v6699, %v6707
    %v6710 = vmul.f32 %v6708, 1.442695
    %v6711 = vpow.pop %v6710
    %v6712 = vmul.f32 %v6709, 1.442695
    %v6713 = vpow.pop %v6712
    %v6714 = vsel %vm133, %v6711, 0.0
    %6715 = vadd.xlane.f32.xlu0 %v6714
    %v6716 = vpop.xlane.xlu0 %6715
    %v6717 = vsel %vm133, %v6713, 0.0
    %6718 = vadd.xlane.f32.xlu0 %v6717
    %v6719 = vpop.xlane.xlu0 %6718
    %v6720 = vrcp.pop %v6716
    %v6721 = vrcp.pop %v6719
    %v6722 = vmul.f32 %v6711, %v6720
    %v6723 = vmul.f32 %v6713, %v6721
    %6724 = vrot.lane.b32.xlu0 %v5552, 40
    %v6725 = vpop.permute.xlu0 %6724
    %v6728 = vsel %vm133, %v6722, 0
    %6730 = vmatprep.subr.mxu0 0.0
    %6731 = vmatpush1.msra.mxu0 0.0
    %6732 = vmatprep.subr.mxu0 0.0
    %6733 = vmatpush1.msra.mxu0 0.0
    %6734 = vmatprep.subr.mxu0 0.0
    %6735 = vmatpush1.msra.mxu0 0.0
    %6736 = vmatprep.subr.mxu0 0.0
    %6737 = vmatpush1.msra.mxu0 0.0
    %6738 = vmatprep.subr.mxu0 0.0
    %6739 = vmatpush1.msra.mxu0 0.0
    %6740 = vmatprep.subr.mxu0 0.0
    %6741 = vmatpush1.msra.mxu0 0.0
    %6742 = vmatprep.subr.mxu0 0.0
    %6743 = vmatpush1.msra.mxu0 0.0
    %6744 = vmatprep.subr.mxu0 0.0
    %6745 = vmatpush1.msra.mxu0 0.0
    %6746 = vmatprep.subr.mxu0 0.0
    %6747 = vmatpush1.msra.mxu0 0.0
    %6748 = vmatprep.subr.mxu0 0.0
    %6749 = vmatpush1.msra.mxu0 0.0
    %6750 = vmatprep.subr.mxu0 0.0
    %6751 = vmatpush1.msra.mxu0 0.0
    %6752 = vmatprep.subr.mxu0 0.0
    %6753 = vmatpush1.msra.mxu0 0.0
    %6754 = vmatprep.subr.mxu0 0.0
    %6755 = vmatpush1.msra.mxu0 0.0
    %6756 = vmatprep.subr.mxu0 0.0
    %6757 = vmatpush1.msra.mxu0 0.0
    %6758 = vmatprep.subr.mxu0 0.0
    %6759 = vmatpush1.msra.mxu0 0.0
    %6760 = vmatprep.subr.mxu0 0.0
    %6761 = vmatpush1.msra.mxu0 %v6725
    %6762 = vmatprep.subr.mxu0 0.0
    %6763 = vmatpush2.msra.mxu0 0.0
    %6764 = vmatprep.subr.mxu0 0.0
    %6765 = vmatpush2.msra.mxu0 0.0
    %6766 = vmatprep.subr.mxu0 0.0
    %6767 = vmatpush2.msra.mxu0 0.0
    %6768 = vmatprep.subr.mxu0 0.0
    %6769 = vmatpush2.msra.mxu0 0.0
    %6770 = vmatprep.subr.mxu0 0.0
    %6771 = vmatpush2.msra.mxu0 0.0
    %6772 = vmatprep.subr.mxu0 0.0
    %6773 = vmatpush2.msra.mxu0 0.0
    %6774 = vmatprep.subr.mxu0 0.0
    %6775 = vmatpush2.msra.mxu0 0.0
    %6776 = vmatprep.subr.mxu0 0.0
    %6777 = vmatpush2.msra.mxu0 0.0
    %6778 = vmatprep.subr.mxu0 0.0
    %6779 = vmatpush2.msra.mxu0 0.0
    %6780 = vmatprep.subr.mxu0 0.0
    %6781 = vmatpush2.msra.mxu0 0.0
    %6782 = vmatprep.subr.mxu0 0.0
    %6783 = vmatpush2.msra.mxu0 0.0
    %6784 = vmatprep.subr.mxu0 0.0
    %6785 = vmatpush2.msra.mxu0 0.0
    %6786 = vmatprep.subr.mxu0 0.0
    %6787 = vmatpush2.msra.mxu0 0.0
    %6788 = vmatprep.subr.mxu0 0.0
    %6789 = vmatpush2.msra.mxu0 0.0
    %6790 = vmatprep.subr.mxu0 0.0
    %6791 = vmatpush2.msra.mxu0 0.0
    %6792 = vmatprep.subr.mxu0 0.0
    %6793 = vmatpush2.msra.mxu0 0.0
    %6794 = vmatprep.mubr.f32.mxu0 0.0
    %6795 = vmatmul.mubr.f32.gmra.mxu0 %v6728
    %v6796 = vpop.f32.mrf.mxu0
    %v6797 = vadd.f32 0.0, %v6796
    %v6798 = vpop.f32.mrf.mxu0
    %6799 = vdwg.mxu0
    %6800 = vrot.lane.b32.xlu0 %v5555, 40
    %v6801 = vpop.permute.xlu0 %6800
    %v6804 = vsel %vm133, %v6723, 0
    %6806 = vmatprep.subr.mxu0 0.0
    %6807 = vmatpush1.msra.mxu0 0.0
    %6808 = vmatprep.subr.mxu0 0.0
    %6809 = vmatpush1.msra.mxu0 0.0
    %6810 = vmatprep.subr.mxu0 0.0
    %6811 = vmatpush1.msra.mxu0 0.0
    %6812 = vmatprep.subr.mxu0 0.0
    %6813 = vmatpush1.msra.mxu0 0.0
    %6814 = vmatprep.subr.mxu0 0.0
    %6815 = vmatpush1.msra.mxu0 0.0
    %6816 = vmatprep.subr.mxu0 0.0
    %6817 = vmatpush1.msra.mxu0 0.0
    %6818 = vmatprep.subr.mxu0 0.0
    %6819 = vmatpush1.msra.mxu0 0.0
    %6820 = vmatprep.subr.mxu0 0.0
    %6821 = vmatpush1.msra.mxu0 0.0
    %6822 = vmatprep.subr.mxu0 0.0
    %6823 = vmatpush1.msra.mxu0 0.0
    %6824 = vmatprep.subr.mxu0 0.0
    %6825 = vmatpush1.msra.mxu0 0.0
    %6826 = vmatprep.subr.mxu0 0.0
    %6827 = vmatpush1.msra.mxu0 0.0
    %6828 = vmatprep.subr.mxu0 0.0
    %6829 = vmatpush1.msra.mxu0 0.0
    %6830 = vmatprep.subr.mxu0 0.0
    %6831 = vmatpush1.msra.mxu0 0.0
    %6832 = vmatprep.subr.mxu0 0.0
    %6833 = vmatpush1.msra.mxu0 0.0
    %6834 = vmatprep.subr.mxu0 0.0
    %6835 = vmatpush1.msra.mxu0 0.0
    %6836 = vmatprep.subr.mxu0 0.0
    %6837 = vmatpush1.msra.mxu0 %v6801
    %6838 = vmatprep.subr.mxu0 0.0
    %6839 = vmatpush2.msra.mxu0 0.0
    %6840 = vmatprep.subr.mxu0 0.0
    %6841 = vmatpush2.msra.mxu0 0.0
    %6842 = vmatprep.subr.mxu0 0.0
    %6843 = vmatpush2.msra.mxu0 0.0
    %6844 = vmatprep.subr.mxu0 0.0
    %6845 = vmatpush2.msra.mxu0 0.0
    %6846 = vmatprep.subr.mxu0 0.0
    %6847 = vmatpush2.msra.mxu0 0.0
    %6848 = vmatprep.subr.mxu0 0.0
    %6849 = vmatpush2.msra.mxu0 0.0
    %6850 = vmatprep.subr.mxu0 0.0
    %6851 = vmatpush2.msra.mxu0 0.0
    %6852 = vmatprep.subr.mxu0 0.0
    %6853 = vmatpush2.msra.mxu0 0.0
    %6854 = vmatprep.subr.mxu0 0.0
    %6855 = vmatpush2.msra.mxu0 0.0
    %6856 = vmatprep.subr.mxu0 0.0
    %6857 = vmatpush2.msra.mxu0 0.0
    %6858 = vmatprep.subr.mxu0 0.0
    %6859 = vmatpush2.msra.mxu0 0.0
    %6860 = vmatprep.subr.mxu0 0.0
    %6861 = vmatpush2.msra.mxu0 0.0
    %6862 = vmatprep.subr.mxu0 0.0
    %6863 = vmatpush2.msra.mxu0 0.0
    %6864 = vmatprep.subr.mxu0 0.0
    %6865 = vmatpush2.msra.mxu0 0.0
    %6866 = vmatprep.subr.mxu0 0.0
    %6867 = vmatpush2.msra.mxu0 0.0
    %6868 = vmatprep.subr.mxu0 0.0
    %6869 = vmatpush2.msra.mxu0 0.0
    %6870 = vmatprep.mubr.f32.mxu0 0.0
    %6871 = vmatmul.mubr.f32.gmra.mxu0 %v6804
    %v6872 = vpop.f32.mrf.mxu0
    %v6873 = vadd.f32 0.0, %v6872
    %v6874 = vpop.f32.mrf.mxu0
    %6875 = vdwg.mxu0
    %6878 = vrot.lane.b32.xlu0 %v6137, 8
    %v6879 = vpop.permute.xlu0 %6878
    %6880 = vrot.lane.b32.xlu0 %v6213, 8
    %v6881 = vpop.permute.xlu0 %6880
    %6886 = vrot.lane.b32.xlu0 %v6467, 16
    %v6887 = vpop.permute.xlu0 %6886
    %6888 = vrot.lane.b32.xlu0 %v6543, 16
    %v6889 = vpop.permute.xlu0 %6888
    %6894 = vrot.lane.b32.xlu0 %v6797, 24
    %v6895 = vpop.permute.xlu0 %6894
    %6896 = vrot.lane.b32.xlu0 %v6873, 24
    %v6897 = vpop.permute.xlu0 %6896
    %v6900 = vsel %vm133, %v5807, %v6879
    %v6901 = vsel %vm133, %v5883, %v6881
    %v6902 = vsel %vm3220, %v6900, %v6887
    %v6903 = vsel %vm3220, %v6901, %v6889
    %v6904 = vsel %vm3223, %v6902, %v6895
    %v6905 = vsel %vm3223, %v6903, %v6897
    %v6906 = vpack.c.bf16 %v6905, %v6904
    %v6907 = vld [vmem:[%s10] sm:$0xf]
    %v6908 = vld [vmem:[%s10 + $0x4] sm:$0xf]
    %v6909 = vld [vmem:[%s10 + $0x8] sm:$0xf]
    %v6910 = vld [vmem:[%s10 + $0xc] sm:$0xf]
    %v6911 = vld [vmem:[%s14 + $0x1a] sm:$0x1]
    %v6913 = vlaneseq
    %v6914 = vshrl.u32 %v6913, 7
    %v6915 = vsub.s32 0, %v6914
    %v6916 = vrot.slane %v6911, %v6915
    %v6922 = vunpack.c.l.b16 %v6907
    %v6923 = vunpack.c.l.b16 %v6908
    %v6924 = vunpack.c.l.b16 %v6909
    %v6925 = vunpack.c.l.b16 %v6910
    %v6926 = vpack.c.b16 %v6923, %v6922
    %v6927 = vpack.c.b16 %v6925, %v6924
    %v6931 = vsel %vm194, %v6906, 0
    %6933 = vmatprep.subr.bf16.mxu0 0
    %6934 = vmatpush1.bf16.msra.mxu0 0
    %6935 = vmatprep.subr.bf16.mxu0 0
    %6936 = vmatpush1.bf16.msra.mxu0 0
    %6937 = vmatprep.subr.bf16.mxu0 0
    %6938 = vmatpush1.bf16.msra.mxu0 0
    %6939 = vmatprep.subr.bf16.mxu0 0
    %6940 = vmatpush1.bf16.msra.mxu0 0
    %6941 = vmatprep.subr.bf16.mxu0 0
    %6942 = vmatpush1.bf16.msra.mxu0 0
    %6943 = vmatprep.subr.bf16.mxu0 0
    %6944 = vmatpush1.bf16.msra.mxu0 0
    %6945 = vmatprep.subr.bf16.mxu0 0
    %6946 = vmatpush1.bf16.msra.mxu0 %v6927
    %6947 = vmatprep.subr.bf16.mxu0 0
    %6948 = vmatpush1.bf16.msra.mxu0 %v6926
    %6949 = vmatprep.subr.bf16.mxu0 0
    %6950 = vmatpush2.bf16.msra.mxu0 0
    %6951 = vmatprep.subr.bf16.mxu0 0
    %6952 = vmatpush2.bf16.msra.mxu0 0
    %6953 = vmatprep.subr.bf16.mxu0 0
    %6954 = vmatpush2.bf16.msra.mxu0 0
    %6955 = vmatprep.subr.bf16.mxu0 0
    %6956 = vmatpush2.bf16.msra.mxu0 0
    %6957 = vmatprep.subr.bf16.mxu0 0
    %6958 = vmatpush2.bf16.msra.mxu0 0
    %6959 = vmatprep.subr.bf16.mxu0 0
    %6960 = vmatpush2.bf16.msra.mxu0 0
    %6961 = vmatprep.subr.bf16.mxu0 0
    %6962 = vmatpush2.bf16.msra.mxu0 0
    %6963 = vmatprep.subr.bf16.mxu0 0
    %6964 = vmatpush2.bf16.msra.mxu0 0
    %6965 = vmatprep.mubr.bf16.mxu0 0
    %6966 = vmatmul.mubr.bf16.gmra.mxu0 %v6931
    %v6967 = vpop.f32.mrf.mxu0
    %v6968 = vadd.f32 %v6916, %v6967
    %v6969 = vpop.f32.mrf.mxu0
    %v6970 = vpop.f32.mrf.mxu0
    %v6971 = vadd.f32 %v6916, %v6970
    %v6972 = vpop.f32.mrf.mxu0
    %6973 = vdwg.mxu0
    %6976 = vrot.lane.b32.xlu0 %v6968, 96
    %v6977 = vpop.permute.xlu0 %6976
    %6978 = vrot.lane.b32.xlu0 %v6971, 96
    %v6979 = vpop.permute.xlu0 %6978
    %v6982 = vadd.f32 %v5485, %v6977
    %v6983 = vadd.f32 %v5486, %v6979
    %v6984 = vld [vmem:[%s14 + $0x1b] sm:$0x1]
    %v6985 = vld [vmem:[%s14 + $0x1c] sm:$0x1]
    %6988 = vrot.lane.b32.xlu0 %v6982, 32
    %v6989 = vpop.permute.xlu0 %6988
    %6990 = vrot.lane.b32.xlu0 %v6983, 32
    %v6991 = vpop.permute.xlu0 %6990
    %v6994 = vsel %vm194, %v6989, 0.0
    %6995 = vadd.xlane.f32.xlu0 %v6994
    %v6996 = vpop.xlane.xlu0 %6995
    %v6997 = vsel %vm194, %v6991, 0.0
    %6998 = vadd.xlane.f32.xlu0 %v6997
    %v6999 = vpop.xlane.xlu0 %6998
    %v7000 = vmul.f32 %v6996, %v3320
    %v7001 = vmul.f32 %v6999, %v3320
    %v7002 = vsub.f32 %v6982, %v7000
    %v7003 = vsub.f32 %v6983, %v7001
    %v7004 = vmul.f32 %v7002, %v7002
    %v7005 = vmul.f32 %v7003, %v7003
    %7008 = vrot.lane.b32.xlu0 %v7004, 32
    %v7009 = vpop.permute.xlu0 %7008
    %7010 = vrot.lane.b32.xlu0 %v7005, 32
    %v7011 = vpop.permute.xlu0 %7010
    %v7014 = vsel %vm194, %v7009, 0.0
    %7015 = vadd.xlane.f32.xlu0 %v7014
    %v7016 = vpop.xlane.xlu0 %7015
    %v7017 = vsel %vm194, %v7011, 0.0
    %7018 = vadd.xlane.f32.xlu0 %v7017
    %v7019 = vpop.xlane.xlu0 %7018
    %v7020 = vmul.f32 %v7016, %v3320
    %v7021 = vmul.f32 %v7019, %v3320
    %v7022 = vadd.f32 %v7020, 1e-05
    %v7023 = vadd.f32 %v7021, 1e-05
    %v7024 = vrsqrt.pop %v7022
    %v7025 = vrsqrt.pop %v7023
    %v7026 = vmul.f32 %v7002, %v7024
    %v7027 = vmul.f32 %v7003, %v7025
    %v7029 = vlaneseq
    %v7030 = vshrl.u32 %v7029, 7
    %v7031 = vsub.s32 0, %v7030
    %v7032 = vrot.slane %v6984, %v7031
    %7033 = vrot.lane.b32.xlu0 %v7032, 96
    %v7034 = vpop.permute.xlu0 %7033
    %v7036 = vmul.f32 %v7026, %v7034
    %v7037 = vmul.f32 %v7027, %v7034
    %v7039 = vlaneseq
    %v7040 = vshrl.u32 %v7039, 7
    %v7041 = vsub.s32 0, %v7040
    %v7042 = vrot.slane %v6985, %v7041
    %7043 = vrot.lane.b32.xlu0 %v7042, 96
    %v7044 = vpop.permute.xlu0 %7043
    %v7046 = vadd.f32 %v7036, %v7044
    %v7047 = vadd.f32 %v7037, %v7044
    %v7048 = vpack.c.bf16 %v7047, %v7046
    %v7049 = vld [vmem:[#allocation8] sm:$0xff]
    %v7050 = vld [vmem:[#allocation8 + $0x8] sm:$0xff]
    %v7051 = vld [vmem:[#allocation8 + $0x40] sm:$0xff]
    %v7052 = vld [vmem:[#allocation8 + $0x48] sm:$0xff]
    %v7053 = vld [vmem:[#allocation8 + $0x80] sm:$0xff]
    %v7054 = vld [vmem:[#allocation8 + $0x88] sm:$0xff]
    %v7055 = vld [vmem:[#allocation8 + $0xc0] sm:$0xff]
    %v7056 = vld [vmem:[#allocation8 + $0xc8] sm:$0xff]
    %v7057 = vld [vmem:[%s14 + $0x1d] sm:$0xf]
    %v7059 = vlaneseq
    %v7060 = vshrl.u32 %v7059, 7
    %v7061 = vsub.s32 0, %v7060
    %v7062 = vrot.slane %v7057, %v7061
    %v7063 = vlaneseq
    %v7064 = vshrl.u32 %v7063, 7
    %v7065 = vsub.s32 1, %v7064
    %v7066 = vrot.slane %v7057, %v7065
    %v7067 = vlaneseq
    %v7068 = vshrl.u32 %v7067, 7
    %v7069 = vsub.s32 2, %v7068
    %v7070 = vrot.slane %v7057, %v7069
    %v7071 = vlaneseq
    %v7072 = vshrl.u32 %v7071, 7
    %v7073 = vsub.s32 3, %v7072
    %v7074 = vrot.slane %v7057, %v7073
    %7080 = vrot.lane.b32.xlu0 %v7048, 32
    %v7081 = vpop.permute.xlu0 %7080
    %v7090 = vunpack.c.l.b16 %v7049
    %v7091 = vunpack.c.h.b16 %v7049
    %v7092 = vunpack.c.l.b16 %v7050
    %v7093 = vunpack.c.h.b16 %v7050
    %v7094 = vunpack.c.l.b16 %v7051
    %v7095 = vunpack.c.h.b16 %v7051
    %v7096 = vunpack.c.l.b16 %v7052
    %v7097 = vunpack.c.h.b16 %v7052
    %v7098 = vunpack.c.l.b16 %v7053
    %v7099 = vunpack.c.h.b16 %v7053
    %v7100 = vunpack.c.l.b16 %v7054
    %v7101 = vunpack.c.h.b16 %v7054
    %v7102 = vunpack.c.l.b16 %v7055
    %v7103 = vunpack.c.h.b16 %v7055
    %v7104 = vunpack.c.l.b16 %v7056
    %v7105 = vunpack.c.h.b16 %v7056
    %v7106 = vpack.c.b16 %v7094, %v7090
    %v7107 = vpack.c.b16 %v7095, %v7091
    %v7108 = vpack.c.b16 %v7096, %v7092
    %v7109 = vpack.c.b16 %v7097, %v7093
    %v7110 = vpack.c.b16 %v7102, %v7098
    %v7111 = vpack.c.b16 %v7103, %v7099
    %v7112 = vpack.c.b16 %v7104, %v7100
    %v7113 = vpack.c.b16 %v7105, %v7101
    %v7123 = vsel %vm194, %v7081, 0
    %7125 = vmatprep.subr.bf16.mxu0 0
    %7126 = vmatpush1.bf16.msra.mxu0 0
    %7127 = vmatprep.subr.bf16.mxu0 0
    %7128 = vmatpush1.bf16.msra.mxu0 0
    %7129 = vmatprep.subr.bf16.mxu0 0
    %7130 = vmatpush1.bf16.msra.mxu0 0
    %7131 = vmatprep.subr.bf16.mxu0 0
    %7132 = vmatpush1.bf16.msra.mxu0 0
    %7133 = vmatprep.subr.bf16.mxu0 0
    %7134 = vmatpush1.bf16.msra.mxu0 0
    %7135 = vmatprep.subr.bf16.mxu0 0
    %7136 = vmatpush1.bf16.msra.mxu0 0
    %7137 = vmatprep.subr.bf16.mxu0 %v7111
    %7138 = vmatpush1.bf16.msra.mxu0 %v7110
    %7139 = vmatprep.subr.bf16.mxu0 %v7107
    %7140 = vmatpush1.bf16.msra.mxu0 %v7106
    %7141 = vmatprep.subr.bf16.mxu0 0
    %7142 = vmatpush2.bf16.msra.mxu0 0
    %7143 = vmatprep.subr.bf16.mxu0 0
    %7144 = vmatpush2.bf16.msra.mxu0 0
    %7145 = vmatprep.subr.bf16.mxu0 0
    %7146 = vmatpush2.bf16.msra.mxu0 0
    %7147 = vmatprep.subr.bf16.mxu0 0
    %7148 = vmatpush2.bf16.msra.mxu0 0
    %7149 = vmatprep.subr.bf16.mxu0 0
    %7150 = vmatpush2.bf16.msra.mxu0 0
    %7151 = vmatprep.subr.bf16.mxu0 0
    %7152 = vmatpush2.bf16.msra.mxu0 0
    %7153 = vmatprep.subr.bf16.mxu0 0
    %7154 = vmatpush2.bf16.msra.mxu0 0
    %7155 = vmatprep.subr.bf16.mxu0 0
    %7156 = vmatpush2.bf16.msra.mxu0 0
    %7157 = vmatprep.mubr.bf16.mxu0 0
    %7158 = vmatmul.mubr.bf16.gmra.mxu0 %v7123
    %v7159 = vpop.f32.mrf.mxu0
    %v7160 = vadd.f32 %v7062, %v7159
    %v7161 = vpop.f32.mrf.mxu0
    %v7162 = vadd.f32 %v7066, %v7161
    %v7163 = vpop.f32.mrf.mxu0
    %v7164 = vadd.f32 %v7062, %v7163
    %v7165 = vpop.f32.mrf.mxu0
    %v7166 = vadd.f32 %v7066, %v7165
    %7167 = vdwg.mxu0
    %7168 = vmatprep.subr.bf16.mxu0 0
    %7169 = vmatpush1.bf16.msra.mxu0 0
    %7170 = vmatprep.subr.bf16.mxu0 0
    %7171 = vmatpush1.bf16.msra.mxu0 0
    %7172 = vmatprep.subr.bf16.mxu0 0
    %7173 = vmatpush1.bf16.msra.mxu0 0
    %7174 = vmatprep.subr.bf16.mxu0 0
    %7175 = vmatpush1.bf16.msra.mxu0 0
    %7176 = vmatprep.subr.bf16.mxu0 0
    %7177 = vmatpush1.bf16.msra.mxu0 0
    %7178 = vmatprep.subr.bf16.mxu0 0
    %7179 = vmatpush1.bf16.msra.mxu0 0
    %7180 = vmatprep.subr.bf16.mxu0 %v7113
    %7181 = vmatpush1.bf16.msra.mxu0 %v7112
    %7182 = vmatprep.subr.bf16.mxu0 %v7109
    %7183 = vmatpush1.bf16.msra.mxu0 %v7108
    %7184 = vmatprep.subr.bf16.mxu0 0
    %7185 = vmatpush2.bf16.msra.mxu0 0
    %7186 = vmatprep.subr.bf16.mxu0 0
    %7187 = vmatpush2.bf16.msra.mxu0 0
    %7188 = vmatprep.subr.bf16.mxu0 0
    %7189 = vmatpush2.bf16.msra.mxu0 0
    %7190 = vmatprep.subr.bf16.mxu0 0
    %7191 = vmatpush2.bf16.msra.mxu0 0
    %7192 = vmatprep.subr.bf16.mxu0 0
    %7193 = vmatpush2.bf16.msra.mxu0 0
    %7194 = vmatprep.subr.bf16.mxu0 0
    %7195 = vmatpush2.bf16.msra.mxu0 0
    %7196 = vmatprep.subr.bf16.mxu0 0
    %7197 = vmatpush2.bf16.msra.mxu0 0
    %7198 = vmatprep.subr.bf16.mxu0 0
    %7199 = vmatpush2.bf16.msra.mxu0 0
    %7200 = vmatprep.mubr.bf16.mxu0 0
    %7201 = vmatmul.mubr.bf16.gmra.mxu0 %v7123
    %v7202 = vpop.f32.mrf.mxu0
    %v7203 = vadd.f32 %v7070, %v7202
    %v7204 = vpop.f32.mrf.mxu0
    %v7205 = vadd.f32 %v7074, %v7204
    %v7206 = vpop.f32.mrf.mxu0
    %v7207 = vadd.f32 %v7070, %v7206
    %v7208 = vpop.f32.mrf.mxu0
    %v7209 = vadd.f32 %v7074, %v7208
    %7210 = vdwg.mxu0
    %v7211 = vmax.f32 %v7160, 0.0
    %v7212 = vmax.f32 %v7162, 0.0
    %v7213 = vmax.f32 %v7203, 0.0
    %v7214 = vmax.f32 %v7205, 0.0
    %v7215 = vmax.f32 %v7164, 0.0
    %v7216 = vmax.f32 %v7166, 0.0
    %v7217 = vmax.f32 %v7207, 0.0
    %v7218 = vmax.f32 %v7209, 0.0
    %v7219 = vpack.c.bf16 %v7215, %v7211
    %v7220 = vpack.c.bf16 %v7216, %v7212
    %v7221 = vpack.c.bf16 %v7217, %v7213
    %v7222 = vpack.c.bf16 %v7218, %v7214
    %v7223 = vld [vmem:[#allocation10] sm:$0xf]
    %v7224 = vld [vmem:[#allocation10 + $0x4] sm:$0xf]
    %v7225 = vld [vmem:[#allocation10 + $0x8] sm:$0xf]
    %v7226 = vld [vmem:[#allocation10 + $0xc] sm:$0xf]
    %v7227 = vld [vmem:[#allocation10 + $0x10] sm:$0xf]
    %v7228 = vld [vmem:[#allocation10 + $0x14] sm:$0xf]
    %v7229 = vld [vmem:[#allocation10 + $0x18] sm:$0xf]
    %v7230 = vld [vmem:[#allocation10 + $0x1c] sm:$0xf]
    %v7231 = vld [vmem:[#allocation10 + $0x20] sm:$0xf]
    %v7232 = vld [vmem:[#allocation10 + $0x24] sm:$0xf]
    %v7233 = vld [vmem:[#allocation10 + $0x28] sm:$0xf]
    %v7234 = vld [vmem:[#allocation10 + $0x2c] sm:$0xf]
    %v7235 = vld [vmem:[#allocation10 + $0x30] sm:$0xf]
    %v7236 = vld [vmem:[#allocation10 + $0x34] sm:$0xf]
    %v7237 = vld [vmem:[#allocation10 + $0x38] sm:$0xf]
    %v7238 = vld [vmem:[#allocation10 + $0x3c] sm:$0xf]
    %v7239 = vld [vmem:[#allocation10 + $0x40] sm:$0xf]
    %v7240 = vld [vmem:[#allocation10 + $0x44] sm:$0xf]
    %v7241 = vld [vmem:[#allocation10 + $0x48] sm:$0xf]
    %v7242 = vld [vmem:[#allocation10 + $0x4c] sm:$0xf]
    %v7243 = vld [vmem:[#allocation10 + $0x50] sm:$0xf]
    %v7244 = vld [vmem:[#allocation10 + $0x54] sm:$0xf]
    %v7245 = vld [vmem:[#allocation10 + $0x58] sm:$0xf]
    %v7246 = vld [vmem:[#allocation10 + $0x5c] sm:$0xf]
    %v7247 = vld [vmem:[#allocation10 + $0x60] sm:$0xf]
    %v7248 = vld [vmem:[#allocation10 + $0x64] sm:$0xf]
    %v7249 = vld [vmem:[#allocation10 + $0x68] sm:$0xf]
    %v7250 = vld [vmem:[#allocation10 + $0x6c] sm:$0xf]
    %v7251 = vld [vmem:[#allocation10 + $0x70] sm:$0xf]
    %v7252 = vld [vmem:[#allocation10 + $0x74] sm:$0xf]
    %v7253 = vld [vmem:[#allocation10 + $0x78] sm:$0xf]
    %v7254 = vld [vmem:[#allocation10 + $0x7c] sm:$0xf]
    %v7255 = vld [vmem:[#allocation10 + $0x80] sm:$0xf]
    %v7256 = vld [vmem:[#allocation10 + $0x84] sm:$0xf]
    %v7257 = vld [vmem:[#allocation10 + $0x88] sm:$0xf]
    %v7258 = vld [vmem:[#allocation10 + $0x8c] sm:$0xf]
    %v7259 = vld [vmem:[#allocation10 + $0x90] sm:$0xf]
    %v7260 = vld [vmem:[#allocation10 + $0x94] sm:$0xf]
    %v7261 = vld [vmem:[#allocation10 + $0x98] sm:$0xf]
    %v7262 = vld [vmem:[#allocation10 + $0x9c] sm:$0xf]
    %v7263 = vld [vmem:[#allocation10 + $0xa0] sm:$0xf]
    %v7264 = vld [vmem:[#allocation10 + $0xa4] sm:$0xf]
    %v7265 = vld [vmem:[#allocation10 + $0xa8] sm:$0xf]
    %v7266 = vld [vmem:[#allocation10 + $0xac] sm:$0xf]
    %v7267 = vld [vmem:[#allocation10 + $0xb0] sm:$0xf]
    %v7268 = vld [vmem:[#allocation10 + $0xb4] sm:$0xf]
    %v7269 = vld [vmem:[#allocation10 + $0xb8] sm:$0xf]
    %v7270 = vld [vmem:[#allocation10 + $0xbc] sm:$0xf]
    %v7271 = vld [vmem:[#allocation10 + $0xc0] sm:$0xf]
    %v7272 = vld [vmem:[#allocation10 + $0xc4] sm:$0xf]
    %v7273 = vld [vmem:[#allocation10 + $0xc8] sm:$0xf]
    %v7274 = vld [vmem:[#allocation10 + $0xcc] sm:$0xf]
    %v7275 = vld [vmem:[#allocation10 + $0xd0] sm:$0xf]
    %v7276 = vld [vmem:[#allocation10 + $0xd4] sm:$0xf]
    %v7277 = vld [vmem:[#allocation10 + $0xd8] sm:$0xf]
    %v7278 = vld [vmem:[#allocation10 + $0xdc] sm:$0xf]
    %v7279 = vld [vmem:[#allocation10 + $0xe0] sm:$0xf]
    %v7280 = vld [vmem:[#allocation10 + $0xe4] sm:$0xf]
    %v7281 = vld [vmem:[#allocation10 + $0xe8] sm:$0xf]
    %v7282 = vld [vmem:[#allocation10 + $0xec] sm:$0xf]
    %v7283 = vld [vmem:[#allocation10 + $0xf0] sm:$0xf]
    %v7284 = vld [vmem:[#allocation10 + $0xf4] sm:$0xf]
    %v7285 = vld [vmem:[#allocation10 + $0xf8] sm:$0xf]
    %v7286 = vld [vmem:[#allocation10 + $0xfc] sm:$0xf]
    %v7287 = vld [vmem:[#allocation8 + $0x10] sm:$0xff]
    %v7288 = vld [vmem:[#allocation8 + $0x18] sm:$0xff]
    %v7289 = vld [vmem:[#allocation8 + $0x50] sm:$0xff]
    %v7290 = vld [vmem:[#allocation8 + $0x58] sm:$0xff]
    %v7291 = vld [vmem:[#allocation8 + $0x90] sm:$0xff]
    %v7292 = vld [vmem:[#allocation8 + $0x98] sm:$0xff]
    %v7293 = vld [vmem:[#allocation8 + $0xd0] sm:$0xff]
    %v7294 = vld [vmem:[#allocation8 + $0xd8] sm:$0xff]
    %v7295 = vld [vmem:[%s14 + $0x21] sm:$0xf]
    %v7297 = vlaneseq
    %v7298 = vshrl.u32 %v7297, 7
    %v7299 = vsub.s32 0, %v7298
    %v7300 = vrot.slane %v7295, %v7299
    %v7301 = vlaneseq
    %v7302 = vshrl.u32 %v7301, 7
    %v7303 = vsub.s32 1, %v7302
    %v7304 = vrot.slane %v7295, %v7303
    %v7305 = vlaneseq
    %v7306 = vshrl.u32 %v7305, 7
    %v7307 = vsub.s32 2, %v7306
    %v7308 = vrot.slane %v7295, %v7307
    %v7309 = vlaneseq
    %v7310 = vshrl.u32 %v7309, 7
    %v7311 = vsub.s32 3, %v7310
    %v7312 = vrot.slane %v7295, %v7311
    %v7325 = vunpack.c.l.b16 %v7287
    %v7326 = vunpack.c.h.b16 %v7287
    %v7327 = vunpack.c.l.b16 %v7288
    %v7328 = vunpack.c.h.b16 %v7288
    %v7329 = vunpack.c.l.b16 %v7289
    %v7330 = vunpack.c.h.b16 %v7289
    %v7331 = vunpack.c.l.b16 %v7290
    %v7332 = vunpack.c.h.b16 %v7290
    %v7333 = vunpack.c.l.b16 %v7291
    %v7334 = vunpack.c.h.b16 %v7291
    %v7335 = vunpack.c.l.b16 %v7292
    %v7336 = vunpack.c.h.b16 %v7292
    %v7337 = vunpack.c.l.b16 %v7293
    %v7338 = vunpack.c.h.b16 %v7293
    %v7339 = vunpack.c.l.b16 %v7294
    %v7340 = vunpack.c.h.b16 %v7294
    %v7341 = vpack.c.b16 %v7329, %v7325
    %v7342 = vpack.c.b16 %v7330, %v7326
    %v7343 = vpack.c.b16 %v7331, %v7327
    %v7344 = vpack.c.b16 %v7332, %v7328
    %v7345 = vpack.c.b16 %v7337, %v7333
    %v7346 = vpack.c.b16 %v7338, %v7334
    %v7347 = vpack.c.b16 %v7339, %v7335
    %v7348 = vpack.c.b16 %v7340, %v7336
    %7357 = vmatprep.subr.bf16.mxu0 0
    %7358 = vmatpush1.bf16.msra.mxu0 0
    %7359 = vmatprep.subr.bf16.mxu0 0
    %7360 = vmatpush1.bf16.msra.mxu0 0
    %7361 = vmatprep.subr.bf16.mxu0 0
    %7362 = vmatpush1.bf16.msra.mxu0 0
    %7363 = vmatprep.subr.bf16.mxu0 0
    %7364 = vmatpush1.bf16.msra.mxu0 0
    %7365 = vmatprep.subr.bf16.mxu0 0
    %7366 = vmatpush1.bf16.msra.mxu0 0
    %7367 = vmatprep.subr.bf16.mxu0 0
    %7368 = vmatpush1.bf16.msra.mxu0 0
    %7369 = vmatprep.subr.bf16.mxu0 %v7346
    %7370 = vmatpush1.bf16.msra.mxu0 %v7345
    %7371 = vmatprep.subr.bf16.mxu0 %v7342
    %7372 = vmatpush1.bf16.msra.mxu0 %v7341
    %7373 = vmatprep.subr.bf16.mxu0 0
    %7374 = vmatpush2.bf16.msra.mxu0 0
    %7375 = vmatprep.subr.bf16.mxu0 0
    %7376 = vmatpush2.bf16.msra.mxu0 0
    %7377 = vmatprep.subr.bf16.mxu0 0
    %7378 = vmatpush2.bf16.msra.mxu0 0
    %7379 = vmatprep.subr.bf16.mxu0 0
    %7380 = vmatpush2.bf16.msra.mxu0 0
    %7381 = vmatprep.subr.bf16.mxu0 0
    %7382 = vmatpush2.bf16.msra.mxu0 0
    %7383 = vmatprep.subr.bf16.mxu0 0
    %7384 = vmatpush2.bf16.msra.mxu0 0
    %7385 = vmatprep.subr.bf16.mxu0 0
    %7386 = vmatpush2.bf16.msra.mxu0 0
    %7387 = vmatprep.subr.bf16.mxu0 0
    %7388 = vmatpush2.bf16.msra.mxu0 0
    %7389 = vmatprep.mubr.bf16.mxu0 0
    %7390 = vmatmul.mubr.bf16.gmra.mxu0 %v7123
    %v7391 = vpop.f32.mrf.mxu0
    %v7392 = vadd.f32 %v7300, %v7391
    %v7393 = vpop.f32.mrf.mxu0
    %v7394 = vadd.f32 %v7304, %v7393
    %v7395 = vpop.f32.mrf.mxu0
    %v7396 = vadd.f32 %v7300, %v7395
    %v7397 = vpop.f32.mrf.mxu0
    %v7398 = vadd.f32 %v7304, %v7397
    %7399 = vdwg.mxu0
    %7400 = vmatprep.subr.bf16.mxu0 0
    %7401 = vmatpush1.bf16.msra.mxu0 0
    %7402 = vmatprep.subr.bf16.mxu0 0
    %7403 = vmatpush1.bf16.msra.mxu0 0
    %7404 = vmatprep.subr.bf16.mxu0 0
    %7405 = vmatpush1.bf16.msra.mxu0 0
    %7406 = vmatprep.subr.bf16.mxu0 0
    %7407 = vmatpush1.bf16.msra.mxu0 0
    %7408 = vmatprep.subr.bf16.mxu0 0
    %7409 = vmatpush1.bf16.msra.mxu0 0
    %7410 = vmatprep.subr.bf16.mxu0 0
    %7411 = vmatpush1.bf16.msra.mxu0 0
    %7412 = vmatprep.subr.bf16.mxu0 %v7348
    %7413 = vmatpush1.bf16.msra.mxu0 %v7347
    %7414 = vmatprep.subr.bf16.mxu0 %v7344
    %7415 = vmatpush1.bf16.msra.mxu0 %v7343
    %7416 = vmatprep.subr.bf16.mxu0 0
    %7417 = vmatpush2.bf16.msra.mxu0 0
    %7418 = vmatprep.subr.bf16.mxu0 0
    %7419 = vmatpush2.bf16.msra.mxu0 0
    %7420 = vmatprep.subr.bf16.mxu0 0
    %7421 = vmatpush2.bf16.msra.mxu0 0
    %7422 = vmatprep.subr.bf16.mxu0 0
    %7423 = vmatpush2.bf16.msra.mxu0 0
    %7424 = vmatprep.subr.bf16.mxu0 0
    %7425 = vmatpush2.bf16.msra.mxu0 0
    %7426 = vmatprep.subr.bf16.mxu0 0
    %7427 = vmatpush2.bf16.msra.mxu0 0
    %7428 = vmatprep.subr.bf16.mxu0 0
    %7429 = vmatpush2.bf16.msra.mxu0 0
    %7430 = vmatprep.subr.bf16.mxu0 0
    %7431 = vmatpush2.bf16.msra.mxu0 0
    %7432 = vmatprep.mubr.bf16.mxu0 0
    %7433 = vmatmul.mubr.bf16.gmra.mxu0 %v7123
    %v7434 = vpop.f32.mrf.mxu0
    %v7435 = vadd.f32 %v7308, %v7434
    %v7436 = vpop.f32.mrf.mxu0
    %v7437 = vadd.f32 %v7312, %v7436
    %v7438 = vpop.f32.mrf.mxu0
    %v7439 = vadd.f32 %v7308, %v7438
    %v7440 = vpop.f32.mrf.mxu0
    %v7441 = vadd.f32 %v7312, %v7440
    %7442 = vdwg.mxu0
    %v7443 = vmax.f32 %v7392, 0.0
    %v7444 = vmax.f32 %v7394, 0.0
    %v7445 = vmax.f32 %v7435, 0.0
    %v7446 = vmax.f32 %v7437, 0.0
    %v7447 = vmax.f32 %v7396, 0.0
    %v7448 = vmax.f32 %v7398, 0.0
    %v7449 = vmax.f32 %v7439, 0.0
    %v7450 = vmax.f32 %v7441, 0.0
    %v7451 = vpack.c.bf16 %v7447, %v7443
    %v7452 = vpack.c.bf16 %v7448, %v7444
    %v7453 = vpack.c.bf16 %v7449, %v7445
    %v7454 = vpack.c.bf16 %v7450, %v7446
    %v7455 = vld [vmem:[#allocation10 + $0x100] sm:$0xf]
    %v7456 = vld [vmem:[#allocation10 + $0x104] sm:$0xf]
    %v7457 = vld [vmem:[#allocation10 + $0x108] sm:$0xf]
    %v7458 = vld [vmem:[#allocation10 + $0x10c] sm:$0xf]
    %v7459 = vld [vmem:[#allocation10 + $0x110] sm:$0xf]
    %v7460 = vld [vmem:[#allocation10 + $0x114] sm:$0xf]
    %v7461 = vld [vmem:[#allocation10 + $0x118] sm:$0xf]
    %v7462 = vld [vmem:[#allocation10 + $0x11c] sm:$0xf]
    %v7463 = vld [vmem:[#allocation10 + $0x120] sm:$0xf]
    %v7464 = vld [vmem:[#allocation10 + $0x124] sm:$0xf]
    %v7465 = vld [vmem:[#allocation10 + $0x128] sm:$0xf]
    %v7466 = vld [vmem:[#allocation10 + $0x12c] sm:$0xf]
    %v7467 = vld [vmem:[#allocation10 + $0x130] sm:$0xf]
    %v7468 = vld [vmem:[#allocation10 + $0x134] sm:$0xf]
    %v7469 = vld [vmem:[#allocation10 + $0x138] sm:$0xf]
    %v7470 = vld [vmem:[#allocation10 + $0x13c] sm:$0xf]
    %v7471 = vld [vmem:[#allocation10 + $0x140] sm:$0xf]
    %v7472 = vld [vmem:[#allocation10 + $0x144] sm:$0xf]
    %v7473 = vld [vmem:[#allocation10 + $0x148] sm:$0xf]
    %v7474 = vld [vmem:[#allocation10 + $0x14c] sm:$0xf]
    %v7475 = vld [vmem:[#allocation10 + $0x150] sm:$0xf]
    %v7476 = vld [vmem:[#allocation10 + $0x154] sm:$0xf]
    %v7477 = vld [vmem:[#allocation10 + $0x158] sm:$0xf]
    %v7478 = vld [vmem:[#allocation10 + $0x15c] sm:$0xf]
    %v7479 = vld [vmem:[#allocation10 + $0x160] sm:$0xf]
    %v7480 = vld [vmem:[#allocation10 + $0x164] sm:$0xf]
    %v7481 = vld [vmem:[#allocation10 + $0x168] sm:$0xf]
    %v7482 = vld [vmem:[#allocation10 + $0x16c] sm:$0xf]
    %v7483 = vld [vmem:[#allocation10 + $0x170] sm:$0xf]
    %v7484 = vld [vmem:[#allocation10 + $0x174] sm:$0xf]
    %v7485 = vld [vmem:[#allocation10 + $0x178] sm:$0xf]
    %v7486 = vld [vmem:[#allocation10 + $0x17c] sm:$0xf]
    %v7487 = vld [vmem:[#allocation10 + $0x180] sm:$0xf]
    %v7488 = vld [vmem:[#allocation10 + $0x184] sm:$0xf]
    %v7489 = vld [vmem:[#allocation10 + $0x188] sm:$0xf]
    %v7490 = vld [vmem:[#allocation10 + $0x18c] sm:$0xf]
    %v7491 = vld [vmem:[#allocation10 + $0x190] sm:$0xf]
    %v7492 = vld [vmem:[#allocation10 + $0x194] sm:$0xf]
    %v7493 = vld [vmem:[#allocation10 + $0x198] sm:$0xf]
    %v7494 = vld [vmem:[#allocation10 + $0x19c] sm:$0xf]
    %v7495 = vld [vmem:[#allocation10 + $0x1a0] sm:$0xf]
    %v7496 = vld [vmem:[#allocation10 + $0x1a4] sm:$0xf]
    %v7497 = vld [vmem:[#allocation10 + $0x1a8] sm:$0xf]
    %v7498 = vld [vmem:[#allocation10 + $0x1ac] sm:$0xf]
    %v7499 = vld [vmem:[#allocation10 + $0x1b0] sm:$0xf]
    %v7500 = vld [vmem:[#allocation10 + $0x1b4] sm:$0xf]
    %v7501 = vld [vmem:[#allocation10 + $0x1b8] sm:$0xf]
    %v7502 = vld [vmem:[#allocation10 + $0x1bc] sm:$0xf]
    %v7503 = vld [vmem:[#allocation10 + $0x1c0] sm:$0xf]
    %v7504 = vld [vmem:[#allocation10 + $0x1c4] sm:$0xf]
    %v7505 = vld [vmem:[#allocation10 + $0x1c8] sm:$0xf]
    %v7506 = vld [vmem:[#allocation10 + $0x1cc] sm:$0xf]
    %v7507 = vld [vmem:[#allocation10 + $0x1d0] sm:$0xf]
    %v7508 = vld [vmem:[#allocation10 + $0x1d4] sm:$0xf]
    %v7509 = vld [vmem:[#allocation10 + $0x1d8] sm:$0xf]
    %v7510 = vld [vmem:[#allocation10 + $0x1dc] sm:$0xf]
    %v7511 = vld [vmem:[#allocation10 + $0x1e0] sm:$0xf]
    %v7512 = vld [vmem:[#allocation10 + $0x1e4] sm:$0xf]
    %v7513 = vld [vmem:[#allocation10 + $0x1e8] sm:$0xf]
    %v7514 = vld [vmem:[#allocation10 + $0x1ec] sm:$0xf]
    %v7515 = vld [vmem:[#allocation10 + $0x1f0] sm:$0xf]
    %v7516 = vld [vmem:[#allocation10 + $0x1f4] sm:$0xf]
    %v7517 = vld [vmem:[#allocation10 + $0x1f8] sm:$0xf]
    %v7518 = vld [vmem:[#allocation10 + $0x1fc] sm:$0xf]
    %v7583 = vunpack.c.l.b16 %v7455
    %v7584 = vunpack.c.l.b16 %v7456
    %v7585 = vunpack.c.l.b16 %v7457
    %v7586 = vunpack.c.l.b16 %v7458
    %v7587 = vunpack.c.l.b16 %v7459
    %v7588 = vunpack.c.l.b16 %v7460
    %v7589 = vunpack.c.l.b16 %v7461
    %v7590 = vunpack.c.l.b16 %v7462
    %v7591 = vunpack.c.l.b16 %v7463
    %v7592 = vunpack.c.l.b16 %v7464
    %v7593 = vunpack.c.l.b16 %v7465
    %v7594 = vunpack.c.l.b16 %v7466
    %v7595 = vunpack.c.l.b16 %v7467
    %v7596 = vunpack.c.l.b16 %v7468
    %v7597 = vunpack.c.l.b16 %v7469
    %v7598 = vunpack.c.l.b16 %v7470
    %v7599 = vunpack.c.l.b16 %v7471
    %v7600 = vunpack.c.l.b16 %v7472
    %v7601 = vunpack.c.l.b16 %v7473
    %v7602 = vunpack.c.l.b16 %v7474
    %v7603 = vunpack.c.l.b16 %v7475
    %v7604 = vunpack.c.l.b16 %v7476
    %v7605 = vunpack.c.l.b16 %v7477
    %v7606 = vunpack.c.l.b16 %v7478
    %v7607 = vunpack.c.l.b16 %v7479
    %v7608 = vunpack.c.l.b16 %v7480
    %v7609 = vunpack.c.l.b16 %v7481
    %v7610 = vunpack.c.l.b16 %v7482
    %v7611 = vunpack.c.l.b16 %v7483
    %v7612 = vunpack.c.l.b16 %v7484
    %v7613 = vunpack.c.l.b16 %v7485
    %v7614 = vunpack.c.l.b16 %v7486
    %v7615 = vunpack.c.l.b16 %v7487
    %v7616 = vunpack.c.l.b16 %v7488
    %v7617 = vunpack.c.l.b16 %v7489
    %v7618 = vunpack.c.l.b16 %v7490
    %v7619 = vunpack.c.l.b16 %v7491
    %v7620 = vunpack.c.l.b16 %v7492
    %v7621 = vunpack.c.l.b16 %v7493
    %v7622 = vunpack.c.l.b16 %v7494
    %v7623 = vunpack.c.l.b16 %v7495
    %v7624 = vunpack.c.l.b16 %v7496
    %v7625 = vunpack.c.l.b16 %v7497
    %v7626 = vunpack.c.l.b16 %v7498
    %v7627 = vunpack.c.l.b16 %v7499
    %v7628 = vunpack.c.l.b16 %v7500
    %v7629 = vunpack.c.l.b16 %v7501
    %v7630 = vunpack.c.l.b16 %v7502
    %v7631 = vunpack.c.l.b16 %v7503
    %v7632 = vunpack.c.l.b16 %v7504
    %v7633 = vunpack.c.l.b16 %v7505
    %v7634 = vunpack.c.l.b16 %v7506
    %v7635 = vunpack.c.l.b16 %v7507
    %v7636 = vunpack.c.l.b16 %v7508
    %v7637 = vunpack.c.l.b16 %v7509
    %v7638 = vunpack.c.l.b16 %v7510
    %v7639 = vunpack.c.l.b16 %v7511
    %v7640 = vunpack.c.l.b16 %v7512
    %v7641 = vunpack.c.l.b16 %v7513
    %v7642 = vunpack.c.l.b16 %v7514
    %v7643 = vunpack.c.l.b16 %v7515
    %v7644 = vunpack.c.l.b16 %v7516
    %v7645 = vunpack.c.l.b16 %v7517
    %v7646 = vunpack.c.l.b16 %v7518
    %v7647 = vpack.c.b16 %v7584, %v7583
    %v7648 = vpack.c.b16 %v7586, %v7585
    %v7649 = vpack.c.b16 %v7588, %v7587
    %v7650 = vpack.c.b16 %v7590, %v7589
    %v7651 = vpack.c.b16 %v7592, %v7591
    %v7652 = vpack.c.b16 %v7594, %v7593
    %v7653 = vpack.c.b16 %v7596, %v7595
    %v7654 = vpack.c.b16 %v7598, %v7597
    %v7655 = vpack.c.b16 %v7600, %v7599
    %v7656 = vpack.c.b16 %v7602, %v7601
    %v7657 = vpack.c.b16 %v7604, %v7603
    %v7658 = vpack.c.b16 %v7606, %v7605
    %v7659 = vpack.c.b16 %v7608, %v7607
    %v7660 = vpack.c.b16 %v7610, %v7609
    %v7661 = vpack.c.b16 %v7612, %v7611
    %v7662 = vpack.c.b16 %v7614, %v7613
    %v7663 = vpack.c.b16 %v7616, %v7615
    %v7664 = vpack.c.b16 %v7618, %v7617
    %v7665 = vpack.c.b16 %v7620, %v7619
    %v7666 = vpack.c.b16 %v7622, %v7621
    %v7667 = vpack.c.b16 %v7624, %v7623
    %v7668 = vpack.c.b16 %v7626, %v7625
    %v7669 = vpack.c.b16 %v7628, %v7627
    %v7670 = vpack.c.b16 %v7630, %v7629
    %v7671 = vpack.c.b16 %v7632, %v7631
    %v7672 = vpack.c.b16 %v7634, %v7633
    %v7673 = vpack.c.b16 %v7636, %v7635
    %v7674 = vpack.c.b16 %v7638, %v7637
    %v7675 = vpack.c.b16 %v7640, %v7639
    %v7676 = vpack.c.b16 %v7642, %v7641
    %v7677 = vpack.c.b16 %v7644, %v7643
    %v7678 = vpack.c.b16 %v7646, %v7645
    %7711 = vmatprep.subr.bf16.mxu0 0
    %7712 = vmatpush1.bf16.msra.mxu0 %v7654
    %7713 = vmatprep.subr.bf16.mxu0 0
    %7714 = vmatpush1.bf16.msra.mxu0 %v7653
    %7715 = vmatprep.subr.bf16.mxu0 0
    %7716 = vmatpush1.bf16.msra.mxu0 %v7652
    %7717 = vmatprep.subr.bf16.mxu0 0
    %7718 = vmatpush1.bf16.msra.mxu0 %v7651
    %7719 = vmatprep.subr.bf16.mxu0 0
    %7720 = vmatpush1.bf16.msra.mxu0 %v7650
    %7721 = vmatprep.subr.bf16.mxu0 0
    %7722 = vmatpush1.bf16.msra.mxu0 %v7649
    %7723 = vmatprep.subr.bf16.mxu0 0
    %7724 = vmatpush1.bf16.msra.mxu0 %v7648
    %7725 = vmatprep.subr.bf16.mxu0 0
    %7726 = vmatpush1.bf16.msra.mxu0 %v7647
    %7727 = vmatprep.subr.bf16.mxu0 0
    %7728 = vmatpush2.bf16.msra.mxu0 %v7662
    %7729 = vmatprep.subr.bf16.mxu0 0
    %7730 = vmatpush2.bf16.msra.mxu0 %v7661
    %7731 = vmatprep.subr.bf16.mxu0 0
    %7732 = vmatpush2.bf16.msra.mxu0 %v7660
    %7733 = vmatprep.subr.bf16.mxu0 0
    %7734 = vmatpush2.bf16.msra.mxu0 %v7659
    %7735 = vmatprep.subr.bf16.mxu0 0
    %7736 = vmatpush2.bf16.msra.mxu0 %v7658
    %7737 = vmatprep.subr.bf16.mxu0 0
    %7738 = vmatpush2.bf16.msra.mxu0 %v7657
    %7739 = vmatprep.subr.bf16.mxu0 0
    %7740 = vmatpush2.bf16.msra.mxu0 %v7656
    %7741 = vmatprep.subr.bf16.mxu0 0
    %7742 = vmatpush2.bf16.msra.mxu0 %v7655
    %7743 = vmatprep.mubr.bf16.mxu0 %v7452
    %7744 = vmatmul.mubr.bf16.gmra.mxu0 %v7451
    %v7745 = vpop.f32.mrf.mxu0
    %v7746 = vadd.f32 0.0, %v7745
    %v7747 = vpop.f32.mrf.mxu0
    %v7748 = vpop.f32.mrf.mxu0
    %v7749 = vadd.f32 0.0, %v7748
    %v7750 = vpop.f32.mrf.mxu0
    %7751 = vdwg.mxu0
    %7752 = vmatprep.subr.bf16.mxu0 0
    %7753 = vmatpush1.bf16.msra.mxu0 %v7670
    %7754 = vmatprep.subr.bf16.mxu0 0
    %7755 = vmatpush1.bf16.msra.mxu0 %v7669
    %7756 = vmatprep.subr.bf16.mxu0 0
    %7757 = vmatpush1.bf16.msra.mxu0 %v7668
    %7758 = vmatprep.subr.bf16.mxu0 0
    %7759 = vmatpush1.bf16.msra.mxu0 %v7667
    %7760 = vmatprep.subr.bf16.mxu0 0
    %7761 = vmatpush1.bf16.msra.mxu0 %v7666
    %7762 = vmatprep.subr.bf16.mxu0 0
    %7763 = vmatpush1.bf16.msra.mxu0 %v7665
    %7764 = vmatprep.subr.bf16.mxu0 0
    %7765 = vmatpush1.bf16.msra.mxu0 %v7664
    %7766 = vmatprep.subr.bf16.mxu0 0
    %7767 = vmatpush1.bf16.msra.mxu0 %v7663
    %7768 = vmatprep.subr.bf16.mxu0 0
    %7769 = vmatpush2.bf16.msra.mxu0 %v7678
    %7770 = vmatprep.subr.bf16.mxu0 0
    %7771 = vmatpush2.bf16.msra.mxu0 %v7677
    %7772 = vmatprep.subr.bf16.mxu0 0
    %7773 = vmatpush2.bf16.msra.mxu0 %v7676
    %7774 = vmatprep.subr.bf16.mxu0 0
    %7775 = vmatpush2.bf16.msra.mxu0 %v7675
    %7776 = vmatprep.subr.bf16.mxu0 0
    %7777 = vmatpush2.bf16.msra.mxu0 %v7674
    %7778 = vmatprep.subr.bf16.mxu0 0
    %7779 = vmatpush2.bf16.msra.mxu0 %v7673
    %7780 = vmatprep.subr.bf16.mxu0 0
    %7781 = vmatpush2.bf16.msra.mxu0 %v7672
    %7782 = vmatprep.subr.bf16.mxu0 0
    %7783 = vmatpush2.bf16.msra.mxu0 %v7671
    %7784 = vmatprep.mubr.bf16.mxu0 %v7454
    %7785 = vmatmul.mubr.bf16.gmra.mxu0 %v7453
    %v7786 = vpop.f32.mrf.mxu0
    %v7787 = vadd.f32 %v7746, %v7786
    %v7788 = vpop.f32.mrf.mxu0
    %v7789 = vpop.f32.mrf.mxu0
    %v7790 = vadd.f32 %v7749, %v7789
    %v7791 = vpop.f32.mrf.mxu0
    %7792 = vdwg.mxu0
    %v7857 = vunpack.c.l.b16 %v7223
    %v7858 = vunpack.c.l.b16 %v7224
    %v7859 = vunpack.c.l.b16 %v7225
    %v7860 = vunpack.c.l.b16 %v7226
    %v7861 = vunpack.c.l.b16 %v7227
    %v7862 = vunpack.c.l.b16 %v7228
    %v7863 = vunpack.c.l.b16 %v7229
    %v7864 = vunpack.c.l.b16 %v7230
    %v7865 = vunpack.c.l.b16 %v7231
    %v7866 = vunpack.c.l.b16 %v7232
    %v7867 = vunpack.c.l.b16 %v7233
    %v7868 = vunpack.c.l.b16 %v7234
    %v7869 = vunpack.c.l.b16 %v7235
    %v7870 = vunpack.c.l.b16 %v7236
    %v7871 = vunpack.c.l.b16 %v7237
    %v7872 = vunpack.c.l.b16 %v7238
    %v7873 = vunpack.c.l.b16 %v7239
    %v7874 = vunpack.c.l.b16 %v7240
    %v7875 = vunpack.c.l.b16 %v7241
    %v7876 = vunpack.c.l.b16 %v7242
    %v7877 = vunpack.c.l.b16 %v7243
    %v7878 = vunpack.c.l.b16 %v7244
    %v7879 = vunpack.c.l.b16 %v7245
    %v7880 = vunpack.c.l.b16 %v7246
    %v7881 = vunpack.c.l.b16 %v7247
    %v7882 = vunpack.c.l.b16 %v7248
    %v7883 = vunpack.c.l.b16 %v7249
    %v7884 = vunpack.c.l.b16 %v7250
    %v7885 = vunpack.c.l.b16 %v7251
    %v7886 = vunpack.c.l.b16 %v7252
    %v7887 = vunpack.c.l.b16 %v7253
    %v7888 = vunpack.c.l.b16 %v7254
    %v7889 = vunpack.c.l.b16 %v7255
    %v7890 = vunpack.c.l.b16 %v7256
    %v7891 = vunpack.c.l.b16 %v7257
    %v7892 = vunpack.c.l.b16 %v7258
    %v7893 = vunpack.c.l.b16 %v7259
    %v7894 = vunpack.c.l.b16 %v7260
    %v7895 = vunpack.c.l.b16 %v7261
    %v7896 = vunpack.c.l.b16 %v7262
    %v7897 = vunpack.c.l.b16 %v7263
    %v7898 = vunpack.c.l.b16 %v7264
    %v7899 = vunpack.c.l.b16 %v7265
    %v7900 = vunpack.c.l.b16 %v7266
    %v7901 = vunpack.c.l.b16 %v7267
    %v7902 = vunpack.c.l.b16 %v7268
    %v7903 = vunpack.c.l.b16 %v7269
    %v7904 = vunpack.c.l.b16 %v7270
    %v7905 = vunpack.c.l.b16 %v7271
    %v7906 = vunpack.c.l.b16 %v7272
    %v7907 = vunpack.c.l.b16 %v7273
    %v7908 = vunpack.c.l.b16 %v7274
    %v7909 = vunpack.c.l.b16 %v7275
    %v7910 = vunpack.c.l.b16 %v7276
    %v7911 = vunpack.c.l.b16 %v7277
    %v7912 = vunpack.c.l.b16 %v7278
    %v7913 = vunpack.c.l.b16 %v7279
    %v7914 = vunpack.c.l.b16 %v7280
    %v7915 = vunpack.c.l.b16 %v7281
    %v7916 = vunpack.c.l.b16 %v7282
    %v7917 = vunpack.c.l.b16 %v7283
    %v7918 = vunpack.c.l.b16 %v7284
    %v7919 = vunpack.c.l.b16 %v7285
    %v7920 = vunpack.c.l.b16 %v7286
    %v7921 = vpack.c.b16 %v7858, %v7857
    %v7922 = vpack.c.b16 %v7860, %v7859
    %v7923 = vpack.c.b16 %v7862, %v7861
    %v7924 = vpack.c.b16 %v7864, %v7863
    %v7925 = vpack.c.b16 %v7866, %v7865
    %v7926 = vpack.c.b16 %v7868, %v7867
    %v7927 = vpack.c.b16 %v7870, %v7869
    %v7928 = vpack.c.b16 %v7872, %v7871
    %v7929 = vpack.c.b16 %v7874, %v7873
    %v7930 = vpack.c.b16 %v7876, %v7875
    %v7931 = vpack.c.b16 %v7878, %v7877
    %v7932 = vpack.c.b16 %v7880, %v7879
    %v7933 = vpack.c.b16 %v7882, %v7881
    %v7934 = vpack.c.b16 %v7884, %v7883
    %v7935 = vpack.c.b16 %v7886, %v7885
    %v7936 = vpack.c.b16 %v7888, %v7887
    %v7937 = vpack.c.b16 %v7890, %v7889
    %v7938 = vpack.c.b16 %v7892, %v7891
    %v7939 = vpack.c.b16 %v7894, %v7893
    %v7940 = vpack.c.b16 %v7896, %v7895
    %v7941 = vpack.c.b16 %v7898, %v7897
    %v7942 = vpack.c.b16 %v7900, %v7899
    %v7943 = vpack.c.b16 %v7902, %v7901
    %v7944 = vpack.c.b16 %v7904, %v7903
    %v7945 = vpack.c.b16 %v7906, %v7905
    %v7946 = vpack.c.b16 %v7908, %v7907
    %v7947 = vpack.c.b16 %v7910, %v7909
    %v7948 = vpack.c.b16 %v7912, %v7911
    %v7949 = vpack.c.b16 %v7914, %v7913
    %v7950 = vpack.c.b16 %v7916, %v7915
    %v7951 = vpack.c.b16 %v7918, %v7917
    %v7952 = vpack.c.b16 %v7920, %v7919
    %7985 = vmatprep.subr.bf16.mxu0 0
    %7986 = vmatpush1.bf16.msra.mxu0 %v7928
    %7987 = vmatprep.subr.bf16.mxu0 0
    %7988 = vmatpush1.bf16.msra.mxu0 %v7927
    %7989 = vmatprep.subr.bf16.mxu0 0
    %7990 = vmatpush1.bf16.msra.mxu0 %v7926
    %7991 = vmatprep.subr.bf16.mxu0 0
    %7992 = vmatpush1.bf16.msra.mxu0 %v7925
    %7993 = vmatprep.subr.bf16.mxu0 0
    %7994 = vmatpush1.bf16.msra.mxu0 %v7924
    %7995 = vmatprep.subr.bf16.mxu0 0
    %7996 = vmatpush1.bf16.msra.mxu0 %v7923
    %7997 = vmatprep.subr.bf16.mxu0 0
    %7998 = vmatpush1.bf16.msra.mxu0 %v7922
    %7999 = vmatprep.subr.bf16.mxu0 0
    %8000 = vmatpush1.bf16.msra.mxu0 %v7921
    %8001 = vmatprep.subr.bf16.mxu0 0
    %8002 = vmatpush2.bf16.msra.mxu0 %v7936
    %8003 = vmatprep.subr.bf16.mxu0 0
    %8004 = vmatpush2.bf16.msra.mxu0 %v7935
    %8005 = vmatprep.subr.bf16.mxu0 0
    %8006 = vmatpush2.bf16.msra.mxu0 %v7934
    %8007 = vmatprep.subr.bf16.mxu0 0
    %8008 = vmatpush2.bf16.msra.mxu0 %v7933
    %8009 = vmatprep.subr.bf16.mxu0 0
    %8010 = vmatpush2.bf16.msra.mxu0 %v7932
    %8011 = vmatprep.subr.bf16.mxu0 0
    %8012 = vmatpush2.bf16.msra.mxu0 %v7931
    %8013 = vmatprep.subr.bf16.mxu0 0
    %8014 = vmatpush2.bf16.msra.mxu0 %v7930
    %8015 = vmatprep.subr.bf16.mxu0 0
    %8016 = vmatpush2.bf16.msra.mxu0 %v7929
    %8017 = vmatprep.mubr.bf16.mxu0 %v7220
    %8018 = vmatmul.mubr.bf16.gmra.mxu0 %v7219
    %v8019 = vpop.f32.mrf.mxu0
    %v8020 = vadd.f32 %v7787, %v8019
    %v8021 = vpop.f32.mrf.mxu0
    %v8022 = vpop.f32.mrf.mxu0
    %v8023 = vadd.f32 %v7790, %v8022
    %v8024 = vpop.f32.mrf.mxu0
    %8025 = vdwg.mxu0
    %8026 = vmatprep.subr.bf16.mxu0 0
    %8027 = vmatpush1.bf16.msra.mxu0 %v7944
    %8028 = vmatprep.subr.bf16.mxu0 0
    %8029 = vmatpush1.bf16.msra.mxu0 %v7943
    %8030 = vmatprep.subr.bf16.mxu0 0
    %8031 = vmatpush1.bf16.msra.mxu0 %v7942
    %8032 = vmatprep.subr.bf16.mxu0 0
    %8033 = vmatpush1.bf16.msra.mxu0 %v7941
    %8034 = vmatprep.subr.bf16.mxu0 0
    %8035 = vmatpush1.bf16.msra.mxu0 %v7940
    %8036 = vmatprep.subr.bf16.mxu0 0
    %8037 = vmatpush1.bf16.msra.mxu0 %v7939
    %8038 = vmatprep.subr.bf16.mxu0 0
    %8039 = vmatpush1.bf16.msra.mxu0 %v7938
    %8040 = vmatprep.subr.bf16.mxu0 0
    %8041 = vmatpush1.bf16.msra.mxu0 %v7937
    %8042 = vmatprep.subr.bf16.mxu0 0
    %8043 = vmatpush2.bf16.msra.mxu0 %v7952
    %8044 = vmatprep.subr.bf16.mxu0 0
    %8045 = vmatpush2.bf16.msra.mxu0 %v7951
    %8046 = vmatprep.subr.bf16.mxu0 0
    %8047 = vmatpush2.bf16.msra.mxu0 %v7950
    %8048 = vmatprep.subr.bf16.mxu0 0
    %8049 = vmatpush2.bf16.msra.mxu0 %v7949
    %8050 = vmatprep.subr.bf16.mxu0 0
    %8051 = vmatpush2.bf16.msra.mxu0 %v7948
    %8052 = vmatprep.subr.bf16.mxu0 0
    %8053 = vmatpush2.bf16.msra.mxu0 %v7947
    %8054 = vmatprep.subr.bf16.mxu0 0
    %8055 = vmatpush2.bf16.msra.mxu0 %v7946
    %8056 = vmatprep.subr.bf16.mxu0 0
    %8057 = vmatpush2.bf16.msra.mxu0 %v7945
    %8058 = vmatprep.mubr.bf16.mxu0 %v7222
    %8059 = vmatmul.mubr.bf16.gmra.mxu0 %v7221
    %v8060 = vpop.f32.mrf.mxu0
    %v8061 = vadd.f32 %v8020, %v8060
    %v8062 = vpop.f32.mrf.mxu0
    %v8063 = vpop.f32.mrf.mxu0
    %v8064 = vadd.f32 %v8023, %v8063
    %v8065 = vpop.f32.mrf.mxu0
    %8066 = vdwg.mxu0
    %v8067 = vld [vmem:[#allocation8 + $0x20] sm:$0xff]
    %v8068 = vld [vmem:[#allocation8 + $0x28] sm:$0xff]
    %v8069 = vld [vmem:[#allocation8 + $0x60] sm:$0xff]
    %v8070 = vld [vmem:[#allocation8 + $0x68] sm:$0xff]
    %v8071 = vld [vmem:[#allocation8 + $0xa0] sm:$0xff]
    %v8072 = vld [vmem:[#allocation8 + $0xa8] sm:$0xff]
    %v8073 = vld [vmem:[#allocation8 + $0xe0] sm:$0xff]
    %v8074 = vld [vmem:[#allocation8 + $0xe8] sm:$0xff]
    %v8075 = vld [vmem:[%s14 + $0x25] sm:$0xf]
    %v8077 = vlaneseq
    %v8078 = vshrl.u32 %v8077, 7
    %v8079 = vsub.s32 0, %v8078
    %v8080 = vrot.slane %v8075, %v8079
    %v8081 = vlaneseq
    %v8082 = vshrl.u32 %v8081, 7
    %v8083 = vsub.s32 1, %v8082
    %v8084 = vrot.slane %v8075, %v8083
    %v8085 = vlaneseq
    %v8086 = vshrl.u32 %v8085, 7
    %v8087 = vsub.s32 2, %v8086
    %v8088 = vrot.slane %v8075, %v8087
    %v8089 = vlaneseq
    %v8090 = vshrl.u32 %v8089, 7
    %v8091 = vsub.s32 3, %v8090
    %v8092 = vrot.slane %v8075, %v8091
    %v8105 = vunpack.c.l.b16 %v8067
    %v8106 = vunpack.c.h.b16 %v8067
    %v8107 = vunpack.c.l.b16 %v8068
    %v8108 = vunpack.c.h.b16 %v8068
    %v8109 = vunpack.c.l.b16 %v8069
    %v8110 = vunpack.c.h.b16 %v8069
    %v8111 = vunpack.c.l.b16 %v8070
    %v8112 = vunpack.c.h.b16 %v8070
    %v8113 = vunpack.c.l.b16 %v8071
    %v8114 = vunpack.c.h.b16 %v8071
    %v8115 = vunpack.c.l.b16 %v8072
    %v8116 = vunpack.c.h.b16 %v8072
    %v8117 = vunpack.c.l.b16 %v8073
    %v8118 = vunpack.c.h.b16 %v8073
    %v8119 = vunpack.c.l.b16 %v8074
    %v8120 = vunpack.c.h.b16 %v8074
    %v8121 = vpack.c.b16 %v8109, %v8105
    %v8122 = vpack.c.b16 %v8110, %v8106
    %v8123 = vpack.c.b16 %v8111, %v8107
    %v8124 = vpack.c.b16 %v8112, %v8108
    %v8125 = vpack.c.b16 %v8117, %v8113
    %v8126 = vpack.c.b16 %v8118, %v8114
    %v8127 = vpack.c.b16 %v8119, %v8115
    %v8128 = vpack.c.b16 %v8120, %v8116
    %8137 = vmatprep.subr.bf16.mxu0 0
    %8138 = vmatpush1.bf16.msra.mxu0 0
    %8139 = vmatprep.subr.bf16.mxu0 0
    %8140 = vmatpush1.bf16.msra.mxu0 0
    %8141 = vmatprep.subr.bf16.mxu0 0
    %8142 = vmatpush1.bf16.msra.mxu0 0
    %8143 = vmatprep.subr.bf16.mxu0 0
    %8144 = vmatpush1.bf16.msra.mxu0 0
    %8145 = vmatprep.subr.bf16.mxu0 0
    %8146 = vmatpush1.bf16.msra.mxu0 0
    %8147 = vmatprep.subr.bf16.mxu0 0
    %8148 = vmatpush1.bf16.msra.mxu0 0
    %8149 = vmatprep.subr.bf16.mxu0 %v8126
    %8150 = vmatpush1.bf16.msra.mxu0 %v8125
    %8151 = vmatprep.subr.bf16.mxu0 %v8122
    %8152 = vmatpush1.bf16.msra.mxu0 %v8121
    %8153 = vmatprep.subr.bf16.mxu0 0
    %8154 = vmatpush2.bf16.msra.mxu0 0
    %8155 = vmatprep.subr.bf16.mxu0 0
    %8156 = vmatpush2.bf16.msra.mxu0 0
    %8157 = vmatprep.subr.bf16.mxu0 0
    %8158 = vmatpush2.bf16.msra.mxu0 0
    %8159 = vmatprep.subr.bf16.mxu0 0
    %8160 = vmatpush2.bf16.msra.mxu0 0
    %8161 = vmatprep.subr.bf16.mxu0 0
    %8162 = vmatpush2.bf16.msra.mxu0 0
    %8163 = vmatprep.subr.bf16.mxu0 0
    %8164 = vmatpush2.bf16.msra.mxu0 0
    %8165 = vmatprep.subr.bf16.mxu0 0
    %8166 = vmatpush2.bf16.msra.mxu0 0
    %8167 = vmatprep.subr.bf16.mxu0 0
    %8168 = vmatpush2.bf16.msra.mxu0 0
    %8169 = vmatprep.mubr.bf16.mxu0 0
    %8170 = vmatmul.mubr.bf16.gmra.mxu0 %v7123
    %v8171 = vpop.f32.mrf.mxu0
    %v8172 = vadd.f32 %v8080, %v8171
    %v8173 = vpop.f32.mrf.mxu0
    %v8174 = vadd.f32 %v8084, %v8173
    %v8175 = vpop.f32.mrf.mxu0
    %v8176 = vadd.f32 %v8080, %v8175
    %v8177 = vpop.f32.mrf.mxu0
    %v8178 = vadd.f32 %v8084, %v8177
    %8179 = vdwg.mxu0
    %8180 = vmatprep.subr.bf16.mxu0 0
    %8181 = vmatpush1.bf16.msra.mxu0 0
    %8182 = vmatprep.subr.bf16.mxu0 0
    %8183 = vmatpush1.bf16.msra.mxu0 0
    %8184 = vmatprep.subr.bf16.mxu0 0
    %8185 = vmatpush1.bf16.msra.mxu0 0
    %8186 = vmatprep.subr.bf16.mxu0 0
    %8187 = vmatpush1.bf16.msra.mxu0 0
    %8188 = vmatprep.subr.bf16.mxu0 0
    %8189 = vmatpush1.bf16.msra.mxu0 0
    %8190 = vmatprep.subr.bf16.mxu0 0
    %8191 = vmatpush1.bf16.msra.mxu0 0
    %8192 = vmatprep.subr.bf16.mxu0 %v8128
    %8193 = vmatpush1.bf16.msra.mxu0 %v8127
    %8194 = vmatprep.subr.bf16.mxu0 %v8124
    %8195 = vmatpush1.bf16.msra.mxu0 %v8123
    %8196 = vmatprep.subr.bf16.mxu0 0
    %8197 = vmatpush2.bf16.msra.mxu0 0
    %8198 = vmatprep.subr.bf16.mxu0 0
    %8199 = vmatpush2.bf16.msra.mxu0 0
    %8200 = vmatprep.subr.bf16.mxu0 0
    %8201 = vmatpush2.bf16.msra.mxu0 0
    %8202 = vmatprep.subr.bf16.mxu0 0
    %8203 = vmatpush2.bf16.msra.mxu0 0
    %8204 = vmatprep.subr.bf16.mxu0 0
    %8205 = vmatpush2.bf16.msra.mxu0 0
    %8206 = vmatprep.subr.bf16.mxu0 0
    %8207 = vmatpush2.bf16.msra.mxu0 0
    %8208 = vmatprep.subr.bf16.mxu0 0
    %8209 = vmatpush2.bf16.msra.mxu0 0
    %8210 = vmatprep.subr.bf16.mxu0 0
    %8211 = vmatpush2.bf16.msra.mxu0 0
    %8212 = vmatprep.mubr.bf16.mxu0 0
    %8213 = vmatmul.mubr.bf16.gmra.mxu0 %v7123
    %v8214 = vpop.f32.mrf.mxu0
    %v8215 = vadd.f32 %v8088, %v8214
    %v8216 = vpop.f32.mrf.mxu0
    %v8217 = vadd.f32 %v8092, %v8216
    %v8218 = vpop.f32.mrf.mxu0
    %v8219 = vadd.f32 %v8088, %v8218
    %v8220 = vpop.f32.mrf.mxu0
    %v8221 = vadd.f32 %v8092, %v8220
    %8222 = vdwg.mxu0
    %v8223 = vmax.f32 %v8172, 0.0
    %v8224 = vmax.f32 %v8174, 0.0
    %v8225 = vmax.f32 %v8215, 0.0
    %v8226 = vmax.f32 %v8217, 0.0
    %v8227 = vmax.f32 %v8176, 0.0
    %v8228 = vmax.f32 %v8178, 0.0
    %v8229 = vmax.f32 %v8219, 0.0
    %v8230 = vmax.f32 %v8221, 0.0
    %v8231 = vpack.c.bf16 %v8227, %v8223
    %v8232 = vpack.c.bf16 %v8228, %v8224
    %v8233 = vpack.c.bf16 %v8229, %v8225
    %v8234 = vpack.c.bf16 %v8230, %v8226
    %v8235 = vld [vmem:[#allocation10 + $0x200] sm:$0xf]
    %v8236 = vld [vmem:[#allocation10 + $0x204] sm:$0xf]
    %v8237 = vld [vmem:[#allocation10 + $0x208] sm:$0xf]
    %v8238 = vld [vmem:[#allocation10 + $0x20c] sm:$0xf]
    %v8239 = vld [vmem:[#allocation10 + $0x210] sm:$0xf]
    %v8240 = vld [vmem:[#allocation10 + $0x214] sm:$0xf]
    %v8241 = vld [vmem:[#allocation10 + $0x218] sm:$0xf]
    %v8242 = vld [vmem:[#allocation10 + $0x21c] sm:$0xf]
    %v8243 = vld [vmem:[#allocation10 + $0x220] sm:$0xf]
    %v8244 = vld [vmem:[#allocation10 + $0x224] sm:$0xf]
    %v8245 = vld [vmem:[#allocation10 + $0x228] sm:$0xf]
    %v8246 = vld [vmem:[#allocation10 + $0x22c] sm:$0xf]
    %v8247 = vld [vmem:[#allocation10 + $0x230] sm:$0xf]
    %v8248 = vld [vmem:[#allocation10 + $0x234] sm:$0xf]
    %v8249 = vld [vmem:[#allocation10 + $0x238] sm:$0xf]
    %v8250 = vld [vmem:[#allocation10 + $0x23c] sm:$0xf]
    %v8251 = vld [vmem:[#allocation10 + $0x240] sm:$0xf]
    %v8252 = vld [vmem:[#allocation10 + $0x244] sm:$0xf]
    %v8253 = vld [vmem:[#allocation10 + $0x248] sm:$0xf]
    %v8254 = vld [vmem:[#allocation10 + $0x24c] sm:$0xf]
    %v8255 = vld [vmem:[#allocation10 + $0x250] sm:$0xf]
    %v8256 = vld [vmem:[#allocation10 + $0x254] sm:$0xf]
    %v8257 = vld [vmem:[#allocation10 + $0x258] sm:$0xf]
    %v8258 = vld [vmem:[#allocation10 + $0x25c] sm:$0xf]
    %v8259 = vld [vmem:[#allocation10 + $0x260] sm:$0xf]
    %v8260 = vld [vmem:[#allocation10 + $0x264] sm:$0xf]
    %v8261 = vld [vmem:[#allocation10 + $0x268] sm:$0xf]
    %v8262 = vld [vmem:[#allocation10 + $0x26c] sm:$0xf]
    %v8263 = vld [vmem:[#allocation10 + $0x270] sm:$0xf]
    %v8264 = vld [vmem:[#allocation10 + $0x274] sm:$0xf]
    %v8265 = vld [vmem:[#allocation10 + $0x278] sm:$0xf]
    %v8266 = vld [vmem:[#allocation10 + $0x27c] sm:$0xf]
    %v8267 = vld [vmem:[#allocation10 + $0x280] sm:$0xf]
    %v8268 = vld [vmem:[#allocation10 + $0x284] sm:$0xf]
    %v8269 = vld [vmem:[#allocation10 + $0x288] sm:$0xf]
    %v8270 = vld [vmem:[#allocation10 + $0x28c] sm:$0xf]
    %v8271 = vld [vmem:[#allocation10 + $0x290] sm:$0xf]
    %v8272 = vld [vmem:[#allocation10 + $0x294] sm:$0xf]
    %v8273 = vld [vmem:[#allocation10 + $0x298] sm:$0xf]
    %v8274 = vld [vmem:[#allocation10 + $0x29c] sm:$0xf]
    %v8275 = vld [vmem:[#allocation10 + $0x2a0] sm:$0xf]
    %v8276 = vld [vmem:[#allocation10 + $0x2a4] sm:$0xf]
    %v8277 = vld [vmem:[#allocation10 + $0x2a8] sm:$0xf]
    %v8278 = vld [vmem:[#allocation10 + $0x2ac] sm:$0xf]
    %v8279 = vld [vmem:[#allocation10 + $0x2b0] sm:$0xf]
    %v8280 = vld [vmem:[#allocation10 + $0x2b4] sm:$0xf]
    %v8281 = vld [vmem:[#allocation10 + $0x2b8] sm:$0xf]
    %v8282 = vld [vmem:[#allocation10 + $0x2bc] sm:$0xf]
    %v8283 = vld [vmem:[#allocation10 + $0x2c0] sm:$0xf]
    %v8284 = vld [vmem:[#allocation10 + $0x2c4] sm:$0xf]
    %v8285 = vld [vmem:[#allocation10 + $0x2c8] sm:$0xf]
    %v8286 = vld [vmem:[#allocation10 + $0x2cc] sm:$0xf]
    %v8287 = vld [vmem:[#allocation10 + $0x2d0] sm:$0xf]
    %v8288 = vld [vmem:[#allocation10 + $0x2d4] sm:$0xf]
    %v8289 = vld [vmem:[#allocation10 + $0x2d8] sm:$0xf]
    %v8290 = vld [vmem:[#allocation10 + $0x2dc] sm:$0xf]
    %v8291 = vld [vmem:[#allocation10 + $0x2e0] sm:$0xf]
    %v8292 = vld [vmem:[#allocation10 + $0x2e4] sm:$0xf]
    %v8293 = vld [vmem:[#allocation10 + $0x2e8] sm:$0xf]
    %v8294 = vld [vmem:[#allocation10 + $0x2ec] sm:$0xf]
    %v8295 = vld [vmem:[#allocation10 + $0x2f0] sm:$0xf]
    %v8296 = vld [vmem:[#allocation10 + $0x2f4] sm:$0xf]
    %v8297 = vld [vmem:[#allocation10 + $0x2f8] sm:$0xf]
    %v8298 = vld [vmem:[#allocation10 + $0x2fc] sm:$0xf]
    %v8363 = vunpack.c.l.b16 %v8235
    %v8364 = vunpack.c.l.b16 %v8236
    %v8365 = vunpack.c.l.b16 %v8237
    %v8366 = vunpack.c.l.b16 %v8238
    %v8367 = vunpack.c.l.b16 %v8239
    %v8368 = vunpack.c.l.b16 %v8240
    %v8369 = vunpack.c.l.b16 %v8241
    %v8370 = vunpack.c.l.b16 %v8242
    %v8371 = vunpack.c.l.b16 %v8243
    %v8372 = vunpack.c.l.b16 %v8244
    %v8373 = vunpack.c.l.b16 %v8245
    %v8374 = vunpack.c.l.b16 %v8246
    %v8375 = vunpack.c.l.b16 %v8247
    %v8376 = vunpack.c.l.b16 %v8248
    %v8377 = vunpack.c.l.b16 %v8249
    %v8378 = vunpack.c.l.b16 %v8250
    %v8379 = vunpack.c.l.b16 %v8251
    %v8380 = vunpack.c.l.b16 %v8252
    %v8381 = vunpack.c.l.b16 %v8253
    %v8382 = vunpack.c.l.b16 %v8254
    %v8383 = vunpack.c.l.b16 %v8255
    %v8384 = vunpack.c.l.b16 %v8256
    %v8385 = vunpack.c.l.b16 %v8257
    %v8386 = vunpack.c.l.b16 %v8258
    %v8387 = vunpack.c.l.b16 %v8259
    %v8388 = vunpack.c.l.b16 %v8260
    %v8389 = vunpack.c.l.b16 %v8261
    %v8390 = vunpack.c.l.b16 %v8262
    %v8391 = vunpack.c.l.b16 %v8263
    %v8392 = vunpack.c.l.b16 %v8264
    %v8393 = vunpack.c.l.b16 %v8265
    %v8394 = vunpack.c.l.b16 %v8266
    %v8395 = vunpack.c.l.b16 %v8267
    %v8396 = vunpack.c.l.b16 %v8268
    %v8397 = vunpack.c.l.b16 %v8269
    %v8398 = vunpack.c.l.b16 %v8270
    %v8399 = vunpack.c.l.b16 %v8271
    %v8400 = vunpack.c.l.b16 %v8272
    %v8401 = vunpack.c.l.b16 %v8273
    %v8402 = vunpack.c.l.b16 %v8274
    %v8403 = vunpack.c.l.b16 %v8275
    %v8404 = vunpack.c.l.b16 %v8276
    %v8405 = vunpack.c.l.b16 %v8277
    %v8406 = vunpack.c.l.b16 %v8278
    %v8407 = vunpack.c.l.b16 %v8279
    %v8408 = vunpack.c.l.b16 %v8280
    %v8409 = vunpack.c.l.b16 %v8281
    %v8410 = vunpack.c.l.b16 %v8282
    %v8411 = vunpack.c.l.b16 %v8283
    %v8412 = vunpack.c.l.b16 %v8284
    %v8413 = vunpack.c.l.b16 %v8285
    %v8414 = vunpack.c.l.b16 %v8286
    %v8415 = vunpack.c.l.b16 %v8287
    %v8416 = vunpack.c.l.b16 %v8288
    %v8417 = vunpack.c.l.b16 %v8289
    %v8418 = vunpack.c.l.b16 %v8290
    %v8419 = vunpack.c.l.b16 %v8291
    %v8420 = vunpack.c.l.b16 %v8292
    %v8421 = vunpack.c.l.b16 %v8293
    %v8422 = vunpack.c.l.b16 %v8294
    %v8423 = vunpack.c.l.b16 %v8295
    %v8424 = vunpack.c.l.b16 %v8296
    %v8425 = vunpack.c.l.b16 %v8297
    %v8426 = vunpack.c.l.b16 %v8298
    %v8427 = vpack.c.b16 %v8364, %v8363
    %v8428 = vpack.c.b16 %v8366, %v8365
    %v8429 = vpack.c.b16 %v8368, %v8367
    %v8430 = vpack.c.b16 %v8370, %v8369
    %v8431 = vpack.c.b16 %v8372, %v8371
    %v8432 = vpack.c.b16 %v8374, %v8373
    %v8433 = vpack.c.b16 %v8376, %v8375
    %v8434 = vpack.c.b16 %v8378, %v8377
    %v8435 = vpack.c.b16 %v8380, %v8379
    %v8436 = vpack.c.b16 %v8382, %v8381
    %v8437 = vpack.c.b16 %v8384, %v8383
    %v8438 = vpack.c.b16 %v8386, %v8385
    %v8439 = vpack.c.b16 %v8388, %v8387
    %v8440 = vpack.c.b16 %v8390, %v8389
    %v8441 = vpack.c.b16 %v8392, %v8391
    %v8442 = vpack.c.b16 %v8394, %v8393
    %v8443 = vpack.c.b16 %v8396, %v8395
    %v8444 = vpack.c.b16 %v8398, %v8397
    %v8445 = vpack.c.b16 %v8400, %v8399
    %v8446 = vpack.c.b16 %v8402, %v8401
    %v8447 = vpack.c.b16 %v8404, %v8403
    %v8448 = vpack.c.b16 %v8406, %v8405
    %v8449 = vpack.c.b16 %v8408, %v8407
    %v8450 = vpack.c.b16 %v8410, %v8409
    %v8451 = vpack.c.b16 %v8412, %v8411
    %v8452 = vpack.c.b16 %v8414, %v8413
    %v8453 = vpack.c.b16 %v8416, %v8415
    %v8454 = vpack.c.b16 %v8418, %v8417
    %v8455 = vpack.c.b16 %v8420, %v8419
    %v8456 = vpack.c.b16 %v8422, %v8421
    %v8457 = vpack.c.b16 %v8424, %v8423
    %v8458 = vpack.c.b16 %v8426, %v8425
    %8491 = vmatprep.subr.bf16.mxu0 0
    %8492 = vmatpush1.bf16.msra.mxu0 %v8434
    %8493 = vmatprep.subr.bf16.mxu0 0
    %8494 = vmatpush1.bf16.msra.mxu0 %v8433
    %8495 = vmatprep.subr.bf16.mxu0 0
    %8496 = vmatpush1.bf16.msra.mxu0 %v8432
    %8497 = vmatprep.subr.bf16.mxu0 0
    %8498 = vmatpush1.bf16.msra.mxu0 %v8431
    %8499 = vmatprep.subr.bf16.mxu0 0
    %8500 = vmatpush1.bf16.msra.mxu0 %v8430
    %8501 = vmatprep.subr.bf16.mxu0 0
    %8502 = vmatpush1.bf16.msra.mxu0 %v8429
    %8503 = vmatprep.subr.bf16.mxu0 0
    %8504 = vmatpush1.bf16.msra.mxu0 %v8428
    %8505 = vmatprep.subr.bf16.mxu0 0
    %8506 = vmatpush1.bf16.msra.mxu0 %v8427
    %8507 = vmatprep.subr.bf16.mxu0 0
    %8508 = vmatpush2.bf16.msra.mxu0 %v8442
    %8509 = vmatprep.subr.bf16.mxu0 0
    %8510 = vmatpush2.bf16.msra.mxu0 %v8441
    %8511 = vmatprep.subr.bf16.mxu0 0
    %8512 = vmatpush2.bf16.msra.mxu0 %v8440
    %8513 = vmatprep.subr.bf16.mxu0 0
    %8514 = vmatpush2.bf16.msra.mxu0 %v8439
    %8515 = vmatprep.subr.bf16.mxu0 0
    %8516 = vmatpush2.bf16.msra.mxu0 %v8438
    %8517 = vmatprep.subr.bf16.mxu0 0
    %8518 = vmatpush2.bf16.msra.mxu0 %v8437
    %8519 = vmatprep.subr.bf16.mxu0 0
    %8520 = vmatpush2.bf16.msra.mxu0 %v8436
    %8521 = vmatprep.subr.bf16.mxu0 0
    %8522 = vmatpush2.bf16.msra.mxu0 %v8435
    %8523 = vmatprep.mubr.bf16.mxu0 %v8232
    %8524 = vmatmul.mubr.bf16.gmra.mxu0 %v8231
    %v8525 = vpop.f32.mrf.mxu0
    %v8526 = vadd.f32 0.0, %v8525
    %v8527 = vpop.f32.mrf.mxu0
    %v8528 = vpop.f32.mrf.mxu0
    %v8529 = vadd.f32 0.0, %v8528
    %v8530 = vpop.f32.mrf.mxu0
    %8531 = vdwg.mxu0
    %8532 = vmatprep.subr.bf16.mxu0 0
    %8533 = vmatpush1.bf16.msra.mxu0 %v8450
    %8534 = vmatprep.subr.bf16.mxu0 0
    %8535 = vmatpush1.bf16.msra.mxu0 %v8449
    %8536 = vmatprep.subr.bf16.mxu0 0
    %8537 = vmatpush1.bf16.msra.mxu0 %v8448
    %8538 = vmatprep.subr.bf16.mxu0 0
    %8539 = vmatpush1.bf16.msra.mxu0 %v8447
    %8540 = vmatprep.subr.bf16.mxu0 0
    %8541 = vmatpush1.bf16.msra.mxu0 %v8446
    %8542 = vmatprep.subr.bf16.mxu0 0
    %8543 = vmatpush1.bf16.msra.mxu0 %v8445
    %8544 = vmatprep.subr.bf16.mxu0 0
    %8545 = vmatpush1.bf16.msra.mxu0 %v8444
    %8546 = vmatprep.subr.bf16.mxu0 0
    %8547 = vmatpush1.bf16.msra.mxu0 %v8443
    %8548 = vmatprep.subr.bf16.mxu0 0
    %8549 = vmatpush2.bf16.msra.mxu0 %v8458
    %8550 = vmatprep.subr.bf16.mxu0 0
    %8551 = vmatpush2.bf16.msra.mxu0 %v8457
    %8552 = vmatprep.subr.bf16.mxu0 0
    %8553 = vmatpush2.bf16.msra.mxu0 %v8456
    %8554 = vmatprep.subr.bf16.mxu0 0
    %8555 = vmatpush2.bf16.msra.mxu0 %v8455
    %8556 = vmatprep.subr.bf16.mxu0 0
    %8557 = vmatpush2.bf16.msra.mxu0 %v8454
    %8558 = vmatprep.subr.bf16.mxu0 0
    %8559 = vmatpush2.bf16.msra.mxu0 %v8453
    %8560 = vmatprep.subr.bf16.mxu0 0
    %8561 = vmatpush2.bf16.msra.mxu0 %v8452
    %8562 = vmatprep.subr.bf16.mxu0 0
    %8563 = vmatpush2.bf16.msra.mxu0 %v8451
    %8564 = vmatprep.mubr.bf16.mxu0 %v8234
    %8565 = vmatmul.mubr.bf16.gmra.mxu0 %v8233
    %v8566 = vpop.f32.mrf.mxu0
    %v8567 = vadd.f32 %v8526, %v8566
    %v8568 = vpop.f32.mrf.mxu0
    %v8569 = vpop.f32.mrf.mxu0
    %v8570 = vadd.f32 %v8529, %v8569
    %v8571 = vpop.f32.mrf.mxu0
    %8572 = vdwg.mxu0
    %v8573 = vadd.f32 %v8061, %v8567
    %v8574 = vadd.f32 %v8064, %v8570
    %v8575 = vld [vmem:[#allocation8 + $0x30] sm:$0xff]
    %v8576 = vld [vmem:[#allocation8 + $0x38] sm:$0xff]
    %v8577 = vld [vmem:[#allocation8 + $0x70] sm:$0xff]
    %v8578 = vld [vmem:[#allocation8 + $0x78] sm:$0xff]
    %v8579 = vld [vmem:[#allocation8 + $0xb0] sm:$0xff]
    %v8580 = vld [vmem:[#allocation8 + $0xb8] sm:$0xff]
    %v8581 = vld [vmem:[#allocation8 + $0xf0] sm:$0xff]
    %v8582 = vld [vmem:[#allocation8 + $0xf8] sm:$0xff]
    %v8583 = vld [vmem:[%s14 + $0x29] sm:$0xf]
    %v8585 = vlaneseq
    %v8586 = vshrl.u32 %v8585, 7
    %v8587 = vsub.s32 0, %v8586
    %v8588 = vrot.slane %v8583, %v8587
    %v8589 = vlaneseq
    %v8590 = vshrl.u32 %v8589, 7
    %v8591 = vsub.s32 1, %v8590
    %v8592 = vrot.slane %v8583, %v8591
    %v8593 = vlaneseq
    %v8594 = vshrl.u32 %v8593, 7
    %v8595 = vsub.s32 2, %v8594
    %v8596 = vrot.slane %v8583, %v8595
    %v8597 = vlaneseq
    %v8598 = vshrl.u32 %v8597, 7
    %v8599 = vsub.s32 3, %v8598
    %v8600 = vrot.slane %v8583, %v8599
    %v8613 = vunpack.c.l.b16 %v8575
    %v8614 = vunpack.c.h.b16 %v8575
    %v8615 = vunpack.c.l.b16 %v8576
    %v8616 = vunpack.c.h.b16 %v8576
    %v8617 = vunpack.c.l.b16 %v8577
    %v8618 = vunpack.c.h.b16 %v8577
    %v8619 = vunpack.c.l.b16 %v8578
    %v8620 = vunpack.c.h.b16 %v8578
    %v8621 = vunpack.c.l.b16 %v8579
    %v8622 = vunpack.c.h.b16 %v8579
    %v8623 = vunpack.c.l.b16 %v8580
    %v8624 = vunpack.c.h.b16 %v8580
    %v8625 = vunpack.c.l.b16 %v8581
    %v8626 = vunpack.c.h.b16 %v8581
    %v8627 = vunpack.c.l.b16 %v8582
    %v8628 = vunpack.c.h.b16 %v8582
    %v8629 = vpack.c.b16 %v8617, %v8613
    %v8630 = vpack.c.b16 %v8618, %v8614
    %v8631 = vpack.c.b16 %v8619, %v8615
    %v8632 = vpack.c.b16 %v8620, %v8616
    %v8633 = vpack.c.b16 %v8625, %v8621
    %v8634 = vpack.c.b16 %v8626, %v8622
    %v8635 = vpack.c.b16 %v8627, %v8623
    %v8636 = vpack.c.b16 %v8628, %v8624
    %8645 = vmatprep.subr.bf16.mxu0 0
    %8646 = vmatpush1.bf16.msra.mxu0 0
    %8647 = vmatprep.subr.bf16.mxu0 0
    %8648 = vmatpush1.bf16.msra.mxu0 0
    %8649 = vmatprep.subr.bf16.mxu0 0
    %8650 = vmatpush1.bf16.msra.mxu0 0
    %8651 = vmatprep.subr.bf16.mxu0 0
    %8652 = vmatpush1.bf16.msra.mxu0 0
    %8653 = vmatprep.subr.bf16.mxu0 0
    %8654 = vmatpush1.bf16.msra.mxu0 0
    %8655 = vmatprep.subr.bf16.mxu0 0
    %8656 = vmatpush1.bf16.msra.mxu0 0
    %8657 = vmatprep.subr.bf16.mxu0 %v8634
    %8658 = vmatpush1.bf16.msra.mxu0 %v8633
    %8659 = vmatprep.subr.bf16.mxu0 %v8630
    %8660 = vmatpush1.bf16.msra.mxu0 %v8629
    %8661 = vmatprep.subr.bf16.mxu0 0
    %8662 = vmatpush2.bf16.msra.mxu0 0
    %8663 = vmatprep.subr.bf16.mxu0 0
    %8664 = vmatpush2.bf16.msra.mxu0 0
    %8665 = vmatprep.subr.bf16.mxu0 0
    %8666 = vmatpush2.bf16.msra.mxu0 0
    %8667 = vmatprep.subr.bf16.mxu0 0
    %8668 = vmatpush2.bf16.msra.mxu0 0
    %8669 = vmatprep.subr.bf16.mxu0 0
    %8670 = vmatpush2.bf16.msra.mxu0 0
    %8671 = vmatprep.subr.bf16.mxu0 0
    %8672 = vmatpush2.bf16.msra.mxu0 0
    %8673 = vmatprep.subr.bf16.mxu0 0
    %8674 = vmatpush2.bf16.msra.mxu0 0
    %8675 = vmatprep.subr.bf16.mxu0 0
    %8676 = vmatpush2.bf16.msra.mxu0 0
    %8677 = vmatprep.mubr.bf16.mxu0 0
    %8678 = vmatmul.mubr.bf16.gmra.mxu0 %v7123
    %v8679 = vpop.f32.mrf.mxu0
    %v8680 = vadd.f32 %v8588, %v8679
    %v8681 = vpop.f32.mrf.mxu0
    %v8682 = vadd.f32 %v8592, %v8681
    %v8683 = vpop.f32.mrf.mxu0
    %v8684 = vadd.f32 %v8588, %v8683
    %v8685 = vpop.f32.mrf.mxu0
    %v8686 = vadd.f32 %v8592, %v8685
    %8687 = vdwg.mxu0
    %8688 = vmatprep.subr.bf16.mxu0 0
    %8689 = vmatpush1.bf16.msra.mxu0 0
    %8690 = vmatprep.subr.bf16.mxu0 0
    %8691 = vmatpush1.bf16.msra.mxu0 0
    %8692 = vmatprep.subr.bf16.mxu0 0
    %8693 = vmatpush1.bf16.msra.mxu0 0
    %8694 = vmatprep.subr.bf16.mxu0 0
    %8695 = vmatpush1.bf16.msra.mxu0 0
    %8696 = vmatprep.subr.bf16.mxu0 0
    %8697 = vmatpush1.bf16.msra.mxu0 0
    %8698 = vmatprep.subr.bf16.mxu0 0
    %8699 = vmatpush1.bf16.msra.mxu0 0
    %8700 = vmatprep.subr.bf16.mxu0 %v8636
    %8701 = vmatpush1.bf16.msra.mxu0 %v8635
    %8702 = vmatprep.subr.bf16.mxu0 %v8632
    %8703 = vmatpush1.bf16.msra.mxu0 %v8631
    %8704 = vmatprep.subr.bf16.mxu0 0
    %8705 = vmatpush2.bf16.msra.mxu0 0
    %8706 = vmatprep.subr.bf16.mxu0 0
    %8707 = vmatpush2.bf16.msra.mxu0 0
    %8708 = vmatprep.subr.bf16.mxu0 0
    %8709 = vmatpush2.bf16.msra.mxu0 0
    %8710 = vmatprep.subr.bf16.mxu0 0
    %8711 = vmatpush2.bf16.msra.mxu0 0
    %8712 = vmatprep.subr.bf16.mxu0 0
    %8713 = vmatpush2.bf16.msra.mxu0 0
    %8714 = vmatprep.subr.bf16.mxu0 0
    %8715 = vmatpush2.bf16.msra.mxu0 0
    %8716 = vmatprep.subr.bf16.mxu0 0
    %8717 = vmatpush2.bf16.msra.mxu0 0
    %8718 = vmatprep.subr.bf16.mxu0 0
    %8719 = vmatpush2.bf16.msra.mxu0 0
    %8720 = vmatprep.mubr.bf16.mxu0 0
    %8721 = vmatmul.mubr.bf16.gmra.mxu0 %v7123
    %v8722 = vpop.f32.mrf.mxu0
    %v8723 = vadd.f32 %v8596, %v8722
    %v8724 = vpop.f32.mrf.mxu0
    %v8725 = vadd.f32 %v8600, %v8724
    %v8726 = vpop.f32.mrf.mxu0
    %v8727 = vadd.f32 %v8596, %v8726
    %v8728 = vpop.f32.mrf.mxu0
    %v8729 = vadd.f32 %v8600, %v8728
    %8730 = vdwg.mxu0
    %v8731 = vmax.f32 %v8680, 0.0
    %v8732 = vmax.f32 %v8682, 0.0
    %v8733 = vmax.f32 %v8723, 0.0
    %v8734 = vmax.f32 %v8725, 0.0
    %v8735 = vmax.f32 %v8684, 0.0
    %v8736 = vmax.f32 %v8686, 0.0
    %v8737 = vmax.f32 %v8727, 0.0
    %v8738 = vmax.f32 %v8729, 0.0
    %v8739 = vpack.c.bf16 %v8735, %v8731
    %v8740 = vpack.c.bf16 %v8736, %v8732
    %v8741 = vpack.c.bf16 %v8737, %v8733
    %v8742 = vpack.c.bf16 %v8738, %v8734
    %v8743 = vld [vmem:[#allocation10 + $0x300] sm:$0xf]
    %v8744 = vld [vmem:[#allocation10 + $0x304] sm:$0xf]
    %v8745 = vld [vmem:[#allocation10 + $0x308] sm:$0xf]
    %v8746 = vld [vmem:[#allocation10 + $0x30c] sm:$0xf]
    %v8747 = vld [vmem:[#allocation10 + $0x310] sm:$0xf]
    %v8748 = vld [vmem:[#allocation10 + $0x314] sm:$0xf]
    %v8749 = vld [vmem:[#allocation10 + $0x318] sm:$0xf]
    %v8750 = vld [vmem:[#allocation10 + $0x31c] sm:$0xf]
    %v8751 = vld [vmem:[#allocation10 + $0x320] sm:$0xf]
    %v8752 = vld [vmem:[#allocation10 + $0x324] sm:$0xf]
    %v8753 = vld [vmem:[#allocation10 + $0x328] sm:$0xf]
    %v8754 = vld [vmem:[#allocation10 + $0x32c] sm:$0xf]
    %v8755 = vld [vmem:[#allocation10 + $0x330] sm:$0xf]
    %v8756 = vld [vmem:[#allocation10 + $0x334] sm:$0xf]
    %v8757 = vld [vmem:[#allocation10 + $0x338] sm:$0xf]
    %v8758 = vld [vmem:[#allocation10 + $0x33c] sm:$0xf]
    %v8759 = vld [vmem:[#allocation10 + $0x340] sm:$0xf]
    %v8760 = vld [vmem:[#allocation10 + $0x344] sm:$0xf]
    %v8761 = vld [vmem:[#allocation10 + $0x348] sm:$0xf]
    %v8762 = vld [vmem:[#allocation10 + $0x34c] sm:$0xf]
    %v8763 = vld [vmem:[#allocation10 + $0x350] sm:$0xf]
    %v8764 = vld [vmem:[#allocation10 + $0x354] sm:$0xf]
    %v8765 = vld [vmem:[#allocation10 + $0x358] sm:$0xf]
    %v8766 = vld [vmem:[#allocation10 + $0x35c] sm:$0xf]
    %v8767 = vld [vmem:[#allocation10 + $0x360] sm:$0xf]
    %v8768 = vld [vmem:[#allocation10 + $0x364] sm:$0xf]
    %v8769 = vld [vmem:[#allocation10 + $0x368] sm:$0xf]
    %v8770 = vld [vmem:[#allocation10 + $0x36c] sm:$0xf]
    %v8771 = vld [vmem:[#allocation10 + $0x370] sm:$0xf]
    %v8772 = vld [vmem:[#allocation10 + $0x374] sm:$0xf]
    %v8773 = vld [vmem:[#allocation10 + $0x378] sm:$0xf]
    %v8774 = vld [vmem:[#allocation10 + $0x37c] sm:$0xf]
    %v8775 = vld [vmem:[#allocation10 + $0x380] sm:$0xf]
    %v8776 = vld [vmem:[#allocation10 + $0x384] sm:$0xf]
    %v8777 = vld [vmem:[#allocation10 + $0x388] sm:$0xf]
    %v8778 = vld [vmem:[#allocation10 + $0x38c] sm:$0xf]
    %v8779 = vld [vmem:[#allocation10 + $0x390] sm:$0xf]
    %v8780 = vld [vmem:[#allocation10 + $0x394] sm:$0xf]
    %v8781 = vld [vmem:[#allocation10 + $0x398] sm:$0xf]
    %v8782 = vld [vmem:[#allocation10 + $0x39c] sm:$0xf]
    %v8783 = vld [vmem:[#allocation10 + $0x3a0] sm:$0xf]
    %v8784 = vld [vmem:[#allocation10 + $0x3a4] sm:$0xf]
    %v8785 = vld [vmem:[#allocation10 + $0x3a8] sm:$0xf]
    %v8786 = vld [vmem:[#allocation10 + $0x3ac] sm:$0xf]
    %v8787 = vld [vmem:[#allocation10 + $0x3b0] sm:$0xf]
    %v8788 = vld [vmem:[#allocation10 + $0x3b4] sm:$0xf]
    %v8789 = vld [vmem:[#allocation10 + $0x3b8] sm:$0xf]
    %v8790 = vld [vmem:[#allocation10 + $0x3bc] sm:$0xf]
    %v8791 = vld [vmem:[#allocation10 + $0x3c0] sm:$0xf]
    %v8792 = vld [vmem:[#allocation10 + $0x3c4] sm:$0xf]
    %v8793 = vld [vmem:[#allocation10 + $0x3c8] sm:$0xf]
    %v8794 = vld [vmem:[#allocation10 + $0x3cc] sm:$0xf]
    %v8795 = vld [vmem:[#allocation10 + $0x3d0] sm:$0xf]
    %v8796 = vld [vmem:[#allocation10 + $0x3d4] sm:$0xf]
    %v8797 = vld [vmem:[#allocation10 + $0x3d8] sm:$0xf]
    %v8798 = vld [vmem:[#allocation10 + $0x3dc] sm:$0xf]
    %v8799 = vld [vmem:[#allocation10 + $0x3e0] sm:$0xf]
    %v8800 = vld [vmem:[#allocation10 + $0x3e4] sm:$0xf]
    %v8801 = vld [vmem:[#allocation10 + $0x3e8] sm:$0xf]
    %v8802 = vld [vmem:[#allocation10 + $0x3ec] sm:$0xf]
    %v8803 = vld [vmem:[#allocation10 + $0x3f0] sm:$0xf]
    %v8804 = vld [vmem:[#allocation10 + $0x3f4] sm:$0xf]
    %v8805 = vld [vmem:[#allocation10 + $0x3f8] sm:$0xf]
    %v8806 = vld [vmem:[#allocation10 + $0x3fc] sm:$0xf]
    %v8871 = vunpack.c.l.b16 %v8743
    %v8872 = vunpack.c.l.b16 %v8744
    %v8873 = vunpack.c.l.b16 %v8745
    %v8874 = vunpack.c.l.b16 %v8746
    %v8875 = vunpack.c.l.b16 %v8747
    %v8876 = vunpack.c.l.b16 %v8748
    %v8877 = vunpack.c.l.b16 %v8749
    %v8878 = vunpack.c.l.b16 %v8750
    %v8879 = vunpack.c.l.b16 %v8751
    %v8880 = vunpack.c.l.b16 %v8752
    %v8881 = vunpack.c.l.b16 %v8753
    %v8882 = vunpack.c.l.b16 %v8754
    %v8883 = vunpack.c.l.b16 %v8755
    %v8884 = vunpack.c.l.b16 %v8756
    %v8885 = vunpack.c.l.b16 %v8757
    %v8886 = vunpack.c.l.b16 %v8758
    %v8887 = vunpack.c.l.b16 %v8759
    %v8888 = vunpack.c.l.b16 %v8760
    %v8889 = vunpack.c.l.b16 %v8761
    %v8890 = vunpack.c.l.b16 %v8762
    %v8891 = vunpack.c.l.b16 %v8763
    %v8892 = vunpack.c.l.b16 %v8764
    %v8893 = vunpack.c.l.b16 %v8765
    %v8894 = vunpack.c.l.b16 %v8766
    %v8895 = vunpack.c.l.b16 %v8767
    %v8896 = vunpack.c.l.b16 %v8768
    %v8897 = vunpack.c.l.b16 %v8769
    %v8898 = vunpack.c.l.b16 %v8770
    %v8899 = vunpack.c.l.b16 %v8771
    %v8900 = vunpack.c.l.b16 %v8772
    %v8901 = vunpack.c.l.b16 %v8773
    %v8902 = vunpack.c.l.b16 %v8774
    %v8903 = vunpack.c.l.b16 %v8775
    %v8904 = vunpack.c.l.b16 %v8776
    %v8905 = vunpack.c.l.b16 %v8777
    %v8906 = vunpack.c.l.b16 %v8778
    %v8907 = vunpack.c.l.b16 %v8779
    %v8908 = vunpack.c.l.b16 %v8780
    %v8909 = vunpack.c.l.b16 %v8781
    %v8910 = vunpack.c.l.b16 %v8782
    %v8911 = vunpack.c.l.b16 %v8783
    %v8912 = vunpack.c.l.b16 %v8784
    %v8913 = vunpack.c.l.b16 %v8785
    %v8914 = vunpack.c.l.b16 %v8786
    %v8915 = vunpack.c.l.b16 %v8787
    %v8916 = vunpack.c.l.b16 %v8788
    %v8917 = vunpack.c.l.b16 %v8789
    %v8918 = vunpack.c.l.b16 %v8790
    %v8919 = vunpack.c.l.b16 %v8791
    %v8920 = vunpack.c.l.b16 %v8792
    %v8921 = vunpack.c.l.b16 %v8793
    %v8922 = vunpack.c.l.b16 %v8794
    %v8923 = vunpack.c.l.b16 %v8795
    %v8924 = vunpack.c.l.b16 %v8796
    %v8925 = vunpack.c.l.b16 %v8797
    %v8926 = vunpack.c.l.b16 %v8798
    %v8927 = vunpack.c.l.b16 %v8799
    %v8928 = vunpack.c.l.b16 %v8800
    %v8929 = vunpack.c.l.b16 %v8801
    %v8930 = vunpack.c.l.b16 %v8802
    %v8931 = vunpack.c.l.b16 %v8803
    %v8932 = vunpack.c.l.b16 %v8804
    %v8933 = vunpack.c.l.b16 %v8805
    %v8934 = vunpack.c.l.b16 %v8806
    %v8935 = vpack.c.b16 %v8872, %v8871
    %v8936 = vpack.c.b16 %v8874, %v8873
    %v8937 = vpack.c.b16 %v8876, %v8875
    %v8938 = vpack.c.b16 %v8878, %v8877
    %v8939 = vpack.c.b16 %v8880, %v8879
    %v8940 = vpack.c.b16 %v8882, %v8881
    %v8941 = vpack.c.b16 %v8884, %v8883
    %v8942 = vpack.c.b16 %v8886, %v8885
    %v8943 = vpack.c.b16 %v8888, %v8887
    %v8944 = vpack.c.b16 %v8890, %v8889
    %v8945 = vpack.c.b16 %v8892, %v8891
    %v8946 = vpack.c.b16 %v8894, %v8893
    %v8947 = vpack.c.b16 %v8896, %v8895
    %v8948 = vpack.c.b16 %v8898, %v8897
    %v8949 = vpack.c.b16 %v8900, %v8899
    %v8950 = vpack.c.b16 %v8902, %v8901
    %v8951 = vpack.c.b16 %v8904, %v8903
    %v8952 = vpack.c.b16 %v8906, %v8905
    %v8953 = vpack.c.b16 %v8908, %v8907
    %v8954 = vpack.c.b16 %v8910, %v8909
    %v8955 = vpack.c.b16 %v8912, %v8911
    %v8956 = vpack.c.b16 %v8914, %v8913
    %v8957 = vpack.c.b16 %v8916, %v8915
    %v8958 = vpack.c.b16 %v8918, %v8917
    %v8959 = vpack.c.b16 %v8920, %v8919
    %v8960 = vpack.c.b16 %v8922, %v8921
    %v8961 = vpack.c.b16 %v8924, %v8923
    %v8962 = vpack.c.b16 %v8926, %v8925
    %v8963 = vpack.c.b16 %v8928, %v8927
    %v8964 = vpack.c.b16 %v8930, %v8929
    %v8965 = vpack.c.b16 %v8932, %v8931
    %v8966 = vpack.c.b16 %v8934, %v8933
    %8999 = vmatprep.subr.bf16.mxu0 0
    %9000 = vmatpush1.bf16.msra.mxu0 %v8942
    %9001 = vmatprep.subr.bf16.mxu0 0
    %9002 = vmatpush1.bf16.msra.mxu0 %v8941
    %9003 = vmatprep.subr.bf16.mxu0 0
    %9004 = vmatpush1.bf16.msra.mxu0 %v8940
    %9005 = vmatprep.subr.bf16.mxu0 0
    %9006 = vmatpush1.bf16.msra.mxu0 %v8939
    %9007 = vmatprep.subr.bf16.mxu0 0
    %9008 = vmatpush1.bf16.msra.mxu0 %v8938
    %9009 = vmatprep.subr.bf16.mxu0 0
    %9010 = vmatpush1.bf16.msra.mxu0 %v8937
    %9011 = vmatprep.subr.bf16.mxu0 0
    %9012 = vmatpush1.bf16.msra.mxu0 %v8936
    %9013 = vmatprep.subr.bf16.mxu0 0
    %9014 = vmatpush1.bf16.msra.mxu0 %v8935
    %9015 = vmatprep.subr.bf16.mxu0 0
    %9016 = vmatpush2.bf16.msra.mxu0 %v8950
    %9017 = vmatprep.subr.bf16.mxu0 0
    %9018 = vmatpush2.bf16.msra.mxu0 %v8949
    %9019 = vmatprep.subr.bf16.mxu0 0
    %9020 = vmatpush2.bf16.msra.mxu0 %v8948
    %9021 = vmatprep.subr.bf16.mxu0 0
    %9022 = vmatpush2.bf16.msra.mxu0 %v8947
    %9023 = vmatprep.subr.bf16.mxu0 0
    %9024 = vmatpush2.bf16.msra.mxu0 %v8946
    %9025 = vmatprep.subr.bf16.mxu0 0
    %9026 = vmatpush2.bf16.msra.mxu0 %v8945
    %9027 = vmatprep.subr.bf16.mxu0 0
    %9028 = vmatpush2.bf16.msra.mxu0 %v8944
    %9029 = vmatprep.subr.bf16.mxu0 0
    %9030 = vmatpush2.bf16.msra.mxu0 %v8943
    %9031 = vmatprep.mubr.bf16.mxu0 %v8740
    %9032 = vmatmul.mubr.bf16.gmra.mxu0 %v8739
    %v9033 = vpop.f32.mrf.mxu0
    %v9034 = vadd.f32 0.0, %v9033
    %v9035 = vpop.f32.mrf.mxu0
    %v9036 = vpop.f32.mrf.mxu0
    %v9037 = vadd.f32 0.0, %v9036
    %v9038 = vpop.f32.mrf.mxu0
    %9039 = vdwg.mxu0
    %9040 = vmatprep.subr.bf16.mxu0 0
    %9041 = vmatpush1.bf16.msra.mxu0 %v8958
    %9042 = vmatprep.subr.bf16.mxu0 0
    %9043 = vmatpush1.bf16.msra.mxu0 %v8957
    %9044 = vmatprep.subr.bf16.mxu0 0
    %9045 = vmatpush1.bf16.msra.mxu0 %v8956
    %9046 = vmatprep.subr.bf16.mxu0 0
    %9047 = vmatpush1.bf16.msra.mxu0 %v8955
    %9048 = vmatprep.subr.bf16.mxu0 0
    %9049 = vmatpush1.bf16.msra.mxu0 %v8954
    %9050 = vmatprep.subr.bf16.mxu0 0
    %9051 = vmatpush1.bf16.msra.mxu0 %v8953
    %9052 = vmatprep.subr.bf16.mxu0 0
    %9053 = vmatpush1.bf16.msra.mxu0 %v8952
    %9054 = vmatprep.subr.bf16.mxu0 0
    %9055 = vmatpush1.bf16.msra.mxu0 %v8951
    %9056 = vmatprep.subr.bf16.mxu0 0
    %9057 = vmatpush2.bf16.msra.mxu0 %v8966
    %9058 = vmatprep.subr.bf16.mxu0 0
    %9059 = vmatpush2.bf16.msra.mxu0 %v8965
    %9060 = vmatprep.subr.bf16.mxu0 0
    %9061 = vmatpush2.bf16.msra.mxu0 %v8964
    %9062 = vmatprep.subr.bf16.mxu0 0
    %9063 = vmatpush2.bf16.msra.mxu0 %v8963
    %9064 = vmatprep.subr.bf16.mxu0 0
    %9065 = vmatpush2.bf16.msra.mxu0 %v8962
    %9066 = vmatprep.subr.bf16.mxu0 0
    %9067 = vmatpush2.bf16.msra.mxu0 %v8961
    %9068 = vmatprep.subr.bf16.mxu0 0
    %9069 = vmatpush2.bf16.msra.mxu0 %v8960
    %9070 = vmatprep.subr.bf16.mxu0 0
    %9071 = vmatpush2.bf16.msra.mxu0 %v8959
    %9072 = vmatprep.mubr.bf16.mxu0 %v8742
    %9073 = vmatmul.mubr.bf16.gmra.mxu0 %v8741
    %v9074 = vpop.f32.mrf.mxu0
    %v9075 = vadd.f32 %v9034, %v9074
    %v9076 = vpop.f32.mrf.mxu0
    %v9077 = vpop.f32.mrf.mxu0
    %v9078 = vadd.f32 %v9037, %v9077
    %v9079 = vpop.f32.mrf.mxu0
    %9080 = vdwg.mxu0
    %v9081 = vadd.f32 %v8573, %v9075
    %v9082 = vadd.f32 %v8574, %v9078
    %v9083 = vld [vmem:[%s14 + $0x2d] sm:$0x1]
    %v9085 = vlaneseq
    %v9086 = vshrl.u32 %v9085, 7
    %v9087 = vsub.s32 0, %v9086
    %v9088 = vrot.slane %v9083, %v9087
    %v9090 = vadd.f32 %v9081, %v9088
    %v9091 = vadd.f32 %v9082, %v9088
    %9094 = vrot.lane.b32.xlu0 %v9090, 96
    %v9095 = vpop.permute.xlu0 %9094
    %9096 = vrot.lane.b32.xlu0 %v9091, 96
    %v9097 = vpop.permute.xlu0 %9096
    %v9100 = vadd.f32 %v7046, %v9095
    %v9101 = vadd.f32 %v7047, %v9097
    %v9102 = vld [vmem:[%s14 + $0x2e] sm:$0x1]
    %v9103 = vld [vmem:[%s14 + $0x2f] sm:$0x1]
    %9106 = vrot.lane.b32.xlu0 %v9100, 32
    %v9107 = vpop.permute.xlu0 %9106
    %9108 = vrot.lane.b32.xlu0 %v9101, 32
    %v9109 = vpop.permute.xlu0 %9108
    %v9112 = vsel %vm194, %v9107, 0.0
    %9113 = vadd.xlane.f32.xlu0 %v9112
    %v9114 = vpop.xlane.xlu0 %9113
    %v9115 = vsel %vm194, %v9109, 0.0
    %9116 = vadd.xlane.f32.xlu0 %v9115
    %v9117 = vpop.xlane.xlu0 %9116
    %v9118 = vmul.f32 %v9114, %v3320
    %v9119 = vmul.f32 %v9117, %v3320
    %v9120 = vsub.f32 %v9100, %v9118
    %v9121 = vsub.f32 %v9101, %v9119
    %v9122 = vmul.f32 %v9120, %v9120
    %v9123 = vmul.f32 %v9121, %v9121
    %9126 = vrot.lane.b32.xlu0 %v9122, 32
    %v9127 = vpop.permute.xlu0 %9126
    %9128 = vrot.lane.b32.xlu0 %v9123, 32
    %v9129 = vpop.permute.xlu0 %9128
    %v9132 = vsel %vm194, %v9127, 0.0
    %9133 = vadd.xlane.f32.xlu0 %v9132
    %v9134 = vpop.xlane.xlu0 %9133
    %v9135 = vsel %vm194, %v9129, 0.0
    %9136 = vadd.xlane.f32.xlu0 %v9135
    %v9137 = vpop.xlane.xlu0 %9136
    %v9138 = vmul.f32 %v9134, %v3320
    %v9139 = vmul.f32 %v9137, %v3320
    %v9140 = vadd.f32 %v9138, 1e-05
    %v9141 = vadd.f32 %v9139, 1e-05
    %v9142 = vrsqrt.pop %v9140
    %v9143 = vrsqrt.pop %v9141
    %v9144 = vmul.f32 %v9120, %v9142
    %v9145 = vmul.f32 %v9121, %v9143
    %v9147 = vlaneseq
    %v9148 = vshrl.u32 %v9147, 7
    %v9149 = vsub.s32 0, %v9148
    %v9150 = vrot.slane %v9102, %v9149
    %9151 = vrot.lane.b32.xlu0 %v9150, 96
    %v9152 = vpop.permute.xlu0 %9151
    %v9154 = vmul.f32 %v9144, %v9152
    %v9155 = vmul.f32 %v9145, %v9152
    %v9157 = vlaneseq
    %v9158 = vshrl.u32 %v9157, 7
    %v9159 = vsub.s32 0, %v9158
    %v9160 = vrot.slane %v9103, %v9159
    %9161 = vrot.lane.b32.xlu0 %v9160, 96
    %v9162 = vpop.permute.xlu0 %9161
    %v9164 = vadd.f32 %v9154, %v9162
    %v9165 = vadd.f32 %v9155, %v9162
    %v9166 = vpack.c.bf16 %v9164, %v9164
    %v9167 = vpack.c.bf16 %v9165, %v9165
    %v9168 = vld [vmem:[%s13] sm:$0xf]
    %v9169 = vld [vmem:[%s13 + $0x4] sm:$0xf]
    %v9170 = vld [vmem:[%s13 + $0x8] sm:$0xf]
    %v9171 = vld [vmem:[%s13 + $0xc] sm:$0xf]
    %v9172 = vld [vmem:[%s14 + $0x30] sm:$0x1]
    %v9174 = vlaneseq
    %v9175 = vshrl.u32 %v9174, 7
    %v9176 = vsub.s32 0, %v9175
    %v9177 = vrot.slane %v9172, %v9176
    %v9181 = vunpack.c.l.b16 %v9166
    %v9182 = vunpack.c.l.b16 %v9167
    %v9183 = vrot.slane %v9181, 7
    %v9184 = vrot.slane %v9182, 6
    %vm9185 = vcmask 1041409
    %v9186 = vsel %vm9185, %v9184, %v9183
    %v9187 = vpack.c.b16 %v9186, %v9186
    %9188 = vrot.lane.b32.xlu0 %v9187, 32
    %v9189 = vpop.permute.xlu0 %9188
    %v9194 = vunpack.c.l.b16 %v9168
    %v9195 = vunpack.c.l.b16 %v9169
    %v9196 = vunpack.c.l.b16 %v9170
    %v9197 = vunpack.c.l.b16 %v9171
    %v9198 = vpack.c.b16 %v9195, %v9194
    %v9199 = vpack.c.b16 %v9197, %v9196
    %v9203 = vsel %vm194, %v9189, 0
    %9205 = vmatprep.subr.bf16.mxu0 0
    %9206 = vmatpush1.bf16.msra.mxu0 0
    %9207 = vmatprep.subr.bf16.mxu0 0
    %9208 = vmatpush1.bf16.msra.mxu0 0
    %9209 = vmatprep.subr.bf16.mxu0 0
    %9210 = vmatpush1.bf16.msra.mxu0 0
    %9211 = vmatprep.subr.bf16.mxu0 0
    %9212 = vmatpush1.bf16.msra.mxu0 0
    %9213 = vmatprep.subr.bf16.mxu0 0
    %9214 = vmatpush1.bf16.msra.mxu0 0
    %9215 = vmatprep.subr.bf16.mxu0 0
    %9216 = vmatpush1.bf16.msra.mxu0 0
    %9217 = vmatprep.subr.bf16.mxu0 0
    %9218 = vmatpush1.bf16.msra.mxu0 %v9199
    %9219 = vmatprep.subr.bf16.mxu0 0
    %9220 = vmatpush1.bf16.msra.mxu0 %v9198
    %9221 = vmatprep.subr.bf16.mxu0 0
    %9222 = vmatpush2.bf16.msra.mxu0 0
    %9223 = vmatprep.subr.bf16.mxu0 0
    %9224 = vmatpush2.bf16.msra.mxu0 0
    %9225 = vmatprep.subr.bf16.mxu0 0
    %9226 = vmatpush2.bf16.msra.mxu0 0
    %9227 = vmatprep.subr.bf16.mxu0 0
    %9228 = vmatpush2.bf16.msra.mxu0 0
    %9229 = vmatprep.subr.bf16.mxu0 0
    %9230 = vmatpush2.bf16.msra.mxu0 0
    %9231 = vmatprep.subr.bf16.mxu0 0
    %9232 = vmatpush2.bf16.msra.mxu0 0
    %9233 = vmatprep.subr.bf16.mxu0 0
    %9234 = vmatpush2.bf16.msra.mxu0 0
    %9235 = vmatprep.subr.bf16.mxu0 0
    %9236 = vmatpush2.bf16.msra.mxu0 0
    %9237 = vmatprep.mubr.bf16.mxu0 0
    %9238 = vmatmul.mubr.bf16.gmra.mxu0 %v9203
    %v9239 = vpop.f32.mrf.mxu0
    %v9240 = vadd.f32 %v9177, %v9239
    %v9241 = vpop.f32.mrf.mxu0
    %v9242 = vpop.f32.mrf.mxu0
    %v9243 = vpop.f32.mrf.mxu0
    %9244 = vdwg.mxu0
    %vm9245 = vcmask 33792
    %9246 = vst.msk [vmem:[#allocation11] sm:$0x3] %vm9245, %v9240
    // Predicated region
    $region82: #{_lambda_.1} parent=1 // pred_check
      _
    $region83: #{_lambda_.1} parent=1 // pred_check_branch
      %9248 = sbr.rel (0) target = $region85
    $region84: #{_lambda_.1} parent=1 // pred_region
      %s9250 = ssub.s32 32, 32
      %9251 = vsyncadd [#allocation4], %s9250
      %s9253 = sshll.u32 [#allocation11], 4
      %s9254 = int_to_ptr.vmem [resolvable:$true] %s9253
      %9256 = dma.vmem_to_hbm [thread:$0]  %s9254, 32, %s15, [#allocation4]
    $region85: #{_lambda_.1} parent=1 // pred_fallthru
      _
    // Predicated region
    $region86: #{_lambda_.1} parent=1 // pred_check
      _
    $region87: #{_lambda_.1} parent=1 // pred_check_branch
      %9258 = sbr.rel (0) target = $region89
    $region88: #{_lambda_.1} parent=1 // pred_region
      %9259 = dma.done [#allocation4], 32
    $region89: #{_lambda_.1} parent=1 // pred_fallthru
      _
    %9260 = vsyncpa [#allocation3], 1
    %9261 = vsyncpa [#allocation6], 1
    %9262 = vsyncpa [#allocation9], 1
    %9263 = vsyncpa [#allocation4], 1

</llo_original>
